<compile_context>
chip_gen: v5e
topology: v5e:2x2
jax: 0.10.0
libtpu: 0.0.40
codegen_flags: <defaults>
</compile_context>

<pallas_src>
import math
import jax
import jax.numpy as jnp
from jax.experimental import pallas as pl
from jax.experimental.pallas import tpu as pltpu

S = 10            # number of candidate images (sequence length of contextual transformer)
SP = 16           # candidate axis padded to sublane multiple
H = 128           # hidden size (original: 1024)
NH = 8            # config.num_attention_heads = 8
HD = H // NH      # head dim
FF = 4 * H        # BERT intermediate size
L = 2             # args.transformer_layers
B = 4             # examples processed per call (folded into the M dimension)
M = B * SP        # row-slab height for all matmuls
ADD_INPUT = True
POSITIONAL = True
LN_EPS = 1e-12
NEG_BIG = -1e9
# NOTE: torch adds attention_mask = ones((1,1,1,10)) directly to the attention scores.
# A constant shift of all (valid) logits is a no-op under softmax, so it is folded away.


def _layer_norm(v, g, b):
    mu = jnp.mean(v, axis=-1, keepdims=True)
    var = jnp.mean(jnp.square(v - mu), axis=-1, keepdims=True)
    return (v - mu) * jax.lax.rsqrt(var + LN_EPS) * g + b


def _gelu(v):
    # TODO(synk): BERT uses exact erf-GELU; tanh approximation used (robust Mosaic lowering).
    c = math.sqrt(2.0 / math.pi)
    return 0.5 * v * (1.0 + jnp.tanh(c * (v + 0.044715 * v * v * v)))


def contextual_clip_kernel(
    x_ref,                          # (B, SP, H) f32  padded CLS tokens
    pe_ref,                         # (SP, H)    f32  padded positional embedding
    pm_ref,                         # (B, SP, 1) f32  padded pos_mask
    bias_ref,                       # (M, M)     f32  additive bias: 0 same-example valid key, -1e9 else
    oh_ref,                         # (B, SP, 1) f32  one-hot ground-truth image index
    wqkv_ref, bqkv_ref,             # (L,H,3H) bf16, (L,1,3H) f32  -- fused QKV
    wo_ref, bo_ref,                 # (L,H,H)  bf16, (L,1,H)  f32
    ln1g_ref, ln1b_ref,
    wi_ref, bi_ref,                 # (L,H,FF) bf16, (L,1,FF) f32
    wd_ref, bd_ref,                 # (L,FF,H) bf16, (L,1,H)  f32
    ln2g_ref, ln2b_ref,
    pw_ref, pb_ref,                 # prediction layer, pre-transposed (1,H), (1,1)
    preds_ref, loss_ref,            # outputs: (B, SP, 1), (B, 1, 1)
):
    x3_in = x_ref[...]
    if POSITIONAL:
        x3 = x3_in + pe_ref[...][None, :, :] * pm_ref[...]   # embs = pos_emb * pos_mask ; x_pos = x_ + embs
    else:
        x3 = x3_in

    # Fold batch into rows: all matmuls run on a (M, H) = (64, 128) slab.
    x = x3.reshape(M, H)
    x_in = x3_in.reshape(M, H)
    bias = bias_ref[...]

    inv_sqrt_hd = 1.0 / math.sqrt(HD)
    for l in range(L):                                # BertLayer stack (static unroll)
        # ---- BertSelfAttention: fused QKV projection on the full slab ----
        qkv = jnp.dot(x.astype(jnp.bfloat16), wqkv_ref[l],
                      preferred_element_type=jnp.float32) + bqkv_ref[l]        # (M, 3H)
        q = (qkv[:, 0 * H:1 * H] * inv_sqrt_hd).astype(jnp.bfloat16)           # fold 1/sqrt(hd) into q
        k = qkv[:, 1 * H:2 * H].astype(jnp.bfloat16)
        v = qkv[:, 2 * H:3 * H].astype(jnp.bfloat16)

        # Per-head scores over the whole slab: contract the feature axis of BOTH operands
        # (no materialized k.T).  Cross-example and padded-key entries are masked by `bias`.
        # 2-D (NH*M, M) sublane-concat layout -> one head-batched softmax pass.
        s_all = jnp.concatenate(
            [jax.lax.dot_general(q[:, h * HD:(h + 1) * HD], k[:, h * HD:(h + 1) * HD],
                                 (((1,), (1,)), ((), ())),
                                 preferred_element_type=jnp.float32) + bias
             for h in range(NH)], axis=0)             # (NH*M, M) f32

        s_all = s_all - jnp.max(s_all, axis=-1, keepdims=True)
        p_all = jnp.exp(s_all)
        p_all = (p_all * pl.reciprocal(jnp.sum(p_all, axis=-1, keepdims=True),
                                       approx=True)).astype(jnp.bfloat16)

        # Context: masked (exp -> 0) columns contribute nothing, so p @ v stays per-example.
        ctx = jnp.concatenate(
            [jnp.dot(p_all[h * M:(h + 1) * M, :], v[:, h * HD:(h + 1) * HD],
                     preferred_element_type=jnp.float32)
             for h in range(NH)], axis=-1)            # (M, H)

        # ---- BertSelfOutput: dense + residual + LayerNorm ----
        attn_out = jnp.dot(ctx.astype(jnp.bfloat16), wo_ref[l],
                           preferred_element_type=jnp.float32) + bo_ref[l]
        h1 = _layer_norm(attn_out + x, ln1g_ref[l], ln1b_ref[l])

        # ---- BertIntermediate (GELU) + BertOutput: dense + residual + LayerNorm ----
        inter = _gelu(jnp.dot(h1.astype(jnp.bfloat16), wi_ref[l],
                              preferred_element_type=jnp.float32) + bi_ref[l])
        ffn = jnp.dot(inter.astype(jnp.bfloat16), wd_ref[l],
                      preferred_element_type=jnp.float32) + bd_ref[l]
        x = _layer_norm(ffn + h1, ln2g_ref[l], ln2b_ref[l])

    if ADD_INPUT:                                     # x = x + x_
        x = x + x_in

    # TODO(synk): torch casts x to .half() (fp16) before prediction_layer; computed in f32 here.
    # Prediction head as a lane reduce (VPU/XLU) instead of an N=1 MXU matmul.
    preds = jnp.sum(x * pw_ref[...], axis=-1, keepdims=True) + pb_ref[...]     # (M, 1)
    preds3 = preds.reshape(B, SP, 1)
    preds_ref[...] = preds3

    # retrieval_loss = CrossEntropyLoss(preds (1,10,1), [[img_idx]])
    # == logsumexp over the 10 valid candidates minus the picked logit, per example.
    valid = jax.lax.broadcasted_iota(jnp.int32, (B, SP, 1), 1) < S
    m = jnp.max(jnp.where(valid, preds3, jnp.float32(-1e30)), axis=1, keepdims=True)   # (B,1,1)
    e = jnp.where(valid, jnp.exp(preds3 - m), 0.0)
    lse = jnp.log(jnp.sum(e, axis=1, keepdims=True)) + m                                # (B,1,1)
    picked = jnp.sum(preds3 * oh_ref[...], axis=1, keepdims=True)                       # (B,1,1)
    loss_ref[...] = lse - picked


def init_params(key):
    ks = jax.random.split(key, 8)

    def w(k, shape):
        return 0.02 * jax.random.normal(k, shape, jnp.float32)

    wq, wk, wv = w(ks[1], (L, H, H)), w(ks[2], (L, H, H)), w(ks[3], (L, H, H))
    return dict(
        pos_emb=w(ks[0], (S, H)),                                                   # nn.Embedding(10, H)
        wqkv=jnp.concatenate([wq, wk, wv], axis=-1).astype(jnp.bfloat16),           # fused QKV, bf16
        bqkv=jnp.zeros((L, 1, 3 * H), jnp.float32),
        wo=w(ks[4], (L, H, H)).astype(jnp.bfloat16), bo=jnp.zeros((L, 1, H), jnp.float32),
        ln1g=jnp.ones((L, 1, H), jnp.float32), ln1b=jnp.zeros((L, 1, H), jnp.float32),
        wi=w(ks[5], (L, H, FF)).astype(jnp.bfloat16), bi=jnp.zeros((L, 1, FF), jnp.float32),
        wd=w(ks[6], (L, FF, H)).astype(jnp.bfloat16), bd=jnp.zeros((L, 1, H), jnp.float32),
        ln2g=jnp.ones((L, 1, H), jnp.float32), ln2b=jnp.zeros((L, 1, H), jnp.float32),
        pred_wT=w(ks[7], (1, H)), pred_b=jnp.zeros((1, 1), jnp.float32),            # nn.Linear(H, 1)
    )


@jax.jit
def contextual_clip_forward(cls_tokens, pos_mask, img_idx, params):
    batch = cls_tokens.shape[0]
    assert batch == B, "kernel constants sized for B examples"

    # Pad candidate axis 10 -> 16 (sublane alignment); padded slots masked below.
    pad = SP - S
    x = jnp.pad(cls_tokens, ((0, 0), (0, pad), (0, 0)))
    pm = jnp.pad(pos_mask, ((0, 0), (0, pad), (0, 0)))
    pe = jnp.pad(params["pos_emb"], ((0, pad), (0, 0)))
    one_hot = jax.nn.one_hot(img_idx.astype(jnp.int32), SP, dtype=jnp.float32)[..., None]  # (B,SP,1)

    # Additive attention bias over the folded (M, M) key/query grid:
    # 0 where key is a *valid* candidate of the *same* example, -1e9 otherwise.
    r = jnp.arange(batch * SP, dtype=jnp.int32)
    same_ex = (r[:, None] // SP) == (r[None, :] // SP)
    key_valid = (r[None, :] % SP) < S
    attn_bias = jnp.where(same_ex & key_valid, 0.0, NEG_BIG).astype(jnp.float32)           # (M, M)

    args = (
        x, pe, pm, attn_bias, one_hot,
        params["wqkv"], params["bqkv"],
        params["wo"], params["bo"],
        params["ln1g"], params["ln1b"],
        params["wi"], params["bi"], params["wd"], params["bd"],
        params["ln2g"], params["ln2b"],
        params["pred_wT"], params["pred_b"],
    )

    def full_spec(a):                       # single grid step: full-array VMEM blocks
        nd = a.ndim
        return pl.BlockSpec(a.shape, lambda i, _n=nd: (0,) * _n)

    in_specs = [full_spec(a) for a in args]
    out_shape = (jax.ShapeDtypeStruct((batch, SP, 1), jnp.float32),
                 jax.ShapeDtypeStruct((batch, 1, 1), jnp.float32))
    out_specs = (pl.BlockSpec((batch, SP, 1), lambda i: (0, 0, 0)),
                 pl.BlockSpec((batch, 1, 1), lambda i: (0, 0, 0)))

    preds_p, loss3 = pl.pallas_call(
        contextual_clip_kernel,
        out_shape=out_shape,
        grid=(1,),                          # whole batch in one invocation (overhead-bound regime)
        in_specs=in_specs,
        out_specs=out_specs,
        compiler_params=pltpu.CompilerParams(dimension_semantics=("arbitrary",)),
    )(*args)

    preds = preds_p[:, :S, :][:, None, :, :]   # per-example torch shape (1, 10, 1)
    loss = loss3[:, 0, 0]                      # retrieval_loss per example (mask_img/txt False)
    return preds, loss


if __name__ == "__main__":
    key = jax.random.PRNGKey(0)
    kp, kc = jax.random.split(key)
    params = init_params(kp)
    # Simulated OFA-encoder CLS tokens for B examples x 10 candidate images
    # (OFA itself not translated).
    cls_tokens = jax.random.normal(kc, (B, S, H), jnp.float32)
    pos_mask = jnp.ones((B, S, 1), jnp.float32)
    img_idx = jnp.array([3, 0, 7, 5], dtype=jnp.int32)[:B]

    preds, loss = contextual_clip_forward(cls_tokens, pos_mask, img_idx, params)
    jax.block_until_ready((preds, loss))
    assert preds.shape == (B, 1, S, 1) and loss.shape == (B,)
    assert bool(jnp.all(jnp.isfinite(preds))) and bool(jnp.all(jnp.isfinite(loss)))
    print("KERNEL_OK")
</pallas_src>

<mosaic_0001>
module attributes {stable_mosaic.version = 11 : i64} {
  func.func @contextual_clip_kernel(%arg0: i32, %arg1: memref<4x16x128xf32, #tpu.memory_space<vmem>>, %arg2: memref<16x128xf32, #tpu.memory_space<vmem>>, %arg3: memref<4x16x1xf32, #tpu.memory_space<vmem>>, %arg4: memref<64x64xf32, #tpu.memory_space<vmem>>, %arg5: memref<4x16x1xf32, #tpu.memory_space<vmem>>, %arg6: memref<2x128x384xbf16, #tpu.memory_space<vmem>>, %arg7: memref<2x1x384xf32, #tpu.memory_space<vmem>>, %arg8: memref<2x128x128xbf16, #tpu.memory_space<vmem>>, %arg9: memref<2x1x128xf32, #tpu.memory_space<vmem>>, %arg10: memref<2x1x128xf32, #tpu.memory_space<vmem>>, %arg11: memref<2x1x128xf32, #tpu.memory_space<vmem>>, %arg12: memref<2x128x512xbf16, #tpu.memory_space<vmem>>, %arg13: memref<2x1x512xf32, #tpu.memory_space<vmem>>, %arg14: memref<2x512x128xbf16, #tpu.memory_space<vmem>>, %arg15: memref<2x1x128xf32, #tpu.memory_space<vmem>>, %arg16: memref<2x1x128xf32, #tpu.memory_space<vmem>>, %arg17: memref<2x1x128xf32, #tpu.memory_space<vmem>>, %arg18: memref<1x128xf32, #tpu.memory_space<vmem>>, %arg19: memref<1x1xf32, #tpu.memory_space<vmem>>, %arg20: memref<4x16x1xf32, #tpu.memory_space<vmem>>, %arg21: memref<4x1x1xf32, #tpu.memory_space<vmem>>) attributes {dimension_semantics = [#tpu.dimension_semantics<arbitrary>], iteration_bounds = array<i64: 1>, scalar_prefetch = 0 : i64, scratch_operands = 0 : i64, tpu.core_type = #tpu.core_type<tc>, window_params = [{pipeline_mode = #tpu.pipeline_mode<synchronous>, transform_indices = @transform_0, window_bounds = array<i64: 4, 16, 128>}, {pipeline_mode = #tpu.pipeline_mode<synchronous>, transform_indices = @transform_1, window_bounds = array<i64: 16, 128>}, {pipeline_mode = #tpu.pipeline_mode<synchronous>, transform_indices = @transform_2, window_bounds = array<i64: 4, 16, 1>}, {pipeline_mode = #tpu.pipeline_mode<synchronous>, transform_indices = @transform_3, window_bounds = array<i64: 64, 64>}, {pipeline_mode = #tpu.pipeline_mode<synchronous>, transform_indices = @transform_4, window_bounds = array<i64: 4, 16, 1>}, {pipeline_mode = #tpu.pipeline_mode<synchronous>, transform_indices = @transform_5, window_bounds = array<i64: 2, 128, 384>}, {pipeline_mode = #tpu.pipeline_mode<synchronous>, transform_indices = @transform_6, window_bounds = array<i64: 2, 1, 384>}, {pipeline_mode = #tpu.pipeline_mode<synchronous>, transform_indices = @transform_7, window_bounds = array<i64: 2, 128, 128>}, {pipeline_mode = #tpu.pipeline_mode<synchronous>, transform_indices = @transform_8, window_bounds = array<i64: 2, 1, 128>}, {pipeline_mode = #tpu.pipeline_mode<synchronous>, transform_indices = @transform_9, window_bounds = array<i64: 2, 1, 128>}, {pipeline_mode = #tpu.pipeline_mode<synchronous>, transform_indices = @transform_10, window_bounds = array<i64: 2, 1, 128>}, {pipeline_mode = #tpu.pipeline_mode<synchronous>, transform_indices = @transform_11, window_bounds = array<i64: 2, 128, 512>}, {pipeline_mode = #tpu.pipeline_mode<synchronous>, transform_indices = @transform_12, window_bounds = array<i64: 2, 1, 512>}, {pipeline_mode = #tpu.pipeline_mode<synchronous>, transform_indices = @transform_13, window_bounds = array<i64: 2, 512, 128>}, {pipeline_mode = #tpu.pipeline_mode<synchronous>, transform_indices = @transform_14, window_bounds = array<i64: 2, 1, 128>}, {pipeline_mode = #tpu.pipeline_mode<synchronous>, transform_indices = @transform_15, window_bounds = array<i64: 2, 1, 128>}, {pipeline_mode = #tpu.pipeline_mode<synchronous>, transform_indices = @transform_16, window_bounds = array<i64: 2, 1, 128>}, {pipeline_mode = #tpu.pipeline_mode<synchronous>, transform_indices = @transform_17, window_bounds = array<i64: 1, 128>}, {pipeline_mode = #tpu.pipeline_mode<synchronous>, transform_indices = @transform_18, window_bounds = array<i64: 1, 1>}, {pipeline_mode = #tpu.pipeline_mode<synchronous>, transform_indices = @transform_19, window_bounds = array<i64: 4, 16, 1>}, {pipeline_mode = #tpu.pipeline_mode<synchronous>, transform_indices = @transform_20, window_bounds = array<i64: 4, 1, 1>}]} {
    %c0 = arith.constant 0 : index
    %c0_0 = arith.constant 0 : index
    %c0_1 = arith.constant 0 : index
    %0 = vector.load %arg1[%c0, %c0_0, %c0_1] : memref<4x16x128xf32, #tpu.memory_space<vmem>>, vector<4x16x128xf32>
    %c0_2 = arith.constant 0 : index
    %c0_3 = arith.constant 0 : index
    %1 = vector.load %arg2[%c0_2, %c0_3] : memref<16x128xf32, #tpu.memory_space<vmem>>, vector<16x128xf32>
    %2 = vector.shape_cast %1 : vector<16x128xf32> to vector<1x16x128xf32>
    %c0_4 = arith.constant 0 : index
    %c0_5 = arith.constant 0 : index
    %c0_6 = arith.constant 0 : index
    %3 = vector.load %arg3[%c0_4, %c0_5, %c0_6] : memref<4x16x1xf32, #tpu.memory_space<vmem>>, vector<4x16x1xf32>
    %4 = vector.broadcast %2 : vector<1x16x128xf32> to vector<4x16x128xf32>
    %5 = vector.broadcast %3 : vector<4x16x1xf32> to vector<4x16x128xf32>
    %6 = arith.mulf %4, %5 : vector<4x16x128xf32>
    %7 = arith.addf %0, %6 : vector<4x16x128xf32>
    %8 = vector.shape_cast %7 : vector<4x16x128xf32> to vector<64x128xf32>
    %9 = vector.shape_cast %0 : vector<4x16x128xf32> to vector<64x128xf32>
    %c0_7 = arith.constant 0 : index
    %c0_8 = arith.constant 0 : index
    %10 = vector.load %arg4[%c0_7, %c0_8] : memref<64x64xf32, #tpu.memory_space<vmem>>, vector<64x64xf32>
    %11 = arith.truncf %8 : vector<64x128xf32> to vector<64x128xbf16>
    %c0_9 = arith.constant 0 : index
    %c0_10 = arith.constant 0 : index
    %c0_11 = arith.constant 0 : index
    %12 = vector.load %arg6[%c0_9, %c0_10, %c0_11] : memref<2x128x384xbf16, #tpu.memory_space<vmem>>, vector<1x128x384xbf16>
    %13 = vector.shape_cast %12 : vector<1x128x384xbf16> to vector<128x384xbf16>
    %cst = arith.constant dense<0.000000e+00> : vector<64x384xf32>
    %14 = tpu.matmul %11, %13, %cst {dimension_numbers = #tpu.dot_dimension_numbers<[1], [0], [0], [1], [0, 0, 1, 1], [], []>} : vector<64x128xbf16>, vector<128x384xbf16>, vector<64x384xf32> -> vector<64x384xf32>
    %c0_12 = arith.constant 0 : index
    %c0_13 = arith.constant 0 : index
    %c0_14 = arith.constant 0 : index
    %15 = vector.load %arg7[%c0_12, %c0_13, %c0_14] : memref<2x1x384xf32, #tpu.memory_space<vmem>>, vector<1x1x384xf32>
    %16 = vector.shape_cast %15 : vector<1x1x384xf32> to vector<1x384xf32>
    %17 = vector.broadcast %16 : vector<1x384xf32> to vector<64x384xf32>
    %18 = arith.addf %14, %17 : vector<64x384xf32>
    %19 = vector.extract_strided_slice %18 {offsets = [0, 0], sizes = [64, 128], strides = [1, 1]} : vector<64x384xf32> to vector<64x128xf32>
    %cst_15 = arith.constant 2.500000e-01 : f32
    %20 = vector.broadcast %cst_15 : f32 to vector<64x128xf32>
    %21 = arith.mulf %19, %20 : vector<64x128xf32>
    %22 = arith.truncf %21 : vector<64x128xf32> to vector<64x128xbf16>
    %23 = vector.extract_strided_slice %18 {offsets = [0, 128], sizes = [64, 128], strides = [1, 1]} : vector<64x384xf32> to vector<64x128xf32>
    %24 = arith.truncf %23 : vector<64x128xf32> to vector<64x128xbf16>
    %25 = vector.extract_strided_slice %18 {offsets = [0, 256], sizes = [64, 128], strides = [1, 1]} : vector<64x384xf32> to vector<64x128xf32>
    %26 = arith.truncf %25 : vector<64x128xf32> to vector<64x128xbf16>
    %27 = vector.extract_strided_slice %22 {offsets = [0, 0], sizes = [64, 16], strides = [1, 1]} : vector<64x128xbf16> to vector<64x16xbf16>
    %28 = vector.extract_strided_slice %24 {offsets = [0, 0], sizes = [64, 16], strides = [1, 1]} : vector<64x128xbf16> to vector<64x16xbf16>
    %cst_16 = arith.constant dense<0.000000e+00> : vector<64x64xf32>
    %29 = tpu.matmul %27, %28, %cst_16 {dimension_numbers = #tpu.dot_dimension_numbers<[1], [1], [0], [0], [0, 0, 1, 0], [], []>} : vector<64x16xbf16>, vector<64x16xbf16>, vector<64x64xf32> -> vector<64x64xf32>
    %30 = arith.addf %29, %10 : vector<64x64xf32>
    %31 = vector.extract_strided_slice %22 {offsets = [0, 16], sizes = [64, 16], strides = [1, 1]} : vector<64x128xbf16> to vector<64x16xbf16>
    %32 = vector.extract_strided_slice %24 {offsets = [0, 16], sizes = [64, 16], strides = [1, 1]} : vector<64x128xbf16> to vector<64x16xbf16>
    %cst_17 = arith.constant dense<0.000000e+00> : vector<64x64xf32>
    %33 = tpu.matmul %31, %32, %cst_17 {dimension_numbers = #tpu.dot_dimension_numbers<[1], [1], [0], [0], [0, 0, 1, 0], [], []>} : vector<64x16xbf16>, vector<64x16xbf16>, vector<64x64xf32> -> vector<64x64xf32>
    %34 = arith.addf %33, %10 : vector<64x64xf32>
    %35 = vector.extract_strided_slice %22 {offsets = [0, 32], sizes = [64, 16], strides = [1, 1]} : vector<64x128xbf16> to vector<64x16xbf16>
    %36 = vector.extract_strided_slice %24 {offsets = [0, 32], sizes = [64, 16], strides = [1, 1]} : vector<64x128xbf16> to vector<64x16xbf16>
    %cst_18 = arith.constant dense<0.000000e+00> : vector<64x64xf32>
    %37 = tpu.matmul %35, %36, %cst_18 {dimension_numbers = #tpu.dot_dimension_numbers<[1], [1], [0], [0], [0, 0, 1, 0], [], []>} : vector<64x16xbf16>, vector<64x16xbf16>, vector<64x64xf32> -> vector<64x64xf32>
    %38 = arith.addf %37, %10 : vector<64x64xf32>
    %39 = vector.extract_strided_slice %22 {offsets = [0, 48], sizes = [64, 16], strides = [1, 1]} : vector<64x128xbf16> to vector<64x16xbf16>
    %40 = vector.extract_strided_slice %24 {offsets = [0, 48], sizes = [64, 16], strides = [1, 1]} : vector<64x128xbf16> to vector<64x16xbf16>
    %cst_19 = arith.constant dense<0.000000e+00> : vector<64x64xf32>
    %41 = tpu.matmul %39, %40, %cst_19 {dimension_numbers = #tpu.dot_dimension_numbers<[1], [1], [0], [0], [0, 0, 1, 0], [], []>} : vector<64x16xbf16>, vector<64x16xbf16>, vector<64x64xf32> -> vector<64x64xf32>
    %42 = arith.addf %41, %10 : vector<64x64xf32>
    %43 = vector.extract_strided_slice %22 {offsets = [0, 64], sizes = [64, 16], strides = [1, 1]} : vector<64x128xbf16> to vector<64x16xbf16>
    %44 = vector.extract_strided_slice %24 {offsets = [0, 64], sizes = [64, 16], strides = [1, 1]} : vector<64x128xbf16> to vector<64x16xbf16>
    %cst_20 = arith.constant dense<0.000000e+00> : vector<64x64xf32>
    %45 = tpu.matmul %43, %44, %cst_20 {dimension_numbers = #tpu.dot_dimension_numbers<[1], [1], [0], [0], [0, 0, 1, 0], [], []>} : vector<64x16xbf16>, vector<64x16xbf16>, vector<64x64xf32> -> vector<64x64xf32>
    %46 = arith.addf %45, %10 : vector<64x64xf32>
    %47 = vector.extract_strided_slice %22 {offsets = [0, 80], sizes = [64, 16], strides = [1, 1]} : vector<64x128xbf16> to vector<64x16xbf16>
    %48 = vector.extract_strided_slice %24 {offsets = [0, 80], sizes = [64, 16], strides = [1, 1]} : vector<64x128xbf16> to vector<64x16xbf16>
    %cst_21 = arith.constant dense<0.000000e+00> : vector<64x64xf32>
    %49 = tpu.matmul %47, %48, %cst_21 {dimension_numbers = #tpu.dot_dimension_numbers<[1], [1], [0], [0], [0, 0, 1, 0], [], []>} : vector<64x16xbf16>, vector<64x16xbf16>, vector<64x64xf32> -> vector<64x64xf32>
    %50 = arith.addf %49, %10 : vector<64x64xf32>
    %51 = vector.extract_strided_slice %22 {offsets = [0, 96], sizes = [64, 16], strides = [1, 1]} : vector<64x128xbf16> to vector<64x16xbf16>
    %52 = vector.extract_strided_slice %24 {offsets = [0, 96], sizes = [64, 16], strides = [1, 1]} : vector<64x128xbf16> to vector<64x16xbf16>
    %cst_22 = arith.constant dense<0.000000e+00> : vector<64x64xf32>
    %53 = tpu.matmul %51, %52, %cst_22 {dimension_numbers = #tpu.dot_dimension_numbers<[1], [1], [0], [0], [0, 0, 1, 0], [], []>} : vector<64x16xbf16>, vector<64x16xbf16>, vector<64x64xf32> -> vector<64x64xf32>
    %54 = arith.addf %53, %10 : vector<64x64xf32>
    %55 = vector.extract_strided_slice %22 {offsets = [0, 112], sizes = [64, 16], strides = [1, 1]} : vector<64x128xbf16> to vector<64x16xbf16>
    %56 = vector.extract_strided_slice %24 {offsets = [0, 112], sizes = [64, 16], strides = [1, 1]} : vector<64x128xbf16> to vector<64x16xbf16>
    %cst_23 = arith.constant dense<0.000000e+00> : vector<64x64xf32>
    %57 = tpu.matmul %55, %56, %cst_23 {dimension_numbers = #tpu.dot_dimension_numbers<[1], [1], [0], [0], [0, 0, 1, 0], [], []>} : vector<64x16xbf16>, vector<64x16xbf16>, vector<64x64xf32> -> vector<64x64xf32>
    %58 = arith.addf %57, %10 : vector<64x64xf32>
    %59 = tpu.concatenate %30, %34, %38, %42, %46, %50, %54, %58 in 0 : vector<64x64xf32>, vector<64x64xf32>, vector<64x64xf32>, vector<64x64xf32>, vector<64x64xf32>, vector<64x64xf32>, vector<64x64xf32>, vector<64x64xf32> -> vector<512x64xf32>
    %cst_24 = arith.constant dense<0xFF800000> : vector<512xf32>
    %60 = vector.multi_reduction <maximumf>, %59, %cst_24 [1] : vector<512x64xf32> to vector<512xf32>
    %61 = vector.shape_cast %60 : vector<512xf32> to vector<512x1xf32>
    %62 = vector.broadcast %61 : vector<512x1xf32> to vector<512x64xf32>
    %63 = arith.subf %59, %62 : vector<512x64xf32>
    %64 = math.exp %63 : vector<512x64xf32>
    %cst_25 = arith.constant dense<0.000000e+00> : vector<512xf32>
    %65 = vector.multi_reduction <add>, %64, %cst_25 [1] : vector<512x64xf32> to vector<512xf32>
    %66 = vector.shape_cast %65 : vector<512xf32> to vector<512x1xf32>
    %67 = tpu.reciprocal %66 {approx = true} : vector<512x1xf32> -> vector<512x1xf32>
    %68 = vector.broadcast %67 : vector<512x1xf32> to vector<512x64xf32>
    %69 = arith.mulf %64, %68 : vector<512x64xf32>
    %70 = arith.truncf %69 : vector<512x64xf32> to vector<512x64xbf16>
    %71 = vector.extract_strided_slice %70 {offsets = [0, 0], sizes = [64, 64], strides = [1, 1]} : vector<512x64xbf16> to vector<64x64xbf16>
    %72 = vector.extract_strided_slice %26 {offsets = [0, 0], sizes = [64, 16], strides = [1, 1]} : vector<64x128xbf16> to vector<64x16xbf16>
    %cst_26 = arith.constant dense<0.000000e+00> : vector<64x16xf32>
    %73 = tpu.matmul %71, %72, %cst_26 {dimension_numbers = #tpu.dot_dimension_numbers<[1], [0], [0], [1], [0, 0, 1, 1], [], []>} : vector<64x64xbf16>, vector<64x16xbf16>, vector<64x16xf32> -> vector<64x16xf32>
    %74 = vector.extract_strided_slice %70 {offsets = [64, 0], sizes = [64, 64], strides = [1, 1]} : vector<512x64xbf16> to vector<64x64xbf16>
    %75 = vector.extract_strided_slice %26 {offsets = [0, 16], sizes = [64, 16], strides = [1, 1]} : vector<64x128xbf16> to vector<64x16xbf16>
    %cst_27 = arith.constant dense<0.000000e+00> : vector<64x16xf32>
    %76 = tpu.matmul %74, %75, %cst_27 {dimension_numbers = #tpu.dot_dimension_numbers<[1], [0], [0], [1], [0, 0, 1, 1], [], []>} : vector<64x64xbf16>, vector<64x16xbf16>, vector<64x16xf32> -> vector<64x16xf32>
    %77 = vector.extract_strided_slice %70 {offsets = [128, 0], sizes = [64, 64], strides = [1, 1]} : vector<512x64xbf16> to vector<64x64xbf16>
    %78 = vector.extract_strided_slice %26 {offsets = [0, 32], sizes = [64, 16], strides = [1, 1]} : vector<64x128xbf16> to vector<64x16xbf16>
    %cst_28 = arith.constant dense<0.000000e+00> : vector<64x16xf32>
    %79 = tpu.matmul %77, %78, %cst_28 {dimension_numbers = #tpu.dot_dimension_numbers<[1], [0], [0], [1], [0, 0, 1, 1], [], []>} : vector<64x64xbf16>, vector<64x16xbf16>, vector<64x16xf32> -> vector<64x16xf32>
    %80 = vector.extract_strided_slice %70 {offsets = [192, 0], sizes = [64, 64], strides = [1, 1]} : vector<512x64xbf16> to vector<64x64xbf16>
    %81 = vector.extract_strided_slice %26 {offsets = [0, 48], sizes = [64, 16], strides = [1, 1]} : vector<64x128xbf16> to vector<64x16xbf16>
    %cst_29 = arith.constant dense<0.000000e+00> : vector<64x16xf32>
    %82 = tpu.matmul %80, %81, %cst_29 {dimension_numbers = #tpu.dot_dimension_numbers<[1], [0], [0], [1], [0, 0, 1, 1], [], []>} : vector<64x64xbf16>, vector<64x16xbf16>, vector<64x16xf32> -> vector<64x16xf32>
    %83 = vector.extract_strided_slice %70 {offsets = [256, 0], sizes = [64, 64], strides = [1, 1]} : vector<512x64xbf16> to vector<64x64xbf16>
    %84 = vector.extract_strided_slice %26 {offsets = [0, 64], sizes = [64, 16], strides = [1, 1]} : vector<64x128xbf16> to vector<64x16xbf16>
    %cst_30 = arith.constant dense<0.000000e+00> : vector<64x16xf32>
    %85 = tpu.matmul %83, %84, %cst_30 {dimension_numbers = #tpu.dot_dimension_numbers<[1], [0], [0], [1], [0, 0, 1, 1], [], []>} : vector<64x64xbf16>, vector<64x16xbf16>, vector<64x16xf32> -> vector<64x16xf32>
    %86 = vector.extract_strided_slice %70 {offsets = [320, 0], sizes = [64, 64], strides = [1, 1]} : vector<512x64xbf16> to vector<64x64xbf16>
    %87 = vector.extract_strided_slice %26 {offsets = [0, 80], sizes = [64, 16], strides = [1, 1]} : vector<64x128xbf16> to vector<64x16xbf16>
    %cst_31 = arith.constant dense<0.000000e+00> : vector<64x16xf32>
    %88 = tpu.matmul %86, %87, %cst_31 {dimension_numbers = #tpu.dot_dimension_numbers<[1], [0], [0], [1], [0, 0, 1, 1], [], []>} : vector<64x64xbf16>, vector<64x16xbf16>, vector<64x16xf32> -> vector<64x16xf32>
    %89 = vector.extract_strided_slice %70 {offsets = [384, 0], sizes = [64, 64], strides = [1, 1]} : vector<512x64xbf16> to vector<64x64xbf16>
    %90 = vector.extract_strided_slice %26 {offsets = [0, 96], sizes = [64, 16], strides = [1, 1]} : vector<64x128xbf16> to vector<64x16xbf16>
    %cst_32 = arith.constant dense<0.000000e+00> : vector<64x16xf32>
    %91 = tpu.matmul %89, %90, %cst_32 {dimension_numbers = #tpu.dot_dimension_numbers<[1], [0], [0], [1], [0, 0, 1, 1], [], []>} : vector<64x64xbf16>, vector<64x16xbf16>, vector<64x16xf32> -> vector<64x16xf32>
    %92 = vector.extract_strided_slice %70 {offsets = [448, 0], sizes = [64, 64], strides = [1, 1]} : vector<512x64xbf16> to vector<64x64xbf16>
    %93 = vector.extract_strided_slice %26 {offsets = [0, 112], sizes = [64, 16], strides = [1, 1]} : vector<64x128xbf16> to vector<64x16xbf16>
    %cst_33 = arith.constant dense<0.000000e+00> : vector<64x16xf32>
    %94 = tpu.matmul %92, %93, %cst_33 {dimension_numbers = #tpu.dot_dimension_numbers<[1], [0], [0], [1], [0, 0, 1, 1], [], []>} : vector<64x64xbf16>, vector<64x16xbf16>, vector<64x16xf32> -> vector<64x16xf32>
    %95 = tpu.concatenate %73, %76, %79, %82, %85, %88, %91, %94 in 1 : vector<64x16xf32>, vector<64x16xf32>, vector<64x16xf32>, vector<64x16xf32>, vector<64x16xf32>, vector<64x16xf32>, vector<64x16xf32>, vector<64x16xf32> -> vector<64x128xf32>
    %96 = arith.truncf %95 : vector<64x128xf32> to vector<64x128xbf16>
    %c0_34 = arith.constant 0 : index
    %c0_35 = arith.constant 0 : index
    %c0_36 = arith.constant 0 : index
    %97 = vector.load %arg8[%c0_34, %c0_35, %c0_36] : memref<2x128x128xbf16, #tpu.memory_space<vmem>>, vector<1x128x128xbf16>
    %98 = vector.shape_cast %97 : vector<1x128x128xbf16> to vector<128x128xbf16>
    %cst_37 = arith.constant dense<0.000000e+00> : vector<64x128xf32>
    %99 = tpu.matmul %96, %98, %cst_37 {dimension_numbers = #tpu.dot_dimension_numbers<[1], [0], [0], [1], [0, 0, 1, 1], [], []>} : vector<64x128xbf16>, vector<128x128xbf16>, vector<64x128xf32> -> vector<64x128xf32>
    %c0_38 = arith.constant 0 : index
    %c0_39 = arith.constant 0 : index
    %c0_40 = arith.constant 0 : index
    %100 = vector.load %arg9[%c0_38, %c0_39, %c0_40] : memref<2x1x128xf32, #tpu.memory_space<vmem>>, vector<1x1x128xf32>
    %101 = vector.shape_cast %100 : vector<1x1x128xf32> to vector<1x128xf32>
    %102 = vector.broadcast %101 : vector<1x128xf32> to vector<64x128xf32>
    %103 = arith.addf %99, %102 : vector<64x128xf32>
    %104 = arith.addf %103, %8 : vector<64x128xf32>
    %c0_41 = arith.constant 0 : index
    %c0_42 = arith.constant 0 : index
    %c0_43 = arith.constant 0 : index
    %105 = vector.load %arg10[%c0_41, %c0_42, %c0_43] : memref<2x1x128xf32, #tpu.memory_space<vmem>>, vector<1x1x128xf32>
    %106 = vector.shape_cast %105 : vector<1x1x128xf32> to vector<1x128xf32>
    %c0_44 = arith.constant 0 : index
    %c0_45 = arith.constant 0 : index
    %c0_46 = arith.constant 0 : index
    %107 = vector.load %arg11[%c0_44, %c0_45, %c0_46] : memref<2x1x128xf32, #tpu.memory_space<vmem>>, vector<1x1x128xf32>
    %108 = vector.shape_cast %107 : vector<1x1x128xf32> to vector<1x128xf32>
    %cst_47 = arith.constant dense<0.000000e+00> : vector<64xf32>
    %109 = vector.multi_reduction <add>, %104, %cst_47 [1] : vector<64x128xf32> to vector<64xf32>
    %110 = vector.shape_cast %109 : vector<64xf32> to vector<64x1xf32>
    %cst_48 = arith.constant 1.280000e+02 : f32
    %111 = vector.broadcast %cst_48 : f32 to vector<64x1xf32>
    %112 = arith.divf %110, %111 : vector<64x1xf32>
    %113 = vector.broadcast %112 : vector<64x1xf32> to vector<64x128xf32>
    %114 = arith.subf %104, %113 : vector<64x128xf32>
    %115 = arith.mulf %114, %114 : vector<64x128xf32>
    %cst_49 = arith.constant dense<0.000000e+00> : vector<64xf32>
    %116 = vector.multi_reduction <add>, %115, %cst_49 [1] : vector<64x128xf32> to vector<64xf32>
    %117 = vector.shape_cast %116 : vector<64xf32> to vector<64x1xf32>
    %cst_50 = arith.constant 1.280000e+02 : f32
    %118 = vector.broadcast %cst_50 : f32 to vector<64x1xf32>
    %119 = arith.divf %117, %118 : vector<64x1xf32>
    %120 = vector.broadcast %112 : vector<64x1xf32> to vector<64x128xf32>
    %121 = arith.subf %104, %120 : vector<64x128xf32>
    %cst_51 = arith.constant 9.99999996E-13 : f32
    %122 = vector.broadcast %cst_51 : f32 to vector<64x1xf32>
    %123 = arith.addf %119, %122 : vector<64x1xf32>
    %124 = math.rsqrt %123 : vector<64x1xf32>
    %125 = vector.broadcast %124 : vector<64x1xf32> to vector<64x128xf32>
    %126 = arith.mulf %121, %125 : vector<64x128xf32>
    %127 = vector.broadcast %106 : vector<1x128xf32> to vector<64x128xf32>
    %128 = arith.mulf %126, %127 : vector<64x128xf32>
    %129 = vector.broadcast %108 : vector<1x128xf32> to vector<64x128xf32>
    %130 = arith.addf %128, %129 : vector<64x128xf32>
    %131 = arith.truncf %130 : vector<64x128xf32> to vector<64x128xbf16>
    %c0_52 = arith.constant 0 : index
    %c0_53 = arith.constant 0 : index
    %c0_54 = arith.constant 0 : index
    %132 = vector.load %arg12[%c0_52, %c0_53, %c0_54] : memref<2x128x512xbf16, #tpu.memory_space<vmem>>, vector<1x128x512xbf16>
    %133 = vector.shape_cast %132 : vector<1x128x512xbf16> to vector<128x512xbf16>
    %cst_55 = arith.constant dense<0.000000e+00> : vector<64x512xf32>
    %134 = tpu.matmul %131, %133, %cst_55 {dimension_numbers = #tpu.dot_dimension_numbers<[1], [0], [0], [1], [0, 0, 1, 1], [], []>} : vector<64x128xbf16>, vector<128x512xbf16>, vector<64x512xf32> -> vector<64x512xf32>
    %c0_56 = arith.constant 0 : index
    %c0_57 = arith.constant 0 : index
    %c0_58 = arith.constant 0 : index
    %135 = vector.load %arg13[%c0_56, %c0_57, %c0_58] : memref<2x1x512xf32, #tpu.memory_space<vmem>>, vector<1x1x512xf32>
    %136 = vector.shape_cast %135 : vector<1x1x512xf32> to vector<1x512xf32>
    %137 = vector.broadcast %136 : vector<1x512xf32> to vector<64x512xf32>
    %138 = arith.addf %134, %137 : vector<64x512xf32>
    %cst_59 = arith.constant 5.000000e-01 : f32
    %139 = vector.broadcast %cst_59 : f32 to vector<64x512xf32>
    %140 = arith.mulf %139, %138 : vector<64x512xf32>
    %cst_60 = arith.constant 4.471500e-02 : f32
    %141 = vector.broadcast %cst_60 : f32 to vector<64x512xf32>
    %142 = arith.mulf %141, %138 : vector<64x512xf32>
    %143 = arith.mulf %142, %138 : vector<64x512xf32>
    %144 = arith.mulf %143, %138 : vector<64x512xf32>
    %145 = arith.addf %138, %144 : vector<64x512xf32>
    %cst_61 = arith.constant 0.797884583 : f32
    %146 = vector.broadcast %cst_61 : f32 to vector<64x512xf32>
    %147 = arith.mulf %146, %145 : vector<64x512xf32>
    %148 = math.tanh %147 : vector<64x512xf32>
    %cst_62 = arith.constant 1.000000e+00 : f32
    %149 = vector.broadcast %cst_62 : f32 to vector<64x512xf32>
    %150 = arith.addf %149, %148 : vector<64x512xf32>
    %151 = arith.mulf %140, %150 : vector<64x512xf32>
    %152 = arith.truncf %151 : vector<64x512xf32> to vector<64x512xbf16>
    %c0_63 = arith.constant 0 : index
    %c0_64 = arith.constant 0 : index
    %c0_65 = arith.constant 0 : index
    %153 = vector.load %arg14[%c0_63, %c0_64, %c0_65] : memref<2x512x128xbf16, #tpu.memory_space<vmem>>, vector<1x512x128xbf16>
    %154 = vector.shape_cast %153 : vector<1x512x128xbf16> to vector<512x128xbf16>
    %cst_66 = arith.constant dense<0.000000e+00> : vector<64x128xf32>
    %155 = tpu.matmul %152, %154, %cst_66 {dimension_numbers = #tpu.dot_dimension_numbers<[1], [0], [0], [1], [0, 0, 1, 1], [], []>} : vector<64x512xbf16>, vector<512x128xbf16>, vector<64x128xf32> -> vector<64x128xf32>
    %c0_67 = arith.constant 0 : index
    %c0_68 = arith.constant 0 : index
    %c0_69 = arith.constant 0 : index
    %156 = vector.load %arg15[%c0_67, %c0_68, %c0_69] : memref<2x1x128xf32, #tpu.memory_space<vmem>>, vector<1x1x128xf32>
    %157 = vector.shape_cast %156 : vector<1x1x128xf32> to vector<1x128xf32>
    %158 = vector.broadcast %157 : vector<1x128xf32> to vector<64x128xf32>
    %159 = arith.addf %155, %158 : vector<64x128xf32>
    %160 = arith.addf %159, %130 : vector<64x128xf32>
    %c0_70 = arith.constant 0 : index
    %c0_71 = arith.constant 0 : index
    %c0_72 = arith.constant 0 : index
    %161 = vector.load %arg16[%c0_70, %c0_71, %c0_72] : memref<2x1x128xf32, #tpu.memory_space<vmem>>, vector<1x1x128xf32>
    %162 = vector.shape_cast %161 : vector<1x1x128xf32> to vector<1x128xf32>
    %c0_73 = arith.constant 0 : index
    %c0_74 = arith.constant 0 : index
    %c0_75 = arith.constant 0 : index
    %163 = vector.load %arg17[%c0_73, %c0_74, %c0_75] : memref<2x1x128xf32, #tpu.memory_space<vmem>>, vector<1x1x128xf32>
    %164 = vector.shape_cast %163 : vector<1x1x128xf32> to vector<1x128xf32>
    %cst_76 = arith.constant dense<0.000000e+00> : vector<64xf32>
    %165 = vector.multi_reduction <add>, %160, %cst_76 [1] : vector<64x128xf32> to vector<64xf32>
    %166 = vector.shape_cast %165 : vector<64xf32> to vector<64x1xf32>
    %cst_77 = arith.constant 1.280000e+02 : f32
    %167 = vector.broadcast %cst_77 : f32 to vector<64x1xf32>
    %168 = arith.divf %166, %167 : vector<64x1xf32>
    %169 = vector.broadcast %168 : vector<64x1xf32> to vector<64x128xf32>
    %170 = arith.subf %160, %169 : vector<64x128xf32>
    %171 = arith.mulf %170, %170 : vector<64x128xf32>
    %cst_78 = arith.constant dense<0.000000e+00> : vector<64xf32>
    %172 = vector.multi_reduction <add>, %171, %cst_78 [1] : vector<64x128xf32> to vector<64xf32>
    %173 = vector.shape_cast %172 : vector<64xf32> to vector<64x1xf32>
    %cst_79 = arith.constant 1.280000e+02 : f32
    %174 = vector.broadcast %cst_79 : f32 to vector<64x1xf32>
    %175 = arith.divf %173, %174 : vector<64x1xf32>
    %176 = vector.broadcast %168 : vector<64x1xf32> to vector<64x128xf32>
    %177 = arith.subf %160, %176 : vector<64x128xf32>
    %cst_80 = arith.constant 9.99999996E-13 : f32
    %178 = vector.broadcast %cst_80 : f32 to vector<64x1xf32>
    %179 = arith.addf %175, %178 : vector<64x1xf32>
    %180 = math.rsqrt %179 : vector<64x1xf32>
    %181 = vector.broadcast %180 : vector<64x1xf32> to vector<64x128xf32>
    %182 = arith.mulf %177, %181 : vector<64x128xf32>
    %183 = vector.broadcast %162 : vector<1x128xf32> to vector<64x128xf32>
    %184 = arith.mulf %182, %183 : vector<64x128xf32>
    %185 = vector.broadcast %164 : vector<1x128xf32> to vector<64x128xf32>
    %186 = arith.addf %184, %185 : vector<64x128xf32>
    %187 = arith.truncf %186 : vector<64x128xf32> to vector<64x128xbf16>
    %c1 = arith.constant 1 : index
    %c0_81 = arith.constant 0 : index
    %c0_82 = arith.constant 0 : index
    %188 = vector.load %arg6[%c1, %c0_81, %c0_82] : memref<2x128x384xbf16, #tpu.memory_space<vmem>>, vector<1x128x384xbf16>
    %189 = vector.shape_cast %188 : vector<1x128x384xbf16> to vector<128x384xbf16>
    %cst_83 = arith.constant dense<0.000000e+00> : vector<64x384xf32>
    %190 = tpu.matmul %187, %189, %cst_83 {dimension_numbers = #tpu.dot_dimension_numbers<[1], [0], [0], [1], [0, 0, 1, 1], [], []>} : vector<64x128xbf16>, vector<128x384xbf16>, vector<64x384xf32> -> vector<64x384xf32>
    %c1_84 = arith.constant 1 : index
    %c0_85 = arith.constant 0 : index
    %c0_86 = arith.constant 0 : index
    %191 = vector.load %arg7[%c1_84, %c0_85, %c0_86] : memref<2x1x384xf32, #tpu.memory_space<vmem>>, vector<1x1x384xf32>
    %192 = vector.shape_cast %191 : vector<1x1x384xf32> to vector<1x384xf32>
    %193 = vector.broadcast %192 : vector<1x384xf32> to vector<64x384xf32>
    %194 = arith.addf %190, %193 : vector<64x384xf32>
    %195 = vector.extract_strided_slice %194 {offsets = [0, 0], sizes = [64, 128], strides = [1, 1]} : vector<64x384xf32> to vector<64x128xf32>
    %cst_87 = arith.constant 2.500000e-01 : f32
    %196 = vector.broadcast %cst_87 : f32 to vector<64x128xf32>
    %197 = arith.mulf %195, %196 : vector<64x128xf32>
    %198 = arith.truncf %197 : vector<64x128xf32> to vector<64x128xbf16>
    %199 = vector.extract_strided_slice %194 {offsets = [0, 128], sizes = [64, 128], strides = [1, 1]} : vector<64x384xf32> to vector<64x128xf32>
    %200 = arith.truncf %199 : vector<64x128xf32> to vector<64x128xbf16>
    %201 = vector.extract_strided_slice %194 {offsets = [0, 256], sizes = [64, 128], strides = [1, 1]} : vector<64x384xf32> to vector<64x128xf32>
    %202 = arith.truncf %201 : vector<64x128xf32> to vector<64x128xbf16>
    %203 = vector.extract_strided_slice %198 {offsets = [0, 0], sizes = [64, 16], strides = [1, 1]} : vector<64x128xbf16> to vector<64x16xbf16>
    %204 = vector.extract_strided_slice %200 {offsets = [0, 0], sizes = [64, 16], strides = [1, 1]} : vector<64x128xbf16> to vector<64x16xbf16>
    %cst_88 = arith.constant dense<0.000000e+00> : vector<64x64xf32>
    %205 = tpu.matmul %203, %204, %cst_88 {dimension_numbers = #tpu.dot_dimension_numbers<[1], [1], [0], [0], [0, 0, 1, 0], [], []>} : vector<64x16xbf16>, vector<64x16xbf16>, vector<64x64xf32> -> vector<64x64xf32>
    %206 = arith.addf %205, %10 : vector<64x64xf32>
    %207 = vector.extract_strided_slice %198 {offsets = [0, 16], sizes = [64, 16], strides = [1, 1]} : vector<64x128xbf16> to vector<64x16xbf16>
    %208 = vector.extract_strided_slice %200 {offsets = [0, 16], sizes = [64, 16], strides = [1, 1]} : vector<64x128xbf16> to vector<64x16xbf16>
    %cst_89 = arith.constant dense<0.000000e+00> : vector<64x64xf32>
    %209 = tpu.matmul %207, %208, %cst_89 {dimension_numbers = #tpu.dot_dimension_numbers<[1], [1], [0], [0], [0, 0, 1, 0], [], []>} : vector<64x16xbf16>, vector<64x16xbf16>, vector<64x64xf32> -> vector<64x64xf32>
    %210 = arith.addf %209, %10 : vector<64x64xf32>
    %211 = vector.extract_strided_slice %198 {offsets = [0, 32], sizes = [64, 16], strides = [1, 1]} : vector<64x128xbf16> to vector<64x16xbf16>
    %212 = vector.extract_strided_slice %200 {offsets = [0, 32], sizes = [64, 16], strides = [1, 1]} : vector<64x128xbf16> to vector<64x16xbf16>
    %cst_90 = arith.constant dense<0.000000e+00> : vector<64x64xf32>
    %213 = tpu.matmul %211, %212, %cst_90 {dimension_numbers = #tpu.dot_dimension_numbers<[1], [1], [0], [0], [0, 0, 1, 0], [], []>} : vector<64x16xbf16>, vector<64x16xbf16>, vector<64x64xf32> -> vector<64x64xf32>
    %214 = arith.addf %213, %10 : vector<64x64xf32>
    %215 = vector.extract_strided_slice %198 {offsets = [0, 48], sizes = [64, 16], strides = [1, 1]} : vector<64x128xbf16> to vector<64x16xbf16>
    %216 = vector.extract_strided_slice %200 {offsets = [0, 48], sizes = [64, 16], strides = [1, 1]} : vector<64x128xbf16> to vector<64x16xbf16>
    %cst_91 = arith.constant dense<0.000000e+00> : vector<64x64xf32>
    %217 = tpu.matmul %215, %216, %cst_91 {dimension_numbers = #tpu.dot_dimension_numbers<[1], [1], [0], [0], [0, 0, 1, 0], [], []>} : vector<64x16xbf16>, vector<64x16xbf16>, vector<64x64xf32> -> vector<64x64xf32>
    %218 = arith.addf %217, %10 : vector<64x64xf32>
    %219 = vector.extract_strided_slice %198 {offsets = [0, 64], sizes = [64, 16], strides = [1, 1]} : vector<64x128xbf16> to vector<64x16xbf16>
    %220 = vector.extract_strided_slice %200 {offsets = [0, 64], sizes = [64, 16], strides = [1, 1]} : vector<64x128xbf16> to vector<64x16xbf16>
    %cst_92 = arith.constant dense<0.000000e+00> : vector<64x64xf32>
    %221 = tpu.matmul %219, %220, %cst_92 {dimension_numbers = #tpu.dot_dimension_numbers<[1], [1], [0], [0], [0, 0, 1, 0], [], []>} : vector<64x16xbf16>, vector<64x16xbf16>, vector<64x64xf32> -> vector<64x64xf32>
    %222 = arith.addf %221, %10 : vector<64x64xf32>
    %223 = vector.extract_strided_slice %198 {offsets = [0, 80], sizes = [64, 16], strides = [1, 1]} : vector<64x128xbf16> to vector<64x16xbf16>
    %224 = vector.extract_strided_slice %200 {offsets = [0, 80], sizes = [64, 16], strides = [1, 1]} : vector<64x128xbf16> to vector<64x16xbf16>
    %cst_93 = arith.constant dense<0.000000e+00> : vector<64x64xf32>
    %225 = tpu.matmul %223, %224, %cst_93 {dimension_numbers = #tpu.dot_dimension_numbers<[1], [1], [0], [0], [0, 0, 1, 0], [], []>} : vector<64x16xbf16>, vector<64x16xbf16>, vector<64x64xf32> -> vector<64x64xf32>
    %226 = arith.addf %225, %10 : vector<64x64xf32>
    %227 = vector.extract_strided_slice %198 {offsets = [0, 96], sizes = [64, 16], strides = [1, 1]} : vector<64x128xbf16> to vector<64x16xbf16>
    %228 = vector.extract_strided_slice %200 {offsets = [0, 96], sizes = [64, 16], strides = [1, 1]} : vector<64x128xbf16> to vector<64x16xbf16>
    %cst_94 = arith.constant dense<0.000000e+00> : vector<64x64xf32>
    %229 = tpu.matmul %227, %228, %cst_94 {dimension_numbers = #tpu.dot_dimension_numbers<[1], [1], [0], [0], [0, 0, 1, 0], [], []>} : vector<64x16xbf16>, vector<64x16xbf16>, vector<64x64xf32> -> vector<64x64xf32>
    %230 = arith.addf %229, %10 : vector<64x64xf32>
    %231 = vector.extract_strided_slice %198 {offsets = [0, 112], sizes = [64, 16], strides = [1, 1]} : vector<64x128xbf16> to vector<64x16xbf16>
    %232 = vector.extract_strided_slice %200 {offsets = [0, 112], sizes = [64, 16], strides = [1, 1]} : vector<64x128xbf16> to vector<64x16xbf16>
    %cst_95 = arith.constant dense<0.000000e+00> : vector<64x64xf32>
    %233 = tpu.matmul %231, %232, %cst_95 {dimension_numbers = #tpu.dot_dimension_numbers<[1], [1], [0], [0], [0, 0, 1, 0], [], []>} : vector<64x16xbf16>, vector<64x16xbf16>, vector<64x64xf32> -> vector<64x64xf32>
    %234 = arith.addf %233, %10 : vector<64x64xf32>
    %235 = tpu.concatenate %206, %210, %214, %218, %222, %226, %230, %234 in 0 : vector<64x64xf32>, vector<64x64xf32>, vector<64x64xf32>, vector<64x64xf32>, vector<64x64xf32>, vector<64x64xf32>, vector<64x64xf32>, vector<64x64xf32> -> vector<512x64xf32>
    %cst_96 = arith.constant dense<0xFF800000> : vector<512xf32>
    %236 = vector.multi_reduction <maximumf>, %235, %cst_96 [1] : vector<512x64xf32> to vector<512xf32>
    %237 = vector.shape_cast %236 : vector<512xf32> to vector<512x1xf32>
    %238 = vector.broadcast %237 : vector<512x1xf32> to vector<512x64xf32>
    %239 = arith.subf %235, %238 : vector<512x64xf32>
    %240 = math.exp %239 : vector<512x64xf32>
    %cst_97 = arith.constant dense<0.000000e+00> : vector<512xf32>
    %241 = vector.multi_reduction <add>, %240, %cst_97 [1] : vector<512x64xf32> to vector<512xf32>
    %242 = vector.shape_cast %241 : vector<512xf32> to vector<512x1xf32>
    %243 = tpu.reciprocal %242 {approx = true} : vector<512x1xf32> -> vector<512x1xf32>
    %244 = vector.broadcast %243 : vector<512x1xf32> to vector<512x64xf32>
    %245 = arith.mulf %240, %244 : vector<512x64xf32>
    %246 = arith.truncf %245 : vector<512x64xf32> to vector<512x64xbf16>
    %247 = vector.extract_strided_slice %246 {offsets = [0, 0], sizes = [64, 64], strides = [1, 1]} : vector<512x64xbf16> to vector<64x64xbf16>
    %248 = vector.extract_strided_slice %202 {offsets = [0, 0], sizes = [64, 16], strides = [1, 1]} : vector<64x128xbf16> to vector<64x16xbf16>
    %cst_98 = arith.constant dense<0.000000e+00> : vector<64x16xf32>
    %249 = tpu.matmul %247, %248, %cst_98 {dimension_numbers = #tpu.dot_dimension_numbers<[1], [0], [0], [1], [0, 0, 1, 1], [], []>} : vector<64x64xbf16>, vector<64x16xbf16>, vector<64x16xf32> -> vector<64x16xf32>
    %250 = vector.extract_strided_slice %246 {offsets = [64, 0], sizes = [64, 64], strides = [1, 1]} : vector<512x64xbf16> to vector<64x64xbf16>
    %251 = vector.extract_strided_slice %202 {offsets = [0, 16], sizes = [64, 16], strides = [1, 1]} : vector<64x128xbf16> to vector<64x16xbf16>
    %cst_99 = arith.constant dense<0.000000e+00> : vector<64x16xf32>
    %252 = tpu.matmul %250, %251, %cst_99 {dimension_numbers = #tpu.dot_dimension_numbers<[1], [0], [0], [1], [0, 0, 1, 1], [], []>} : vector<64x64xbf16>, vector<64x16xbf16>, vector<64x16xf32> -> vector<64x16xf32>
    %253 = vector.extract_strided_slice %246 {offsets = [128, 0], sizes = [64, 64], strides = [1, 1]} : vector<512x64xbf16> to vector<64x64xbf16>
    %254 = vector.extract_strided_slice %202 {offsets = [0, 32], sizes = [64, 16], strides = [1, 1]} : vector<64x128xbf16> to vector<64x16xbf16>
    %cst_100 = arith.constant dense<0.000000e+00> : vector<64x16xf32>
    %255 = tpu.matmul %253, %254, %cst_100 {dimension_numbers = #tpu.dot_dimension_numbers<[1], [0], [0], [1], [0, 0, 1, 1], [], []>} : vector<64x64xbf16>, vector<64x16xbf16>, vector<64x16xf32> -> vector<64x16xf32>
    %256 = vector.extract_strided_slice %246 {offsets = [192, 0], sizes = [64, 64], strides = [1, 1]} : vector<512x64xbf16> to vector<64x64xbf16>
    %257 = vector.extract_strided_slice %202 {offsets = [0, 48], sizes = [64, 16], strides = [1, 1]} : vector<64x128xbf16> to vector<64x16xbf16>
    %cst_101 = arith.constant dense<0.000000e+00> : vector<64x16xf32>
    %258 = tpu.matmul %256, %257, %cst_101 {dimension_numbers = #tpu.dot_dimension_numbers<[1], [0], [0], [1], [0, 0, 1, 1], [], []>} : vector<64x64xbf16>, vector<64x16xbf16>, vector<64x16xf32> -> vector<64x16xf32>
    %259 = vector.extract_strided_slice %246 {offsets = [256, 0], sizes = [64, 64], strides = [1, 1]} : vector<512x64xbf16> to vector<64x64xbf16>
    %260 = vector.extract_strided_slice %202 {offsets = [0, 64], sizes = [64, 16], strides = [1, 1]} : vector<64x128xbf16> to vector<64x16xbf16>
    %cst_102 = arith.constant dense<0.000000e+00> : vector<64x16xf32>
    %261 = tpu.matmul %259, %260, %cst_102 {dimension_numbers = #tpu.dot_dimension_numbers<[1], [0], [0], [1], [0, 0, 1, 1], [], []>} : vector<64x64xbf16>, vector<64x16xbf16>, vector<64x16xf32> -> vector<64x16xf32>
    %262 = vector.extract_strided_slice %246 {offsets = [320, 0], sizes = [64, 64], strides = [1, 1]} : vector<512x64xbf16> to vector<64x64xbf16>
    %263 = vector.extract_strided_slice %202 {offsets = [0, 80], sizes = [64, 16], strides = [1, 1]} : vector<64x128xbf16> to vector<64x16xbf16>
    %cst_103 = arith.constant dense<0.000000e+00> : vector<64x16xf32>
    %264 = tpu.matmul %262, %263, %cst_103 {dimension_numbers = #tpu.dot_dimension_numbers<[1], [0], [0], [1], [0, 0, 1, 1], [], []>} : vector<64x64xbf16>, vector<64x16xbf16>, vector<64x16xf32> -> vector<64x16xf32>
    %265 = vector.extract_strided_slice %246 {offsets = [384, 0], sizes = [64, 64], strides = [1, 1]} : vector<512x64xbf16> to vector<64x64xbf16>
    %266 = vector.extract_strided_slice %202 {offsets = [0, 96], sizes = [64, 16], strides = [1, 1]} : vector<64x128xbf16> to vector<64x16xbf16>
    %cst_104 = arith.constant dense<0.000000e+00> : vector<64x16xf32>
    %267 = tpu.matmul %265, %266, %cst_104 {dimension_numbers = #tpu.dot_dimension_numbers<[1], [0], [0], [1], [0, 0, 1, 1], [], []>} : vector<64x64xbf16>, vector<64x16xbf16>, vector<64x16xf32> -> vector<64x16xf32>
    %268 = vector.extract_strided_slice %246 {offsets = [448, 0], sizes = [64, 64], strides = [1, 1]} : vector<512x64xbf16> to vector<64x64xbf16>
    %269 = vector.extract_strided_slice %202 {offsets = [0, 112], sizes = [64, 16], strides = [1, 1]} : vector<64x128xbf16> to vector<64x16xbf16>
    %cst_105 = arith.constant dense<0.000000e+00> : vector<64x16xf32>
    %270 = tpu.matmul %268, %269, %cst_105 {dimension_numbers = #tpu.dot_dimension_numbers<[1], [0], [0], [1], [0, 0, 1, 1], [], []>} : vector<64x64xbf16>, vector<64x16xbf16>, vector<64x16xf32> -> vector<64x16xf32>
    %271 = tpu.concatenate %249, %252, %255, %258, %261, %264, %267, %270 in 1 : vector<64x16xf32>, vector<64x16xf32>, vector<64x16xf32>, vector<64x16xf32>, vector<64x16xf32>, vector<64x16xf32>, vector<64x16xf32>, vector<64x16xf32> -> vector<64x128xf32>
    %272 = arith.truncf %271 : vector<64x128xf32> to vector<64x128xbf16>
    %c1_106 = arith.constant 1 : index
    %c0_107 = arith.constant 0 : index
    %c0_108 = arith.constant 0 : index
    %273 = vector.load %arg8[%c1_106, %c0_107, %c0_108] : memref<2x128x128xbf16, #tpu.memory_space<vmem>>, vector<1x128x128xbf16>
    %274 = vector.shape_cast %273 : vector<1x128x128xbf16> to vector<128x128xbf16>
    %cst_109 = arith.constant dense<0.000000e+00> : vector<64x128xf32>
    %275 = tpu.matmul %272, %274, %cst_109 {dimension_numbers = #tpu.dot_dimension_numbers<[1], [0], [0], [1], [0, 0, 1, 1], [], []>} : vector<64x128xbf16>, vector<128x128xbf16>, vector<64x128xf32> -> vector<64x128xf32>
    %c1_110 = arith.constant 1 : index
    %c0_111 = arith.constant 0 : index
    %c0_112 = arith.constant 0 : index
    %276 = vector.load %arg9[%c1_110, %c0_111, %c0_112] : memref<2x1x128xf32, #tpu.memory_space<vmem>>, vector<1x1x128xf32>
    %277 = vector.shape_cast %276 : vector<1x1x128xf32> to vector<1x128xf32>
    %278 = vector.broadcast %277 : vector<1x128xf32> to vector<64x128xf32>
    %279 = arith.addf %275, %278 : vector<64x128xf32>
    %280 = arith.addf %279, %186 : vector<64x128xf32>
    %c1_113 = arith.constant 1 : index
    %c0_114 = arith.constant 0 : index
    %c0_115 = arith.constant 0 : index
    %281 = vector.load %arg10[%c1_113, %c0_114, %c0_115] : memref<2x1x128xf32, #tpu.memory_space<vmem>>, vector<1x1x128xf32>
    %282 = vector.shape_cast %281 : vector<1x1x128xf32> to vector<1x128xf32>
    %c1_116 = arith.constant 1 : index
    %c0_117 = arith.constant 0 : index
    %c0_118 = arith.constant 0 : index
    %283 = vector.load %arg11[%c1_116, %c0_117, %c0_118] : memref<2x1x128xf32, #tpu.memory_space<vmem>>, vector<1x1x128xf32>
    %284 = vector.shape_cast %283 : vector<1x1x128xf32> to vector<1x128xf32>
    %cst_119 = arith.constant dense<0.000000e+00> : vector<64xf32>
    %285 = vector.multi_reduction <add>, %280, %cst_119 [1] : vector<64x128xf32> to vector<64xf32>
    %286 = vector.shape_cast %285 : vector<64xf32> to vector<64x1xf32>
    %cst_120 = arith.constant 1.280000e+02 : f32
    %287 = vector.broadcast %cst_120 : f32 to vector<64x1xf32>
    %288 = arith.divf %286, %287 : vector<64x1xf32>
    %289 = vector.broadcast %288 : vector<64x1xf32> to vector<64x128xf32>
    %290 = arith.subf %280, %289 : vector<64x128xf32>
    %291 = arith.mulf %290, %290 : vector<64x128xf32>
    %cst_121 = arith.constant dense<0.000000e+00> : vector<64xf32>
    %292 = vector.multi_reduction <add>, %291, %cst_121 [1] : vector<64x128xf32> to vector<64xf32>
    %293 = vector.shape_cast %292 : vector<64xf32> to vector<64x1xf32>
    %cst_122 = arith.constant 1.280000e+02 : f32
    %294 = vector.broadcast %cst_122 : f32 to vector<64x1xf32>
    %295 = arith.divf %293, %294 : vector<64x1xf32>
    %296 = vector.broadcast %288 : vector<64x1xf32> to vector<64x128xf32>
    %297 = arith.subf %280, %296 : vector<64x128xf32>
    %cst_123 = arith.constant 9.99999996E-13 : f32
    %298 = vector.broadcast %cst_123 : f32 to vector<64x1xf32>
    %299 = arith.addf %295, %298 : vector<64x1xf32>
    %300 = math.rsqrt %299 : vector<64x1xf32>
    %301 = vector.broadcast %300 : vector<64x1xf32> to vector<64x128xf32>
    %302 = arith.mulf %297, %301 : vector<64x128xf32>
    %303 = vector.broadcast %282 : vector<1x128xf32> to vector<64x128xf32>
    %304 = arith.mulf %302, %303 : vector<64x128xf32>
    %305 = vector.broadcast %284 : vector<1x128xf32> to vector<64x128xf32>
    %306 = arith.addf %304, %305 : vector<64x128xf32>
    %307 = arith.truncf %306 : vector<64x128xf32> to vector<64x128xbf16>
    %c1_124 = arith.constant 1 : index
    %c0_125 = arith.constant 0 : index
    %c0_126 = arith.constant 0 : index
    %308 = vector.load %arg12[%c1_124, %c0_125, %c0_126] : memref<2x128x512xbf16, #tpu.memory_space<vmem>>, vector<1x128x512xbf16>
    %309 = vector.shape_cast %308 : vector<1x128x512xbf16> to vector<128x512xbf16>
    %cst_127 = arith.constant dense<0.000000e+00> : vector<64x512xf32>
    %310 = tpu.matmul %307, %309, %cst_127 {dimension_numbers = #tpu.dot_dimension_numbers<[1], [0], [0], [1], [0, 0, 1, 1], [], []>} : vector<64x128xbf16>, vector<128x512xbf16>, vector<64x512xf32> -> vector<64x512xf32>
    %c1_128 = arith.constant 1 : index
    %c0_129 = arith.constant 0 : index
    %c0_130 = arith.constant 0 : index
    %311 = vector.load %arg13[%c1_128, %c0_129, %c0_130] : memref<2x1x512xf32, #tpu.memory_space<vmem>>, vector<1x1x512xf32>
    %312 = vector.shape_cast %311 : vector<1x1x512xf32> to vector<1x512xf32>
    %313 = vector.broadcast %312 : vector<1x512xf32> to vector<64x512xf32>
    %314 = arith.addf %310, %313 : vector<64x512xf32>
    %cst_131 = arith.constant 5.000000e-01 : f32
    %315 = vector.broadcast %cst_131 : f32 to vector<64x512xf32>
    %316 = arith.mulf %315, %314 : vector<64x512xf32>
    %cst_132 = arith.constant 4.471500e-02 : f32
    %317 = vector.broadcast %cst_132 : f32 to vector<64x512xf32>
    %318 = arith.mulf %317, %314 : vector<64x512xf32>
    %319 = arith.mulf %318, %314 : vector<64x512xf32>
    %320 = arith.mulf %319, %314 : vector<64x512xf32>
    %321 = arith.addf %314, %320 : vector<64x512xf32>
    %cst_133 = arith.constant 0.797884583 : f32
    %322 = vector.broadcast %cst_133 : f32 to vector<64x512xf32>
    %323 = arith.mulf %322, %321 : vector<64x512xf32>
    %324 = math.tanh %323 : vector<64x512xf32>
    %cst_134 = arith.constant 1.000000e+00 : f32
    %325 = vector.broadcast %cst_134 : f32 to vector<64x512xf32>
    %326 = arith.addf %325, %324 : vector<64x512xf32>
    %327 = arith.mulf %316, %326 : vector<64x512xf32>
    %328 = arith.truncf %327 : vector<64x512xf32> to vector<64x512xbf16>
    %c1_135 = arith.constant 1 : index
    %c0_136 = arith.constant 0 : index
    %c0_137 = arith.constant 0 : index
    %329 = vector.load %arg14[%c1_135, %c0_136, %c0_137] : memref<2x512x128xbf16, #tpu.memory_space<vmem>>, vector<1x512x128xbf16>
    %330 = vector.shape_cast %329 : vector<1x512x128xbf16> to vector<512x128xbf16>
    %cst_138 = arith.constant dense<0.000000e+00> : vector<64x128xf32>
    %331 = tpu.matmul %328, %330, %cst_138 {dimension_numbers = #tpu.dot_dimension_numbers<[1], [0], [0], [1], [0, 0, 1, 1], [], []>} : vector<64x512xbf16>, vector<512x128xbf16>, vector<64x128xf32> -> vector<64x128xf32>
    %c1_139 = arith.constant 1 : index
    %c0_140 = arith.constant 0 : index
    %c0_141 = arith.constant 0 : index
    %332 = vector.load %arg15[%c1_139, %c0_140, %c0_141] : memref<2x1x128xf32, #tpu.memory_space<vmem>>, vector<1x1x128xf32>
    %333 = vector.shape_cast %332 : vector<1x1x128xf32> to vector<1x128xf32>
    %334 = vector.broadcast %333 : vector<1x128xf32> to vector<64x128xf32>
    %335 = arith.addf %331, %334 : vector<64x128xf32>
    %336 = arith.addf %335, %306 : vector<64x128xf32>
    %c1_142 = arith.constant 1 : index
    %c0_143 = arith.constant 0 : index
    %c0_144 = arith.constant 0 : index
    %337 = vector.load %arg16[%c1_142, %c0_143, %c0_144] : memref<2x1x128xf32, #tpu.memory_space<vmem>>, vector<1x1x128xf32>
    %338 = vector.shape_cast %337 : vector<1x1x128xf32> to vector<1x128xf32>
    %c1_145 = arith.constant 1 : index
    %c0_146 = arith.constant 0 : index
    %c0_147 = arith.constant 0 : index
    %339 = vector.load %arg17[%c1_145, %c0_146, %c0_147] : memref<2x1x128xf32, #tpu.memory_space<vmem>>, vector<1x1x128xf32>
    %340 = vector.shape_cast %339 : vector<1x1x128xf32> to vector<1x128xf32>
    %cst_148 = arith.constant dense<0.000000e+00> : vector<64xf32>
    %341 = vector.multi_reduction <add>, %336, %cst_148 [1] : vector<64x128xf32> to vector<64xf32>
    %342 = vector.shape_cast %341 : vector<64xf32> to vector<64x1xf32>
    %cst_149 = arith.constant 1.280000e+02 : f32
    %343 = vector.broadcast %cst_149 : f32 to vector<64x1xf32>
    %344 = arith.divf %342, %343 : vector<64x1xf32>
    %345 = vector.broadcast %344 : vector<64x1xf32> to vector<64x128xf32>
    %346 = arith.subf %336, %345 : vector<64x128xf32>
    %347 = arith.mulf %346, %346 : vector<64x128xf32>
    %cst_150 = arith.constant dense<0.000000e+00> : vector<64xf32>
    %348 = vector.multi_reduction <add>, %347, %cst_150 [1] : vector<64x128xf32> to vector<64xf32>
    %349 = vector.shape_cast %348 : vector<64xf32> to vector<64x1xf32>
    %cst_151 = arith.constant 1.280000e+02 : f32
    %350 = vector.broadcast %cst_151 : f32 to vector<64x1xf32>
    %351 = arith.divf %349, %350 : vector<64x1xf32>
    %352 = vector.broadcast %344 : vector<64x1xf32> to vector<64x128xf32>
    %353 = arith.subf %336, %352 : vector<64x128xf32>
    %cst_152 = arith.constant 9.99999996E-13 : f32
    %354 = vector.broadcast %cst_152 : f32 to vector<64x1xf32>
    %355 = arith.addf %351, %354 : vector<64x1xf32>
    %356 = math.rsqrt %355 : vector<64x1xf32>
    %357 = vector.broadcast %356 : vector<64x1xf32> to vector<64x128xf32>
    %358 = arith.mulf %353, %357 : vector<64x128xf32>
    %359 = vector.broadcast %338 : vector<1x128xf32> to vector<64x128xf32>
    %360 = arith.mulf %358, %359 : vector<64x128xf32>
    %361 = vector.broadcast %340 : vector<1x128xf32> to vector<64x128xf32>
    %362 = arith.addf %360, %361 : vector<64x128xf32>
    %363 = arith.addf %362, %9 : vector<64x128xf32>
    %c0_153 = arith.constant 0 : index
    %c0_154 = arith.constant 0 : index
    %364 = vector.load %arg18[%c0_153, %c0_154] : memref<1x128xf32, #tpu.memory_space<vmem>>, vector<1x128xf32>
    %365 = vector.broadcast %364 : vector<1x128xf32> to vector<64x128xf32>
    %366 = arith.mulf %363, %365 : vector<64x128xf32>
    %cst_155 = arith.constant dense<0.000000e+00> : vector<64xf32>
    %367 = vector.multi_reduction <add>, %366, %cst_155 [1] : vector<64x128xf32> to vector<64xf32>
    %368 = vector.shape_cast %367 : vector<64xf32> to vector<64x1xf32>
    %c0_156 = arith.constant 0 : index
    %c0_157 = arith.constant 0 : index
    %369 = vector.load %arg19[%c0_156, %c0_157] : memref<1x1xf32, #tpu.memory_space<vmem>>, vector<1x1xf32>
    %370 = vector.broadcast %369 : vector<1x1xf32> to vector<64x1xf32>
    %371 = arith.addf %368, %370 : vector<64x1xf32>
    %372 = vector.shape_cast %371 : vector<64x1xf32> to vector<4x16x1xf32>
    %c0_158 = arith.constant 0 : index
    %c0_159 = arith.constant 0 : index
    %c0_160 = arith.constant 0 : index
    %373 = vector.load %arg20[%c0_158, %c0_159, %c0_160] : memref<4x16x1xf32, #tpu.memory_space<vmem>>, vector<4x16x1xf32>
    tpu.vector_store %arg20[%c0_158, %c0_159, %c0_160], %372 {strides = array<i32>} : memref<4x16x1xf32, #tpu.memory_space<vmem>>, vector<4x16x1xf32>,
    %374 = tpu.iota {dimensions = array<i32: 1>} : vector<4x16x1xi32>
    %c10_i32 = arith.constant 10 : i32
    %375 = vector.broadcast %c10_i32 : i32 to vector<4x16x1xi32>
    %376 = arith.cmpi slt, %374, %375 : vector<4x16x1xi32>
    %cst_161 = arith.constant -1.000000e+30 : f32
    %377 = vector.broadcast %cst_161 : f32 to vector<4x16x1xf32>
    %378 = arith.select %376, %372, %377 : vector<4x16x1xi1>, vector<4x16x1xf32>
    %cst_162 = arith.constant dense<0xFF800000> : vector<4x1xf32>
    %379 = vector.multi_reduction <maximumf>, %378, %cst_162 [1] : vector<4x16x1xf32> to vector<4x1xf32>
    %380 = vector.shape_cast %379 : vector<4x1xf32> to vector<4x1x1xf32>
    %381 = vector.broadcast %380 : vector<4x1x1xf32> to vector<4x16x1xf32>
    %382 = arith.subf %372, %381 : vector<4x16x1xf32>
    %383 = math.exp %382 : vector<4x16x1xf32>
    %cst_163 = arith.constant 0.000000e+00 : f32
    %384 = vector.broadcast %cst_163 : f32 to vector<4x16x1xf32>
    %385 = arith.select %376, %383, %384 : vector<4x16x1xi1>, vector<4x16x1xf32>
    %cst_164 = arith.constant dense<0.000000e+00> : vector<4x1xf32>
    %386 = vector.multi_reduction <add>, %385, %cst_164 [1] : vector<4x16x1xf32> to vector<4x1xf32>
    %387 = vector.shape_cast %386 : vector<4x1xf32> to vector<4x1x1xf32>
    %388 = math.log %387 : vector<4x1x1xf32>
    %389 = arith.addf %388, %380 : vector<4x1x1xf32>
    %c0_165 = arith.constant 0 : index
    %c0_166 = arith.constant 0 : index
    %c0_167 = arith.constant 0 : index
    %390 = vector.load %arg5[%c0_165, %c0_166, %c0_167] : memref<4x16x1xf32, #tpu.memory_space<vmem>>, vector<4x16x1xf32>
    %391 = arith.mulf %372, %390 : vector<4x16x1xf32>
    %cst_168 = arith.constant dense<0.000000e+00> : vector<4x1xf32>
    %392 = vector.multi_reduction <add>, %391, %cst_168 [1] : vector<4x16x1xf32> to vector<4x1xf32>
    %393 = vector.shape_cast %392 : vector<4x1xf32> to vector<4x1x1xf32>
    %394 = arith.subf %389, %393 : vector<4x1x1xf32>
    %c0_169 = arith.constant 0 : index
    %c0_170 = arith.constant 0 : index
    %c0_171 = arith.constant 0 : index
    %395 = vector.load %arg21[%c0_169, %c0_170, %c0_171] : memref<4x1x1xf32, #tpu.memory_space<vmem>>, vector<4x1x1xf32>
    tpu.vector_store %arg21[%c0_169, %c0_170, %c0_171], %394 {strides = array<i32>} : memref<4x1x1xf32, #tpu.memory_space<vmem>>, vector<4x1x1xf32>,
    return
  }
  func.func @transform_0(%arg0: i32) -> (i32, i32, i32) {
    %c0_i32 = arith.constant 0 : i32
    %c0_i32_0 = arith.constant 0 : i32
    %c0_i32_1 = arith.constant 0 : i32
    %c0_i32_2 = arith.constant 0 : i32
    return %c0_i32, %c0_i32_0, %c0_i32_1 : i32, i32, i32
  }
  func.func @transform_1(%arg0: i32) -> (i32, i32) {
    %c0_i32 = arith.constant 0 : i32
    %c0_i32_0 = arith.constant 0 : i32
    %c0_i32_1 = arith.constant 0 : i32
    return %c0_i32, %c0_i32_0 : i32, i32
  }
  func.func @transform_2(%arg0: i32) -> (i32, i32, i32) {
    %c0_i32 = arith.constant 0 : i32
    %c0_i32_0 = arith.constant 0 : i32
    %c0_i32_1 = arith.constant 0 : i32
    %c0_i32_2 = arith.constant 0 : i32
    return %c0_i32, %c0_i32_0, %c0_i32_1 : i32, i32, i32
  }
  func.func @transform_3(%arg0: i32) -> (i32, i32) {
    %c0_i32 = arith.constant 0 : i32
    %c0_i32_0 = arith.constant 0 : i32
    %c0_i32_1 = arith.constant 0 : i32
    return %c0_i32, %c0_i32_0 : i32, i32
  }
  func.func @transform_4(%arg0: i32) -> (i32, i32, i32) {
    %c0_i32 = arith.constant 0 : i32
    %c0_i32_0 = arith.constant 0 : i32
    %c0_i32_1 = arith.constant 0 : i32
    %c0_i32_2 = arith.constant 0 : i32
    return %c0_i32, %c0_i32_0, %c0_i32_1 : i32, i32, i32
  }
  func.func @transform_5(%arg0: i32) -> (i32, i32, i32) {
    %c0_i32 = arith.constant 0 : i32
    %c0_i32_0 = arith.constant 0 : i32
    %c0_i32_1 = arith.constant 0 : i32
    %c0_i32_2 = arith.constant 0 : i32
    return %c0_i32, %c0_i32_0, %c0_i32_1 : i32, i32, i32
  }
  func.func @transform_6(%arg0: i32) -> (i32, i32, i32) {
    %c0_i32 = arith.constant 0 : i32
    %c0_i32_0 = arith.constant 0 : i32
    %c0_i32_1 = arith.constant 0 : i32
    %c0_i32_2 = arith.constant 0 : i32
    return %c0_i32, %c0_i32_0, %c0_i32_1 : i32, i32, i32
  }
  func.func @transform_7(%arg0: i32) -> (i32, i32, i32) {
    %c0_i32 = arith.constant 0 : i32
    %c0_i32_0 = arith.constant 0 : i32
    %c0_i32_1 = arith.constant 0 : i32
    %c0_i32_2 = arith.constant 0 : i32
    return %c0_i32, %c0_i32_0, %c0_i32_1 : i32, i32, i32
  }
  func.func @transform_8(%arg0: i32) -> (i32, i32, i32) {
    %c0_i32 = arith.constant 0 : i32
    %c0_i32_0 = arith.constant 0 : i32
    %c0_i32_1 = arith.constant 0 : i32
    %c0_i32_2 = arith.constant 0 : i32
    return %c0_i32, %c0_i32_0, %c0_i32_1 : i32, i32, i32
  }
  func.func @transform_9(%arg0: i32) -> (i32, i32, i32) {
    %c0_i32 = arith.constant 0 : i32
    %c0_i32_0 = arith.constant 0 : i32
    %c0_i32_1 = arith.constant 0 : i32
    %c0_i32_2 = arith.constant 0 : i32
    return %c0_i32, %c0_i32_0, %c0_i32_1 : i32, i32, i32
  }
  func.func @transform_10(%arg0: i32) -> (i32, i32, i32) {
    %c0_i32 = arith.constant 0 : i32
    %c0_i32_0 = arith.constant 0 : i32
    %c0_i32_1 = arith.constant 0 : i32
    %c0_i32_2 = arith.constant 0 : i32
    return %c0_i32, %c0_i32_0, %c0_i32_1 : i32, i32, i32
  }
  func.func @transform_11(%arg0: i32) -> (i32, i32, i32) {
    %c0_i32 = arith.constant 0 : i32
    %c0_i32_0 = arith.constant 0 : i32
    %c0_i32_1 = arith.constant 0 : i32
    %c0_i32_2 = arith.constant 0 : i32
    return %c0_i32, %c0_i32_0, %c0_i32_1 : i32, i32, i32
  }
  func.func @transform_12(%arg0: i32) -> (i32, i32, i32) {
    %c0_i32 = arith.constant 0 : i32
    %c0_i32_0 = arith.constant 0 : i32
    %c0_i32_1 = arith.constant 0 : i32
    %c0_i32_2 = arith.constant 0 : i32
    return %c0_i32, %c0_i32_0, %c0_i32_1 : i32, i32, i32
  }
  func.func @transform_13(%arg0: i32) -> (i32, i32, i32) {
    %c0_i32 = arith.constant 0 : i32
    %c0_i32_0 = arith.constant 0 : i32
    %c0_i32_1 = arith.constant 0 : i32
    %c0_i32_2 = arith.constant 0 : i32
    return %c0_i32, %c0_i32_0, %c0_i32_1 : i32, i32, i32
  }
  func.func @transform_14(%arg0: i32) -> (i32, i32, i32) {
    %c0_i32 = arith.constant 0 : i32
    %c0_i32_0 = arith.constant 0 : i32
    %c0_i32_1 = arith.constant 0 : i32
    %c0_i32_2 = arith.constant 0 : i32
    return %c0_i32, %c0_i32_0, %c0_i32_1 : i32, i32, i32
  }
  func.func @transform_15(%arg0: i32) -> (i32, i32, i32) {
    %c0_i32 = arith.constant 0 : i32
    %c0_i32_0 = arith.constant 0 : i32
    %c0_i32_1 = arith.constant 0 : i32
    %c0_i32_2 = arith.constant 0 : i32
    return %c0_i32, %c0_i32_0, %c0_i32_1 : i32, i32, i32
  }
  func.func @transform_16(%arg0: i32) -> (i32, i32, i32) {
    %c0_i32 = arith.constant 0 : i32
    %c0_i32_0 = arith.constant 0 : i32
    %c0_i32_1 = arith.constant 0 : i32
    %c0_i32_2 = arith.constant 0 : i32
    return %c0_i32, %c0_i32_0, %c0_i32_1 : i32, i32, i32
  }
  func.func @transform_17(%arg0: i32) -> (i32, i32) {
    %c0_i32 = arith.constant 0 : i32
    %c0_i32_0 = arith.constant 0 : i32
    %c0_i32_1 = arith.constant 0 : i32
    return %c0_i32, %c0_i32_0 : i32, i32
  }
  func.func @transform_18(%arg0: i32) -> (i32, i32) {
    %c0_i32 = arith.constant 0 : i32
    %c0_i32_0 = arith.constant 0 : i32
    %c0_i32_1 = arith.constant 0 : i32
    return %c0_i32, %c0_i32_0 : i32, i32
  }
  func.func @transform_19(%arg0: i32) -> (i32, i32, i32) {
    %c0_i32 = arith.constant 0 : i32
    %c0_i32_0 = arith.constant 0 : i32
    %c0_i32_1 = arith.constant 0 : i32
    %c0_i32_2 = arith.constant 0 : i32
    return %c0_i32, %c0_i32_0, %c0_i32_1 : i32, i32, i32
  }
  func.func @transform_20(%arg0: i32) -> (i32, i32, i32) {
    %c0_i32 = arith.constant 0 : i32
    %c0_i32_0 = arith.constant 0 : i32
    %c0_i32_1 = arith.constant 0 : i32
    %c0_i32_2 = arith.constant 0 : i32
    return %c0_i32, %c0_i32_0, %c0_i32_1 : i32, i32, i32
  }
}

</mosaic_0001>

<llo_original>
// kernel: contextual_clip_forward.1
$region0: #{contextual_clip_forward.1}
  #allocation0 [shape = 'u32[]', space=smem, size = 0x4, offset = 0x4, fixed_abs, tag = 'smem constant byte address 0x4 - core index']
  #allocation1 [shape = 'u32[72,128]{1,0:T(1,128)}', space=vmem, size = 0x9000, scoped, tag = 'internal scratch']
  #allocation2 [shape = 'f32[1,1]{1,0:T(1,128)S(1)}', space=vmem, size = 0x200, scoped, tag = 'scoped memory for contextual_clip_forward.1']
  %s0 = inlined_call_operand.vmem [shape: f32[4,16,128], index: 0, kind: input, shape index: {}]
  %s1 = inlined_call_operand.vmem [shape: f32[16,128], index: 1, kind: input, shape index: {}]
  %s2 = inlined_call_operand.vmem [shape: f32[4,16,1], index: 2, kind: input, shape index: {}]
  %s3 = inlined_call_operand.vmem [shape: f32[64,64], index: 3, kind: input, shape index: {}]
  %s4 = inlined_call_operand.vmem [shape: f32[4,16,1], index: 4, kind: input, shape index: {}]
  %s5 = inlined_call_operand.hbm [shape: bf16[2,128,384], index: 5, kind: input, shape index: {}]
  %s6 = inlined_call_operand.vmem [shape: f32[2,1,384], index: 6, kind: input, shape index: {}]
  %s7 = inlined_call_operand.vmem [shape: bf16[2,128,128], index: 7, kind: input, shape index: {}]
  %s8 = inlined_call_operand.vmem [shape: f32[2,1,128], index: 8, kind: input, shape index: {}]
  %s9 = inlined_call_operand.vmem [shape: f32[2,1,128], index: 9, kind: input, shape index: {}]
  %s10 = inlined_call_operand.vmem [shape: f32[2,1,128], index: 10, kind: input, shape index: {}]
  %s11 = inlined_call_operand.hbm [shape: bf16[2,128,512], index: 11, kind: input, shape index: {}]
  %s12 = inlined_call_operand.vmem [shape: f32[2,1,512], index: 12, kind: input, shape index: {}]
  %s13 = inlined_call_operand.hbm [shape: bf16[2,512,128], index: 13, kind: input, shape index: {}]
  %s14 = inlined_call_operand.vmem [shape: f32[2,1,128], index: 14, kind: input, shape index: {}]
  %s15 = inlined_call_operand.vmem [shape: f32[2,1,128], index: 15, kind: input, shape index: {}]
  %s16 = inlined_call_operand.vmem [shape: f32[2,1,128], index: 16, kind: input, shape index: {}]
  %s17 = inlined_call_operand.vmem [shape: f32[1,128], index: 17, kind: input, shape index: {}]
  %s18 = inlined_call_operand.<no memory space> [shape: f32[1,1], index: 18, kind: input, shape index: {}]
  %s19 = inlined_call_operand.vmem [shape: f32[4,16,1], index: 19, kind: output, shape index: {0}]
  %s20 = inlined_call_operand.vmem [shape: f32[4,1,1], index: 20, kind: output, shape index: {1}]
  %21 = xla_tuple %s19, %s20
  %s22 = sld [smem:[#allocation0]]
  $region106: #{contextual_clip_forward.1} parent=0
    _
  %s24 = ssub.s32 1, %s22
  %s25 = scalar_select 0, %s24, %s22
  %v26 = vstv %s18
  %27 = vst [vmem:[#allocation2] sm:$0x1] %v26
  $region1: #{contextual_clip_forward.1} parent=0
    #allocation3 [shape = 'u8[196608]{0}', space=vmem, size = 0x30000, scoped, tag = 'input window, operand 5, single buffered']
    #allocation4 [shape = 's32[1]{0}', space=sflag, size = 0x4, scoped, tag = 'scoped memory for contextual_clip_forward.1']
    #allocation5 [shape = 'u8[262144]{0}', space=vmem, size = 0x40000, scoped, tag = 'input window, operand 11, single buffered']
    #allocation6 [shape = 's32[1]{0}', space=sflag, size = 0x4, scoped, tag = 'scoped memory for contextual_clip_forward.1']
    #allocation7 [shape = 'u8[262144]{0}', space=vmem, size = 0x40000, scoped, tag = 'input window, operand 13, single buffered']
    %28 = vsyncpa [#allocation4], 0
    %29 = vsyncpa [#allocation6], 0
    // Predicated region
    $region2: #{contextual_clip_forward.1} parent=1 // pred_check
      _
    $region3: #{contextual_clip_forward.1} parent=1 // pred_check_branch
      %31 = sbr.rel (0) target = $region5
    $region4: #{contextual_clip_forward.1} parent=1 // pred_region
      _
    $region5: #{contextual_clip_forward.1} parent=1 // pred_fallthru
      _
    // Predicated region
    $region6: #{contextual_clip_forward.1} parent=1 // pred_check
      _
    $region7: #{contextual_clip_forward.1} parent=1 // pred_check_branch
      %33 = sbr.rel (0) target = $region9
    $region8: #{contextual_clip_forward.1} parent=1 // pred_region
      _
    $region9: #{contextual_clip_forward.1} parent=1 // pred_fallthru
      _
    // Predicated region
    $region10: #{contextual_clip_forward.1} parent=1 // pred_check
      _
    $region11: #{contextual_clip_forward.1} parent=1 // pred_check_branch
      %35 = sbr.rel (0) target = $region13
    $region12: #{contextual_clip_forward.1} parent=1 // pred_region
      _
    $region13: #{contextual_clip_forward.1} parent=1 // pred_fallthru
      _
    // Predicated region
    $region14: #{contextual_clip_forward.1} parent=1 // pred_check
      _
    $region15: #{contextual_clip_forward.1} parent=1 // pred_check_branch
      %37 = sbr.rel (0) target = $region17
    $region16: #{contextual_clip_forward.1} parent=1 // pred_region
      _
    $region17: #{contextual_clip_forward.1} parent=1 // pred_fallthru
      _
    // Predicated region
    $region18: #{contextual_clip_forward.1} parent=1 // pred_check
      _
    $region19: #{contextual_clip_forward.1} parent=1 // pred_check_branch
      %39 = sbr.rel (0) target = $region21
    $region20: #{contextual_clip_forward.1} parent=1 // pred_region
      _
    $region21: #{contextual_clip_forward.1} parent=1 // pred_fallthru
      _
    // Predicated region
    $region22: #{contextual_clip_forward.1} parent=1 // pred_check
      _
    $region23: #{contextual_clip_forward.1} parent=1 // pred_check_branch
      %41 = sbr.rel (0) target = $region25
    $region24: #{contextual_clip_forward.1} parent=1 // pred_region
      %43 = vsyncadd [#allocation4], 0
      %s44 = sshll.u32 %s5, 4
      %s45 = int_to_ptr.hbm [resolvable:$true] %s44
      %s46 = sshll.u32 [#allocation3], 4
      %s47 = int_to_ptr.vmem [resolvable:$true] %s46
      %52 = dma.hbm_to_vmem [thread:$0]  %s45, 6144, %s47, [#allocation4], 192, 192, 12
    $region25: #{contextual_clip_forward.1} parent=1 // pred_fallthru
      _
    // Predicated region
    $region26: #{contextual_clip_forward.1} parent=1 // pred_check
      _
    $region27: #{contextual_clip_forward.1} parent=1 // pred_check_branch
      %54 = sbr.rel (0) target = $region29
    $region28: #{contextual_clip_forward.1} parent=1 // pred_region
      _
    $region29: #{contextual_clip_forward.1} parent=1 // pred_fallthru
      _
    // Predicated region
    $region30: #{contextual_clip_forward.1} parent=1 // pred_check
      _
    $region31: #{contextual_clip_forward.1} parent=1 // pred_check_branch
      %56 = sbr.rel (0) target = $region33
    $region32: #{contextual_clip_forward.1} parent=1 // pred_region
      _
    $region33: #{contextual_clip_forward.1} parent=1 // pred_fallthru
      _
    // Predicated region
    $region34: #{contextual_clip_forward.1} parent=1 // pred_check
      _
    $region35: #{contextual_clip_forward.1} parent=1 // pred_check_branch
      %58 = sbr.rel (0) target = $region37
    $region36: #{contextual_clip_forward.1} parent=1 // pred_region
      _
    $region37: #{contextual_clip_forward.1} parent=1 // pred_fallthru
      _
    // Predicated region
    $region38: #{contextual_clip_forward.1} parent=1 // pred_check
      _
    $region39: #{contextual_clip_forward.1} parent=1 // pred_check_branch
      %60 = sbr.rel (0) target = $region41
    $region40: #{contextual_clip_forward.1} parent=1 // pred_region
      _
    $region41: #{contextual_clip_forward.1} parent=1 // pred_fallthru
      _
    // Predicated region
    $region42: #{contextual_clip_forward.1} parent=1 // pred_check
      _
    $region43: #{contextual_clip_forward.1} parent=1 // pred_check_branch
      %62 = sbr.rel (0) target = $region45
    $region44: #{contextual_clip_forward.1} parent=1 // pred_region
      _
    $region45: #{contextual_clip_forward.1} parent=1 // pred_fallthru
      _
    // Predicated region
    $region46: #{contextual_clip_forward.1} parent=1 // pred_check
      _
    $region47: #{contextual_clip_forward.1} parent=1 // pred_check_branch
      %64 = sbr.rel (0) target = $region49
    $region48: #{contextual_clip_forward.1} parent=1 // pred_region
      %66 = vsyncadd [#allocation6], 0
      %s67 = sshll.u32 %s11, 4
      %s68 = int_to_ptr.hbm [resolvable:$true] %s67
      %s69 = sshll.u32 [#allocation5], 4
      %s70 = int_to_ptr.vmem [resolvable:$true] %s69
      %75 = dma.hbm_to_vmem [thread:$0]  %s68, 8192, %s70, [#allocation6], 256, 256, 16
    $region49: #{contextual_clip_forward.1} parent=1 // pred_fallthru
      _
    // Predicated region
    $region50: #{contextual_clip_forward.1} parent=1 // pred_check
      _
    $region51: #{contextual_clip_forward.1} parent=1 // pred_check_branch
      %77 = sbr.rel (0) target = $region53
    $region52: #{contextual_clip_forward.1} parent=1 // pred_region
      _
    $region53: #{contextual_clip_forward.1} parent=1 // pred_fallthru
      _
    // Predicated region
    $region54: #{contextual_clip_forward.1} parent=1 // pred_check
      _
    $region55: #{contextual_clip_forward.1} parent=1 // pred_check_branch
      %79 = sbr.rel (0) target = $region57
    $region56: #{contextual_clip_forward.1} parent=1 // pred_region
      %81 = vsyncadd [#allocation6], 0
      %s82 = sshll.u32 %s13, 4
      %s83 = int_to_ptr.hbm [resolvable:$true] %s82
      %s84 = sshll.u32 [#allocation7], 4
      %s85 = int_to_ptr.vmem [resolvable:$true] %s84
      %90 = dma.hbm_to_vmem [thread:$0]  %s83, 8192, %s85, [#allocation6], 64, 64, 4
    $region57: #{contextual_clip_forward.1} parent=1 // pred_fallthru
      _
    // Predicated region
    $region58: #{contextual_clip_forward.1} parent=1 // pred_check
      _
    $region59: #{contextual_clip_forward.1} parent=1 // pred_check_branch
      %92 = sbr.rel (0) target = $region61
    $region60: #{contextual_clip_forward.1} parent=1 // pred_region
      _
    $region61: #{contextual_clip_forward.1} parent=1 // pred_fallthru
      _
    // Predicated region
    $region62: #{contextual_clip_forward.1} parent=1 // pred_check
      _
    $region63: #{contextual_clip_forward.1} parent=1 // pred_check_branch
      %94 = sbr.rel (0) target = $region65
    $region64: #{contextual_clip_forward.1} parent=1 // pred_region
      _
    $region65: #{contextual_clip_forward.1} parent=1 // pred_fallthru
      _
    // Predicated region
    $region66: #{contextual_clip_forward.1} parent=1 // pred_check
      _
    $region67: #{contextual_clip_forward.1} parent=1 // pred_check_branch
      %96 = sbr.rel (0) target = $region69
    $region68: #{contextual_clip_forward.1} parent=1 // pred_region
      _
    $region69: #{contextual_clip_forward.1} parent=1 // pred_fallthru
      _
    // Predicated region
    $region70: #{contextual_clip_forward.1} parent=1 // pred_check
      _
    $region71: #{contextual_clip_forward.1} parent=1 // pred_check_branch
      %98 = sbr.rel (0) target = $region73
    $region72: #{contextual_clip_forward.1} parent=1 // pred_region
      _
    $region73: #{contextual_clip_forward.1} parent=1 // pred_fallthru
      _
    // Predicated region
    $region74: #{contextual_clip_forward.1} parent=1 // pred_check
      _
    $region75: #{contextual_clip_forward.1} parent=1 // pred_check_branch
      %100 = sbr.rel (0) target = $region77
    $region76: #{contextual_clip_forward.1} parent=1 // pred_region
      _
    $region77: #{contextual_clip_forward.1} parent=1 // pred_fallthru
      _
    // Predicated region
    $region78: #{contextual_clip_forward.1} parent=1 // pred_check
      _
    $region79: #{contextual_clip_forward.1} parent=1 // pred_check_branch
      %102 = sbr.rel (0) target = $region81
    $region80: #{contextual_clip_forward.1} parent=1 // pred_region
      %104 = dma.done [#allocation4], 6144
    $region81: #{contextual_clip_forward.1} parent=1 // pred_fallthru
      _
    // Predicated region
    $region82: #{contextual_clip_forward.1} parent=1 // pred_check
      _
    $region83: #{contextual_clip_forward.1} parent=1 // pred_check_branch
      %106 = sbr.rel (0) target = $region85
    $region84: #{contextual_clip_forward.1} parent=1 // pred_region
      %108 = dma.done [#allocation6], 8192
    $region85: #{contextual_clip_forward.1} parent=1 // pred_fallthru
      _
    // Predicated region
    $region86: #{contextual_clip_forward.1} parent=1 // pred_check
      _
    $region87: #{contextual_clip_forward.1} parent=1 // pred_check_branch
      %110 = sbr.rel (0) target = $region89
    $region88: #{contextual_clip_forward.1} parent=1 // pred_region
      %112 = dma.done [#allocation6], 8192
    $region89: #{contextual_clip_forward.1} parent=1 // pred_fallthru
      _
    %v114 = vld [vmem:[%s0] sm:$0xff]
    %v115 = vld [vmem:[%s0 + $0x8] sm:$0xff]
    %v116 = vld [vmem:[%s0 + $0x10] sm:$0xff]
    %v117 = vld [vmem:[%s0 + $0x18] sm:$0xff]
    %v118 = vld [vmem:[%s0 + $0x20] sm:$0xff]
    %v119 = vld [vmem:[%s0 + $0x28] sm:$0xff]
    %v120 = vld [vmem:[%s0 + $0x30] sm:$0xff]
    %v121 = vld [vmem:[%s0 + $0x38] sm:$0xff]
    %v122 = vld [vmem:[%s1] sm:$0xff]
    %v123 = vld [vmem:[%s1 + $0x8] sm:$0xff]
    %v124 = vld [vmem:[%s2] sm:$0xff]
    %v125 = vld [vmem:[%s2 + $0x8] sm:$0xff]
    %v126 = vld [vmem:[%s2 + $0x10] sm:$0xff]
    %v127 = vld [vmem:[%s2 + $0x18] sm:$0xff]
    %v128 = vld [vmem:[%s2 + $0x20] sm:$0xff]
    %v129 = vld [vmem:[%s2 + $0x28] sm:$0xff]
    %v130 = vld [vmem:[%s2 + $0x30] sm:$0xff]
    %v131 = vld [vmem:[%s2 + $0x38] sm:$0xff]
    %133 = vset.pattern.permute.xlu0 0
    %134 = vperm.xlu0 %133, %v124
    %v135 = vpop.permute.xlu0 %134
    %138 = vset.pattern.permute.xlu0 0
    %139 = vperm.xlu0 %138, %v125
    %v140 = vpop.permute.xlu0 %139
    %143 = vset.pattern.permute.xlu0 0
    %144 = vperm.xlu0 %143, %v126
    %v145 = vpop.permute.xlu0 %144
    %148 = vset.pattern.permute.xlu0 0
    %149 = vperm.xlu0 %148, %v127
    %v150 = vpop.permute.xlu0 %149
    %153 = vset.pattern.permute.xlu0 0
    %154 = vperm.xlu0 %153, %v128
    %v155 = vpop.permute.xlu0 %154
    %158 = vset.pattern.permute.xlu0 0
    %159 = vperm.xlu0 %158, %v129
    %v160 = vpop.permute.xlu0 %159
    %163 = vset.pattern.permute.xlu0 0
    %164 = vperm.xlu0 %163, %v130
    %v165 = vpop.permute.xlu0 %164
    %168 = vset.pattern.permute.xlu0 0
    %169 = vperm.xlu0 %168, %v131
    %v170 = vpop.permute.xlu0 %169
    %v172 = vmul.f32 %v122, %v135
    %v173 = vmul.f32 %v123, %v140
    %v174 = vmul.f32 %v122, %v145
    %v175 = vmul.f32 %v123, %v150
    %v176 = vmul.f32 %v122, %v155
    %v177 = vmul.f32 %v123, %v160
    %v178 = vmul.f32 %v122, %v165
    %v179 = vmul.f32 %v123, %v170
    %v180 = vadd.f32 %v114, %v172
    %v181 = vadd.f32 %v115, %v173
    %v182 = vadd.f32 %v116, %v174
    %v183 = vadd.f32 %v117, %v175
    %v184 = vadd.f32 %v118, %v176
    %v185 = vadd.f32 %v119, %v177
    %v186 = vadd.f32 %v120, %v178
    %v187 = vadd.f32 %v121, %v179
    %v188 = vld [vmem:[%s3] sm:$0xff]
    %v189 = vld [vmem:[%s3 + $0x8] sm:$0xff]
    %v190 = vld [vmem:[%s3 + $0x10] sm:$0xff]
    %v191 = vld [vmem:[%s3 + $0x18] sm:$0xff]
    %v192 = vld [vmem:[%s3 + $0x20] sm:$0xff]
    %v193 = vld [vmem:[%s3 + $0x28] sm:$0xff]
    %v194 = vld [vmem:[%s3 + $0x30] sm:$0xff]
    %v195 = vld [vmem:[%s3 + $0x38] sm:$0xff]
    %v196 = vpack.c.bf16 %v181, %v180
    %v197 = vpack.c.bf16 %v183, %v182
    %v198 = vpack.c.bf16 %v185, %v184
    %v199 = vpack.c.bf16 %v187, %v186
    %v200 = vld [vmem:[#allocation3] sm:$0xff]
    %v201 = vld [vmem:[#allocation3 + $0x8] sm:$0xf]
    %v202 = vld [vmem:[#allocation3 + $0xc] sm:$0xff]
    %v203 = vld [vmem:[#allocation3 + $0x14] sm:$0xf]
    %v204 = vld [vmem:[#allocation3 + $0x18] sm:$0xff]
    %v205 = vld [vmem:[#allocation3 + $0x20] sm:$0xf]
    %v206 = vld [vmem:[#allocation3 + $0x24] sm:$0xff]
    %v207 = vld [vmem:[#allocation3 + $0x2c] sm:$0xf]
    %v208 = vld [vmem:[#allocation3 + $0x30] sm:$0xff]
    %v209 = vld [vmem:[#allocation3 + $0x38] sm:$0xf]
    %v210 = vld [vmem:[#allocation3 + $0x3c] sm:$0xff]
    %v211 = vld [vmem:[#allocation3 + $0x44] sm:$0xf]
    %v212 = vld [vmem:[#allocation3 + $0x48] sm:$0xff]
    %v213 = vld [vmem:[#allocation3 + $0x50] sm:$0xf]
    %v214 = vld [vmem:[#allocation3 + $0x54] sm:$0xff]
    %v215 = vld [vmem:[#allocation3 + $0x5c] sm:$0xf]
    %v216 = vld [vmem:[#allocation3 + $0x60] sm:$0xff]
    %v217 = vld [vmem:[#allocation3 + $0x68] sm:$0xf]
    %v218 = vld [vmem:[#allocation3 + $0x6c] sm:$0xff]
    %v219 = vld [vmem:[#allocation3 + $0x74] sm:$0xf]
    %v220 = vld [vmem:[#allocation3 + $0x78] sm:$0xff]
    %v221 = vld [vmem:[#allocation3 + $0x80] sm:$0xf]
    %v222 = vld [vmem:[#allocation3 + $0x84] sm:$0xff]
    %v223 = vld [vmem:[#allocation3 + $0x8c] sm:$0xf]
    %v224 = vld [vmem:[#allocation3 + $0x90] sm:$0xff]
    %v225 = vld [vmem:[#allocation3 + $0x98] sm:$0xf]
    %v226 = vld [vmem:[#allocation3 + $0x9c] sm:$0xff]
    %v227 = vld [vmem:[#allocation3 + $0xa4] sm:$0xf]
    %v228 = vld [vmem:[#allocation3 + $0xa8] sm:$0xff]
    %v229 = vld [vmem:[#allocation3 + $0xb0] sm:$0xf]
    %v230 = vld [vmem:[#allocation3 + $0xb4] sm:$0xff]
    %v231 = vld [vmem:[#allocation3 + $0xbc] sm:$0xf]
    %v232 = vld [vmem:[%s6] sm:$0x7]
    %v234 = vperm.slane %v232, 0
    %v235 = vperm.slane %v232, 1
    %v236 = vperm.slane %v232, 2
    %v272 = vunpack.c.l.b16 %v200
    %v273 = vunpack.c.h.b16 %v200
    %v274 = vunpack.c.l.b16 %v201
    %v275 = vunpack.c.l.b16 %v202
    %v276 = vunpack.c.h.b16 %v202
    %v277 = vunpack.c.l.b16 %v203
    %v278 = vunpack.c.l.b16 %v204
    %v279 = vunpack.c.h.b16 %v204
    %v280 = vunpack.c.l.b16 %v205
    %v281 = vunpack.c.l.b16 %v206
    %v282 = vunpack.c.h.b16 %v206
    %v283 = vunpack.c.l.b16 %v207
    %v284 = vunpack.c.l.b16 %v208
    %v285 = vunpack.c.h.b16 %v208
    %v286 = vunpack.c.l.b16 %v209
    %v287 = vunpack.c.l.b16 %v210
    %v288 = vunpack.c.h.b16 %v210
    %v289 = vunpack.c.l.b16 %v211
    %v290 = vunpack.c.l.b16 %v212
    %v291 = vunpack.c.h.b16 %v212
    %v292 = vunpack.c.l.b16 %v213
    %v293 = vunpack.c.l.b16 %v214
    %v294 = vunpack.c.h.b16 %v214
    %v295 = vunpack.c.l.b16 %v215
    %v296 = vunpack.c.l.b16 %v216
    %v297 = vunpack.c.h.b16 %v216
    %v298 = vunpack.c.l.b16 %v217
    %v299 = vunpack.c.l.b16 %v218
    %v300 = vunpack.c.h.b16 %v218
    %v301 = vunpack.c.l.b16 %v219
    %v302 = vunpack.c.l.b16 %v220
    %v303 = vunpack.c.h.b16 %v220
    %v304 = vunpack.c.l.b16 %v221
    %v305 = vunpack.c.l.b16 %v222
    %v306 = vunpack.c.h.b16 %v222
    %v307 = vunpack.c.l.b16 %v223
    %v308 = vunpack.c.l.b16 %v224
    %v309 = vunpack.c.h.b16 %v224
    %v310 = vunpack.c.l.b16 %v225
    %v311 = vunpack.c.l.b16 %v226
    %v312 = vunpack.c.h.b16 %v226
    %v313 = vunpack.c.l.b16 %v227
    %v314 = vunpack.c.l.b16 %v228
    %v315 = vunpack.c.h.b16 %v228
    %v316 = vunpack.c.l.b16 %v229
    %v317 = vunpack.c.l.b16 %v230
    %v318 = vunpack.c.h.b16 %v230
    %v319 = vunpack.c.l.b16 %v231
    %v320 = vpack.c.b16 %v275, %v272
    %v321 = vpack.c.b16 %v276, %v273
    %v322 = vpack.c.b16 %v277, %v274
    %v323 = vpack.c.b16 %v281, %v278
    %v324 = vpack.c.b16 %v282, %v279
    %v325 = vpack.c.b16 %v283, %v280
    %v326 = vpack.c.b16 %v287, %v284
    %v327 = vpack.c.b16 %v288, %v285
    %v328 = vpack.c.b16 %v289, %v286
    %v329 = vpack.c.b16 %v293, %v290
    %v330 = vpack.c.b16 %v294, %v291
    %v331 = vpack.c.b16 %v295, %v292
    %v332 = vpack.c.b16 %v299, %v296
    %v333 = vpack.c.b16 %v300, %v297
    %v334 = vpack.c.b16 %v301, %v298
    %v335 = vpack.c.b16 %v305, %v302
    %v336 = vpack.c.b16 %v306, %v303
    %v337 = vpack.c.b16 %v307, %v304
    %v338 = vpack.c.b16 %v311, %v308
    %v339 = vpack.c.b16 %v312, %v309
    %v340 = vpack.c.b16 %v313, %v310
    %v341 = vpack.c.b16 %v317, %v314
    %v342 = vpack.c.b16 %v318, %v315
    %v343 = vpack.c.b16 %v319, %v316
    %368 = vmatpush.bf16.msra.mxu0 %v341
    %369 = vmatpush.bf16.msra.mxu0 %v338
    %370 = vmatpush.bf16.msra.mxu0 %v335
    %371 = vmatpush.bf16.msra.mxu0 %v332
    %372 = vmatpush.bf16.msra.mxu0 %v329
    %373 = vmatpush.bf16.msra.mxu0 %v326
    %374 = vmatpush.bf16.msra.mxu0 %v323
    %375 = vmatpush.bf16.msra.mxu0 %v320
    %376 = vmatmul.bf16.gmra.mxu0 %v196
    %v377 = vpop.f32.mrf.mxu0
    %v378 = vadd.f32 %v234, %v377
    %v379 = vpop.f32.mrf.mxu0
    %v380 = vadd.f32 %v234, %v379
    %381 = vmatmul.bf16.gmra.mxu0 %v197
    %v382 = vpop.f32.mrf.mxu0
    %v383 = vadd.f32 %v234, %v382
    %v384 = vpop.f32.mrf.mxu0
    %v385 = vadd.f32 %v234, %v384
    %386 = vmatmul.bf16.gmra.mxu0 %v198
    %v387 = vpop.f32.mrf.mxu0
    %v388 = vadd.f32 %v234, %v387
    %v389 = vpop.f32.mrf.mxu0
    %v390 = vadd.f32 %v234, %v389
    %391 = vmatmul.bf16.gmra.mxu0 %v199
    %v392 = vpop.f32.mrf.mxu0
    %v393 = vadd.f32 %v234, %v392
    %v394 = vpop.f32.mrf.mxu0
    %v395 = vadd.f32 %v234, %v394
    %396 = vdwg.mxu0
    %397 = vmatpush.bf16.msra.mxu0 %v342
    %398 = vmatpush.bf16.msra.mxu0 %v339
    %399 = vmatpush.bf16.msra.mxu0 %v336
    %400 = vmatpush.bf16.msra.mxu0 %v333
    %401 = vmatpush.bf16.msra.mxu0 %v330
    %402 = vmatpush.bf16.msra.mxu0 %v327
    %403 = vmatpush.bf16.msra.mxu0 %v324
    %404 = vmatpush.bf16.msra.mxu0 %v321
    %405 = vmatmul.bf16.gmra.mxu0 %v196
    %v406 = vpop.f32.mrf.mxu0
    %v407 = vadd.f32 %v235, %v406
    %v408 = vpop.f32.mrf.mxu0
    %v409 = vadd.f32 %v235, %v408
    %410 = vmatmul.bf16.gmra.mxu0 %v197
    %v411 = vpop.f32.mrf.mxu0
    %v412 = vadd.f32 %v235, %v411
    %v413 = vpop.f32.mrf.mxu0
    %v414 = vadd.f32 %v235, %v413
    %415 = vmatmul.bf16.gmra.mxu0 %v198
    %v416 = vpop.f32.mrf.mxu0
    %v417 = vadd.f32 %v235, %v416
    %v418 = vpop.f32.mrf.mxu0
    %v419 = vadd.f32 %v235, %v418
    %420 = vmatmul.bf16.gmra.mxu0 %v199
    %v421 = vpop.f32.mrf.mxu0
    %v422 = vadd.f32 %v235, %v421
    %v423 = vpop.f32.mrf.mxu0
    %v424 = vadd.f32 %v235, %v423
    %425 = vdwg.mxu0
    %426 = vmatpush.bf16.msra.mxu0 %v343
    %427 = vmatpush.bf16.msra.mxu0 %v340
    %428 = vmatpush.bf16.msra.mxu0 %v337
    %429 = vmatpush.bf16.msra.mxu0 %v334
    %430 = vmatpush.bf16.msra.mxu0 %v331
    %431 = vmatpush.bf16.msra.mxu0 %v328
    %432 = vmatpush.bf16.msra.mxu0 %v325
    %433 = vmatpush.bf16.msra.mxu0 %v322
    %434 = vmatmul.bf16.gmra.mxu0 %v196
    %v435 = vpop.f32.mrf.mxu0
    %v436 = vadd.f32 %v236, %v435
    %v437 = vpop.f32.mrf.mxu0
    %v438 = vadd.f32 %v236, %v437
    %439 = vmatmul.bf16.gmra.mxu0 %v197
    %v440 = vpop.f32.mrf.mxu0
    %v441 = vadd.f32 %v236, %v440
    %v442 = vpop.f32.mrf.mxu0
    %v443 = vadd.f32 %v236, %v442
    %444 = vmatmul.bf16.gmra.mxu0 %v198
    %v445 = vpop.f32.mrf.mxu0
    %v446 = vadd.f32 %v236, %v445
    %v447 = vpop.f32.mrf.mxu0
    %v448 = vadd.f32 %v236, %v447
    %449 = vmatmul.bf16.gmra.mxu0 %v199
    %v450 = vpop.f32.mrf.mxu0
    %v451 = vadd.f32 %v236, %v450
    %v452 = vpop.f32.mrf.mxu0
    %v453 = vadd.f32 %v236, %v452
    %454 = vdwg.mxu0
    %v455 = vmul.f32 %v378, 0.25
    %v456 = vmul.f32 %v380, 0.25
    %v457 = vmul.f32 %v383, 0.25
    %v458 = vmul.f32 %v385, 0.25
    %v459 = vmul.f32 %v388, 0.25
    %v460 = vmul.f32 %v390, 0.25
    %v461 = vmul.f32 %v393, 0.25
    %v462 = vmul.f32 %v395, 0.25
    %v463 = vpack.c.bf16 %v455, %v455
    %v464 = vpack.c.bf16 %v456, %v456
    %v465 = vpack.c.bf16 %v457, %v457
    %v466 = vpack.c.bf16 %v458, %v458
    %v467 = vpack.c.bf16 %v459, %v459
    %v468 = vpack.c.bf16 %v460, %v460
    %v469 = vpack.c.bf16 %v461, %v461
    %v470 = vpack.c.bf16 %v462, %v462
    %v471 = vpack.c.bf16 %v407, %v407
    %v472 = vpack.c.bf16 %v409, %v409
    %v473 = vpack.c.bf16 %v412, %v412
    %v474 = vpack.c.bf16 %v414, %v414
    %v475 = vpack.c.bf16 %v417, %v417
    %v476 = vpack.c.bf16 %v419, %v419
    %v477 = vpack.c.bf16 %v422, %v422
    %v478 = vpack.c.bf16 %v424, %v424
    %v479 = vpack.c.bf16 %v436, %v436
    %v480 = vpack.c.bf16 %v438, %v438
    %v481 = vpack.c.bf16 %v441, %v441
    %v482 = vpack.c.bf16 %v443, %v443
    %v483 = vpack.c.bf16 %v446, %v446
    %v484 = vpack.c.bf16 %v448, %v448
    %v485 = vpack.c.bf16 %v451, %v451
    %v486 = vpack.c.bf16 %v453, %v453
    %v495 = vunpack.c.l.b16 %v463
    %v496 = vunpack.c.l.b16 %v464
    %v497 = vunpack.c.l.b16 %v465
    %v498 = vunpack.c.l.b16 %v466
    %v499 = vunpack.c.l.b16 %v467
    %v500 = vunpack.c.l.b16 %v468
    %v501 = vunpack.c.l.b16 %v469
    %v502 = vunpack.c.l.b16 %v470
    %v503 = vpack.c.b16 %v496, %v495
    %v504 = vpack.c.b16 %v498, %v497
    %v505 = vpack.c.b16 %v500, %v499
    %v506 = vpack.c.b16 %v502, %v501
    %v515 = vunpack.c.l.b16 %v471
    %v516 = vunpack.c.l.b16 %v472
    %v517 = vunpack.c.l.b16 %v473
    %v518 = vunpack.c.l.b16 %v474
    %v519 = vunpack.c.l.b16 %v475
    %v520 = vunpack.c.l.b16 %v476
    %v521 = vunpack.c.l.b16 %v477
    %v522 = vunpack.c.l.b16 %v478
    %v523 = vpack.c.b16 %v516, %v515
    %v524 = vpack.c.b16 %v518, %v517
    %v525 = vpack.c.b16 %v520, %v519
    %v526 = vpack.c.b16 %v522, %v521
    %vm527 = vcmask 130048
    %v529 = vsel %vm527, %v503, 0
    %v532 = vsel %vm527, %v504, 0
    %v535 = vsel %vm527, %v505, 0
    %v538 = vsel %vm527, %v506, 0
    %v541 = vsel %vm527, %v523, 0
    %v544 = vsel %vm527, %v524, 0
    %v547 = vsel %vm527, %v525, 0
    %v550 = vsel %vm527, %v526, 0
    %552 = vmatpush.bf16.xpose.msra.mxu0 0
    %553 = vmatpush.bf16.xpose.msra.mxu0 0
    %554 = vmatpush.bf16.xpose.msra.mxu0 0
    %555 = vmatpush.bf16.xpose.msra.mxu0 0
    %556 = vmatpush.bf16.xpose.msra.mxu0 %v550
    %557 = vmatpush.bf16.xpose.msra.mxu0 %v547
    %558 = vmatpush.bf16.xpose.msra.mxu0 %v544
    %559 = vmatpush.bf16.xpose.msra.mxu0 %v541
    %560 = vmatmul.bf16.gmra.mxu0 %v529
    %v561 = vpop.f32.mrf.mxu0
    %v562 = vadd.f32 %v188, %v561
    %v563 = vpop.f32.mrf.mxu0
    %v564 = vadd.f32 %v189, %v563
    %565 = vmatmul.bf16.gmra.mxu0 %v532
    %v566 = vpop.f32.mrf.mxu0
    %v567 = vadd.f32 %v190, %v566
    %v568 = vpop.f32.mrf.mxu0
    %v569 = vadd.f32 %v191, %v568
    %570 = vmatmul.bf16.gmra.mxu0 %v535
    %v571 = vpop.f32.mrf.mxu0
    %v572 = vadd.f32 %v192, %v571
    %v573 = vpop.f32.mrf.mxu0
    %v574 = vadd.f32 %v193, %v573
    %575 = vmatmul.bf16.gmra.mxu0 %v538
    %v576 = vpop.f32.mrf.mxu0
    %v577 = vadd.f32 %v194, %v576
    %v578 = vpop.f32.mrf.mxu0
    %v579 = vadd.f32 %v195, %v578
    %580 = vdwg.mxu0
    %581 = vrot.lane.b32.xlu0 %v503, 112
    %v582 = vpop.permute.xlu0 %581
    %583 = vrot.lane.b32.xlu0 %v504, 112
    %v584 = vpop.permute.xlu0 %583
    %585 = vrot.lane.b32.xlu0 %v505, 112
    %v586 = vpop.permute.xlu0 %585
    %587 = vrot.lane.b32.xlu0 %v506, 112
    %v588 = vpop.permute.xlu0 %587
    %589 = vrot.lane.b32.xlu0 %v523, 112
    %v590 = vpop.permute.xlu0 %589
    %591 = vrot.lane.b32.xlu0 %v524, 112
    %v592 = vpop.permute.xlu0 %591
    %593 = vrot.lane.b32.xlu0 %v525, 112
    %v594 = vpop.permute.xlu0 %593
    %595 = vrot.lane.b32.xlu0 %v526, 112
    %v596 = vpop.permute.xlu0 %595
    %v598 = vsel %vm527, %v582, 0
    %v601 = vsel %vm527, %v584, 0
    %v604 = vsel %vm527, %v586, 0
    %v607 = vsel %vm527, %v588, 0
    %v610 = vsel %vm527, %v590, 0
    %v613 = vsel %vm527, %v592, 0
    %v616 = vsel %vm527, %v594, 0
    %v619 = vsel %vm527, %v596, 0
    %621 = vmatpush.bf16.xpose.msra.mxu0 0
    %622 = vmatpush.bf16.xpose.msra.mxu0 0
    %623 = vmatpush.bf16.xpose.msra.mxu0 0
    %624 = vmatpush.bf16.xpose.msra.mxu0 0
    %625 = vmatpush.bf16.xpose.msra.mxu0 %v619
    %626 = vmatpush.bf16.xpose.msra.mxu0 %v616
    %627 = vmatpush.bf16.xpose.msra.mxu0 %v613
    %628 = vmatpush.bf16.xpose.msra.mxu0 %v610
    %629 = vmatmul.bf16.gmra.mxu0 %v598
    %v630 = vpop.f32.mrf.mxu0
    %v631 = vadd.f32 %v188, %v630
    %v632 = vpop.f32.mrf.mxu0
    %v633 = vadd.f32 %v189, %v632
    %634 = vmatmul.bf16.gmra.mxu0 %v601
    %v635 = vpop.f32.mrf.mxu0
    %v636 = vadd.f32 %v190, %v635
    %v637 = vpop.f32.mrf.mxu0
    %v638 = vadd.f32 %v191, %v637
    %639 = vmatmul.bf16.gmra.mxu0 %v604
    %v640 = vpop.f32.mrf.mxu0
    %v641 = vadd.f32 %v192, %v640
    %v642 = vpop.f32.mrf.mxu0
    %v643 = vadd.f32 %v193, %v642
    %644 = vmatmul.bf16.gmra.mxu0 %v607
    %v645 = vpop.f32.mrf.mxu0
    %v646 = vadd.f32 %v194, %v645
    %v647 = vpop.f32.mrf.mxu0
    %v648 = vadd.f32 %v195, %v647
    %649 = vdwg.mxu0
    %650 = vrot.lane.b32.xlu0 %v503, 96
    %v651 = vpop.permute.xlu0 %650
    %652 = vrot.lane.b32.xlu0 %v504, 96
    %v653 = vpop.permute.xlu0 %652
    %654 = vrot.lane.b32.xlu0 %v505, 96
    %v655 = vpop.permute.xlu0 %654
    %656 = vrot.lane.b32.xlu0 %v506, 96
    %v657 = vpop.permute.xlu0 %656
    %658 = vrot.lane.b32.xlu0 %v523, 96
    %v659 = vpop.permute.xlu0 %658
    %660 = vrot.lane.b32.xlu0 %v524, 96
    %v661 = vpop.permute.xlu0 %660
    %662 = vrot.lane.b32.xlu0 %v525, 96
    %v663 = vpop.permute.xlu0 %662
    %664 = vrot.lane.b32.xlu0 %v526, 96
    %v665 = vpop.permute.xlu0 %664
    %v667 = vsel %vm527, %v651, 0
    %v670 = vsel %vm527, %v653, 0
    %v673 = vsel %vm527, %v655, 0
    %v676 = vsel %vm527, %v657, 0
    %v679 = vsel %vm527, %v659, 0
    %v682 = vsel %vm527, %v661, 0
    %v685 = vsel %vm527, %v663, 0
    %v688 = vsel %vm527, %v665, 0
    %690 = vmatpush.bf16.xpose.msra.mxu0 0
    %691 = vmatpush.bf16.xpose.msra.mxu0 0
    %692 = vmatpush.bf16.xpose.msra.mxu0 0
    %693 = vmatpush.bf16.xpose.msra.mxu0 0
    %694 = vmatpush.bf16.xpose.msra.mxu0 %v688
    %695 = vmatpush.bf16.xpose.msra.mxu0 %v685
    %696 = vmatpush.bf16.xpose.msra.mxu0 %v682
    %697 = vmatpush.bf16.xpose.msra.mxu0 %v679
    %698 = vmatmul.bf16.gmra.mxu0 %v667
    %v699 = vpop.f32.mrf.mxu0
    %v700 = vadd.f32 %v188, %v699
    %v701 = vpop.f32.mrf.mxu0
    %v702 = vadd.f32 %v189, %v701
    %703 = vmatmul.bf16.gmra.mxu0 %v670
    %v704 = vpop.f32.mrf.mxu0
    %v705 = vadd.f32 %v190, %v704
    %v706 = vpop.f32.mrf.mxu0
    %v707 = vadd.f32 %v191, %v706
    %708 = vmatmul.bf16.gmra.mxu0 %v673
    %v709 = vpop.f32.mrf.mxu0
    %v710 = vadd.f32 %v192, %v709
    %v711 = vpop.f32.mrf.mxu0
    %v712 = vadd.f32 %v193, %v711
    %713 = vmatmul.bf16.gmra.mxu0 %v676
    %v714 = vpop.f32.mrf.mxu0
    %v715 = vadd.f32 %v194, %v714
    %v716 = vpop.f32.mrf.mxu0
    %v717 = vadd.f32 %v195, %v716
    %718 = vdwg.mxu0
    %719 = vrot.lane.b32.xlu0 %v503, 80
    %v720 = vpop.permute.xlu0 %719
    %721 = vrot.lane.b32.xlu0 %v504, 80
    %v722 = vpop.permute.xlu0 %721
    %723 = vrot.lane.b32.xlu0 %v505, 80
    %v724 = vpop.permute.xlu0 %723
    %725 = vrot.lane.b32.xlu0 %v506, 80
    %v726 = vpop.permute.xlu0 %725
    %727 = vrot.lane.b32.xlu0 %v523, 80
    %v728 = vpop.permute.xlu0 %727
    %729 = vrot.lane.b32.xlu0 %v524, 80
    %v730 = vpop.permute.xlu0 %729
    %731 = vrot.lane.b32.xlu0 %v525, 80
    %v732 = vpop.permute.xlu0 %731
    %733 = vrot.lane.b32.xlu0 %v526, 80
    %v734 = vpop.permute.xlu0 %733
    %v736 = vsel %vm527, %v720, 0
    %v739 = vsel %vm527, %v722, 0
    %v742 = vsel %vm527, %v724, 0
    %v745 = vsel %vm527, %v726, 0
    %v748 = vsel %vm527, %v728, 0
    %v751 = vsel %vm527, %v730, 0
    %v754 = vsel %vm527, %v732, 0
    %v757 = vsel %vm527, %v734, 0
    %759 = vmatpush.bf16.xpose.msra.mxu0 0
    %760 = vmatpush.bf16.xpose.msra.mxu0 0
    %761 = vmatpush.bf16.xpose.msra.mxu0 0
    %762 = vmatpush.bf16.xpose.msra.mxu0 0
    %763 = vmatpush.bf16.xpose.msra.mxu0 %v757
    %764 = vmatpush.bf16.xpose.msra.mxu0 %v754
    %765 = vmatpush.bf16.xpose.msra.mxu0 %v751
    %766 = vmatpush.bf16.xpose.msra.mxu0 %v748
    %767 = vmatmul.bf16.gmra.mxu0 %v736
    %v768 = vpop.f32.mrf.mxu0
    %v769 = vadd.f32 %v188, %v768
    %v770 = vpop.f32.mrf.mxu0
    %v771 = vadd.f32 %v189, %v770
    %772 = vmatmul.bf16.gmra.mxu0 %v739
    %v773 = vpop.f32.mrf.mxu0
    %v774 = vadd.f32 %v190, %v773
    %v775 = vpop.f32.mrf.mxu0
    %v776 = vadd.f32 %v191, %v775
    %777 = vmatmul.bf16.gmra.mxu0 %v742
    %v778 = vpop.f32.mrf.mxu0
    %v779 = vadd.f32 %v192, %v778
    %v780 = vpop.f32.mrf.mxu0
    %v781 = vadd.f32 %v193, %v780
    %782 = vmatmul.bf16.gmra.mxu0 %v745
    %v783 = vpop.f32.mrf.mxu0
    %v784 = vadd.f32 %v194, %v783
    %v785 = vpop.f32.mrf.mxu0
    %v786 = vadd.f32 %v195, %v785
    %787 = vdwg.mxu0
    %788 = vrot.lane.b32.xlu0 %v503, 64
    %v789 = vpop.permute.xlu0 %788
    %790 = vrot.lane.b32.xlu0 %v504, 64
    %v791 = vpop.permute.xlu0 %790
    %792 = vrot.lane.b32.xlu0 %v505, 64
    %v793 = vpop.permute.xlu0 %792
    %794 = vrot.lane.b32.xlu0 %v506, 64
    %v795 = vpop.permute.xlu0 %794
    %796 = vrot.lane.b32.xlu0 %v523, 64
    %v797 = vpop.permute.xlu0 %796
    %798 = vrot.lane.b32.xlu0 %v524, 64
    %v799 = vpop.permute.xlu0 %798
    %800 = vrot.lane.b32.xlu0 %v525, 64
    %v801 = vpop.permute.xlu0 %800
    %802 = vrot.lane.b32.xlu0 %v526, 64
    %v803 = vpop.permute.xlu0 %802
    %v805 = vsel %vm527, %v789, 0
    %v808 = vsel %vm527, %v791, 0
    %v811 = vsel %vm527, %v793, 0
    %v814 = vsel %vm527, %v795, 0
    %v817 = vsel %vm527, %v797, 0
    %v820 = vsel %vm527, %v799, 0
    %v823 = vsel %vm527, %v801, 0
    %v826 = vsel %vm527, %v803, 0
    %828 = vmatpush.bf16.xpose.msra.mxu0 0
    %829 = vmatpush.bf16.xpose.msra.mxu0 0
    %830 = vmatpush.bf16.xpose.msra.mxu0 0
    %831 = vmatpush.bf16.xpose.msra.mxu0 0
    %832 = vmatpush.bf16.xpose.msra.mxu0 %v826
    %833 = vmatpush.bf16.xpose.msra.mxu0 %v823
    %834 = vmatpush.bf16.xpose.msra.mxu0 %v820
    %835 = vmatpush.bf16.xpose.msra.mxu0 %v817
    %836 = vmatmul.bf16.gmra.mxu0 %v805
    %v837 = vpop.f32.mrf.mxu0
    %v838 = vadd.f32 %v188, %v837
    %v839 = vpop.f32.mrf.mxu0
    %v840 = vadd.f32 %v189, %v839
    %841 = vmatmul.bf16.gmra.mxu0 %v808
    %v842 = vpop.f32.mrf.mxu0
    %v843 = vadd.f32 %v190, %v842
    %v844 = vpop.f32.mrf.mxu0
    %v845 = vadd.f32 %v191, %v844
    %846 = vmatmul.bf16.gmra.mxu0 %v811
    %v847 = vpop.f32.mrf.mxu0
    %v848 = vadd.f32 %v192, %v847
    %v849 = vpop.f32.mrf.mxu0
    %v850 = vadd.f32 %v193, %v849
    %851 = vmatmul.bf16.gmra.mxu0 %v814
    %v852 = vpop.f32.mrf.mxu0
    %v853 = vadd.f32 %v194, %v852
    %v854 = vpop.f32.mrf.mxu0
    %v855 = vadd.f32 %v195, %v854
    %856 = vdwg.mxu0
    %857 = vrot.lane.b32.xlu0 %v503, 48
    %v858 = vpop.permute.xlu0 %857
    %859 = vrot.lane.b32.xlu0 %v504, 48
    %v860 = vpop.permute.xlu0 %859
    %861 = vrot.lane.b32.xlu0 %v505, 48
    %v862 = vpop.permute.xlu0 %861
    %863 = vrot.lane.b32.xlu0 %v506, 48
    %v864 = vpop.permute.xlu0 %863
    %865 = vrot.lane.b32.xlu0 %v523, 48
    %v866 = vpop.permute.xlu0 %865
    %867 = vrot.lane.b32.xlu0 %v524, 48
    %v868 = vpop.permute.xlu0 %867
    %869 = vrot.lane.b32.xlu0 %v525, 48
    %v870 = vpop.permute.xlu0 %869
    %871 = vrot.lane.b32.xlu0 %v526, 48
    %v872 = vpop.permute.xlu0 %871
    %v874 = vsel %vm527, %v858, 0
    %v877 = vsel %vm527, %v860, 0
    %v880 = vsel %vm527, %v862, 0
    %v883 = vsel %vm527, %v864, 0
    %v886 = vsel %vm527, %v866, 0
    %v889 = vsel %vm527, %v868, 0
    %v892 = vsel %vm527, %v870, 0
    %v895 = vsel %vm527, %v872, 0
    %897 = vmatpush.bf16.xpose.msra.mxu0 0
    %898 = vmatpush.bf16.xpose.msra.mxu0 0
    %899 = vmatpush.bf16.xpose.msra.mxu0 0
    %900 = vmatpush.bf16.xpose.msra.mxu0 0
    %901 = vmatpush.bf16.xpose.msra.mxu0 %v895
    %902 = vmatpush.bf16.xpose.msra.mxu0 %v892
    %903 = vmatpush.bf16.xpose.msra.mxu0 %v889
    %904 = vmatpush.bf16.xpose.msra.mxu0 %v886
    %905 = vmatmul.bf16.gmra.mxu0 %v874
    %v906 = vpop.f32.mrf.mxu0
    %v907 = vadd.f32 %v188, %v906
    %v908 = vpop.f32.mrf.mxu0
    %v909 = vadd.f32 %v189, %v908
    %910 = vmatmul.bf16.gmra.mxu0 %v877
    %v911 = vpop.f32.mrf.mxu0
    %v912 = vadd.f32 %v190, %v911
    %v913 = vpop.f32.mrf.mxu0
    %v914 = vadd.f32 %v191, %v913
    %915 = vmatmul.bf16.gmra.mxu0 %v880
    %v916 = vpop.f32.mrf.mxu0
    %v917 = vadd.f32 %v192, %v916
    %v918 = vpop.f32.mrf.mxu0
    %v919 = vadd.f32 %v193, %v918
    %920 = vmatmul.bf16.gmra.mxu0 %v883
    %v921 = vpop.f32.mrf.mxu0
    %v922 = vadd.f32 %v194, %v921
    %v923 = vpop.f32.mrf.mxu0
    %v924 = vadd.f32 %v195, %v923
    %925 = vdwg.mxu0
    %926 = vrot.lane.b32.xlu0 %v503, 32
    %v927 = vpop.permute.xlu0 %926
    %928 = vrot.lane.b32.xlu0 %v504, 32
    %v929 = vpop.permute.xlu0 %928
    %930 = vrot.lane.b32.xlu0 %v505, 32
    %v931 = vpop.permute.xlu0 %930
    %932 = vrot.lane.b32.xlu0 %v506, 32
    %v933 = vpop.permute.xlu0 %932
    %934 = vrot.lane.b32.xlu0 %v523, 32
    %v935 = vpop.permute.xlu0 %934
    %936 = vrot.lane.b32.xlu0 %v524, 32
    %v937 = vpop.permute.xlu0 %936
    %938 = vrot.lane.b32.xlu0 %v525, 32
    %v939 = vpop.permute.xlu0 %938
    %940 = vrot.lane.b32.xlu0 %v526, 32
    %v941 = vpop.permute.xlu0 %940
    %v943 = vsel %vm527, %v927, 0
    %v946 = vsel %vm527, %v929, 0
    %v949 = vsel %vm527, %v931, 0
    %v952 = vsel %vm527, %v933, 0
    %v955 = vsel %vm527, %v935, 0
    %v958 = vsel %vm527, %v937, 0
    %v961 = vsel %vm527, %v939, 0
    %v964 = vsel %vm527, %v941, 0
    %966 = vmatpush.bf16.xpose.msra.mxu0 0
    %967 = vmatpush.bf16.xpose.msra.mxu0 0
    %968 = vmatpush.bf16.xpose.msra.mxu0 0
    %969 = vmatpush.bf16.xpose.msra.mxu0 0
    %970 = vmatpush.bf16.xpose.msra.mxu0 %v964
    %971 = vmatpush.bf16.xpose.msra.mxu0 %v961
    %972 = vmatpush.bf16.xpose.msra.mxu0 %v958
    %973 = vmatpush.bf16.xpose.msra.mxu0 %v955
    %974 = vmatmul.bf16.gmra.mxu0 %v943
    %v975 = vpop.f32.mrf.mxu0
    %v976 = vadd.f32 %v188, %v975
    %v977 = vpop.f32.mrf.mxu0
    %v978 = vadd.f32 %v189, %v977
    %979 = vmatmul.bf16.gmra.mxu0 %v946
    %v980 = vpop.f32.mrf.mxu0
    %v981 = vadd.f32 %v190, %v980
    %v982 = vpop.f32.mrf.mxu0
    %v983 = vadd.f32 %v191, %v982
    %984 = vmatmul.bf16.gmra.mxu0 %v949
    %v985 = vpop.f32.mrf.mxu0
    %v986 = vadd.f32 %v192, %v985
    %v987 = vpop.f32.mrf.mxu0
    %v988 = vadd.f32 %v193, %v987
    %989 = vmatmul.bf16.gmra.mxu0 %v952
    %v990 = vpop.f32.mrf.mxu0
    %v991 = vadd.f32 %v194, %v990
    %v992 = vpop.f32.mrf.mxu0
    %v993 = vadd.f32 %v195, %v992
    %994 = vdwg.mxu0
    %995 = vrot.lane.b32.xlu0 %v503, 16
    %v996 = vpop.permute.xlu0 %995
    %997 = vrot.lane.b32.xlu0 %v504, 16
    %v998 = vpop.permute.xlu0 %997
    %999 = vrot.lane.b32.xlu0 %v505, 16
    %v1000 = vpop.permute.xlu0 %999
    %1001 = vrot.lane.b32.xlu0 %v506, 16
    %v1002 = vpop.permute.xlu0 %1001
    %1003 = vrot.lane.b32.xlu0 %v523, 16
    %v1004 = vpop.permute.xlu0 %1003
    %1005 = vrot.lane.b32.xlu0 %v524, 16
    %v1006 = vpop.permute.xlu0 %1005
    %1007 = vrot.lane.b32.xlu0 %v525, 16
    %v1008 = vpop.permute.xlu0 %1007
    %1009 = vrot.lane.b32.xlu0 %v526, 16
    %v1010 = vpop.permute.xlu0 %1009
    %v1012 = vsel %vm527, %v996, 0
    %v1015 = vsel %vm527, %v998, 0
    %v1018 = vsel %vm527, %v1000, 0
    %v1021 = vsel %vm527, %v1002, 0
    %v1024 = vsel %vm527, %v1004, 0
    %v1027 = vsel %vm527, %v1006, 0
    %v1030 = vsel %vm527, %v1008, 0
    %v1033 = vsel %vm527, %v1010, 0
    %1035 = vmatpush.bf16.xpose.msra.mxu0 0
    %1036 = vmatpush.bf16.xpose.msra.mxu0 0
    %1037 = vmatpush.bf16.xpose.msra.mxu0 0
    %1038 = vmatpush.bf16.xpose.msra.mxu0 0
    %1039 = vmatpush.bf16.xpose.msra.mxu0 %v1033
    %1040 = vmatpush.bf16.xpose.msra.mxu0 %v1030
    %1041 = vmatpush.bf16.xpose.msra.mxu0 %v1027
    %1042 = vmatpush.bf16.xpose.msra.mxu0 %v1024
    %1043 = vmatmul.bf16.gmra.mxu0 %v1012
    %v1044 = vpop.f32.mrf.mxu0
    %v1045 = vadd.f32 %v188, %v1044
    %v1046 = vpop.f32.mrf.mxu0
    %v1047 = vadd.f32 %v189, %v1046
    %1048 = vmatmul.bf16.gmra.mxu0 %v1015
    %v1049 = vpop.f32.mrf.mxu0
    %v1050 = vadd.f32 %v190, %v1049
    %v1051 = vpop.f32.mrf.mxu0
    %v1052 = vadd.f32 %v191, %v1051
    %1053 = vmatmul.bf16.gmra.mxu0 %v1018
    %v1054 = vpop.f32.mrf.mxu0
    %v1055 = vadd.f32 %v192, %v1054
    %v1056 = vpop.f32.mrf.mxu0
    %v1057 = vadd.f32 %v193, %v1056
    %1058 = vmatmul.bf16.gmra.mxu0 %v1021
    %v1059 = vpop.f32.mrf.mxu0
    %v1060 = vadd.f32 %v194, %v1059
    %v1061 = vpop.f32.mrf.mxu0
    %v1062 = vadd.f32 %v195, %v1061
    %1063 = vdwg.mxu0
    %vm1064 = vcmask 523264
    %v1065 = vsel %vm1064, %v562, -inf
    %1066 = vmax.xlane.f32.xlu0 %v1065
    %v1067 = vpop.xlane.xlu0 %1066
    %v1068 = vsel %vm1064, %v564, -inf
    %1069 = vmax.xlane.f32.xlu0 %v1068
    %v1070 = vpop.xlane.xlu0 %1069
    %v1071 = vsel %vm1064, %v567, -inf
    %1072 = vmax.xlane.f32.xlu0 %v1071
    %v1073 = vpop.xlane.xlu0 %1072
    %v1074 = vsel %vm1064, %v569, -inf
    %1075 = vmax.xlane.f32.xlu0 %v1074
    %v1076 = vpop.xlane.xlu0 %1075
    %v1077 = vsel %vm1064, %v572, -inf
    %1078 = vmax.xlane.f32.xlu0 %v1077
    %v1079 = vpop.xlane.xlu0 %1078
    %v1080 = vsel %vm1064, %v574, -inf
    %1081 = vmax.xlane.f32.xlu0 %v1080
    %v1082 = vpop.xlane.xlu0 %1081
    %v1083 = vsel %vm1064, %v577, -inf
    %1084 = vmax.xlane.f32.xlu0 %v1083
    %v1085 = vpop.xlane.xlu0 %1084
    %v1086 = vsel %vm1064, %v579, -inf
    %1087 = vmax.xlane.f32.xlu0 %v1086
    %v1088 = vpop.xlane.xlu0 %1087
    %v1089 = vsel %vm1064, %v631, -inf
    %1090 = vmax.xlane.f32.xlu0 %v1089
    %v1091 = vpop.xlane.xlu0 %1090
    %v1092 = vsel %vm1064, %v633, -inf
    %1093 = vmax.xlane.f32.xlu0 %v1092
    %v1094 = vpop.xlane.xlu0 %1093
    %v1095 = vsel %vm1064, %v636, -inf
    %1096 = vmax.xlane.f32.xlu0 %v1095
    %v1097 = vpop.xlane.xlu0 %1096
    %v1098 = vsel %vm1064, %v638, -inf
    %1099 = vmax.xlane.f32.xlu0 %v1098
    %v1100 = vpop.xlane.xlu0 %1099
    %v1101 = vsel %vm1064, %v641, -inf
    %1102 = vmax.xlane.f32.xlu0 %v1101
    %v1103 = vpop.xlane.xlu0 %1102
    %v1104 = vsel %vm1064, %v643, -inf
    %1105 = vmax.xlane.f32.xlu0 %v1104
    %v1106 = vpop.xlane.xlu0 %1105
    %v1107 = vsel %vm1064, %v646, -inf
    %1108 = vmax.xlane.f32.xlu0 %v1107
    %v1109 = vpop.xlane.xlu0 %1108
    %v1110 = vsel %vm1064, %v648, -inf
    %1111 = vmax.xlane.f32.xlu0 %v1110
    %v1112 = vpop.xlane.xlu0 %1111
    %v1113 = vsel %vm1064, %v700, -inf
    %1114 = vmax.xlane.f32.xlu0 %v1113
    %v1115 = vpop.xlane.xlu0 %1114
    %v1116 = vsel %vm1064, %v702, -inf
    %1117 = vmax.xlane.f32.xlu0 %v1116
    %v1118 = vpop.xlane.xlu0 %1117
    %v1119 = vsel %vm1064, %v705, -inf
    %1120 = vmax.xlane.f32.xlu0 %v1119
    %v1121 = vpop.xlane.xlu0 %1120
    %v1122 = vsel %vm1064, %v707, -inf
    %1123 = vmax.xlane.f32.xlu0 %v1122
    %v1124 = vpop.xlane.xlu0 %1123
    %v1125 = vsel %vm1064, %v710, -inf
    %1126 = vmax.xlane.f32.xlu0 %v1125
    %v1127 = vpop.xlane.xlu0 %1126
    %v1128 = vsel %vm1064, %v712, -inf
    %1129 = vmax.xlane.f32.xlu0 %v1128
    %v1130 = vpop.xlane.xlu0 %1129
    %v1131 = vsel %vm1064, %v715, -inf
    %1132 = vmax.xlane.f32.xlu0 %v1131
    %v1133 = vpop.xlane.xlu0 %1132
    %v1134 = vsel %vm1064, %v717, -inf
    %1135 = vmax.xlane.f32.xlu0 %v1134
    %v1136 = vpop.xlane.xlu0 %1135
    %v1137 = vsel %vm1064, %v769, -inf
    %1138 = vmax.xlane.f32.xlu0 %v1137
    %v1139 = vpop.xlane.xlu0 %1138
    %v1140 = vsel %vm1064, %v771, -inf
    %1141 = vmax.xlane.f32.xlu0 %v1140
    %v1142 = vpop.xlane.xlu0 %1141
    %v1143 = vsel %vm1064, %v774, -inf
    %1144 = vmax.xlane.f32.xlu0 %v1143
    %v1145 = vpop.xlane.xlu0 %1144
    %v1146 = vsel %vm1064, %v776, -inf
    %1147 = vmax.xlane.f32.xlu0 %v1146
    %v1148 = vpop.xlane.xlu0 %1147
    %v1149 = vsel %vm1064, %v779, -inf
    %1150 = vmax.xlane.f32.xlu0 %v1149
    %v1151 = vpop.xlane.xlu0 %1150
    %v1152 = vsel %vm1064, %v781, -inf
    %1153 = vmax.xlane.f32.xlu0 %v1152
    %v1154 = vpop.xlane.xlu0 %1153
    %v1155 = vsel %vm1064, %v784, -inf
    %1156 = vmax.xlane.f32.xlu0 %v1155
    %v1157 = vpop.xlane.xlu0 %1156
    %v1158 = vsel %vm1064, %v786, -inf
    %1159 = vmax.xlane.f32.xlu0 %v1158
    %v1160 = vpop.xlane.xlu0 %1159
    %v1161 = vsel %vm1064, %v838, -inf
    %1162 = vmax.xlane.f32.xlu0 %v1161
    %v1163 = vpop.xlane.xlu0 %1162
    %v1164 = vsel %vm1064, %v840, -inf
    %1165 = vmax.xlane.f32.xlu0 %v1164
    %v1166 = vpop.xlane.xlu0 %1165
    %v1167 = vsel %vm1064, %v843, -inf
    %1168 = vmax.xlane.f32.xlu0 %v1167
    %v1169 = vpop.xlane.xlu0 %1168
    %v1170 = vsel %vm1064, %v845, -inf
    %1171 = vmax.xlane.f32.xlu0 %v1170
    %v1172 = vpop.xlane.xlu0 %1171
    %v1173 = vsel %vm1064, %v848, -inf
    %1174 = vmax.xlane.f32.xlu0 %v1173
    %v1175 = vpop.xlane.xlu0 %1174
    %v1176 = vsel %vm1064, %v850, -inf
    %1177 = vmax.xlane.f32.xlu0 %v1176
    %v1178 = vpop.xlane.xlu0 %1177
    %v1179 = vsel %vm1064, %v853, -inf
    %1180 = vmax.xlane.f32.xlu0 %v1179
    %v1181 = vpop.xlane.xlu0 %1180
    %v1182 = vsel %vm1064, %v855, -inf
    %1183 = vmax.xlane.f32.xlu0 %v1182
    %v1184 = vpop.xlane.xlu0 %1183
    %v1185 = vsel %vm1064, %v907, -inf
    %1186 = vmax.xlane.f32.xlu0 %v1185
    %v1187 = vpop.xlane.xlu0 %1186
    %v1188 = vsel %vm1064, %v909, -inf
    %1189 = vmax.xlane.f32.xlu0 %v1188
    %v1190 = vpop.xlane.xlu0 %1189
    %v1191 = vsel %vm1064, %v912, -inf
    %1192 = vmax.xlane.f32.xlu0 %v1191
    %v1193 = vpop.xlane.xlu0 %1192
    %v1194 = vsel %vm1064, %v914, -inf
    %1195 = vmax.xlane.f32.xlu0 %v1194
    %v1196 = vpop.xlane.xlu0 %1195
    %v1197 = vsel %vm1064, %v917, -inf
    %1198 = vmax.xlane.f32.xlu0 %v1197
    %v1199 = vpop.xlane.xlu0 %1198
    %v1200 = vsel %vm1064, %v919, -inf
    %1201 = vmax.xlane.f32.xlu0 %v1200
    %v1202 = vpop.xlane.xlu0 %1201
    %v1203 = vsel %vm1064, %v922, -inf
    %1204 = vmax.xlane.f32.xlu0 %v1203
    %v1205 = vpop.xlane.xlu0 %1204
    %v1206 = vsel %vm1064, %v924, -inf
    %1207 = vmax.xlane.f32.xlu0 %v1206
    %v1208 = vpop.xlane.xlu0 %1207
    %v1209 = vsel %vm1064, %v976, -inf
    %1210 = vmax.xlane.f32.xlu0 %v1209
    %v1211 = vpop.xlane.xlu0 %1210
    %v1212 = vsel %vm1064, %v978, -inf
    %1213 = vmax.xlane.f32.xlu0 %v1212
    %v1214 = vpop.xlane.xlu0 %1213
    %v1215 = vsel %vm1064, %v981, -inf
    %1216 = vmax.xlane.f32.xlu0 %v1215
    %v1217 = vpop.xlane.xlu0 %1216
    %v1218 = vsel %vm1064, %v983, -inf
    %1219 = vmax.xlane.f32.xlu0 %v1218
    %v1220 = vpop.xlane.xlu0 %1219
    %v1221 = vsel %vm1064, %v986, -inf
    %1222 = vmax.xlane.f32.xlu0 %v1221
    %v1223 = vpop.xlane.xlu0 %1222
    %v1224 = vsel %vm1064, %v988, -inf
    %1225 = vmax.xlane.f32.xlu0 %v1224
    %v1226 = vpop.xlane.xlu0 %1225
    %v1227 = vsel %vm1064, %v991, -inf
    %1228 = vmax.xlane.f32.xlu0 %v1227
    %v1229 = vpop.xlane.xlu0 %1228
    %v1230 = vsel %vm1064, %v993, -inf
    %1231 = vmax.xlane.f32.xlu0 %v1230
    %v1232 = vpop.xlane.xlu0 %1231
    %v1233 = vsel %vm1064, %v1045, -inf
    %1234 = vmax.xlane.f32.xlu0 %v1233
    %v1235 = vpop.xlane.xlu0 %1234
    %v1236 = vsel %vm1064, %v1047, -inf
    %1237 = vmax.xlane.f32.xlu0 %v1236
    %v1238 = vpop.xlane.xlu0 %1237
    %v1239 = vsel %vm1064, %v1050, -inf
    %1240 = vmax.xlane.f32.xlu0 %v1239
    %v1241 = vpop.xlane.xlu0 %1240
    %v1242 = vsel %vm1064, %v1052, -inf
    %1243 = vmax.xlane.f32.xlu0 %v1242
    %v1244 = vpop.xlane.xlu0 %1243
    %v1245 = vsel %vm1064, %v1055, -inf
    %1246 = vmax.xlane.f32.xlu0 %v1245
    %v1247 = vpop.xlane.xlu0 %1246
    %v1248 = vsel %vm1064, %v1057, -inf
    %1249 = vmax.xlane.f32.xlu0 %v1248
    %v1250 = vpop.xlane.xlu0 %1249
    %v1251 = vsel %vm1064, %v1060, -inf
    %1252 = vmax.xlane.f32.xlu0 %v1251
    %v1253 = vpop.xlane.xlu0 %1252
    %v1254 = vsel %vm1064, %v1062, -inf
    %1255 = vmax.xlane.f32.xlu0 %v1254
    %v1256 = vpop.xlane.xlu0 %1255
    %v1257 = vsub.f32 %v562, %v1067
    %v1258 = vsub.f32 %v564, %v1070
    %v1259 = vsub.f32 %v567, %v1073
    %v1260 = vsub.f32 %v569, %v1076
    %v1261 = vsub.f32 %v572, %v1079
    %v1262 = vsub.f32 %v574, %v1082
    %v1263 = vsub.f32 %v577, %v1085
    %v1264 = vsub.f32 %v579, %v1088
    %v1265 = vsub.f32 %v631, %v1091
    %v1266 = vsub.f32 %v633, %v1094
    %v1267 = vsub.f32 %v636, %v1097
    %v1268 = vsub.f32 %v638, %v1100
    %v1269 = vsub.f32 %v641, %v1103
    %v1270 = vsub.f32 %v643, %v1106
    %v1271 = vsub.f32 %v646, %v1109
    %v1272 = vsub.f32 %v648, %v1112
    %v1273 = vsub.f32 %v700, %v1115
    %v1274 = vsub.f32 %v702, %v1118
    %v1275 = vsub.f32 %v705, %v1121
    %v1276 = vsub.f32 %v707, %v1124
    %v1277 = vsub.f32 %v710, %v1127
    %v1278 = vsub.f32 %v712, %v1130
    %v1279 = vsub.f32 %v715, %v1133
    %v1280 = vsub.f32 %v717, %v1136
    %v1281 = vsub.f32 %v769, %v1139
    %v1282 = vsub.f32 %v771, %v1142
    %v1283 = vsub.f32 %v774, %v1145
    %v1284 = vsub.f32 %v776, %v1148
    %v1285 = vsub.f32 %v779, %v1151
    %v1286 = vsub.f32 %v781, %v1154
    %v1287 = vsub.f32 %v784, %v1157
    %v1288 = vsub.f32 %v786, %v1160
    %v1289 = vsub.f32 %v838, %v1163
    %v1290 = vsub.f32 %v840, %v1166
    %v1291 = vsub.f32 %v843, %v1169
    %v1292 = vsub.f32 %v845, %v1172
    %v1293 = vsub.f32 %v848, %v1175
    %v1294 = vsub.f32 %v850, %v1178
    %v1295 = vsub.f32 %v853, %v1181
    %v1296 = vsub.f32 %v855, %v1184
    %v1297 = vsub.f32 %v907, %v1187
    %v1298 = vsub.f32 %v909, %v1190
    %v1299 = vsub.f32 %v912, %v1193
    %v1300 = vsub.f32 %v914, %v1196
    %v1301 = vsub.f32 %v917, %v1199
    %v1302 = vsub.f32 %v919, %v1202
    %v1303 = vsub.f32 %v922, %v1205
    %v1304 = vsub.f32 %v924, %v1208
    %v1305 = vsub.f32 %v976, %v1211
    %v1306 = vsub.f32 %v978, %v1214
    %v1307 = vsub.f32 %v981, %v1217
    %v1308 = vsub.f32 %v983, %v1220
    %v1309 = vsub.f32 %v986, %v1223
    %v1310 = vsub.f32 %v988, %v1226
    %v1311 = vsub.f32 %v991, %v1229
    %v1312 = vsub.f32 %v993, %v1232
    %v1313 = vsub.f32 %v1045, %v1235
    %v1314 = vsub.f32 %v1047, %v1238
    %v1315 = vsub.f32 %v1050, %v1241
    %v1316 = vsub.f32 %v1052, %v1244
    %v1317 = vsub.f32 %v1055, %v1247
    %v1318 = vsub.f32 %v1057, %v1250
    %v1319 = vsub.f32 %v1060, %v1253
    %v1320 = vsub.f32 %v1062, %v1256
    %v1321 = vmul.f32 %v1257, 1.442695
    %v1322 = vpow.pop %v1321
    %v1323 = vmul.f32 %v1258, 1.442695
    %v1324 = vpow.pop %v1323
    %v1325 = vmul.f32 %v1259, 1.442695
    %v1326 = vpow.pop %v1325
    %v1327 = vmul.f32 %v1260, 1.442695
    %v1328 = vpow.pop %v1327
    %v1329 = vmul.f32 %v1261, 1.442695
    %v1330 = vpow.pop %v1329
    %v1331 = vmul.f32 %v1262, 1.442695
    %v1332 = vpow.pop %v1331
    %v1333 = vmul.f32 %v1263, 1.442695
    %v1334 = vpow.pop %v1333
    %v1335 = vmul.f32 %v1264, 1.442695
    %v1336 = vpow.pop %v1335
    %v1337 = vmul.f32 %v1265, 1.442695
    %v1338 = vpow.pop %v1337
    %v1339 = vmul.f32 %v1266, 1.442695
    %v1340 = vpow.pop %v1339
    %v1341 = vmul.f32 %v1267, 1.442695
    %v1342 = vpow.pop %v1341
    %v1343 = vmul.f32 %v1268, 1.442695
    %v1344 = vpow.pop %v1343
    %v1345 = vmul.f32 %v1269, 1.442695
    %v1346 = vpow.pop %v1345
    %v1347 = vmul.f32 %v1270, 1.442695
    %v1348 = vpow.pop %v1347
    %v1349 = vmul.f32 %v1271, 1.442695
    %v1350 = vpow.pop %v1349
    %v1351 = vmul.f32 %v1272, 1.442695
    %v1352 = vpow.pop %v1351
    %v1353 = vmul.f32 %v1273, 1.442695
    %v1354 = vpow.pop %v1353
    %v1355 = vmul.f32 %v1274, 1.442695
    %v1356 = vpow.pop %v1355
    %v1357 = vmul.f32 %v1275, 1.442695
    %v1358 = vpow.pop %v1357
    %v1359 = vmul.f32 %v1276, 1.442695
    %v1360 = vpow.pop %v1359
    %v1361 = vmul.f32 %v1277, 1.442695
    %v1362 = vpow.pop %v1361
    %v1363 = vmul.f32 %v1278, 1.442695
    %v1364 = vpow.pop %v1363
    %v1365 = vmul.f32 %v1279, 1.442695
    %v1366 = vpow.pop %v1365
    %v1367 = vmul.f32 %v1280, 1.442695
    %v1368 = vpow.pop %v1367
    %v1369 = vmul.f32 %v1281, 1.442695
    %v1370 = vpow.pop %v1369
    %v1371 = vmul.f32 %v1282, 1.442695
    %v1372 = vpow.pop %v1371
    %v1373 = vmul.f32 %v1283, 1.442695
    %v1374 = vpow.pop %v1373
    %v1375 = vmul.f32 %v1284, 1.442695
    %v1376 = vpow.pop %v1375
    %v1377 = vmul.f32 %v1285, 1.442695
    %v1378 = vpow.pop %v1377
    %v1379 = vmul.f32 %v1286, 1.442695
    %v1380 = vpow.pop %v1379
    %v1381 = vmul.f32 %v1287, 1.442695
    %v1382 = vpow.pop %v1381
    %v1383 = vmul.f32 %v1288, 1.442695
    %v1384 = vpow.pop %v1383
    %v1385 = vmul.f32 %v1289, 1.442695
    %v1386 = vpow.pop %v1385
    %v1387 = vmul.f32 %v1290, 1.442695
    %v1388 = vpow.pop %v1387
    %v1389 = vmul.f32 %v1291, 1.442695
    %v1390 = vpow.pop %v1389
    %v1391 = vmul.f32 %v1292, 1.442695
    %v1392 = vpow.pop %v1391
    %v1393 = vmul.f32 %v1293, 1.442695
    %v1394 = vpow.pop %v1393
    %v1395 = vmul.f32 %v1294, 1.442695
    %v1396 = vpow.pop %v1395
    %v1397 = vmul.f32 %v1295, 1.442695
    %v1398 = vpow.pop %v1397
    %v1399 = vmul.f32 %v1296, 1.442695
    %v1400 = vpow.pop %v1399
    %v1401 = vmul.f32 %v1297, 1.442695
    %v1402 = vpow.pop %v1401
    %v1403 = vmul.f32 %v1298, 1.442695
    %v1404 = vpow.pop %v1403
    %v1405 = vmul.f32 %v1299, 1.442695
    %v1406 = vpow.pop %v1405
    %v1407 = vmul.f32 %v1300, 1.442695
    %v1408 = vpow.pop %v1407
    %v1409 = vmul.f32 %v1301, 1.442695
    %v1410 = vpow.pop %v1409
    %v1411 = vmul.f32 %v1302, 1.442695
    %v1412 = vpow.pop %v1411
    %v1413 = vmul.f32 %v1303, 1.442695
    %v1414 = vpow.pop %v1413
    %v1415 = vmul.f32 %v1304, 1.442695
    %v1416 = vpow.pop %v1415
    %v1417 = vmul.f32 %v1305, 1.442695
    %v1418 = vpow.pop %v1417
    %v1419 = vmul.f32 %v1306, 1.442695
    %v1420 = vpow.pop %v1419
    %v1421 = vmul.f32 %v1307, 1.442695
    %v1422 = vpow.pop %v1421
    %v1423 = vmul.f32 %v1308, 1.442695
    %v1424 = vpow.pop %v1423
    %v1425 = vmul.f32 %v1309, 1.442695
    %v1426 = vpow.pop %v1425
    %v1427 = vmul.f32 %v1310, 1.442695
    %v1428 = vpow.pop %v1427
    %v1429 = vmul.f32 %v1311, 1.442695
    %v1430 = vpow.pop %v1429
    %v1431 = vmul.f32 %v1312, 1.442695
    %v1432 = vpow.pop %v1431
    %v1433 = vmul.f32 %v1313, 1.442695
    %v1434 = vpow.pop %v1433
    %v1435 = vmul.f32 %v1314, 1.442695
    %v1436 = vpow.pop %v1435
    %v1437 = vmul.f32 %v1315, 1.442695
    %v1438 = vpow.pop %v1437
    %v1439 = vmul.f32 %v1316, 1.442695
    %v1440 = vpow.pop %v1439
    %v1441 = vmul.f32 %v1317, 1.442695
    %v1442 = vpow.pop %v1441
    %v1443 = vmul.f32 %v1318, 1.442695
    %v1444 = vpow.pop %v1443
    %v1445 = vmul.f32 %v1319, 1.442695
    %v1446 = vpow.pop %v1445
    %v1447 = vmul.f32 %v1320, 1.442695
    %v1448 = vpow.pop %v1447
    %v1449 = vsel %vm1064, %v1322, 0.0
    %1450 = vadd.xlane.f32.xlu0 %v1449
    %v1451 = vpop.xlane.xlu0 %1450
    %v1452 = vsel %vm1064, %v1324, 0.0
    %1453 = vadd.xlane.f32.xlu0 %v1452
    %v1454 = vpop.xlane.xlu0 %1453
    %v1455 = vsel %vm1064, %v1326, 0.0
    %1456 = vadd.xlane.f32.xlu0 %v1455
    %v1457 = vpop.xlane.xlu0 %1456
    %v1458 = vsel %vm1064, %v1328, 0.0
    %1459 = vadd.xlane.f32.xlu0 %v1458
    %v1460 = vpop.xlane.xlu0 %1459
    %v1461 = vsel %vm1064, %v1330, 0.0
    %1462 = vadd.xlane.f32.xlu0 %v1461
    %v1463 = vpop.xlane.xlu0 %1462
    %v1464 = vsel %vm1064, %v1332, 0.0
    %1465 = vadd.xlane.f32.xlu0 %v1464
    %v1466 = vpop.xlane.xlu0 %1465
    %v1467 = vsel %vm1064, %v1334, 0.0
    %1468 = vadd.xlane.f32.xlu0 %v1467
    %v1469 = vpop.xlane.xlu0 %1468
    %v1470 = vsel %vm1064, %v1336, 0.0
    %1471 = vadd.xlane.f32.xlu0 %v1470
    %v1472 = vpop.xlane.xlu0 %1471
    %v1473 = vsel %vm1064, %v1338, 0.0
    %1474 = vadd.xlane.f32.xlu0 %v1473
    %v1475 = vpop.xlane.xlu0 %1474
    %v1476 = vsel %vm1064, %v1340, 0.0
    %1477 = vadd.xlane.f32.xlu0 %v1476
    %v1478 = vpop.xlane.xlu0 %1477
    %v1479 = vsel %vm1064, %v1342, 0.0
    %1480 = vadd.xlane.f32.xlu0 %v1479
    %v1481 = vpop.xlane.xlu0 %1480
    %v1482 = vsel %vm1064, %v1344, 0.0
    %1483 = vadd.xlane.f32.xlu0 %v1482
    %v1484 = vpop.xlane.xlu0 %1483
    %v1485 = vsel %vm1064, %v1346, 0.0
    %1486 = vadd.xlane.f32.xlu0 %v1485
    %v1487 = vpop.xlane.xlu0 %1486
    %v1488 = vsel %vm1064, %v1348, 0.0
    %1489 = vadd.xlane.f32.xlu0 %v1488
    %v1490 = vpop.xlane.xlu0 %1489
    %v1491 = vsel %vm1064, %v1350, 0.0
    %1492 = vadd.xlane.f32.xlu0 %v1491
    %v1493 = vpop.xlane.xlu0 %1492
    %v1494 = vsel %vm1064, %v1352, 0.0
    %1495 = vadd.xlane.f32.xlu0 %v1494
    %v1496 = vpop.xlane.xlu0 %1495
    %v1497 = vsel %vm1064, %v1354, 0.0
    %1498 = vadd.xlane.f32.xlu0 %v1497
    %v1499 = vpop.xlane.xlu0 %1498
    %v1500 = vsel %vm1064, %v1356, 0.0
    %1501 = vadd.xlane.f32.xlu0 %v1500
    %v1502 = vpop.xlane.xlu0 %1501
    %v1503 = vsel %vm1064, %v1358, 0.0
    %1504 = vadd.xlane.f32.xlu0 %v1503
    %v1505 = vpop.xlane.xlu0 %1504
    %v1506 = vsel %vm1064, %v1360, 0.0
    %1507 = vadd.xlane.f32.xlu0 %v1506
    %v1508 = vpop.xlane.xlu0 %1507
    %v1509 = vsel %vm1064, %v1362, 0.0
    %1510 = vadd.xlane.f32.xlu0 %v1509
    %v1511 = vpop.xlane.xlu0 %1510
    %v1512 = vsel %vm1064, %v1364, 0.0
    %1513 = vadd.xlane.f32.xlu0 %v1512
    %v1514 = vpop.xlane.xlu0 %1513
    %v1515 = vsel %vm1064, %v1366, 0.0
    %1516 = vadd.xlane.f32.xlu0 %v1515
    %v1517 = vpop.xlane.xlu0 %1516
    %v1518 = vsel %vm1064, %v1368, 0.0
    %1519 = vadd.xlane.f32.xlu0 %v1518
    %v1520 = vpop.xlane.xlu0 %1519
    %v1521 = vsel %vm1064, %v1370, 0.0
    %1522 = vadd.xlane.f32.xlu0 %v1521
    %v1523 = vpop.xlane.xlu0 %1522
    %v1524 = vsel %vm1064, %v1372, 0.0
    %1525 = vadd.xlane.f32.xlu0 %v1524
    %v1526 = vpop.xlane.xlu0 %1525
    %v1527 = vsel %vm1064, %v1374, 0.0
    %1528 = vadd.xlane.f32.xlu0 %v1527
    %v1529 = vpop.xlane.xlu0 %1528
    %v1530 = vsel %vm1064, %v1376, 0.0
    %1531 = vadd.xlane.f32.xlu0 %v1530
    %v1532 = vpop.xlane.xlu0 %1531
    %v1533 = vsel %vm1064, %v1378, 0.0
    %1534 = vadd.xlane.f32.xlu0 %v1533
    %v1535 = vpop.xlane.xlu0 %1534
    %v1536 = vsel %vm1064, %v1380, 0.0
    %1537 = vadd.xlane.f32.xlu0 %v1536
    %v1538 = vpop.xlane.xlu0 %1537
    %v1539 = vsel %vm1064, %v1382, 0.0
    %1540 = vadd.xlane.f32.xlu0 %v1539
    %v1541 = vpop.xlane.xlu0 %1540
    %v1542 = vsel %vm1064, %v1384, 0.0
    %1543 = vadd.xlane.f32.xlu0 %v1542
    %v1544 = vpop.xlane.xlu0 %1543
    %v1545 = vsel %vm1064, %v1386, 0.0
    %1546 = vadd.xlane.f32.xlu0 %v1545
    %v1547 = vpop.xlane.xlu0 %1546
    %v1548 = vsel %vm1064, %v1388, 0.0
    %1549 = vadd.xlane.f32.xlu0 %v1548
    %v1550 = vpop.xlane.xlu0 %1549
    %v1551 = vsel %vm1064, %v1390, 0.0
    %1552 = vadd.xlane.f32.xlu0 %v1551
    %v1553 = vpop.xlane.xlu0 %1552
    %v1554 = vsel %vm1064, %v1392, 0.0
    %1555 = vadd.xlane.f32.xlu0 %v1554
    %v1556 = vpop.xlane.xlu0 %1555
    %v1557 = vsel %vm1064, %v1394, 0.0
    %1558 = vadd.xlane.f32.xlu0 %v1557
    %v1559 = vpop.xlane.xlu0 %1558
    %v1560 = vsel %vm1064, %v1396, 0.0
    %1561 = vadd.xlane.f32.xlu0 %v1560
    %v1562 = vpop.xlane.xlu0 %1561
    %v1563 = vsel %vm1064, %v1398, 0.0
    %1564 = vadd.xlane.f32.xlu0 %v1563
    %v1565 = vpop.xlane.xlu0 %1564
    %v1566 = vsel %vm1064, %v1400, 0.0
    %1567 = vadd.xlane.f32.xlu0 %v1566
    %v1568 = vpop.xlane.xlu0 %1567
    %v1569 = vsel %vm1064, %v1402, 0.0
    %1570 = vadd.xlane.f32.xlu0 %v1569
    %v1571 = vpop.xlane.xlu0 %1570
    %v1572 = vsel %vm1064, %v1404, 0.0
    %1573 = vadd.xlane.f32.xlu0 %v1572
    %v1574 = vpop.xlane.xlu0 %1573
    %v1575 = vsel %vm1064, %v1406, 0.0
    %1576 = vadd.xlane.f32.xlu0 %v1575
    %v1577 = vpop.xlane.xlu0 %1576
    %v1578 = vsel %vm1064, %v1408, 0.0
    %1579 = vadd.xlane.f32.xlu0 %v1578
    %v1580 = vpop.xlane.xlu0 %1579
    %v1581 = vsel %vm1064, %v1410, 0.0
    %1582 = vadd.xlane.f32.xlu0 %v1581
    %v1583 = vpop.xlane.xlu0 %1582
    %v1584 = vsel %vm1064, %v1412, 0.0
    %1585 = vadd.xlane.f32.xlu0 %v1584
    %v1586 = vpop.xlane.xlu0 %1585
    %v1587 = vsel %vm1064, %v1414, 0.0
    %1588 = vadd.xlane.f32.xlu0 %v1587
    %v1589 = vpop.xlane.xlu0 %1588
    %v1590 = vsel %vm1064, %v1416, 0.0
    %1591 = vadd.xlane.f32.xlu0 %v1590
    %v1592 = vpop.xlane.xlu0 %1591
    %v1593 = vsel %vm1064, %v1418, 0.0
    %1594 = vadd.xlane.f32.xlu0 %v1593
    %v1595 = vpop.xlane.xlu0 %1594
    %v1596 = vsel %vm1064, %v1420, 0.0
    %1597 = vadd.xlane.f32.xlu0 %v1596
    %v1598 = vpop.xlane.xlu0 %1597
    %v1599 = vsel %vm1064, %v1422, 0.0
    %1600 = vadd.xlane.f32.xlu0 %v1599
    %v1601 = vpop.xlane.xlu0 %1600
    %v1602 = vsel %vm1064, %v1424, 0.0
    %1603 = vadd.xlane.f32.xlu0 %v1602
    %v1604 = vpop.xlane.xlu0 %1603
    %v1605 = vsel %vm1064, %v1426, 0.0
    %1606 = vadd.xlane.f32.xlu0 %v1605
    %v1607 = vpop.xlane.xlu0 %1606
    %v1608 = vsel %vm1064, %v1428, 0.0
    %1609 = vadd.xlane.f32.xlu0 %v1608
    %v1610 = vpop.xlane.xlu0 %1609
    %v1611 = vsel %vm1064, %v1430, 0.0
    %1612 = vadd.xlane.f32.xlu0 %v1611
    %v1613 = vpop.xlane.xlu0 %1612
    %v1614 = vsel %vm1064, %v1432, 0.0
    %1615 = vadd.xlane.f32.xlu0 %v1614
    %v1616 = vpop.xlane.xlu0 %1615
    %v1617 = vsel %vm1064, %v1434, 0.0
    %1618 = vadd.xlane.f32.xlu0 %v1617
    %v1619 = vpop.xlane.xlu0 %1618
    %v1620 = vsel %vm1064, %v1436, 0.0
    %1621 = vadd.xlane.f32.xlu0 %v1620
    %v1622 = vpop.xlane.xlu0 %1621
    %v1623 = vsel %vm1064, %v1438, 0.0
    %1624 = vadd.xlane.f32.xlu0 %v1623
    %v1625 = vpop.xlane.xlu0 %1624
    %v1626 = vsel %vm1064, %v1440, 0.0
    %1627 = vadd.xlane.f32.xlu0 %v1626
    %v1628 = vpop.xlane.xlu0 %1627
    %v1629 = vsel %vm1064, %v1442, 0.0
    %1630 = vadd.xlane.f32.xlu0 %v1629
    %v1631 = vpop.xlane.xlu0 %1630
    %v1632 = vsel %vm1064, %v1444, 0.0
    %1633 = vadd.xlane.f32.xlu0 %v1632
    %v1634 = vpop.xlane.xlu0 %1633
    %v1635 = vsel %vm1064, %v1446, 0.0
    %1636 = vadd.xlane.f32.xlu0 %v1635
    %v1637 = vpop.xlane.xlu0 %1636
    %v1638 = vsel %vm1064, %v1448, 0.0
    %1639 = vadd.xlane.f32.xlu0 %v1638
    %v1640 = vpop.xlane.xlu0 %1639
    %v1641 = vrcp.pop %v1451
    %v1642 = vrcp.pop %v1454
    %v1643 = vrcp.pop %v1457
    %v1644 = vrcp.pop %v1460
    %v1645 = vrcp.pop %v1463
    %v1646 = vrcp.pop %v1466
    %v1647 = vrcp.pop %v1469
    %v1648 = vrcp.pop %v1472
    %v1649 = vrcp.pop %v1475
    %v1650 = vrcp.pop %v1478
    %v1651 = vrcp.pop %v1481
    %v1652 = vrcp.pop %v1484
    %v1653 = vrcp.pop %v1487
    %v1654 = vrcp.pop %v1490
    %v1655 = vrcp.pop %v1493
    %v1656 = vrcp.pop %v1496
    %v1657 = vrcp.pop %v1499
    %v1658 = vrcp.pop %v1502
    %v1659 = vrcp.pop %v1505
    %v1660 = vrcp.pop %v1508
    %v1661 = vrcp.pop %v1511
    %v1662 = vrcp.pop %v1514
    %v1663 = vrcp.pop %v1517
    %v1664 = vrcp.pop %v1520
    %v1665 = vrcp.pop %v1523
    %v1666 = vrcp.pop %v1526
    %v1667 = vrcp.pop %v1529
    %v1668 = vrcp.pop %v1532
    %v1669 = vrcp.pop %v1535
    %v1670 = vrcp.pop %v1538
    %v1671 = vrcp.pop %v1541
    %v1672 = vrcp.pop %v1544
    %v1673 = vrcp.pop %v1547
    %v1674 = vrcp.pop %v1550
    %v1675 = vrcp.pop %v1553
    %v1676 = vrcp.pop %v1556
    %v1677 = vrcp.pop %v1559
    %v1678 = vrcp.pop %v1562
    %v1679 = vrcp.pop %v1565
    %v1680 = vrcp.pop %v1568
    %v1681 = vrcp.pop %v1571
    %v1682 = vrcp.pop %v1574
    %v1683 = vrcp.pop %v1577
    %v1684 = vrcp.pop %v1580
    %v1685 = vrcp.pop %v1583
    %v1686 = vrcp.pop %v1586
    %v1687 = vrcp.pop %v1589
    %v1688 = vrcp.pop %v1592
    %v1689 = vrcp.pop %v1595
    %v1690 = vrcp.pop %v1598
    %v1691 = vrcp.pop %v1601
    %v1692 = vrcp.pop %v1604
    %v1693 = vrcp.pop %v1607
    %v1694 = vrcp.pop %v1610
    %v1695 = vrcp.pop %v1613
    %v1696 = vrcp.pop %v1616
    %v1697 = vrcp.pop %v1619
    %v1698 = vrcp.pop %v1622
    %v1699 = vrcp.pop %v1625
    %v1700 = vrcp.pop %v1628
    %v1701 = vrcp.pop %v1631
    %v1702 = vrcp.pop %v1634
    %v1703 = vrcp.pop %v1637
    %v1704 = vrcp.pop %v1640
    %v1705 = vmul.f32 %v1322, %v1641
    %v1706 = vmul.f32 %v1324, %v1642
    %v1707 = vmul.f32 %v1326, %v1643
    %v1708 = vmul.f32 %v1328, %v1644
    %v1709 = vmul.f32 %v1330, %v1645
    %v1710 = vmul.f32 %v1332, %v1646
    %v1711 = vmul.f32 %v1334, %v1647
    %v1712 = vmul.f32 %v1336, %v1648
    %v1713 = vmul.f32 %v1338, %v1649
    %v1714 = vmul.f32 %v1340, %v1650
    %v1715 = vmul.f32 %v1342, %v1651
    %v1716 = vmul.f32 %v1344, %v1652
    %v1717 = vmul.f32 %v1346, %v1653
    %v1718 = vmul.f32 %v1348, %v1654
    %v1719 = vmul.f32 %v1350, %v1655
    %v1720 = vmul.f32 %v1352, %v1656
    %v1721 = vmul.f32 %v1354, %v1657
    %v1722 = vmul.f32 %v1356, %v1658
    %v1723 = vmul.f32 %v1358, %v1659
    %v1724 = vmul.f32 %v1360, %v1660
    %v1725 = vmul.f32 %v1362, %v1661
    %v1726 = vmul.f32 %v1364, %v1662
    %v1727 = vmul.f32 %v1366, %v1663
    %v1728 = vmul.f32 %v1368, %v1664
    %v1729 = vmul.f32 %v1370, %v1665
    %v1730 = vmul.f32 %v1372, %v1666
    %v1731 = vmul.f32 %v1374, %v1667
    %v1732 = vmul.f32 %v1376, %v1668
    %v1733 = vmul.f32 %v1378, %v1669
    %v1734 = vmul.f32 %v1380, %v1670
    %v1735 = vmul.f32 %v1382, %v1671
    %v1736 = vmul.f32 %v1384, %v1672
    %v1737 = vmul.f32 %v1386, %v1673
    %v1738 = vmul.f32 %v1388, %v1674
    %v1739 = vmul.f32 %v1390, %v1675
    %v1740 = vmul.f32 %v1392, %v1676
    %v1741 = vmul.f32 %v1394, %v1677
    %v1742 = vmul.f32 %v1396, %v1678
    %v1743 = vmul.f32 %v1398, %v1679
    %v1744 = vmul.f32 %v1400, %v1680
    %v1745 = vmul.f32 %v1402, %v1681
    %v1746 = vmul.f32 %v1404, %v1682
    %v1747 = vmul.f32 %v1406, %v1683
    %v1748 = vmul.f32 %v1408, %v1684
    %v1749 = vmul.f32 %v1410, %v1685
    %v1750 = vmul.f32 %v1412, %v1686
    %v1751 = vmul.f32 %v1414, %v1687
    %v1752 = vmul.f32 %v1416, %v1688
    %v1753 = vmul.f32 %v1418, %v1689
    %v1754 = vmul.f32 %v1420, %v1690
    %v1755 = vmul.f32 %v1422, %v1691
    %v1756 = vmul.f32 %v1424, %v1692
    %v1757 = vmul.f32 %v1426, %v1693
    %v1758 = vmul.f32 %v1428, %v1694
    %v1759 = vmul.f32 %v1430, %v1695
    %v1760 = vmul.f32 %v1432, %v1696
    %v1761 = vmul.f32 %v1434, %v1697
    %v1762 = vmul.f32 %v1436, %v1698
    %v1763 = vmul.f32 %v1438, %v1699
    %v1764 = vmul.f32 %v1440, %v1700
    %v1765 = vmul.f32 %v1442, %v1701
    %v1766 = vmul.f32 %v1444, %v1702
    %v1767 = vmul.f32 %v1446, %v1703
    %v1768 = vmul.f32 %v1448, %v1704
    %v1769 = vpack.c.bf16 %v1705, %v1705
    %v1770 = vpack.c.bf16 %v1706, %v1706
    %v1771 = vpack.c.bf16 %v1707, %v1707
    %v1772 = vpack.c.bf16 %v1708, %v1708
    %v1773 = vpack.c.bf16 %v1709, %v1709
    %v1774 = vpack.c.bf16 %v1710, %v1710
    %v1775 = vpack.c.bf16 %v1711, %v1711
    %v1776 = vpack.c.bf16 %v1712, %v1712
    %v1777 = vpack.c.bf16 %v1713, %v1713
    %v1778 = vpack.c.bf16 %v1714, %v1714
    %v1779 = vpack.c.bf16 %v1715, %v1715
    %v1780 = vpack.c.bf16 %v1716, %v1716
    %v1781 = vpack.c.bf16 %v1717, %v1717
    %v1782 = vpack.c.bf16 %v1718, %v1718
    %v1783 = vpack.c.bf16 %v1719, %v1719
    %v1784 = vpack.c.bf16 %v1720, %v1720
    %v1785 = vpack.c.bf16 %v1721, %v1721
    %v1786 = vpack.c.bf16 %v1722, %v1722
    %v1787 = vpack.c.bf16 %v1723, %v1723
    %v1788 = vpack.c.bf16 %v1724, %v1724
    %v1789 = vpack.c.bf16 %v1725, %v1725
    %v1790 = vpack.c.bf16 %v1726, %v1726
    %v1791 = vpack.c.bf16 %v1727, %v1727
    %v1792 = vpack.c.bf16 %v1728, %v1728
    %v1793 = vpack.c.bf16 %v1729, %v1729
    %v1794 = vpack.c.bf16 %v1730, %v1730
    %v1795 = vpack.c.bf16 %v1731, %v1731
    %v1796 = vpack.c.bf16 %v1732, %v1732
    %v1797 = vpack.c.bf16 %v1733, %v1733
    %v1798 = vpack.c.bf16 %v1734, %v1734
    %v1799 = vpack.c.bf16 %v1735, %v1735
    %v1800 = vpack.c.bf16 %v1736, %v1736
    %v1801 = vpack.c.bf16 %v1737, %v1737
    %v1802 = vpack.c.bf16 %v1738, %v1738
    %v1803 = vpack.c.bf16 %v1739, %v1739
    %v1804 = vpack.c.bf16 %v1740, %v1740
    %v1805 = vpack.c.bf16 %v1741, %v1741
    %v1806 = vpack.c.bf16 %v1742, %v1742
    %v1807 = vpack.c.bf16 %v1743, %v1743
    %v1808 = vpack.c.bf16 %v1744, %v1744
    %v1809 = vpack.c.bf16 %v1745, %v1745
    %v1810 = vpack.c.bf16 %v1746, %v1746
    %v1811 = vpack.c.bf16 %v1747, %v1747
    %v1812 = vpack.c.bf16 %v1748, %v1748
    %v1813 = vpack.c.bf16 %v1749, %v1749
    %v1814 = vpack.c.bf16 %v1750, %v1750
    %v1815 = vpack.c.bf16 %v1751, %v1751
    %v1816 = vpack.c.bf16 %v1752, %v1752
    %v1817 = vpack.c.bf16 %v1753, %v1753
    %v1818 = vpack.c.bf16 %v1754, %v1754
    %v1819 = vpack.c.bf16 %v1755, %v1755
    %v1820 = vpack.c.bf16 %v1756, %v1756
    %v1821 = vpack.c.bf16 %v1757, %v1757
    %v1822 = vpack.c.bf16 %v1758, %v1758
    %v1823 = vpack.c.bf16 %v1759, %v1759
    %v1824 = vpack.c.bf16 %v1760, %v1760
    %v1825 = vpack.c.bf16 %v1761, %v1761
    %v1826 = vpack.c.bf16 %v1762, %v1762
    %v1827 = vpack.c.bf16 %v1763, %v1763
    %v1828 = vpack.c.bf16 %v1764, %v1764
    %v1829 = vpack.c.bf16 %v1765, %v1765
    %v1830 = vpack.c.bf16 %v1766, %v1766
    %v1831 = vpack.c.bf16 %v1767, %v1767
    %v1832 = vpack.c.bf16 %v1768, %v1768
    %v1841 = vunpack.c.l.b16 %v1769
    %v1842 = vunpack.c.l.b16 %v1770
    %v1843 = vunpack.c.l.b16 %v1771
    %v1844 = vunpack.c.l.b16 %v1772
    %v1845 = vunpack.c.l.b16 %v1773
    %v1846 = vunpack.c.l.b16 %v1774
    %v1847 = vunpack.c.l.b16 %v1775
    %v1848 = vunpack.c.l.b16 %v1776
    %v1849 = vpack.c.b16 %v1842, %v1841
    %v1850 = vpack.c.b16 %v1844, %v1843
    %v1851 = vpack.c.b16 %v1846, %v1845
    %v1852 = vpack.c.b16 %v1848, %v1847
    %v1861 = vunpack.c.l.b16 %v479
    %v1862 = vunpack.c.l.b16 %v480
    %v1863 = vunpack.c.l.b16 %v481
    %v1864 = vunpack.c.l.b16 %v482
    %v1865 = vunpack.c.l.b16 %v483
    %v1866 = vunpack.c.l.b16 %v484
    %v1867 = vunpack.c.l.b16 %v485
    %v1868 = vunpack.c.l.b16 %v486
    %v1869 = vpack.c.b16 %v1862, %v1861
    %v1870 = vpack.c.b16 %v1864, %v1863
    %v1871 = vpack.c.b16 %v1866, %v1865
    %v1872 = vpack.c.b16 %v1868, %v1867
    %v1878 = vsel %vm1064, %v1849, 0
    %v1881 = vsel %vm1064, %v1850, 0
    %v1884 = vsel %vm1064, %v1851, 0
    %v1887 = vsel %vm1064, %v1852, 0
    %1889 = vmatpush.bf16.msra.mxu0 0
    %1890 = vmatpush.bf16.msra.mxu0 0
    %1891 = vmatpush.bf16.msra.mxu0 0
    %1892 = vmatpush.bf16.msra.mxu0 0
    %1893 = vmatpush.bf16.msra.mxu0 %v1872
    %1894 = vmatpush.bf16.msra.mxu0 %v1871
    %1895 = vmatpush.bf16.msra.mxu0 %v1870
    %1896 = vmatpush.bf16.msra.mxu0 %v1869
    %1897 = vmatmul.bf16.gmra.mxu0 %v1878
    %v1898 = vpop.f32.mrf.mxu0
    %v1899 = vadd.f32 0.0, %v1898
    %v1900 = vpop.f32.mrf.mxu0
    %v1901 = vadd.f32 0.0, %v1900
    %1902 = vmatmul.bf16.gmra.mxu0 %v1881
    %v1903 = vpop.f32.mrf.mxu0
    %v1904 = vadd.f32 0.0, %v1903
    %v1905 = vpop.f32.mrf.mxu0
    %v1906 = vadd.f32 0.0, %v1905
    %1907 = vmatmul.bf16.gmra.mxu0 %v1884
    %v1908 = vpop.f32.mrf.mxu0
    %v1909 = vadd.f32 0.0, %v1908
    %v1910 = vpop.f32.mrf.mxu0
    %v1911 = vadd.f32 0.0, %v1910
    %1912 = vmatmul.bf16.gmra.mxu0 %v1887
    %v1913 = vpop.f32.mrf.mxu0
    %v1914 = vadd.f32 0.0, %v1913
    %v1915 = vpop.f32.mrf.mxu0
    %v1916 = vadd.f32 0.0, %v1915
    %1917 = vdwg.mxu0
    %v1926 = vunpack.c.l.b16 %v1777
    %v1927 = vunpack.c.l.b16 %v1778
    %v1928 = vunpack.c.l.b16 %v1779
    %v1929 = vunpack.c.l.b16 %v1780
    %v1930 = vunpack.c.l.b16 %v1781
    %v1931 = vunpack.c.l.b16 %v1782
    %v1932 = vunpack.c.l.b16 %v1783
    %v1933 = vunpack.c.l.b16 %v1784
    %v1934 = vpack.c.b16 %v1927, %v1926
    %v1935 = vpack.c.b16 %v1929, %v1928
    %v1936 = vpack.c.b16 %v1931, %v1930
    %v1937 = vpack.c.b16 %v1933, %v1932
    %1938 = vrot.lane.b32.xlu0 %v1869, 112
    %v1939 = vpop.permute.xlu0 %1938
    %1940 = vrot.lane.b32.xlu0 %v1870, 112
    %v1941 = vpop.permute.xlu0 %1940
    %1942 = vrot.lane.b32.xlu0 %v1871, 112
    %v1943 = vpop.permute.xlu0 %1942
    %1944 = vrot.lane.b32.xlu0 %v1872, 112
    %v1945 = vpop.permute.xlu0 %1944
    %v1951 = vsel %vm1064, %v1934, 0
    %v1954 = vsel %vm1064, %v1935, 0
    %v1957 = vsel %vm1064, %v1936, 0
    %v1960 = vsel %vm1064, %v1937, 0
    %1962 = vmatpush.bf16.msra.mxu0 0
    %1963 = vmatpush.bf16.msra.mxu0 0
    %1964 = vmatpush.bf16.msra.mxu0 0
    %1965 = vmatpush.bf16.msra.mxu0 0
    %1966 = vmatpush.bf16.msra.mxu0 %v1945
    %1967 = vmatpush.bf16.msra.mxu0 %v1943
    %1968 = vmatpush.bf16.msra.mxu0 %v1941
    %1969 = vmatpush.bf16.msra.mxu0 %v1939
    %1970 = vmatmul.bf16.gmra.mxu0 %v1951
    %v1971 = vpop.f32.mrf.mxu0
    %v1972 = vadd.f32 0.0, %v1971
    %v1973 = vpop.f32.mrf.mxu0
    %v1974 = vadd.f32 0.0, %v1973
    %1975 = vmatmul.bf16.gmra.mxu0 %v1954
    %v1976 = vpop.f32.mrf.mxu0
    %v1977 = vadd.f32 0.0, %v1976
    %v1978 = vpop.f32.mrf.mxu0
    %v1979 = vadd.f32 0.0, %v1978
    %1980 = vmatmul.bf16.gmra.mxu0 %v1957
    %v1981 = vpop.f32.mrf.mxu0
    %v1982 = vadd.f32 0.0, %v1981
    %v1983 = vpop.f32.mrf.mxu0
    %v1984 = vadd.f32 0.0, %v1983
    %1985 = vmatmul.bf16.gmra.mxu0 %v1960
    %v1986 = vpop.f32.mrf.mxu0
    %v1987 = vadd.f32 0.0, %v1986
    %v1988 = vpop.f32.mrf.mxu0
    %v1989 = vadd.f32 0.0, %v1988
    %1990 = vdwg.mxu0
    %v1999 = vunpack.c.l.b16 %v1785
    %v2000 = vunpack.c.l.b16 %v1786
    %v2001 = vunpack.c.l.b16 %v1787
    %v2002 = vunpack.c.l.b16 %v1788
    %v2003 = vunpack.c.l.b16 %v1789
    %v2004 = vunpack.c.l.b16 %v1790
    %v2005 = vunpack.c.l.b16 %v1791
    %v2006 = vunpack.c.l.b16 %v1792
    %v2007 = vpack.c.b16 %v2000, %v1999
    %v2008 = vpack.c.b16 %v2002, %v2001
    %v2009 = vpack.c.b16 %v2004, %v2003
    %v2010 = vpack.c.b16 %v2006, %v2005
    %2011 = vrot.lane.b32.xlu0 %v1869, 96
    %v2012 = vpop.permute.xlu0 %2011
    %2013 = vrot.lane.b32.xlu0 %v1870, 96
    %v2014 = vpop.permute.xlu0 %2013
    %2015 = vrot.lane.b32.xlu0 %v1871, 96
    %v2016 = vpop.permute.xlu0 %2015
    %2017 = vrot.lane.b32.xlu0 %v1872, 96
    %v2018 = vpop.permute.xlu0 %2017
    %v2024 = vsel %vm1064, %v2007, 0
    %v2027 = vsel %vm1064, %v2008, 0
    %v2030 = vsel %vm1064, %v2009, 0
    %v2033 = vsel %vm1064, %v2010, 0
    %2035 = vmatpush.bf16.msra.mxu0 0
    %2036 = vmatpush.bf16.msra.mxu0 0
    %2037 = vmatpush.bf16.msra.mxu0 0
    %2038 = vmatpush.bf16.msra.mxu0 0
    %2039 = vmatpush.bf16.msra.mxu0 %v2018
    %2040 = vmatpush.bf16.msra.mxu0 %v2016
    %2041 = vmatpush.bf16.msra.mxu0 %v2014
    %2042 = vmatpush.bf16.msra.mxu0 %v2012
    %2043 = vmatmul.bf16.gmra.mxu0 %v2024
    %v2044 = vpop.f32.mrf.mxu0
    %v2045 = vadd.f32 0.0, %v2044
    %v2046 = vpop.f32.mrf.mxu0
    %v2047 = vadd.f32 0.0, %v2046
    %2048 = vmatmul.bf16.gmra.mxu0 %v2027
    %v2049 = vpop.f32.mrf.mxu0
    %v2050 = vadd.f32 0.0, %v2049
    %v2051 = vpop.f32.mrf.mxu0
    %v2052 = vadd.f32 0.0, %v2051
    %2053 = vmatmul.bf16.gmra.mxu0 %v2030
    %v2054 = vpop.f32.mrf.mxu0
    %v2055 = vadd.f32 0.0, %v2054
    %v2056 = vpop.f32.mrf.mxu0
    %v2057 = vadd.f32 0.0, %v2056
    %2058 = vmatmul.bf16.gmra.mxu0 %v2033
    %v2059 = vpop.f32.mrf.mxu0
    %v2060 = vadd.f32 0.0, %v2059
    %v2061 = vpop.f32.mrf.mxu0
    %v2062 = vadd.f32 0.0, %v2061
    %2063 = vdwg.mxu0
    %v2072 = vunpack.c.l.b16 %v1793
    %v2073 = vunpack.c.l.b16 %v1794
    %v2074 = vunpack.c.l.b16 %v1795
    %v2075 = vunpack.c.l.b16 %v1796
    %v2076 = vunpack.c.l.b16 %v1797
    %v2077 = vunpack.c.l.b16 %v1798
    %v2078 = vunpack.c.l.b16 %v1799
    %v2079 = vunpack.c.l.b16 %v1800
    %v2080 = vpack.c.b16 %v2073, %v2072
    %v2081 = vpack.c.b16 %v2075, %v2074
    %v2082 = vpack.c.b16 %v2077, %v2076
    %v2083 = vpack.c.b16 %v2079, %v2078
    %2084 = vrot.lane.b32.xlu0 %v1869, 80
    %v2085 = vpop.permute.xlu0 %2084
    %2086 = vrot.lane.b32.xlu0 %v1870, 80
    %v2087 = vpop.permute.xlu0 %2086
    %2088 = vrot.lane.b32.xlu0 %v1871, 80
    %v2089 = vpop.permute.xlu0 %2088
    %2090 = vrot.lane.b32.xlu0 %v1872, 80
    %v2091 = vpop.permute.xlu0 %2090
    %v2097 = vsel %vm1064, %v2080, 0
    %v2100 = vsel %vm1064, %v2081, 0
    %v2103 = vsel %vm1064, %v2082, 0
    %v2106 = vsel %vm1064, %v2083, 0
    %2108 = vmatpush.bf16.msra.mxu0 0
    %2109 = vmatpush.bf16.msra.mxu0 0
    %2110 = vmatpush.bf16.msra.mxu0 0
    %2111 = vmatpush.bf16.msra.mxu0 0
    %2112 = vmatpush.bf16.msra.mxu0 %v2091
    %2113 = vmatpush.bf16.msra.mxu0 %v2089
    %2114 = vmatpush.bf16.msra.mxu0 %v2087
    %2115 = vmatpush.bf16.msra.mxu0 %v2085
    %2116 = vmatmul.bf16.gmra.mxu0 %v2097
    %v2117 = vpop.f32.mrf.mxu0
    %v2118 = vadd.f32 0.0, %v2117
    %v2119 = vpop.f32.mrf.mxu0
    %v2120 = vadd.f32 0.0, %v2119
    %2121 = vmatmul.bf16.gmra.mxu0 %v2100
    %v2122 = vpop.f32.mrf.mxu0
    %v2123 = vadd.f32 0.0, %v2122
    %v2124 = vpop.f32.mrf.mxu0
    %v2125 = vadd.f32 0.0, %v2124
    %2126 = vmatmul.bf16.gmra.mxu0 %v2103
    %v2127 = vpop.f32.mrf.mxu0
    %v2128 = vadd.f32 0.0, %v2127
    %v2129 = vpop.f32.mrf.mxu0
    %v2130 = vadd.f32 0.0, %v2129
    %2131 = vmatmul.bf16.gmra.mxu0 %v2106
    %v2132 = vpop.f32.mrf.mxu0
    %v2133 = vadd.f32 0.0, %v2132
    %v2134 = vpop.f32.mrf.mxu0
    %v2135 = vadd.f32 0.0, %v2134
    %2136 = vdwg.mxu0
    %v2145 = vunpack.c.l.b16 %v1801
    %v2146 = vunpack.c.l.b16 %v1802
    %v2147 = vunpack.c.l.b16 %v1803
    %v2148 = vunpack.c.l.b16 %v1804
    %v2149 = vunpack.c.l.b16 %v1805
    %v2150 = vunpack.c.l.b16 %v1806
    %v2151 = vunpack.c.l.b16 %v1807
    %v2152 = vunpack.c.l.b16 %v1808
    %v2153 = vpack.c.b16 %v2146, %v2145
    %v2154 = vpack.c.b16 %v2148, %v2147
    %v2155 = vpack.c.b16 %v2150, %v2149
    %v2156 = vpack.c.b16 %v2152, %v2151
    %2157 = vrot.lane.b32.xlu0 %v1869, 64
    %v2158 = vpop.permute.xlu0 %2157
    %2159 = vrot.lane.b32.xlu0 %v1870, 64
    %v2160 = vpop.permute.xlu0 %2159
    %2161 = vrot.lane.b32.xlu0 %v1871, 64
    %v2162 = vpop.permute.xlu0 %2161
    %2163 = vrot.lane.b32.xlu0 %v1872, 64
    %v2164 = vpop.permute.xlu0 %2163
    %v2170 = vsel %vm1064, %v2153, 0
    %v2173 = vsel %vm1064, %v2154, 0
    %v2176 = vsel %vm1064, %v2155, 0
    %v2179 = vsel %vm1064, %v2156, 0
    %2181 = vmatpush.bf16.msra.mxu0 0
    %2182 = vmatpush.bf16.msra.mxu0 0
    %2183 = vmatpush.bf16.msra.mxu0 0
    %2184 = vmatpush.bf16.msra.mxu0 0
    %2185 = vmatpush.bf16.msra.mxu0 %v2164
    %2186 = vmatpush.bf16.msra.mxu0 %v2162
    %2187 = vmatpush.bf16.msra.mxu0 %v2160
    %2188 = vmatpush.bf16.msra.mxu0 %v2158
    %2189 = vmatmul.bf16.gmra.mxu0 %v2170
    %v2190 = vpop.f32.mrf.mxu0
    %v2191 = vadd.f32 0.0, %v2190
    %v2192 = vpop.f32.mrf.mxu0
    %v2193 = vadd.f32 0.0, %v2192
    %2194 = vmatmul.bf16.gmra.mxu0 %v2173
    %v2195 = vpop.f32.mrf.mxu0
    %v2196 = vadd.f32 0.0, %v2195
    %v2197 = vpop.f32.mrf.mxu0
    %v2198 = vadd.f32 0.0, %v2197
    %2199 = vmatmul.bf16.gmra.mxu0 %v2176
    %v2200 = vpop.f32.mrf.mxu0
    %v2201 = vadd.f32 0.0, %v2200
    %v2202 = vpop.f32.mrf.mxu0
    %v2203 = vadd.f32 0.0, %v2202
    %2204 = vmatmul.bf16.gmra.mxu0 %v2179
    %v2205 = vpop.f32.mrf.mxu0
    %v2206 = vadd.f32 0.0, %v2205
    %v2207 = vpop.f32.mrf.mxu0
    %v2208 = vadd.f32 0.0, %v2207
    %2209 = vdwg.mxu0
    %v2218 = vunpack.c.l.b16 %v1809
    %v2219 = vunpack.c.l.b16 %v1810
    %v2220 = vunpack.c.l.b16 %v1811
    %v2221 = vunpack.c.l.b16 %v1812
    %v2222 = vunpack.c.l.b16 %v1813
    %v2223 = vunpack.c.l.b16 %v1814
    %v2224 = vunpack.c.l.b16 %v1815
    %v2225 = vunpack.c.l.b16 %v1816
    %v2226 = vpack.c.b16 %v2219, %v2218
    %v2227 = vpack.c.b16 %v2221, %v2220
    %v2228 = vpack.c.b16 %v2223, %v2222
    %v2229 = vpack.c.b16 %v2225, %v2224
    %2230 = vrot.lane.b32.xlu0 %v1869, 48
    %v2231 = vpop.permute.xlu0 %2230
    %2232 = vrot.lane.b32.xlu0 %v1870, 48
    %v2233 = vpop.permute.xlu0 %2232
    %2234 = vrot.lane.b32.xlu0 %v1871, 48
    %v2235 = vpop.permute.xlu0 %2234
    %2236 = vrot.lane.b32.xlu0 %v1872, 48
    %v2237 = vpop.permute.xlu0 %2236
    %v2243 = vsel %vm1064, %v2226, 0
    %v2246 = vsel %vm1064, %v2227, 0
    %v2249 = vsel %vm1064, %v2228, 0
    %v2252 = vsel %vm1064, %v2229, 0
    %2254 = vmatpush.bf16.msra.mxu0 0
    %2255 = vmatpush.bf16.msra.mxu0 0
    %2256 = vmatpush.bf16.msra.mxu0 0
    %2257 = vmatpush.bf16.msra.mxu0 0
    %2258 = vmatpush.bf16.msra.mxu0 %v2237
    %2259 = vmatpush.bf16.msra.mxu0 %v2235
    %2260 = vmatpush.bf16.msra.mxu0 %v2233
    %2261 = vmatpush.bf16.msra.mxu0 %v2231
    %2262 = vmatmul.bf16.gmra.mxu0 %v2243
    %v2263 = vpop.f32.mrf.mxu0
    %v2264 = vadd.f32 0.0, %v2263
    %v2265 = vpop.f32.mrf.mxu0
    %v2266 = vadd.f32 0.0, %v2265
    %2267 = vmatmul.bf16.gmra.mxu0 %v2246
    %v2268 = vpop.f32.mrf.mxu0
    %v2269 = vadd.f32 0.0, %v2268
    %v2270 = vpop.f32.mrf.mxu0
    %v2271 = vadd.f32 0.0, %v2270
    %2272 = vmatmul.bf16.gmra.mxu0 %v2249
    %v2273 = vpop.f32.mrf.mxu0
    %v2274 = vadd.f32 0.0, %v2273
    %v2275 = vpop.f32.mrf.mxu0
    %v2276 = vadd.f32 0.0, %v2275
    %2277 = vmatmul.bf16.gmra.mxu0 %v2252
    %v2278 = vpop.f32.mrf.mxu0
    %v2279 = vadd.f32 0.0, %v2278
    %v2280 = vpop.f32.mrf.mxu0
    %v2281 = vadd.f32 0.0, %v2280
    %2282 = vdwg.mxu0
    %v2291 = vunpack.c.l.b16 %v1817
    %v2292 = vunpack.c.l.b16 %v1818
    %v2293 = vunpack.c.l.b16 %v1819
    %v2294 = vunpack.c.l.b16 %v1820
    %v2295 = vunpack.c.l.b16 %v1821
    %v2296 = vunpack.c.l.b16 %v1822
    %v2297 = vunpack.c.l.b16 %v1823
    %v2298 = vunpack.c.l.b16 %v1824
    %v2299 = vpack.c.b16 %v2292, %v2291
    %v2300 = vpack.c.b16 %v2294, %v2293
    %v2301 = vpack.c.b16 %v2296, %v2295
    %v2302 = vpack.c.b16 %v2298, %v2297
    %2303 = vrot.lane.b32.xlu0 %v1869, 32
    %v2304 = vpop.permute.xlu0 %2303
    %2305 = vrot.lane.b32.xlu0 %v1870, 32
    %v2306 = vpop.permute.xlu0 %2305
    %2307 = vrot.lane.b32.xlu0 %v1871, 32
    %v2308 = vpop.permute.xlu0 %2307
    %2309 = vrot.lane.b32.xlu0 %v1872, 32
    %v2310 = vpop.permute.xlu0 %2309
    %v2316 = vsel %vm1064, %v2299, 0
    %v2319 = vsel %vm1064, %v2300, 0
    %v2322 = vsel %vm1064, %v2301, 0
    %v2325 = vsel %vm1064, %v2302, 0
    %2327 = vmatpush.bf16.msra.mxu0 0
    %2328 = vmatpush.bf16.msra.mxu0 0
    %2329 = vmatpush.bf16.msra.mxu0 0
    %2330 = vmatpush.bf16.msra.mxu0 0
    %2331 = vmatpush.bf16.msra.mxu0 %v2310
    %2332 = vmatpush.bf16.msra.mxu0 %v2308
    %2333 = vmatpush.bf16.msra.mxu0 %v2306
    %2334 = vmatpush.bf16.msra.mxu0 %v2304
    %2335 = vmatmul.bf16.gmra.mxu0 %v2316
    %v2336 = vpop.f32.mrf.mxu0
    %v2337 = vadd.f32 0.0, %v2336
    %v2338 = vpop.f32.mrf.mxu0
    %v2339 = vadd.f32 0.0, %v2338
    %2340 = vmatmul.bf16.gmra.mxu0 %v2319
    %v2341 = vpop.f32.mrf.mxu0
    %v2342 = vadd.f32 0.0, %v2341
    %v2343 = vpop.f32.mrf.mxu0
    %v2344 = vadd.f32 0.0, %v2343
    %2345 = vmatmul.bf16.gmra.mxu0 %v2322
    %v2346 = vpop.f32.mrf.mxu0
    %v2347 = vadd.f32 0.0, %v2346
    %v2348 = vpop.f32.mrf.mxu0
    %v2349 = vadd.f32 0.0, %v2348
    %2350 = vmatmul.bf16.gmra.mxu0 %v2325
    %v2351 = vpop.f32.mrf.mxu0
    %v2352 = vadd.f32 0.0, %v2351
    %v2353 = vpop.f32.mrf.mxu0
    %v2354 = vadd.f32 0.0, %v2353
    %2355 = vdwg.mxu0
    %v2364 = vunpack.c.l.b16 %v1825
    %v2365 = vunpack.c.l.b16 %v1826
    %v2366 = vunpack.c.l.b16 %v1827
    %v2367 = vunpack.c.l.b16 %v1828
    %v2368 = vunpack.c.l.b16 %v1829
    %v2369 = vunpack.c.l.b16 %v1830
    %v2370 = vunpack.c.l.b16 %v1831
    %v2371 = vunpack.c.l.b16 %v1832
    %v2372 = vpack.c.b16 %v2365, %v2364
    %v2373 = vpack.c.b16 %v2367, %v2366
    %v2374 = vpack.c.b16 %v2369, %v2368
    %v2375 = vpack.c.b16 %v2371, %v2370
    %2376 = vrot.lane.b32.xlu0 %v1869, 16
    %v2377 = vpop.permute.xlu0 %2376
    %2378 = vrot.lane.b32.xlu0 %v1870, 16
    %v2379 = vpop.permute.xlu0 %2378
    %2380 = vrot.lane.b32.xlu0 %v1871, 16
    %v2381 = vpop.permute.xlu0 %2380
    %2382 = vrot.lane.b32.xlu0 %v1872, 16
    %v2383 = vpop.permute.xlu0 %2382
    %v2389 = vsel %vm1064, %v2372, 0
    %v2392 = vsel %vm1064, %v2373, 0
    %v2395 = vsel %vm1064, %v2374, 0
    %v2398 = vsel %vm1064, %v2375, 0
    %2400 = vmatpush.bf16.msra.mxu0 0
    %2401 = vmatpush.bf16.msra.mxu0 0
    %2402 = vmatpush.bf16.msra.mxu0 0
    %2403 = vmatpush.bf16.msra.mxu0 0
    %2404 = vmatpush.bf16.msra.mxu0 %v2383
    %2405 = vmatpush.bf16.msra.mxu0 %v2381
    %2406 = vmatpush.bf16.msra.mxu0 %v2379
    %2407 = vmatpush.bf16.msra.mxu0 %v2377
    %2408 = vmatmul.bf16.gmra.mxu0 %v2389
    %v2409 = vpop.f32.mrf.mxu0
    %v2410 = vadd.f32 0.0, %v2409
    %v2411 = vpop.f32.mrf.mxu0
    %v2412 = vadd.f32 0.0, %v2411
    %2413 = vmatmul.bf16.gmra.mxu0 %v2392
    %v2414 = vpop.f32.mrf.mxu0
    %v2415 = vadd.f32 0.0, %v2414
    %v2416 = vpop.f32.mrf.mxu0
    %v2417 = vadd.f32 0.0, %v2416
    %2418 = vmatmul.bf16.gmra.mxu0 %v2395
    %v2419 = vpop.f32.mrf.mxu0
    %v2420 = vadd.f32 0.0, %v2419
    %v2421 = vpop.f32.mrf.mxu0
    %v2422 = vadd.f32 0.0, %v2421
    %2423 = vmatmul.bf16.gmra.mxu0 %v2398
    %v2424 = vpop.f32.mrf.mxu0
    %v2425 = vadd.f32 0.0, %v2424
    %v2426 = vpop.f32.mrf.mxu0
    %v2427 = vadd.f32 0.0, %v2426
    %2428 = vdwg.mxu0
    %2437 = vrot.lane.b32.xlu0 %v1972, 16
    %v2438 = vpop.permute.xlu0 %2437
    %2439 = vrot.lane.b32.xlu0 %v1974, 16
    %v2440 = vpop.permute.xlu0 %2439
    %2441 = vrot.lane.b32.xlu0 %v1977, 16
    %v2442 = vpop.permute.xlu0 %2441
    %2443 = vrot.lane.b32.xlu0 %v1979, 16
    %v2444 = vpop.permute.xlu0 %2443
    %2445 = vrot.lane.b32.xlu0 %v1982, 16
    %v2446 = vpop.permute.xlu0 %2445
    %2447 = vrot.lane.b32.xlu0 %v1984, 16
    %v2448 = vpop.permute.xlu0 %2447
    %2449 = vrot.lane.b32.xlu0 %v1987, 16
    %v2450 = vpop.permute.xlu0 %2449
    %2451 = vrot.lane.b32.xlu0 %v1989, 16
    %v2452 = vpop.permute.xlu0 %2451
    %2469 = vrot.lane.b32.xlu0 %v2045, 32
    %v2470 = vpop.permute.xlu0 %2469
    %2471 = vrot.lane.b32.xlu0 %v2047, 32
    %v2472 = vpop.permute.xlu0 %2471
    %2473 = vrot.lane.b32.xlu0 %v2050, 32
    %v2474 = vpop.permute.xlu0 %2473
    %2475 = vrot.lane.b32.xlu0 %v2052, 32
    %v2476 = vpop.permute.xlu0 %2475
    %2477 = vrot.lane.b32.xlu0 %v2055, 32
    %v2478 = vpop.permute.xlu0 %2477
    %2479 = vrot.lane.b32.xlu0 %v2057, 32
    %v2480 = vpop.permute.xlu0 %2479
    %2481 = vrot.lane.b32.xlu0 %v2060, 32
    %v2482 = vpop.permute.xlu0 %2481
    %2483 = vrot.lane.b32.xlu0 %v2062, 32
    %v2484 = vpop.permute.xlu0 %2483
    %2501 = vrot.lane.b32.xlu0 %v2118, 48
    %v2502 = vpop.permute.xlu0 %2501
    %2503 = vrot.lane.b32.xlu0 %v2120, 48
    %v2504 = vpop.permute.xlu0 %2503
    %2505 = vrot.lane.b32.xlu0 %v2123, 48
    %v2506 = vpop.permute.xlu0 %2505
    %2507 = vrot.lane.b32.xlu0 %v2125, 48
    %v2508 = vpop.permute.xlu0 %2507
    %2509 = vrot.lane.b32.xlu0 %v2128, 48
    %v2510 = vpop.permute.xlu0 %2509
    %2511 = vrot.lane.b32.xlu0 %v2130, 48
    %v2512 = vpop.permute.xlu0 %2511
    %2513 = vrot.lane.b32.xlu0 %v2133, 48
    %v2514 = vpop.permute.xlu0 %2513
    %2515 = vrot.lane.b32.xlu0 %v2135, 48
    %v2516 = vpop.permute.xlu0 %2515
    %2533 = vrot.lane.b32.xlu0 %v2191, 64
    %v2534 = vpop.permute.xlu0 %2533
    %2535 = vrot.lane.b32.xlu0 %v2193, 64
    %v2536 = vpop.permute.xlu0 %2535
    %2537 = vrot.lane.b32.xlu0 %v2196, 64
    %v2538 = vpop.permute.xlu0 %2537
    %2539 = vrot.lane.b32.xlu0 %v2198, 64
    %v2540 = vpop.permute.xlu0 %2539
    %2541 = vrot.lane.b32.xlu0 %v2201, 64
    %v2542 = vpop.permute.xlu0 %2541
    %2543 = vrot.lane.b32.xlu0 %v2203, 64
    %v2544 = vpop.permute.xlu0 %2543
    %2545 = vrot.lane.b32.xlu0 %v2206, 64
    %v2546 = vpop.permute.xlu0 %2545
    %2547 = vrot.lane.b32.xlu0 %v2208, 64
    %v2548 = vpop.permute.xlu0 %2547
    %2565 = vrot.lane.b32.xlu0 %v2264, 80
    %v2566 = vpop.permute.xlu0 %2565
    %2567 = vrot.lane.b32.xlu0 %v2266, 80
    %v2568 = vpop.permute.xlu0 %2567
    %2569 = vrot.lane.b32.xlu0 %v2269, 80
    %v2570 = vpop.permute.xlu0 %2569
    %2571 = vrot.lane.b32.xlu0 %v2271, 80
    %v2572 = vpop.permute.xlu0 %2571
    %2573 = vrot.lane.b32.xlu0 %v2274, 80
    %v2574 = vpop.permute.xlu0 %2573
    %2575 = vrot.lane.b32.xlu0 %v2276, 80
    %v2576 = vpop.permute.xlu0 %2575
    %2577 = vrot.lane.b32.xlu0 %v2279, 80
    %v2578 = vpop.permute.xlu0 %2577
    %2579 = vrot.lane.b32.xlu0 %v2281, 80
    %v2580 = vpop.permute.xlu0 %2579
    %2597 = vrot.lane.b32.xlu0 %v2337, 96
    %v2598 = vpop.permute.xlu0 %2597
    %2599 = vrot.lane.b32.xlu0 %v2339, 96
    %v2600 = vpop.permute.xlu0 %2599
    %2601 = vrot.lane.b32.xlu0 %v2342, 96
    %v2602 = vpop.permute.xlu0 %2601
    %2603 = vrot.lane.b32.xlu0 %v2344, 96
    %v2604 = vpop.permute.xlu0 %2603
    %2605 = vrot.lane.b32.xlu0 %v2347, 96
    %v2606 = vpop.permute.xlu0 %2605
    %2607 = vrot.lane.b32.xlu0 %v2349, 96
    %v2608 = vpop.permute.xlu0 %2607
    %2609 = vrot.lane.b32.xlu0 %v2352, 96
    %v2610 = vpop.permute.xlu0 %2609
    %2611 = vrot.lane.b32.xlu0 %v2354, 96
    %v2612 = vpop.permute.xlu0 %2611
    %2629 = vrot.lane.b32.xlu0 %v2410, 112
    %v2630 = vpop.permute.xlu0 %2629
    %2631 = vrot.lane.b32.xlu0 %v2412, 112
    %v2632 = vpop.permute.xlu0 %2631
    %2633 = vrot.lane.b32.xlu0 %v2415, 112
    %v2634 = vpop.permute.xlu0 %2633
    %2635 = vrot.lane.b32.xlu0 %v2417, 112
    %v2636 = vpop.permute.xlu0 %2635
    %2637 = vrot.lane.b32.xlu0 %v2420, 112
    %v2638 = vpop.permute.xlu0 %2637
    %2639 = vrot.lane.b32.xlu0 %v2422, 112
    %v2640 = vpop.permute.xlu0 %2639
    %2641 = vrot.lane.b32.xlu0 %v2425, 112
    %v2642 = vpop.permute.xlu0 %2641
    %2643 = vrot.lane.b32.xlu0 %v2427, 112
    %v2644 = vpop.permute.xlu0 %2643
    %v2653 = vsel %vm527, %v1899, %v2438
    %v2654 = vsel %vm527, %v1901, %v2440
    %v2655 = vsel %vm527, %v1904, %v2442
    %v2656 = vsel %vm527, %v1906, %v2444
    %v2657 = vsel %vm527, %v1909, %v2446
    %v2658 = vsel %vm527, %v1911, %v2448
    %v2659 = vsel %vm527, %v1914, %v2450
    %v2660 = vsel %vm527, %v1916, %v2452
    %vm2661 = vcmask 261120
    %v2662 = vsel %vm2661, %v2653, %v2470
    %v2663 = vsel %vm2661, %v2654, %v2472
    %v2664 = vsel %vm2661, %v2655, %v2474
    %v2665 = vsel %vm2661, %v2656, %v2476
    %v2666 = vsel %vm2661, %v2657, %v2478
    %v2667 = vsel %vm2661, %v2658, %v2480
    %v2668 = vsel %vm2661, %v2659, %v2482
    %v2669 = vsel %vm2661, %v2660, %v2484
    %vm2670 = vcmask 392192
    %v2671 = vsel %vm2670, %v2662, %v2502
    %v2672 = vsel %vm2670, %v2663, %v2504
    %v2673 = vsel %vm2670, %v2664, %v2506
    %v2674 = vsel %vm2670, %v2665, %v2508
    %v2675 = vsel %vm2670, %v2666, %v2510
    %v2676 = vsel %vm2670, %v2667, %v2512
    %v2677 = vsel %vm2670, %v2668, %v2514
    %v2678 = vsel %vm2670, %v2669, %v2516
    %v2679 = vsel %vm1064, %v2671, %v2534
    %v2680 = vsel %vm1064, %v2672, %v2536
    %v2681 = vsel %vm1064, %v2673, %v2538
    %v2682 = vsel %vm1064, %v2674, %v2540
    %v2683 = vsel %vm1064, %v2675, %v2542
    %v2684 = vsel %vm1064, %v2676, %v2544
    %v2685 = vsel %vm1064, %v2677, %v2546
    %v2686 = vsel %vm1064, %v2678, %v2548
    %vm2687 = vcmask 654336
    %v2688 = vsel %vm2687, %v2679, %v2566
    %v2689 = vsel %vm2687, %v2680, %v2568
    %v2690 = vsel %vm2687, %v2681, %v2570
    %v2691 = vsel %vm2687, %v2682, %v2572
    %v2692 = vsel %vm2687, %v2683, %v2574
    %v2693 = vsel %vm2687, %v2684, %v2576
    %v2694 = vsel %vm2687, %v2685, %v2578
    %v2695 = vsel %vm2687, %v2686, %v2580
    %vm2696 = vcmask 785408
    %v2697 = vsel %vm2696, %v2688, %v2598
    %v2698 = vsel %vm2696, %v2689, %v2600
    %v2699 = vsel %vm2696, %v2690, %v2602
    %v2700 = vsel %vm2696, %v2691, %v2604
    %v2701 = vsel %vm2696, %v2692, %v2606
    %v2702 = vsel %vm2696, %v2693, %v2608
    %v2703 = vsel %vm2696, %v2694, %v2610
    %v2704 = vsel %vm2696, %v2695, %v2612
    %vm2705 = vcmask 916480
    %v2706 = vsel %vm2705, %v2697, %v2630
    %v2707 = vsel %vm2705, %v2698, %v2632
    %v2708 = vsel %vm2705, %v2699, %v2634
    %v2709 = vsel %vm2705, %v2700, %v2636
    %v2710 = vsel %vm2705, %v2701, %v2638
    %v2711 = vsel %vm2705, %v2702, %v2640
    %v2712 = vsel %vm2705, %v2703, %v2642
    %v2713 = vsel %vm2705, %v2704, %v2644
    %v2714 = vpack.c.bf16 %v2707, %v2706
    %v2715 = vpack.c.bf16 %v2709, %v2708
    %v2716 = vpack.c.bf16 %v2711, %v2710
    %v2717 = vpack.c.bf16 %v2713, %v2712
    %v2718 = vld [vmem:[%s7] sm:$0xf]
    %v2719 = vld [vmem:[%s7 + $0x4] sm:$0xf]
    %v2720 = vld [vmem:[%s7 + $0x8] sm:$0xf]
    %v2721 = vld [vmem:[%s7 + $0xc] sm:$0xf]
    %v2722 = vld [vmem:[%s7 + $0x10] sm:$0xf]
    %v2723 = vld [vmem:[%s7 + $0x14] sm:$0xf]
    %v2724 = vld [vmem:[%s7 + $0x18] sm:$0xf]
    %v2725 = vld [vmem:[%s7 + $0x1c] sm:$0xf]
    %v2726 = vld [vmem:[%s7 + $0x20] sm:$0xf]
    %v2727 = vld [vmem:[%s7 + $0x24] sm:$0xf]
    %v2728 = vld [vmem:[%s7 + $0x28] sm:$0xf]
    %v2729 = vld [vmem:[%s7 + $0x2c] sm:$0xf]
    %v2730 = vld [vmem:[%s7 + $0x30] sm:$0xf]
    %v2731 = vld [vmem:[%s7 + $0x34] sm:$0xf]
    %v2732 = vld [vmem:[%s7 + $0x38] sm:$0xf]
    %v2733 = vld [vmem:[%s7 + $0x3c] sm:$0xf]
    %v2734 = vld [vmem:[%s8] sm:$0x1]
    %v2736 = vperm.slane %v2734, 0
    %v2754 = vunpack.c.l.b16 %v2718
    %v2755 = vunpack.c.l.b16 %v2719
    %v2756 = vunpack.c.l.b16 %v2720
    %v2757 = vunpack.c.l.b16 %v2721
    %v2758 = vunpack.c.l.b16 %v2722
    %v2759 = vunpack.c.l.b16 %v2723
    %v2760 = vunpack.c.l.b16 %v2724
    %v2761 = vunpack.c.l.b16 %v2725
    %v2762 = vunpack.c.l.b16 %v2726
    %v2763 = vunpack.c.l.b16 %v2727
    %v2764 = vunpack.c.l.b16 %v2728
    %v2765 = vunpack.c.l.b16 %v2729
    %v2766 = vunpack.c.l.b16 %v2730
    %v2767 = vunpack.c.l.b16 %v2731
    %v2768 = vunpack.c.l.b16 %v2732
    %v2769 = vunpack.c.l.b16 %v2733
    %v2770 = vpack.c.b16 %v2755, %v2754
    %v2771 = vpack.c.b16 %v2757, %v2756
    %v2772 = vpack.c.b16 %v2759, %v2758
    %v2773 = vpack.c.b16 %v2761, %v2760
    %v2774 = vpack.c.b16 %v2763, %v2762
    %v2775 = vpack.c.b16 %v2765, %v2764
    %v2776 = vpack.c.b16 %v2767, %v2766
    %v2777 = vpack.c.b16 %v2769, %v2768
    %2786 = vmatpush.bf16.msra.mxu0 %v2777
    %2787 = vmatpush.bf16.msra.mxu0 %v2776
    %2788 = vmatpush.bf16.msra.mxu0 %v2775
    %2789 = vmatpush.bf16.msra.mxu0 %v2774
    %2790 = vmatpush.bf16.msra.mxu0 %v2773
    %2791 = vmatpush.bf16.msra.mxu0 %v2772
    %2792 = vmatpush.bf16.msra.mxu0 %v2771
    %2793 = vmatpush.bf16.msra.mxu0 %v2770
    %2794 = vmatmul.bf16.gmra.mxu0 %v2714
    %v2795 = vpop.f32.mrf.mxu0
    %v2796 = vadd.f32 %v2736, %v2795
    %v2797 = vpop.f32.mrf.mxu0
    %v2798 = vadd.f32 %v2736, %v2797
    %2799 = vmatmul.bf16.gmra.mxu0 %v2715
    %v2800 = vpop.f32.mrf.mxu0
    %v2801 = vadd.f32 %v2736, %v2800
    %v2802 = vpop.f32.mrf.mxu0
    %v2803 = vadd.f32 %v2736, %v2802
    %2804 = vmatmul.bf16.gmra.mxu0 %v2716
    %v2805 = vpop.f32.mrf.mxu0
    %v2806 = vadd.f32 %v2736, %v2805
    %v2807 = vpop.f32.mrf.mxu0
    %v2808 = vadd.f32 %v2736, %v2807
    %2809 = vmatmul.bf16.gmra.mxu0 %v2717
    %v2810 = vpop.f32.mrf.mxu0
    %v2811 = vadd.f32 %v2736, %v2810
    %v2812 = vpop.f32.mrf.mxu0
    %v2813 = vadd.f32 %v2736, %v2812
    %2814 = vdwg.mxu0
    %v2815 = vadd.f32 %v2796, %v180
    %v2816 = vadd.f32 %v2798, %v181
    %v2817 = vadd.f32 %v2801, %v182
    %v2818 = vadd.f32 %v2803, %v183
    %v2819 = vadd.f32 %v2806, %v184
    %v2820 = vadd.f32 %v2808, %v185
    %v2821 = vadd.f32 %v2811, %v186
    %v2822 = vadd.f32 %v2813, %v187
    %v2823 = vld [vmem:[%s9] sm:$0x1]
    %v2824 = vld [vmem:[%s10] sm:$0x1]
    %2825 = vadd.xlane.f32.xlu0 %v2815
    %v2826 = vpop.xlane.xlu0 %2825
    %2827 = vadd.xlane.f32.xlu0 %v2816
    %v2828 = vpop.xlane.xlu0 %2827
    %2829 = vadd.xlane.f32.xlu0 %v2817
    %v2830 = vpop.xlane.xlu0 %2829
    %2831 = vadd.xlane.f32.xlu0 %v2818
    %v2832 = vpop.xlane.xlu0 %2831
    %2833 = vadd.xlane.f32.xlu0 %v2819
    %v2834 = vpop.xlane.xlu0 %2833
    %2835 = vadd.xlane.f32.xlu0 %v2820
    %v2836 = vpop.xlane.xlu0 %2835
    %2837 = vadd.xlane.f32.xlu0 %v2821
    %v2838 = vpop.xlane.xlu0 %2837
    %2839 = vadd.xlane.f32.xlu0 %v2822
    %v2840 = vpop.xlane.xlu0 %2839
    %v2841 = vrcp.pop 128.0
    %v2842 = vmul.f32 128.0, %v2841
    %v2843 = vsub.f32 1.0, %v2842
    %v2844 = vmul.f32 %v2841, %v2843
    %v2845 = vadd.f32 %v2841, %v2844
    %vm2846 = vweird.f32 %v2841
    %v2847 = vsel %vm2846, %v2841, %v2845
    %v2848 = vmul.f32 %v2826, %v2847
    %v2849 = vmul.f32 %v2828, %v2847
    %v2850 = vmul.f32 %v2830, %v2847
    %v2851 = vmul.f32 %v2832, %v2847
    %v2852 = vmul.f32 %v2834, %v2847
    %v2853 = vmul.f32 %v2836, %v2847
    %v2854 = vmul.f32 %v2838, %v2847
    %v2855 = vmul.f32 %v2840, %v2847
    %v2856 = vsub.f32 %v2815, %v2848
    %v2857 = vsub.f32 %v2816, %v2849
    %v2858 = vsub.f32 %v2817, %v2850
    %v2859 = vsub.f32 %v2818, %v2851
    %v2860 = vsub.f32 %v2819, %v2852
    %v2861 = vsub.f32 %v2820, %v2853
    %v2862 = vsub.f32 %v2821, %v2854
    %v2863 = vsub.f32 %v2822, %v2855
    %v2864 = vmul.f32 %v2856, %v2856
    %v2865 = vmul.f32 %v2857, %v2857
    %v2866 = vmul.f32 %v2858, %v2858
    %v2867 = vmul.f32 %v2859, %v2859
    %v2868 = vmul.f32 %v2860, %v2860
    %v2869 = vmul.f32 %v2861, %v2861
    %v2870 = vmul.f32 %v2862, %v2862
    %v2871 = vmul.f32 %v2863, %v2863
    %2872 = vadd.xlane.f32.xlu0 %v2864
    %v2873 = vpop.xlane.xlu0 %2872
    %2874 = vadd.xlane.f32.xlu0 %v2865
    %v2875 = vpop.xlane.xlu0 %2874
    %2876 = vadd.xlane.f32.xlu0 %v2866
    %v2877 = vpop.xlane.xlu0 %2876
    %2878 = vadd.xlane.f32.xlu0 %v2867
    %v2879 = vpop.xlane.xlu0 %2878
    %2880 = vadd.xlane.f32.xlu0 %v2868
    %v2881 = vpop.xlane.xlu0 %2880
    %2882 = vadd.xlane.f32.xlu0 %v2869
    %v2883 = vpop.xlane.xlu0 %2882
    %2884 = vadd.xlane.f32.xlu0 %v2870
    %v2885 = vpop.xlane.xlu0 %2884
    %2886 = vadd.xlane.f32.xlu0 %v2871
    %v2887 = vpop.xlane.xlu0 %2886
    %v2888 = vmul.f32 %v2873, %v2847
    %v2889 = vmul.f32 %v2875, %v2847
    %v2890 = vmul.f32 %v2877, %v2847
    %v2891 = vmul.f32 %v2879, %v2847
    %v2892 = vmul.f32 %v2881, %v2847
    %v2893 = vmul.f32 %v2883, %v2847
    %v2894 = vmul.f32 %v2885, %v2847
    %v2895 = vmul.f32 %v2887, %v2847
    %v2896 = vadd.f32 %v2888, 1e-12
    %v2897 = vadd.f32 %v2889, 1e-12
    %v2898 = vadd.f32 %v2890, 1e-12
    %v2899 = vadd.f32 %v2891, 1e-12
    %v2900 = vadd.f32 %v2892, 1e-12
    %v2901 = vadd.f32 %v2893, 1e-12
    %v2902 = vadd.f32 %v2894, 1e-12
    %v2903 = vadd.f32 %v2895, 1e-12
    %v2904 = vrsqrt.pop %v2896
    %v2905 = vmul.f32 %v2904, %v2896
    %v2906 = vmul.f32 %v2905, %v2904
    %v2907 = vmul.f32 0.5, %v2906
    %v2908 = vsub.f32 1.5, %v2907
    %v2909 = vmul.f32 %v2904, %v2908
    %vm2910 = vweird.f32 %v2896
    %vm2911 = vweird.f32 %v2904
    %vm2912 = vmor %vm2910, %vm2911
    %v2913 = vsel %vm2912, %v2904, %v2909
    %v2914 = vrsqrt.pop %v2897
    %v2915 = vmul.f32 %v2914, %v2897
    %v2916 = vmul.f32 %v2915, %v2914
    %v2917 = vmul.f32 0.5, %v2916
    %v2918 = vsub.f32 1.5, %v2917
    %v2919 = vmul.f32 %v2914, %v2918
    %vm2920 = vweird.f32 %v2897
    %vm2921 = vweird.f32 %v2914
    %vm2922 = vmor %vm2920, %vm2921
    %v2923 = vsel %vm2922, %v2914, %v2919
    %v2924 = vrsqrt.pop %v2898
    %v2925 = vmul.f32 %v2924, %v2898
    %v2926 = vmul.f32 %v2925, %v2924
    %v2927 = vmul.f32 0.5, %v2926
    %v2928 = vsub.f32 1.5, %v2927
    %v2929 = vmul.f32 %v2924, %v2928
    %vm2930 = vweird.f32 %v2898
    %vm2931 = vweird.f32 %v2924
    %vm2932 = vmor %vm2930, %vm2931
    %v2933 = vsel %vm2932, %v2924, %v2929
    %v2934 = vrsqrt.pop %v2899
    %v2935 = vmul.f32 %v2934, %v2899
    %v2936 = vmul.f32 %v2935, %v2934
    %v2937 = vmul.f32 0.5, %v2936
    %v2938 = vsub.f32 1.5, %v2937
    %v2939 = vmul.f32 %v2934, %v2938
    %vm2940 = vweird.f32 %v2899
    %vm2941 = vweird.f32 %v2934
    %vm2942 = vmor %vm2940, %vm2941
    %v2943 = vsel %vm2942, %v2934, %v2939
    %v2944 = vrsqrt.pop %v2900
    %v2945 = vmul.f32 %v2944, %v2900
    %v2946 = vmul.f32 %v2945, %v2944
    %v2947 = vmul.f32 0.5, %v2946
    %v2948 = vsub.f32 1.5, %v2947
    %v2949 = vmul.f32 %v2944, %v2948
    %vm2950 = vweird.f32 %v2900
    %vm2951 = vweird.f32 %v2944
    %vm2952 = vmor %vm2950, %vm2951
    %v2953 = vsel %vm2952, %v2944, %v2949
    %v2954 = vrsqrt.pop %v2901
    %v2955 = vmul.f32 %v2954, %v2901
    %v2956 = vmul.f32 %v2955, %v2954
    %v2957 = vmul.f32 0.5, %v2956
    %v2958 = vsub.f32 1.5, %v2957
    %v2959 = vmul.f32 %v2954, %v2958
    %vm2960 = vweird.f32 %v2901
    %vm2961 = vweird.f32 %v2954
    %vm2962 = vmor %vm2960, %vm2961
    %v2963 = vsel %vm2962, %v2954, %v2959
    %v2964 = vrsqrt.pop %v2902
    %v2965 = vmul.f32 %v2964, %v2902
    %v2966 = vmul.f32 %v2965, %v2964
    %v2967 = vmul.f32 0.5, %v2966
    %v2968 = vsub.f32 1.5, %v2967
    %v2969 = vmul.f32 %v2964, %v2968
    %vm2970 = vweird.f32 %v2902
    %vm2971 = vweird.f32 %v2964
    %vm2972 = vmor %vm2970, %vm2971
    %v2973 = vsel %vm2972, %v2964, %v2969
    %v2974 = vrsqrt.pop %v2903
    %v2975 = vmul.f32 %v2974, %v2903
    %v2976 = vmul.f32 %v2975, %v2974
    %v2977 = vmul.f32 0.5, %v2976
    %v2978 = vsub.f32 1.5, %v2977
    %v2979 = vmul.f32 %v2974, %v2978
    %vm2980 = vweird.f32 %v2903
    %vm2981 = vweird.f32 %v2974
    %vm2982 = vmor %vm2980, %vm2981
    %v2983 = vsel %vm2982, %v2974, %v2979
    %v2984 = vmul.f32 %v2856, %v2913
    %v2985 = vmul.f32 %v2857, %v2923
    %v2986 = vmul.f32 %v2858, %v2933
    %v2987 = vmul.f32 %v2859, %v2943
    %v2988 = vmul.f32 %v2860, %v2953
    %v2989 = vmul.f32 %v2861, %v2963
    %v2990 = vmul.f32 %v2862, %v2973
    %v2991 = vmul.f32 %v2863, %v2983
    %v2993 = vperm.slane %v2823, 0
    %v2995 = vmul.f32 %v2984, %v2993
    %v2996 = vmul.f32 %v2985, %v2993
    %v2997 = vmul.f32 %v2986, %v2993
    %v2998 = vmul.f32 %v2987, %v2993
    %v2999 = vmul.f32 %v2988, %v2993
    %v3000 = vmul.f32 %v2989, %v2993
    %v3001 = vmul.f32 %v2990, %v2993
    %v3002 = vmul.f32 %v2991, %v2993
    %v3004 = vperm.slane %v2824, 0
    %v3006 = vadd.f32 %v2995, %v3004
    %v3007 = vadd.f32 %v2996, %v3004
    %v3008 = vadd.f32 %v2997, %v3004
    %v3009 = vadd.f32 %v2998, %v3004
    %v3010 = vadd.f32 %v2999, %v3004
    %v3011 = vadd.f32 %v3000, %v3004
    %v3012 = vadd.f32 %v3001, %v3004
    %v3013 = vadd.f32 %v3002, %v3004
    %v3014 = vpack.c.bf16 %v3007, %v3006
    %v3015 = vpack.c.bf16 %v3009, %v3008
    %v3016 = vpack.c.bf16 %v3011, %v3010
    %v3017 = vpack.c.bf16 %v3013, %v3012
    %v3018 = vld [vmem:[#allocation5] sm:$0xff]
    %v3019 = vld [vmem:[#allocation5 + $0x8] sm:$0xff]
    %v3020 = vld [vmem:[#allocation5 + $0x10] sm:$0xff]
    %v3021 = vld [vmem:[#allocation5 + $0x18] sm:$0xff]
    %v3022 = vld [vmem:[#allocation5 + $0x20] sm:$0xff]
    %v3023 = vld [vmem:[#allocation5 + $0x28] sm:$0xff]
    %v3024 = vld [vmem:[#allocation5 + $0x30] sm:$0xff]
    %v3025 = vld [vmem:[#allocation5 + $0x38] sm:$0xff]
    %v3026 = vld [vmem:[#allocation5 + $0x40] sm:$0xff]
    %v3027 = vld [vmem:[#allocation5 + $0x48] sm:$0xff]
    %v3028 = vld [vmem:[#allocation5 + $0x50] sm:$0xff]
    %v3029 = vld [vmem:[#allocation5 + $0x58] sm:$0xff]
    %v3030 = vld [vmem:[#allocation5 + $0x60] sm:$0xff]
    %v3031 = vld [vmem:[#allocation5 + $0x68] sm:$0xff]
    %v3032 = vld [vmem:[#allocation5 + $0x70] sm:$0xff]
    %v3033 = vld [vmem:[#allocation5 + $0x78] sm:$0xff]
    %v3034 = vld [vmem:[#allocation5 + $0x80] sm:$0xff]
    %v3035 = vld [vmem:[#allocation5 + $0x88] sm:$0xff]
    %v3036 = vld [vmem:[#allocation5 + $0x90] sm:$0xff]
    %v3037 = vld [vmem:[#allocation5 + $0x98] sm:$0xff]
    %v3038 = vld [vmem:[#allocation5 + $0xa0] sm:$0xff]
    %v3039 = vld [vmem:[#allocation5 + $0xa8] sm:$0xff]
    %v3040 = vld [vmem:[#allocation5 + $0xb0] sm:$0xff]
    %v3041 = vld [vmem:[#allocation5 + $0xb8] sm:$0xff]
    %v3042 = vld [vmem:[#allocation5 + $0xc0] sm:$0xff]
    %v3043 = vld [vmem:[#allocation5 + $0xc8] sm:$0xff]
    %v3044 = vld [vmem:[#allocation5 + $0xd0] sm:$0xff]
    %v3045 = vld [vmem:[#allocation5 + $0xd8] sm:$0xff]
    %v3046 = vld [vmem:[#allocation5 + $0xe0] sm:$0xff]
    %v3047 = vld [vmem:[#allocation5 + $0xe8] sm:$0xff]
    %v3048 = vld [vmem:[#allocation5 + $0xf0] sm:$0xff]
    %v3049 = vld [vmem:[#allocation5 + $0xf8] sm:$0xff]
    %v3050 = vld [vmem:[%s12] sm:$0xf]
    %v3052 = vperm.slane %v3050, 0
    %v3053 = vperm.slane %v3050, 1
    %v3054 = vperm.slane %v3050, 2
    %v3055 = vperm.slane %v3050, 3
    %v3092 = vunpack.c.l.b16 %v3018
    %v3093 = vunpack.c.h.b16 %v3018
    %v3094 = vunpack.c.l.b16 %v3019
    %v3095 = vunpack.c.h.b16 %v3019
    %v3096 = vunpack.c.l.b16 %v3020
    %v3097 = vunpack.c.h.b16 %v3020
    %v3098 = vunpack.c.l.b16 %v3021
    %v3099 = vunpack.c.h.b16 %v3021
    %v3100 = vunpack.c.l.b16 %v3022
    %v3101 = vunpack.c.h.b16 %v3022
    %v3102 = vunpack.c.l.b16 %v3023
    %v3103 = vunpack.c.h.b16 %v3023
    %v3104 = vunpack.c.l.b16 %v3024
    %v3105 = vunpack.c.h.b16 %v3024
    %v3106 = vunpack.c.l.b16 %v3025
    %v3107 = vunpack.c.h.b16 %v3025
    %v3108 = vunpack.c.l.b16 %v3026
    %v3109 = vunpack.c.h.b16 %v3026
    %v3110 = vunpack.c.l.b16 %v3027
    %v3111 = vunpack.c.h.b16 %v3027
    %v3112 = vunpack.c.l.b16 %v3028
    %v3113 = vunpack.c.h.b16 %v3028
    %v3114 = vunpack.c.l.b16 %v3029
    %v3115 = vunpack.c.h.b16 %v3029
    %v3116 = vunpack.c.l.b16 %v3030
    %v3117 = vunpack.c.h.b16 %v3030
    %v3118 = vunpack.c.l.b16 %v3031
    %v3119 = vunpack.c.h.b16 %v3031
    %v3120 = vunpack.c.l.b16 %v3032
    %v3121 = vunpack.c.h.b16 %v3032
    %v3122 = vunpack.c.l.b16 %v3033
    %v3123 = vunpack.c.h.b16 %v3033
    %v3124 = vunpack.c.l.b16 %v3034
    %v3125 = vunpack.c.h.b16 %v3034
    %v3126 = vunpack.c.l.b16 %v3035
    %v3127 = vunpack.c.h.b16 %v3035
    %v3128 = vunpack.c.l.b16 %v3036
    %v3129 = vunpack.c.h.b16 %v3036
    %v3130 = vunpack.c.l.b16 %v3037
    %v3131 = vunpack.c.h.b16 %v3037
    %v3132 = vunpack.c.l.b16 %v3038
    %v3133 = vunpack.c.h.b16 %v3038
    %v3134 = vunpack.c.l.b16 %v3039
    %v3135 = vunpack.c.h.b16 %v3039
    %v3136 = vunpack.c.l.b16 %v3040
    %v3137 = vunpack.c.h.b16 %v3040
    %v3138 = vunpack.c.l.b16 %v3041
    %v3139 = vunpack.c.h.b16 %v3041
    %v3140 = vunpack.c.l.b16 %v3042
    %v3141 = vunpack.c.h.b16 %v3042
    %v3142 = vunpack.c.l.b16 %v3043
    %v3143 = vunpack.c.h.b16 %v3043
    %v3144 = vunpack.c.l.b16 %v3044
    %v3145 = vunpack.c.h.b16 %v3044
    %v3146 = vunpack.c.l.b16 %v3045
    %v3147 = vunpack.c.h.b16 %v3045
    %v3148 = vunpack.c.l.b16 %v3046
    %v3149 = vunpack.c.h.b16 %v3046
    %v3150 = vunpack.c.l.b16 %v3047
    %v3151 = vunpack.c.h.b16 %v3047
    %v3152 = vunpack.c.l.b16 %v3048
    %v3153 = vunpack.c.h.b16 %v3048
    %v3154 = vunpack.c.l.b16 %v3049
    %v3155 = vunpack.c.h.b16 %v3049
    %v3156 = vpack.c.b16 %v3096, %v3092
    %v3157 = vpack.c.b16 %v3097, %v3093
    %v3158 = vpack.c.b16 %v3098, %v3094
    %v3159 = vpack.c.b16 %v3099, %v3095
    %v3160 = vpack.c.b16 %v3104, %v3100
    %v3161 = vpack.c.b16 %v3105, %v3101
    %v3162 = vpack.c.b16 %v3106, %v3102
    %v3163 = vpack.c.b16 %v3107, %v3103
    %v3164 = vpack.c.b16 %v3112, %v3108
    %v3165 = vpack.c.b16 %v3113, %v3109
    %v3166 = vpack.c.b16 %v3114, %v3110
    %v3167 = vpack.c.b16 %v3115, %v3111
    %v3168 = vpack.c.b16 %v3120, %v3116
    %v3169 = vpack.c.b16 %v3121, %v3117
    %v3170 = vpack.c.b16 %v3122, %v3118
    %v3171 = vpack.c.b16 %v3123, %v3119
    %v3172 = vpack.c.b16 %v3128, %v3124
    %v3173 = vpack.c.b16 %v3129, %v3125
    %v3174 = vpack.c.b16 %v3130, %v3126
    %v3175 = vpack.c.b16 %v3131, %v3127
    %v3176 = vpack.c.b16 %v3136, %v3132
    %v3177 = vpack.c.b16 %v3137, %v3133
    %v3178 = vpack.c.b16 %v3138, %v3134
    %v3179 = vpack.c.b16 %v3139, %v3135
    %v3180 = vpack.c.b16 %v3144, %v3140
    %v3181 = vpack.c.b16 %v3145, %v3141
    %v3182 = vpack.c.b16 %v3146, %v3142
    %v3183 = vpack.c.b16 %v3147, %v3143
    %v3184 = vpack.c.b16 %v3152, %v3148
    %v3185 = vpack.c.b16 %v3153, %v3149
    %v3186 = vpack.c.b16 %v3154, %v3150
    %v3187 = vpack.c.b16 %v3155, %v3151
    %3220 = vmatpush.bf16.msra.mxu0 %v3184
    %3221 = vmatpush.bf16.msra.mxu0 %v3180
    %3222 = vmatpush.bf16.msra.mxu0 %v3176
    %3223 = vmatpush.bf16.msra.mxu0 %v3172
    %3224 = vmatpush.bf16.msra.mxu0 %v3168
    %3225 = vmatpush.bf16.msra.mxu0 %v3164
    %3226 = vmatpush.bf16.msra.mxu0 %v3160
    %3227 = vmatpush.bf16.msra.mxu0 %v3156
    %3228 = vmatmul.bf16.gmra.mxu0 %v3014
    %v3229 = vpop.f32.mrf.mxu0
    %v3230 = vadd.f32 %v3052, %v3229
    %v3231 = vpop.f32.mrf.mxu0
    %v3232 = vadd.f32 %v3052, %v3231
    %3233 = vmatmul.bf16.gmra.mxu0 %v3015
    %v3234 = vpop.f32.mrf.mxu0
    %v3235 = vadd.f32 %v3052, %v3234
    %v3236 = vpop.f32.mrf.mxu0
    %v3237 = vadd.f32 %v3052, %v3236
    %3238 = vmatmul.bf16.gmra.mxu0 %v3016
    %v3239 = vpop.f32.mrf.mxu0
    %v3240 = vadd.f32 %v3052, %v3239
    %v3241 = vpop.f32.mrf.mxu0
    %v3242 = vadd.f32 %v3052, %v3241
    %3243 = vmatmul.bf16.gmra.mxu0 %v3017
    %v3244 = vpop.f32.mrf.mxu0
    %v3245 = vadd.f32 %v3052, %v3244
    %v3246 = vpop.f32.mrf.mxu0
    %v3247 = vadd.f32 %v3052, %v3246
    %3248 = vdwg.mxu0
    %3249 = vmatpush.bf16.msra.mxu0 %v3185
    %3250 = vmatpush.bf16.msra.mxu0 %v3181
    %3251 = vmatpush.bf16.msra.mxu0 %v3177
    %3252 = vmatpush.bf16.msra.mxu0 %v3173
    %3253 = vmatpush.bf16.msra.mxu0 %v3169
    %3254 = vmatpush.bf16.msra.mxu0 %v3165
    %3255 = vmatpush.bf16.msra.mxu0 %v3161
    %3256 = vmatpush.bf16.msra.mxu0 %v3157
    %3257 = vmatmul.bf16.gmra.mxu0 %v3014
    %v3258 = vpop.f32.mrf.mxu0
    %v3259 = vadd.f32 %v3053, %v3258
    %v3260 = vpop.f32.mrf.mxu0
    %v3261 = vadd.f32 %v3053, %v3260
    %3262 = vmatmul.bf16.gmra.mxu0 %v3015
    %v3263 = vpop.f32.mrf.mxu0
    %v3264 = vadd.f32 %v3053, %v3263
    %v3265 = vpop.f32.mrf.mxu0
    %v3266 = vadd.f32 %v3053, %v3265
    %3267 = vmatmul.bf16.gmra.mxu0 %v3016
    %v3268 = vpop.f32.mrf.mxu0
    %v3269 = vadd.f32 %v3053, %v3268
    %v3270 = vpop.f32.mrf.mxu0
    %v3271 = vadd.f32 %v3053, %v3270
    %3272 = vmatmul.bf16.gmra.mxu0 %v3017
    %v3273 = vpop.f32.mrf.mxu0
    %v3274 = vadd.f32 %v3053, %v3273
    %v3275 = vpop.f32.mrf.mxu0
    %v3276 = vadd.f32 %v3053, %v3275
    %3277 = vdwg.mxu0
    %3278 = vmatpush.bf16.msra.mxu0 %v3186
    %3279 = vmatpush.bf16.msra.mxu0 %v3182
    %3280 = vmatpush.bf16.msra.mxu0 %v3178
    %3281 = vmatpush.bf16.msra.mxu0 %v3174
    %3282 = vmatpush.bf16.msra.mxu0 %v3170
    %3283 = vmatpush.bf16.msra.mxu0 %v3166
    %3284 = vmatpush.bf16.msra.mxu0 %v3162
    %3285 = vmatpush.bf16.msra.mxu0 %v3158
    %3286 = vmatmul.bf16.gmra.mxu0 %v3014
    %v3287 = vpop.f32.mrf.mxu0
    %v3288 = vadd.f32 %v3054, %v3287
    %v3289 = vpop.f32.mrf.mxu0
    %v3290 = vadd.f32 %v3054, %v3289
    %3291 = vmatmul.bf16.gmra.mxu0 %v3015
    %v3292 = vpop.f32.mrf.mxu0
    %v3293 = vadd.f32 %v3054, %v3292
    %v3294 = vpop.f32.mrf.mxu0
    %v3295 = vadd.f32 %v3054, %v3294
    %3296 = vmatmul.bf16.gmra.mxu0 %v3016
    %v3297 = vpop.f32.mrf.mxu0
    %v3298 = vadd.f32 %v3054, %v3297
    %v3299 = vpop.f32.mrf.mxu0
    %v3300 = vadd.f32 %v3054, %v3299
    %3301 = vmatmul.bf16.gmra.mxu0 %v3017
    %v3302 = vpop.f32.mrf.mxu0
    %v3303 = vadd.f32 %v3054, %v3302
    %v3304 = vpop.f32.mrf.mxu0
    %v3305 = vadd.f32 %v3054, %v3304
    %3306 = vdwg.mxu0
    %3307 = vmatpush.bf16.msra.mxu0 %v3187
    %3308 = vmatpush.bf16.msra.mxu0 %v3183
    %3309 = vmatpush.bf16.msra.mxu0 %v3179
    %3310 = vmatpush.bf16.msra.mxu0 %v3175
    %3311 = vmatpush.bf16.msra.mxu0 %v3171
    %3312 = vmatpush.bf16.msra.mxu0 %v3167
    %3313 = vmatpush.bf16.msra.mxu0 %v3163
    %3314 = vmatpush.bf16.msra.mxu0 %v3159
    %3315 = vmatmul.bf16.gmra.mxu0 %v3014
    %v3316 = vpop.f32.mrf.mxu0
    %v3317 = vadd.f32 %v3055, %v3316
    %v3318 = vpop.f32.mrf.mxu0
    %v3319 = vadd.f32 %v3055, %v3318
    %3320 = vmatmul.bf16.gmra.mxu0 %v3015
    %v3321 = vpop.f32.mrf.mxu0
    %v3322 = vadd.f32 %v3055, %v3321
    %v3323 = vpop.f32.mrf.mxu0
    %v3324 = vadd.f32 %v3055, %v3323
    %3325 = vmatmul.bf16.gmra.mxu0 %v3016
    %v3326 = vpop.f32.mrf.mxu0
    %v3327 = vadd.f32 %v3055, %v3326
    %v3328 = vpop.f32.mrf.mxu0
    %v3329 = vadd.f32 %v3055, %v3328
    %3330 = vmatmul.bf16.gmra.mxu0 %v3017
    %v3331 = vpop.f32.mrf.mxu0
    %v3332 = vadd.f32 %v3055, %v3331
    %v3333 = vpop.f32.mrf.mxu0
    %v3334 = vadd.f32 %v3055, %v3333
    %3335 = vdwg.mxu0
    %v3336 = vmul.f32 %v3230, 0.5
    %v3337 = vmul.f32 %v3259, 0.5
    %v3338 = vmul.f32 %v3288, 0.5
    %v3339 = vmul.f32 %v3317, 0.5
    %v3340 = vmul.f32 %v3232, 0.5
    %v3341 = vmul.f32 %v3261, 0.5
    %v3342 = vmul.f32 %v3290, 0.5
    %v3343 = vmul.f32 %v3319, 0.5
    %v3344 = vmul.f32 %v3235, 0.5
    %v3345 = vmul.f32 %v3264, 0.5
    %v3346 = vmul.f32 %v3293, 0.5
    %v3347 = vmul.f32 %v3322, 0.5
    %v3348 = vmul.f32 %v3237, 0.5
    %v3349 = vmul.f32 %v3266, 0.5
    %v3350 = vmul.f32 %v3295, 0.5
    %v3351 = vmul.f32 %v3324, 0.5
    %v3352 = vmul.f32 %v3240, 0.5
    %v3353 = vmul.f32 %v3269, 0.5
    %v3354 = vmul.f32 %v3298, 0.5
    %v3355 = vmul.f32 %v3327, 0.5
    %v3356 = vmul.f32 %v3242, 0.5
    %v3357 = vmul.f32 %v3271, 0.5
    %v3358 = vmul.f32 %v3300, 0.5
    %v3359 = vmul.f32 %v3329, 0.5
    %v3360 = vmul.f32 %v3245, 0.5
    %v3361 = vmul.f32 %v3274, 0.5
    %v3362 = vmul.f32 %v3303, 0.5
    %v3363 = vmul.f32 %v3332, 0.5
    %v3364 = vmul.f32 %v3247, 0.5
    %v3365 = vmul.f32 %v3276, 0.5
    %v3366 = vmul.f32 %v3305, 0.5
    %v3367 = vmul.f32 %v3334, 0.5
    %v3368 = vmul.f32 %v3230, 0.044715
    %v3369 = vmul.f32 %v3259, 0.044715
    %v3370 = vmul.f32 %v3288, 0.044715
    %v3371 = vmul.f32 %v3317, 0.044715
    %v3372 = vmul.f32 %v3232, 0.044715
    %v3373 = vmul.f32 %v3261, 0.044715
    %v3374 = vmul.f32 %v3290, 0.044715
    %v3375 = vmul.f32 %v3319, 0.044715
    %v3376 = vmul.f32 %v3235, 0.044715
    %v3377 = vmul.f32 %v3264, 0.044715
    %v3378 = vmul.f32 %v3293, 0.044715
    %v3379 = vmul.f32 %v3322, 0.044715
    %v3380 = vmul.f32 %v3237, 0.044715
    %v3381 = vmul.f32 %v3266, 0.044715
    %v3382 = vmul.f32 %v3295, 0.044715
    %v3383 = vmul.f32 %v3324, 0.044715
    %v3384 = vmul.f32 %v3240, 0.044715
    %v3385 = vmul.f32 %v3269, 0.044715
    %v3386 = vmul.f32 %v3298, 0.044715
    %v3387 = vmul.f32 %v3327, 0.044715
    %v3388 = vmul.f32 %v3242, 0.044715
    %v3389 = vmul.f32 %v3271, 0.044715
    %v3390 = vmul.f32 %v3300, 0.044715
    %v3391 = vmul.f32 %v3329, 0.044715
    %v3392 = vmul.f32 %v3245, 0.044715
    %v3393 = vmul.f32 %v3274, 0.044715
    %v3394 = vmul.f32 %v3303, 0.044715
    %v3395 = vmul.f32 %v3332, 0.044715
    %v3396 = vmul.f32 %v3247, 0.044715
    %v3397 = vmul.f32 %v3276, 0.044715
    %v3398 = vmul.f32 %v3305, 0.044715
    %v3399 = vmul.f32 %v3334, 0.044715
    %v3400 = vmul.f32 %v3368, %v3230
    %v3401 = vmul.f32 %v3369, %v3259
    %v3402 = vmul.f32 %v3370, %v3288
    %v3403 = vmul.f32 %v3371, %v3317
    %v3404 = vmul.f32 %v3372, %v3232
    %v3405 = vmul.f32 %v3373, %v3261
    %v3406 = vmul.f32 %v3374, %v3290
    %v3407 = vmul.f32 %v3375, %v3319
    %v3408 = vmul.f32 %v3376, %v3235
    %v3409 = vmul.f32 %v3377, %v3264
    %v3410 = vmul.f32 %v3378, %v3293
    %v3411 = vmul.f32 %v3379, %v3322
    %v3412 = vmul.f32 %v3380, %v3237
    %v3413 = vmul.f32 %v3381, %v3266
    %v3414 = vmul.f32 %v3382, %v3295
    %v3415 = vmul.f32 %v3383, %v3324
    %v3416 = vmul.f32 %v3384, %v3240
    %v3417 = vmul.f32 %v3385, %v3269
    %v3418 = vmul.f32 %v3386, %v3298
    %v3419 = vmul.f32 %v3387, %v3327
    %v3420 = vmul.f32 %v3388, %v3242
    %v3421 = vmul.f32 %v3389, %v3271
    %v3422 = vmul.f32 %v3390, %v3300
    %v3423 = vmul.f32 %v3391, %v3329
    %v3424 = vmul.f32 %v3392, %v3245
    %v3425 = vmul.f32 %v3393, %v3274
    %v3426 = vmul.f32 %v3394, %v3303
    %v3427 = vmul.f32 %v3395, %v3332
    %v3428 = vmul.f32 %v3396, %v3247
    %v3429 = vmul.f32 %v3397, %v3276
    %v3430 = vmul.f32 %v3398, %v3305
    %v3431 = vmul.f32 %v3399, %v3334
    %v3432 = vmul.f32 %v3400, %v3230
    %v3433 = vmul.f32 %v3401, %v3259
    %v3434 = vmul.f32 %v3402, %v3288
    %v3435 = vmul.f32 %v3403, %v3317
    %v3436 = vmul.f32 %v3404, %v3232
    %v3437 = vmul.f32 %v3405, %v3261
    %v3438 = vmul.f32 %v3406, %v3290
    %v3439 = vmul.f32 %v3407, %v3319
    %v3440 = vmul.f32 %v3408, %v3235
    %v3441 = vmul.f32 %v3409, %v3264
    %v3442 = vmul.f32 %v3410, %v3293
    %v3443 = vmul.f32 %v3411, %v3322
    %v3444 = vmul.f32 %v3412, %v3237
    %v3445 = vmul.f32 %v3413, %v3266
    %v3446 = vmul.f32 %v3414, %v3295
    %v3447 = vmul.f32 %v3415, %v3324
    %v3448 = vmul.f32 %v3416, %v3240
    %v3449 = vmul.f32 %v3417, %v3269
    %v3450 = vmul.f32 %v3418, %v3298
    %v3451 = vmul.f32 %v3419, %v3327
    %v3452 = vmul.f32 %v3420, %v3242
    %v3453 = vmul.f32 %v3421, %v3271
    %v3454 = vmul.f32 %v3422, %v3300
    %v3455 = vmul.f32 %v3423, %v3329
    %v3456 = vmul.f32 %v3424, %v3245
    %v3457 = vmul.f32 %v3425, %v3274
    %v3458 = vmul.f32 %v3426, %v3303
    %v3459 = vmul.f32 %v3427, %v3332
    %v3460 = vmul.f32 %v3428, %v3247
    %v3461 = vmul.f32 %v3429, %v3276
    %v3462 = vmul.f32 %v3430, %v3305
    %v3463 = vmul.f32 %v3431, %v3334
    %v3464 = vadd.f32 %v3230, %v3432
    %v3465 = vadd.f32 %v3259, %v3433
    %v3466 = vadd.f32 %v3288, %v3434
    %v3467 = vadd.f32 %v3317, %v3435
    %v3468 = vadd.f32 %v3232, %v3436
    %v3469 = vadd.f32 %v3261, %v3437
    %v3470 = vadd.f32 %v3290, %v3438
    %v3471 = vadd.f32 %v3319, %v3439
    %v3472 = vadd.f32 %v3235, %v3440
    %v3473 = vadd.f32 %v3264, %v3441
    %v3474 = vadd.f32 %v3293, %v3442
    %v3475 = vadd.f32 %v3322, %v3443
    %v3476 = vadd.f32 %v3237, %v3444
    %v3477 = vadd.f32 %v3266, %v3445
    %v3478 = vadd.f32 %v3295, %v3446
    %v3479 = vadd.f32 %v3324, %v3447
    %v3480 = vadd.f32 %v3240, %v3448
    %v3481 = vadd.f32 %v3269, %v3449
    %v3482 = vadd.f32 %v3298, %v3450
    %v3483 = vadd.f32 %v3327, %v3451
    %v3484 = vadd.f32 %v3242, %v3452
    %v3485 = vadd.f32 %v3271, %v3453
    %v3486 = vadd.f32 %v3300, %v3454
    %v3487 = vadd.f32 %v3329, %v3455
    %v3488 = vadd.f32 %v3245, %v3456
    %v3489 = vadd.f32 %v3274, %v3457
    %v3490 = vadd.f32 %v3303, %v3458
    %v3491 = vadd.f32 %v3332, %v3459
    %v3492 = vadd.f32 %v3247, %v3460
    %v3493 = vadd.f32 %v3276, %v3461
    %v3494 = vadd.f32 %v3305, %v3462
    %v3495 = vadd.f32 %v3334, %v3463
    %v3496 = vmul.f32 %v3464, 0.7978846
    %v3497 = vmul.f32 %v3465, 0.7978846
    %v3498 = vmul.f32 %v3466, 0.7978846
    %v3499 = vmul.f32 %v3467, 0.7978846
    %v3500 = vmul.f32 %v3468, 0.7978846
    %v3501 = vmul.f32 %v3469, 0.7978846
    %v3502 = vmul.f32 %v3470, 0.7978846
    %v3503 = vmul.f32 %v3471, 0.7978846
    %v3504 = vmul.f32 %v3472, 0.7978846
    %v3505 = vmul.f32 %v3473, 0.7978846
    %v3506 = vmul.f32 %v3474, 0.7978846
    %v3507 = vmul.f32 %v3475, 0.7978846
    %v3508 = vmul.f32 %v3476, 0.7978846
    %v3509 = vmul.f32 %v3477, 0.7978846
    %v3510 = vmul.f32 %v3478, 0.7978846
    %v3511 = vmul.f32 %v3479, 0.7978846
    %v3512 = vmul.f32 %v3480, 0.7978846
    %v3513 = vmul.f32 %v3481, 0.7978846
    %v3514 = vmul.f32 %v3482, 0.7978846
    %v3515 = vmul.f32 %v3483, 0.7978846
    %v3516 = vmul.f32 %v3484, 0.7978846
    %v3517 = vmul.f32 %v3485, 0.7978846
    %v3518 = vmul.f32 %v3486, 0.7978846
    %v3519 = vmul.f32 %v3487, 0.7978846
    %v3520 = vmul.f32 %v3488, 0.7978846
    %v3521 = vmul.f32 %v3489, 0.7978846
    %v3522 = vmul.f32 %v3490, 0.7978846
    %v3523 = vmul.f32 %v3491, 0.7978846
    %v3524 = vmul.f32 %v3492, 0.7978846
    %v3525 = vmul.f32 %v3493, 0.7978846
    %v3526 = vmul.f32 %v3494, 0.7978846
    %v3527 = vmul.f32 %v3495, 0.7978846
    %v3528 = vtanh.pop %v3496
    %v3529 = vtanh.pop %v3497
    %v3530 = vtanh.pop %v3498
    %v3531 = vtanh.pop %v3499
    %v3532 = vtanh.pop %v3500
    %v3533 = vtanh.pop %v3501
    %v3534 = vtanh.pop %v3502
    %v3535 = vtanh.pop %v3503
    %v3536 = vtanh.pop %v3504
    %v3537 = vtanh.pop %v3505
    %v3538 = vtanh.pop %v3506
    %v3539 = vtanh.pop %v3507
    %v3540 = vtanh.pop %v3508
    %v3541 = vtanh.pop %v3509
    %v3542 = vtanh.pop %v3510
    %v3543 = vtanh.pop %v3511
    %v3544 = vtanh.pop %v3512
    %v3545 = vtanh.pop %v3513
    %v3546 = vtanh.pop %v3514
    %v3547 = vtanh.pop %v3515
    %v3548 = vtanh.pop %v3516
    %v3549 = vtanh.pop %v3517
    %v3550 = vtanh.pop %v3518
    %v3551 = vtanh.pop %v3519
    %v3552 = vtanh.pop %v3520
    %v3553 = vtanh.pop %v3521
    %v3554 = vtanh.pop %v3522
    %v3555 = vtanh.pop %v3523
    %v3556 = vtanh.pop %v3524
    %v3557 = vtanh.pop %v3525
    %v3558 = vtanh.pop %v3526
    %v3559 = vtanh.pop %v3527
    %v3560 = vadd.f32 %v3528, 1.0
    %v3561 = vadd.f32 %v3529, 1.0
    %v3562 = vadd.f32 %v3530, 1.0
    %v3563 = vadd.f32 %v3531, 1.0
    %v3564 = vadd.f32 %v3532, 1.0
    %v3565 = vadd.f32 %v3533, 1.0
    %v3566 = vadd.f32 %v3534, 1.0
    %v3567 = vadd.f32 %v3535, 1.0
    %v3568 = vadd.f32 %v3536, 1.0
    %v3569 = vadd.f32 %v3537, 1.0
    %v3570 = vadd.f32 %v3538, 1.0
    %v3571 = vadd.f32 %v3539, 1.0
    %v3572 = vadd.f32 %v3540, 1.0
    %v3573 = vadd.f32 %v3541, 1.0
    %v3574 = vadd.f32 %v3542, 1.0
    %v3575 = vadd.f32 %v3543, 1.0
    %v3576 = vadd.f32 %v3544, 1.0
    %v3577 = vadd.f32 %v3545, 1.0
    %v3578 = vadd.f32 %v3546, 1.0
    %v3579 = vadd.f32 %v3547, 1.0
    %v3580 = vadd.f32 %v3548, 1.0
    %v3581 = vadd.f32 %v3549, 1.0
    %v3582 = vadd.f32 %v3550, 1.0
    %v3583 = vadd.f32 %v3551, 1.0
    %v3584 = vadd.f32 %v3552, 1.0
    %v3585 = vadd.f32 %v3553, 1.0
    %v3586 = vadd.f32 %v3554, 1.0
    %v3587 = vadd.f32 %v3555, 1.0
    %v3588 = vadd.f32 %v3556, 1.0
    %v3589 = vadd.f32 %v3557, 1.0
    %v3590 = vadd.f32 %v3558, 1.0
    %v3591 = vadd.f32 %v3559, 1.0
    %v3592 = vmul.f32 %v3336, %v3560
    %v3593 = vmul.f32 %v3337, %v3561
    %v3594 = vmul.f32 %v3338, %v3562
    %v3595 = vmul.f32 %v3339, %v3563
    %v3596 = vmul.f32 %v3340, %v3564
    %v3597 = vmul.f32 %v3341, %v3565
    %v3598 = vmul.f32 %v3342, %v3566
    %v3599 = vmul.f32 %v3343, %v3567
    %v3600 = vmul.f32 %v3344, %v3568
    %v3601 = vmul.f32 %v3345, %v3569
    %v3602 = vmul.f32 %v3346, %v3570
    %v3603 = vmul.f32 %v3347, %v3571
    %v3604 = vmul.f32 %v3348, %v3572
    %v3605 = vmul.f32 %v3349, %v3573
    %v3606 = vmul.f32 %v3350, %v3574
    %v3607 = vmul.f32 %v3351, %v3575
    %v3608 = vmul.f32 %v3352, %v3576
    %v3609 = vmul.f32 %v3353, %v3577
    %v3610 = vmul.f32 %v3354, %v3578
    %v3611 = vmul.f32 %v3355, %v3579
    %v3612 = vmul.f32 %v3356, %v3580
    %v3613 = vmul.f32 %v3357, %v3581
    %v3614 = vmul.f32 %v3358, %v3582
    %v3615 = vmul.f32 %v3359, %v3583
    %v3616 = vmul.f32 %v3360, %v3584
    %v3617 = vmul.f32 %v3361, %v3585
    %v3618 = vmul.f32 %v3362, %v3586
    %v3619 = vmul.f32 %v3363, %v3587
    %v3620 = vmul.f32 %v3364, %v3588
    %v3621 = vmul.f32 %v3365, %v3589
    %v3622 = vmul.f32 %v3366, %v3590
    %v3623 = vmul.f32 %v3367, %v3591
    %v3624 = vpack.c.bf16 %v3596, %v3592
    %v3625 = vpack.c.bf16 %v3597, %v3593
    %v3626 = vpack.c.bf16 %v3598, %v3594
    %v3627 = vpack.c.bf16 %v3599, %v3595
    %v3628 = vpack.c.bf16 %v3604, %v3600
    %v3629 = vpack.c.bf16 %v3605, %v3601
    %v3630 = vpack.c.bf16 %v3606, %v3602
    %v3631 = vpack.c.bf16 %v3607, %v3603
    %v3632 = vpack.c.bf16 %v3612, %v3608
    %v3633 = vpack.c.bf16 %v3613, %v3609
    %v3634 = vpack.c.bf16 %v3614, %v3610
    %v3635 = vpack.c.bf16 %v3615, %v3611
    %v3636 = vpack.c.bf16 %v3620, %v3616
    %v3637 = vpack.c.bf16 %v3621, %v3617
    %v3638 = vpack.c.bf16 %v3622, %v3618
    %v3639 = vpack.c.bf16 %v3623, %v3619
    %v3640 = vld [vmem:[#allocation7] sm:$0xf]
    %v3641 = vld [vmem:[#allocation7 + $0x4] sm:$0xf]
    %v3642 = vld [vmem:[#allocation7 + $0x8] sm:$0xf]
    %v3643 = vld [vmem:[#allocation7 + $0xc] sm:$0xf]
    %v3644 = vld [vmem:[#allocation7 + $0x10] sm:$0xf]
    %v3645 = vld [vmem:[#allocation7 + $0x14] sm:$0xf]
    %v3646 = vld [vmem:[#allocation7 + $0x18] sm:$0xf]
    %v3647 = vld [vmem:[#allocation7 + $0x1c] sm:$0xf]
    %v3648 = vld [vmem:[#allocation7 + $0x20] sm:$0xf]
    %v3649 = vld [vmem:[#allocation7 + $0x24] sm:$0xf]
    %v3650 = vld [vmem:[#allocation7 + $0x28] sm:$0xf]
    %v3651 = vld [vmem:[#allocation7 + $0x2c] sm:$0xf]
    %v3652 = vld [vmem:[#allocation7 + $0x30] sm:$0xf]
    %v3653 = vld [vmem:[#allocation7 + $0x34] sm:$0xf]
    %v3654 = vld [vmem:[#allocation7 + $0x38] sm:$0xf]
    %v3655 = vld [vmem:[#allocation7 + $0x3c] sm:$0xf]
    %v3656 = vld [vmem:[#allocation7 + $0x40] sm:$0xf]
    %v3657 = vld [vmem:[#allocation7 + $0x44] sm:$0xf]
    %v3658 = vld [vmem:[#allocation7 + $0x48] sm:$0xf]
    %v3659 = vld [vmem:[#allocation7 + $0x4c] sm:$0xf]
    %v3660 = vld [vmem:[#allocation7 + $0x50] sm:$0xf]
    %v3661 = vld [vmem:[#allocation7 + $0x54] sm:$0xf]
    %v3662 = vld [vmem:[#allocation7 + $0x58] sm:$0xf]
    %v3663 = vld [vmem:[#allocation7 + $0x5c] sm:$0xf]
    %v3664 = vld [vmem:[#allocation7 + $0x60] sm:$0xf]
    %v3665 = vld [vmem:[#allocation7 + $0x64] sm:$0xf]
    %v3666 = vld [vmem:[#allocation7 + $0x68] sm:$0xf]
    %v3667 = vld [vmem:[#allocation7 + $0x6c] sm:$0xf]
    %v3668 = vld [vmem:[#allocation7 + $0x70] sm:$0xf]
    %v3669 = vld [vmem:[#allocation7 + $0x74] sm:$0xf]
    %v3670 = vld [vmem:[#allocation7 + $0x78] sm:$0xf]
    %v3671 = vld [vmem:[#allocation7 + $0x7c] sm:$0xf]
    %v3672 = vld [vmem:[#allocation7 + $0x80] sm:$0xf]
    %v3673 = vld [vmem:[#allocation7 + $0x84] sm:$0xf]
    %v3674 = vld [vmem:[#allocation7 + $0x88] sm:$0xf]
    %v3675 = vld [vmem:[#allocation7 + $0x8c] sm:$0xf]
    %v3676 = vld [vmem:[#allocation7 + $0x90] sm:$0xf]
    %v3677 = vld [vmem:[#allocation7 + $0x94] sm:$0xf]
    %v3678 = vld [vmem:[#allocation7 + $0x98] sm:$0xf]
    %v3679 = vld [vmem:[#allocation7 + $0x9c] sm:$0xf]
    %v3680 = vld [vmem:[#allocation7 + $0xa0] sm:$0xf]
    %v3681 = vld [vmem:[#allocation7 + $0xa4] sm:$0xf]
    %v3682 = vld [vmem:[#allocation7 + $0xa8] sm:$0xf]
    %v3683 = vld [vmem:[#allocation7 + $0xac] sm:$0xf]
    %v3684 = vld [vmem:[#allocation7 + $0xb0] sm:$0xf]
    %v3685 = vld [vmem:[#allocation7 + $0xb4] sm:$0xf]
    %v3686 = vld [vmem:[#allocation7 + $0xb8] sm:$0xf]
    %v3687 = vld [vmem:[#allocation7 + $0xbc] sm:$0xf]
    %v3688 = vld [vmem:[#allocation7 + $0xc0] sm:$0xf]
    %v3689 = vld [vmem:[#allocation7 + $0xc4] sm:$0xf]
    %v3690 = vld [vmem:[#allocation7 + $0xc8] sm:$0xf]
    %v3691 = vld [vmem:[#allocation7 + $0xcc] sm:$0xf]
    %v3692 = vld [vmem:[#allocation7 + $0xd0] sm:$0xf]
    %v3693 = vld [vmem:[#allocation7 + $0xd4] sm:$0xf]
    %v3694 = vld [vmem:[#allocation7 + $0xd8] sm:$0xf]
    %v3695 = vld [vmem:[#allocation7 + $0xdc] sm:$0xf]
    %v3696 = vld [vmem:[#allocation7 + $0xe0] sm:$0xf]
    %v3697 = vld [vmem:[#allocation7 + $0xe4] sm:$0xf]
    %v3698 = vld [vmem:[#allocation7 + $0xe8] sm:$0xf]
    %v3699 = vld [vmem:[#allocation7 + $0xec] sm:$0xf]
    %v3700 = vld [vmem:[#allocation7 + $0xf0] sm:$0xf]
    %v3701 = vld [vmem:[#allocation7 + $0xf4] sm:$0xf]
    %v3702 = vld [vmem:[#allocation7 + $0xf8] sm:$0xf]
    %v3703 = vld [vmem:[#allocation7 + $0xfc] sm:$0xf]
    %v3704 = vld [vmem:[%s14] sm:$0x1]
    %v3706 = vperm.slane %v3704, 0
    %v3772 = vunpack.c.l.b16 %v3640
    %v3773 = vunpack.c.l.b16 %v3641
    %v3774 = vunpack.c.l.b16 %v3642
    %v3775 = vunpack.c.l.b16 %v3643
    %v3776 = vunpack.c.l.b16 %v3644
    %v3777 = vunpack.c.l.b16 %v3645
    %v3778 = vunpack.c.l.b16 %v3646
    %v3779 = vunpack.c.l.b16 %v3647
    %v3780 = vunpack.c.l.b16 %v3648
    %v3781 = vunpack.c.l.b16 %v3649
    %v3782 = vunpack.c.l.b16 %v3650
    %v3783 = vunpack.c.l.b16 %v3651
    %v3784 = vunpack.c.l.b16 %v3652
    %v3785 = vunpack.c.l.b16 %v3653
    %v3786 = vunpack.c.l.b16 %v3654
    %v3787 = vunpack.c.l.b16 %v3655
    %v3788 = vunpack.c.l.b16 %v3656
    %v3789 = vunpack.c.l.b16 %v3657
    %v3790 = vunpack.c.l.b16 %v3658
    %v3791 = vunpack.c.l.b16 %v3659
    %v3792 = vunpack.c.l.b16 %v3660
    %v3793 = vunpack.c.l.b16 %v3661
    %v3794 = vunpack.c.l.b16 %v3662
    %v3795 = vunpack.c.l.b16 %v3663
    %v3796 = vunpack.c.l.b16 %v3664
    %v3797 = vunpack.c.l.b16 %v3665
    %v3798 = vunpack.c.l.b16 %v3666
    %v3799 = vunpack.c.l.b16 %v3667
    %v3800 = vunpack.c.l.b16 %v3668
    %v3801 = vunpack.c.l.b16 %v3669
    %v3802 = vunpack.c.l.b16 %v3670
    %v3803 = vunpack.c.l.b16 %v3671
    %v3804 = vunpack.c.l.b16 %v3672
    %v3805 = vunpack.c.l.b16 %v3673
    %v3806 = vunpack.c.l.b16 %v3674
    %v3807 = vunpack.c.l.b16 %v3675
    %v3808 = vunpack.c.l.b16 %v3676
    %v3809 = vunpack.c.l.b16 %v3677
    %v3810 = vunpack.c.l.b16 %v3678
    %v3811 = vunpack.c.l.b16 %v3679
    %v3812 = vunpack.c.l.b16 %v3680
    %v3813 = vunpack.c.l.b16 %v3681
    %v3814 = vunpack.c.l.b16 %v3682
    %v3815 = vunpack.c.l.b16 %v3683
    %v3816 = vunpack.c.l.b16 %v3684
    %v3817 = vunpack.c.l.b16 %v3685
    %v3818 = vunpack.c.l.b16 %v3686
    %v3819 = vunpack.c.l.b16 %v3687
    %v3820 = vunpack.c.l.b16 %v3688
    %v3821 = vunpack.c.l.b16 %v3689
    %v3822 = vunpack.c.l.b16 %v3690
    %v3823 = vunpack.c.l.b16 %v3691
    %v3824 = vunpack.c.l.b16 %v3692
    %v3825 = vunpack.c.l.b16 %v3693
    %v3826 = vunpack.c.l.b16 %v3694
    %v3827 = vunpack.c.l.b16 %v3695
    %v3828 = vunpack.c.l.b16 %v3696
    %v3829 = vunpack.c.l.b16 %v3697
    %v3830 = vunpack.c.l.b16 %v3698
    %v3831 = vunpack.c.l.b16 %v3699
    %v3832 = vunpack.c.l.b16 %v3700
    %v3833 = vunpack.c.l.b16 %v3701
    %v3834 = vunpack.c.l.b16 %v3702
    %v3835 = vunpack.c.l.b16 %v3703
    %v3836 = vpack.c.b16 %v3773, %v3772
    %v3837 = vpack.c.b16 %v3775, %v3774
    %v3838 = vpack.c.b16 %v3777, %v3776
    %v3839 = vpack.c.b16 %v3779, %v3778
    %v3840 = vpack.c.b16 %v3781, %v3780
    %v3841 = vpack.c.b16 %v3783, %v3782
    %v3842 = vpack.c.b16 %v3785, %v3784
    %v3843 = vpack.c.b16 %v3787, %v3786
    %v3844 = vpack.c.b16 %v3789, %v3788
    %v3845 = vpack.c.b16 %v3791, %v3790
    %v3846 = vpack.c.b16 %v3793, %v3792
    %v3847 = vpack.c.b16 %v3795, %v3794
    %v3848 = vpack.c.b16 %v3797, %v3796
    %v3849 = vpack.c.b16 %v3799, %v3798
    %v3850 = vpack.c.b16 %v3801, %v3800
    %v3851 = vpack.c.b16 %v3803, %v3802
    %v3852 = vpack.c.b16 %v3805, %v3804
    %v3853 = vpack.c.b16 %v3807, %v3806
    %v3854 = vpack.c.b16 %v3809, %v3808
    %v3855 = vpack.c.b16 %v3811, %v3810
    %v3856 = vpack.c.b16 %v3813, %v3812
    %v3857 = vpack.c.b16 %v3815, %v3814
    %v3858 = vpack.c.b16 %v3817, %v3816
    %v3859 = vpack.c.b16 %v3819, %v3818
    %v3860 = vpack.c.b16 %v3821, %v3820
    %v3861 = vpack.c.b16 %v3823, %v3822
    %v3862 = vpack.c.b16 %v3825, %v3824
    %v3863 = vpack.c.b16 %v3827, %v3826
    %v3864 = vpack.c.b16 %v3829, %v3828
    %v3865 = vpack.c.b16 %v3831, %v3830
    %v3866 = vpack.c.b16 %v3833, %v3832
    %v3867 = vpack.c.b16 %v3835, %v3834
    %3900 = vmatpush.bf16.msra.mxu0 %v3843
    %3901 = vmatpush.bf16.msra.mxu0 %v3842
    %3902 = vmatpush.bf16.msra.mxu0 %v3841
    %3903 = vmatpush.bf16.msra.mxu0 %v3840
    %3904 = vmatpush.bf16.msra.mxu0 %v3839
    %3905 = vmatpush.bf16.msra.mxu0 %v3838
    %3906 = vmatpush.bf16.msra.mxu0 %v3837
    %3907 = vmatpush.bf16.msra.mxu0 %v3836
    %3908 = vmatmul.bf16.gmra.mxu0 %v3624
    %v3909 = vpop.f32.mrf.mxu0
    %v3910 = vadd.f32 %v3706, %v3909
    %v3911 = vpop.f32.mrf.mxu0
    %v3912 = vadd.f32 %v3706, %v3911
    %3913 = vmatmul.bf16.gmra.mxu0 %v3628
    %v3914 = vpop.f32.mrf.mxu0
    %v3915 = vadd.f32 %v3706, %v3914
    %v3916 = vpop.f32.mrf.mxu0
    %v3917 = vadd.f32 %v3706, %v3916
    %3918 = vmatmul.bf16.gmra.mxu0 %v3632
    %v3919 = vpop.f32.mrf.mxu0
    %v3920 = vadd.f32 %v3706, %v3919
    %v3921 = vpop.f32.mrf.mxu0
    %v3922 = vadd.f32 %v3706, %v3921
    %3923 = vmatmul.bf16.gmra.mxu0 %v3636
    %v3924 = vpop.f32.mrf.mxu0
    %v3925 = vadd.f32 %v3706, %v3924
    %v3926 = vpop.f32.mrf.mxu0
    %v3927 = vadd.f32 %v3706, %v3926
    %3928 = vdwg.mxu0
    %3929 = vmatpush.bf16.msra.mxu0 %v3851
    %3930 = vmatpush.bf16.msra.mxu0 %v3850
    %3931 = vmatpush.bf16.msra.mxu0 %v3849
    %3932 = vmatpush.bf16.msra.mxu0 %v3848
    %3933 = vmatpush.bf16.msra.mxu0 %v3847
    %3934 = vmatpush.bf16.msra.mxu0 %v3846
    %3935 = vmatpush.bf16.msra.mxu0 %v3845
    %3936 = vmatpush.bf16.msra.mxu0 %v3844
    %3937 = vmatmul.bf16.gmra.mxu0 %v3625
    %v3938 = vpop.f32.mrf.mxu0
    %v3939 = vadd.f32 %v3910, %v3938
    %v3940 = vpop.f32.mrf.mxu0
    %v3941 = vadd.f32 %v3912, %v3940
    %3942 = vmatmul.bf16.gmra.mxu0 %v3629
    %v3943 = vpop.f32.mrf.mxu0
    %v3944 = vadd.f32 %v3915, %v3943
    %v3945 = vpop.f32.mrf.mxu0
    %v3946 = vadd.f32 %v3917, %v3945
    %3947 = vmatmul.bf16.gmra.mxu0 %v3633
    %v3948 = vpop.f32.mrf.mxu0
    %v3949 = vadd.f32 %v3920, %v3948
    %v3950 = vpop.f32.mrf.mxu0
    %v3951 = vadd.f32 %v3922, %v3950
    %3952 = vmatmul.bf16.gmra.mxu0 %v3637
    %v3953 = vpop.f32.mrf.mxu0
    %v3954 = vadd.f32 %v3925, %v3953
    %v3955 = vpop.f32.mrf.mxu0
    %v3956 = vadd.f32 %v3927, %v3955
    %3957 = vdwg.mxu0
    %3958 = vmatpush.bf16.msra.mxu0 %v3859
    %3959 = vmatpush.bf16.msra.mxu0 %v3858
    %3960 = vmatpush.bf16.msra.mxu0 %v3857
    %3961 = vmatpush.bf16.msra.mxu0 %v3856
    %3962 = vmatpush.bf16.msra.mxu0 %v3855
    %3963 = vmatpush.bf16.msra.mxu0 %v3854
    %3964 = vmatpush.bf16.msra.mxu0 %v3853
    %3965 = vmatpush.bf16.msra.mxu0 %v3852
    %3966 = vmatmul.bf16.gmra.mxu0 %v3626
    %v3967 = vpop.f32.mrf.mxu0
    %v3968 = vadd.f32 %v3939, %v3967
    %v3969 = vpop.f32.mrf.mxu0
    %v3970 = vadd.f32 %v3941, %v3969
    %3971 = vmatmul.bf16.gmra.mxu0 %v3630
    %v3972 = vpop.f32.mrf.mxu0
    %v3973 = vadd.f32 %v3944, %v3972
    %v3974 = vpop.f32.mrf.mxu0
    %v3975 = vadd.f32 %v3946, %v3974
    %3976 = vmatmul.bf16.gmra.mxu0 %v3634
    %v3977 = vpop.f32.mrf.mxu0
    %v3978 = vadd.f32 %v3949, %v3977
    %v3979 = vpop.f32.mrf.mxu0
    %v3980 = vadd.f32 %v3951, %v3979
    %3981 = vmatmul.bf16.gmra.mxu0 %v3638
    %v3982 = vpop.f32.mrf.mxu0
    %v3983 = vadd.f32 %v3954, %v3982
    %v3984 = vpop.f32.mrf.mxu0
    %v3985 = vadd.f32 %v3956, %v3984
    %3986 = vdwg.mxu0
    %3987 = vmatpush.bf16.msra.mxu0 %v3867
    %3988 = vmatpush.bf16.msra.mxu0 %v3866
    %3989 = vmatpush.bf16.msra.mxu0 %v3865
    %3990 = vmatpush.bf16.msra.mxu0 %v3864
    %3991 = vmatpush.bf16.msra.mxu0 %v3863
    %3992 = vmatpush.bf16.msra.mxu0 %v3862
    %3993 = vmatpush.bf16.msra.mxu0 %v3861
    %3994 = vmatpush.bf16.msra.mxu0 %v3860
    %3995 = vmatmul.bf16.gmra.mxu0 %v3627
    %v3996 = vpop.f32.mrf.mxu0
    %v3997 = vadd.f32 %v3968, %v3996
    %v3998 = vpop.f32.mrf.mxu0
    %v3999 = vadd.f32 %v3970, %v3998
    %4000 = vmatmul.bf16.gmra.mxu0 %v3631
    %v4001 = vpop.f32.mrf.mxu0
    %v4002 = vadd.f32 %v3973, %v4001
    %v4003 = vpop.f32.mrf.mxu0
    %v4004 = vadd.f32 %v3975, %v4003
    %4005 = vmatmul.bf16.gmra.mxu0 %v3635
    %v4006 = vpop.f32.mrf.mxu0
    %v4007 = vadd.f32 %v3978, %v4006
    %v4008 = vpop.f32.mrf.mxu0
    %v4009 = vadd.f32 %v3980, %v4008
    %4010 = vmatmul.bf16.gmra.mxu0 %v3639
    %v4011 = vpop.f32.mrf.mxu0
    %v4012 = vadd.f32 %v3983, %v4011
    %v4013 = vpop.f32.mrf.mxu0
    %v4014 = vadd.f32 %v3985, %v4013
    %4015 = vdwg.mxu0
    %v4016 = vadd.f32 %v3997, %v3006
    %v4017 = vadd.f32 %v3999, %v3007
    %v4018 = vadd.f32 %v4002, %v3008
    %v4019 = vadd.f32 %v4004, %v3009
    %v4020 = vadd.f32 %v4007, %v3010
    %v4021 = vadd.f32 %v4009, %v3011
    %v4022 = vadd.f32 %v4012, %v3012
    %v4023 = vadd.f32 %v4014, %v3013
    %v4024 = vld [vmem:[%s15] sm:$0x1]
    %v4025 = vld [vmem:[%s16] sm:$0x1]
    %4026 = vadd.xlane.f32.xlu0 %v4016
    %v4027 = vpop.xlane.xlu0 %4026
    %4028 = vadd.xlane.f32.xlu0 %v4017
    %v4029 = vpop.xlane.xlu0 %4028
    %4030 = vadd.xlane.f32.xlu0 %v4018
    %v4031 = vpop.xlane.xlu0 %4030
    %4032 = vadd.xlane.f32.xlu0 %v4019
    %v4033 = vpop.xlane.xlu0 %4032
    %4034 = vadd.xlane.f32.xlu0 %v4020
    %v4035 = vpop.xlane.xlu0 %4034
    %4036 = vadd.xlane.f32.xlu0 %v4021
    %v4037 = vpop.xlane.xlu0 %4036
    %4038 = vadd.xlane.f32.xlu0 %v4022
    %v4039 = vpop.xlane.xlu0 %4038
    %4040 = vadd.xlane.f32.xlu0 %v4023
    %v4041 = vpop.xlane.xlu0 %4040
    %v4042 = vmul.f32 %v4027, %v2847
    %v4043 = vmul.f32 %v4029, %v2847
    %v4044 = vmul.f32 %v4031, %v2847
    %v4045 = vmul.f32 %v4033, %v2847
    %v4046 = vmul.f32 %v4035, %v2847
    %v4047 = vmul.f32 %v4037, %v2847
    %v4048 = vmul.f32 %v4039, %v2847
    %v4049 = vmul.f32 %v4041, %v2847
    %v4050 = vsub.f32 %v4016, %v4042
    %v4051 = vsub.f32 %v4017, %v4043
    %v4052 = vsub.f32 %v4018, %v4044
    %v4053 = vsub.f32 %v4019, %v4045
    %v4054 = vsub.f32 %v4020, %v4046
    %v4055 = vsub.f32 %v4021, %v4047
    %v4056 = vsub.f32 %v4022, %v4048
    %v4057 = vsub.f32 %v4023, %v4049
    %v4058 = vmul.f32 %v4050, %v4050
    %v4059 = vmul.f32 %v4051, %v4051
    %v4060 = vmul.f32 %v4052, %v4052
    %v4061 = vmul.f32 %v4053, %v4053
    %v4062 = vmul.f32 %v4054, %v4054
    %v4063 = vmul.f32 %v4055, %v4055
    %v4064 = vmul.f32 %v4056, %v4056
    %v4065 = vmul.f32 %v4057, %v4057
    %4066 = vadd.xlane.f32.xlu0 %v4058
    %v4067 = vpop.xlane.xlu0 %4066
    %4068 = vadd.xlane.f32.xlu0 %v4059
    %v4069 = vpop.xlane.xlu0 %4068
    %4070 = vadd.xlane.f32.xlu0 %v4060
    %v4071 = vpop.xlane.xlu0 %4070
    %4072 = vadd.xlane.f32.xlu0 %v4061
    %v4073 = vpop.xlane.xlu0 %4072
    %4074 = vadd.xlane.f32.xlu0 %v4062
    %v4075 = vpop.xlane.xlu0 %4074
    %4076 = vadd.xlane.f32.xlu0 %v4063
    %v4077 = vpop.xlane.xlu0 %4076
    %4078 = vadd.xlane.f32.xlu0 %v4064
    %v4079 = vpop.xlane.xlu0 %4078
    %4080 = vadd.xlane.f32.xlu0 %v4065
    %v4081 = vpop.xlane.xlu0 %4080
    %v4082 = vmul.f32 %v4067, %v2847
    %v4083 = vmul.f32 %v4069, %v2847
    %v4084 = vmul.f32 %v4071, %v2847
    %v4085 = vmul.f32 %v4073, %v2847
    %v4086 = vmul.f32 %v4075, %v2847
    %v4087 = vmul.f32 %v4077, %v2847
    %v4088 = vmul.f32 %v4079, %v2847
    %v4089 = vmul.f32 %v4081, %v2847
    %v4090 = vadd.f32 %v4082, 1e-12
    %v4091 = vadd.f32 %v4083, 1e-12
    %v4092 = vadd.f32 %v4084, 1e-12
    %v4093 = vadd.f32 %v4085, 1e-12
    %v4094 = vadd.f32 %v4086, 1e-12
    %v4095 = vadd.f32 %v4087, 1e-12
    %v4096 = vadd.f32 %v4088, 1e-12
    %v4097 = vadd.f32 %v4089, 1e-12
    %v4098 = vrsqrt.pop %v4090
    %v4099 = vmul.f32 %v4098, %v4090
    %v4100 = vmul.f32 %v4099, %v4098
    %v4101 = vmul.f32 0.5, %v4100
    %v4102 = vsub.f32 1.5, %v4101
    %v4103 = vmul.f32 %v4098, %v4102
    %vm4104 = vweird.f32 %v4090
    %vm4105 = vweird.f32 %v4098
    %vm4106 = vmor %vm4104, %vm4105
    %v4107 = vsel %vm4106, %v4098, %v4103
    %v4108 = vrsqrt.pop %v4091
    %v4109 = vmul.f32 %v4108, %v4091
    %v4110 = vmul.f32 %v4109, %v4108
    %v4111 = vmul.f32 0.5, %v4110
    %v4112 = vsub.f32 1.5, %v4111
    %v4113 = vmul.f32 %v4108, %v4112
    %vm4114 = vweird.f32 %v4091
    %vm4115 = vweird.f32 %v4108
    %vm4116 = vmor %vm4114, %vm4115
    %v4117 = vsel %vm4116, %v4108, %v4113
    %v4118 = vrsqrt.pop %v4092
    %v4119 = vmul.f32 %v4118, %v4092
    %v4120 = vmul.f32 %v4119, %v4118
    %v4121 = vmul.f32 0.5, %v4120
    %v4122 = vsub.f32 1.5, %v4121
    %v4123 = vmul.f32 %v4118, %v4122
    %vm4124 = vweird.f32 %v4092
    %vm4125 = vweird.f32 %v4118
    %vm4126 = vmor %vm4124, %vm4125
    %v4127 = vsel %vm4126, %v4118, %v4123
    %v4128 = vrsqrt.pop %v4093
    %v4129 = vmul.f32 %v4128, %v4093
    %v4130 = vmul.f32 %v4129, %v4128
    %v4131 = vmul.f32 0.5, %v4130
    %v4132 = vsub.f32 1.5, %v4131
    %v4133 = vmul.f32 %v4128, %v4132
    %vm4134 = vweird.f32 %v4093
    %vm4135 = vweird.f32 %v4128
    %vm4136 = vmor %vm4134, %vm4135
    %v4137 = vsel %vm4136, %v4128, %v4133
    %v4138 = vrsqrt.pop %v4094
    %v4139 = vmul.f32 %v4138, %v4094
    %v4140 = vmul.f32 %v4139, %v4138
    %v4141 = vmul.f32 0.5, %v4140
    %v4142 = vsub.f32 1.5, %v4141
    %v4143 = vmul.f32 %v4138, %v4142
    %vm4144 = vweird.f32 %v4094
    %vm4145 = vweird.f32 %v4138
    %vm4146 = vmor %vm4144, %vm4145
    %v4147 = vsel %vm4146, %v4138, %v4143
    %v4148 = vrsqrt.pop %v4095
    %v4149 = vmul.f32 %v4148, %v4095
    %v4150 = vmul.f32 %v4149, %v4148
    %v4151 = vmul.f32 0.5, %v4150
    %v4152 = vsub.f32 1.5, %v4151
    %v4153 = vmul.f32 %v4148, %v4152
    %vm4154 = vweird.f32 %v4095
    %vm4155 = vweird.f32 %v4148
    %vm4156 = vmor %vm4154, %vm4155
    %v4157 = vsel %vm4156, %v4148, %v4153
    %v4158 = vrsqrt.pop %v4096
    %v4159 = vmul.f32 %v4158, %v4096
    %v4160 = vmul.f32 %v4159, %v4158
    %v4161 = vmul.f32 0.5, %v4160
    %v4162 = vsub.f32 1.5, %v4161
    %v4163 = vmul.f32 %v4158, %v4162
    %vm4164 = vweird.f32 %v4096
    %vm4165 = vweird.f32 %v4158
    %vm4166 = vmor %vm4164, %vm4165
    %v4167 = vsel %vm4166, %v4158, %v4163
    %v4168 = vrsqrt.pop %v4097
    %v4169 = vmul.f32 %v4168, %v4097
    %v4170 = vmul.f32 %v4169, %v4168
    %v4171 = vmul.f32 0.5, %v4170
    %v4172 = vsub.f32 1.5, %v4171
    %v4173 = vmul.f32 %v4168, %v4172
    %vm4174 = vweird.f32 %v4097
    %vm4175 = vweird.f32 %v4168
    %vm4176 = vmor %vm4174, %vm4175
    %v4177 = vsel %vm4176, %v4168, %v4173
    %v4178 = vmul.f32 %v4050, %v4107
    %v4179 = vmul.f32 %v4051, %v4117
    %v4180 = vmul.f32 %v4052, %v4127
    %v4181 = vmul.f32 %v4053, %v4137
    %v4182 = vmul.f32 %v4054, %v4147
    %v4183 = vmul.f32 %v4055, %v4157
    %v4184 = vmul.f32 %v4056, %v4167
    %v4185 = vmul.f32 %v4057, %v4177
    %v4187 = vperm.slane %v4024, 0
    %v4189 = vmul.f32 %v4178, %v4187
    %v4190 = vmul.f32 %v4179, %v4187
    %v4191 = vmul.f32 %v4180, %v4187
    %v4192 = vmul.f32 %v4181, %v4187
    %v4193 = vmul.f32 %v4182, %v4187
    %v4194 = vmul.f32 %v4183, %v4187
    %v4195 = vmul.f32 %v4184, %v4187
    %v4196 = vmul.f32 %v4185, %v4187
    %v4198 = vperm.slane %v4025, 0
    %v4200 = vadd.f32 %v4189, %v4198
    %v4201 = vadd.f32 %v4190, %v4198
    %v4202 = vadd.f32 %v4191, %v4198
    %v4203 = vadd.f32 %v4192, %v4198
    %v4204 = vadd.f32 %v4193, %v4198
    %v4205 = vadd.f32 %v4194, %v4198
    %v4206 = vadd.f32 %v4195, %v4198
    %v4207 = vadd.f32 %v4196, %v4198
    %v4208 = vpack.c.bf16 %v4201, %v4200
    %v4209 = vpack.c.bf16 %v4203, %v4202
    %v4210 = vpack.c.bf16 %v4205, %v4204
    %v4211 = vpack.c.bf16 %v4207, %v4206
    %s4212 = scalar_lea.vmem [#allocation3], 192
    %v4213 = vld [vmem:[%s4212] sm:$0xff]
    %v4214 = vld [vmem:[%s4212 + $0x8] sm:$0xf]
    %v4215 = vld [vmem:[%s4212 + $0xc] sm:$0xff]
    %v4216 = vld [vmem:[%s4212 + $0x14] sm:$0xf]
    %v4217 = vld [vmem:[%s4212 + $0x18] sm:$0xff]
    %v4218 = vld [vmem:[%s4212 + $0x20] sm:$0xf]
    %v4219 = vld [vmem:[%s4212 + $0x24] sm:$0xff]
    %v4220 = vld [vmem:[%s4212 + $0x2c] sm:$0xf]
    %v4221 = vld [vmem:[%s4212 + $0x30] sm:$0xff]
    %v4222 = vld [vmem:[%s4212 + $0x38] sm:$0xf]
    %v4223 = vld [vmem:[%s4212 + $0x3c] sm:$0xff]
    %v4224 = vld [vmem:[%s4212 + $0x44] sm:$0xf]
    %v4225 = vld [vmem:[%s4212 + $0x48] sm:$0xff]
    %v4226 = vld [vmem:[%s4212 + $0x50] sm:$0xf]
    %v4227 = vld [vmem:[%s4212 + $0x54] sm:$0xff]
    %v4228 = vld [vmem:[%s4212 + $0x5c] sm:$0xf]
    %v4229 = vld [vmem:[%s4212 + $0x60] sm:$0xff]
    %v4230 = vld [vmem:[%s4212 + $0x68] sm:$0xf]
    %v4231 = vld [vmem:[%s4212 + $0x6c] sm:$0xff]
    %v4232 = vld [vmem:[%s4212 + $0x74] sm:$0xf]
    %v4233 = vld [vmem:[%s4212 + $0x78] sm:$0xff]
    %v4234 = vld [vmem:[%s4212 + $0x80] sm:$0xf]
    %v4235 = vld [vmem:[%s4212 + $0x84] sm:$0xff]
    %v4236 = vld [vmem:[%s4212 + $0x8c] sm:$0xf]
    %v4237 = vld [vmem:[%s4212 + $0x90] sm:$0xff]
    %v4238 = vld [vmem:[%s4212 + $0x98] sm:$0xf]
    %v4239 = vld [vmem:[%s4212 + $0x9c] sm:$0xff]
    %v4240 = vld [vmem:[%s4212 + $0xa4] sm:$0xf]
    %v4241 = vld [vmem:[%s4212 + $0xa8] sm:$0xff]
    %v4242 = vld [vmem:[%s4212 + $0xb0] sm:$0xf]
    %v4243 = vld [vmem:[%s4212 + $0xb4] sm:$0xff]
    %v4244 = vld [vmem:[%s4212 + $0xbc] sm:$0xf]
    %s4245 = scalar_lea.vmem %s6, 3
    %v4246 = vld [vmem:[%s4245] sm:$0x7]
    %v4248 = vperm.slane %v4246, 0
    %v4249 = vperm.slane %v4246, 1
    %v4250 = vperm.slane %v4246, 2
    %v4286 = vunpack.c.l.b16 %v4213
    %v4287 = vunpack.c.h.b16 %v4213
    %v4288 = vunpack.c.l.b16 %v4214
    %v4289 = vunpack.c.l.b16 %v4215
    %v4290 = vunpack.c.h.b16 %v4215
    %v4291 = vunpack.c.l.b16 %v4216
    %v4292 = vunpack.c.l.b16 %v4217
    %v4293 = vunpack.c.h.b16 %v4217
    %v4294 = vunpack.c.l.b16 %v4218
    %v4295 = vunpack.c.l.b16 %v4219
    %v4296 = vunpack.c.h.b16 %v4219
    %v4297 = vunpack.c.l.b16 %v4220
    %v4298 = vunpack.c.l.b16 %v4221
    %v4299 = vunpack.c.h.b16 %v4221
    %v4300 = vunpack.c.l.b16 %v4222
    %v4301 = vunpack.c.l.b16 %v4223
    %v4302 = vunpack.c.h.b16 %v4223
    %v4303 = vunpack.c.l.b16 %v4224
    %v4304 = vunpack.c.l.b16 %v4225
    %v4305 = vunpack.c.h.b16 %v4225
    %v4306 = vunpack.c.l.b16 %v4226
    %v4307 = vunpack.c.l.b16 %v4227
    %v4308 = vunpack.c.h.b16 %v4227
    %v4309 = vunpack.c.l.b16 %v4228
    %v4310 = vunpack.c.l.b16 %v4229
    %v4311 = vunpack.c.h.b16 %v4229
    %v4312 = vunpack.c.l.b16 %v4230
    %v4313 = vunpack.c.l.b16 %v4231
    %v4314 = vunpack.c.h.b16 %v4231
    %v4315 = vunpack.c.l.b16 %v4232
    %v4316 = vunpack.c.l.b16 %v4233
    %v4317 = vunpack.c.h.b16 %v4233
    %v4318 = vunpack.c.l.b16 %v4234
    %v4319 = vunpack.c.l.b16 %v4235
    %v4320 = vunpack.c.h.b16 %v4235
    %v4321 = vunpack.c.l.b16 %v4236
    %v4322 = vunpack.c.l.b16 %v4237
    %v4323 = vunpack.c.h.b16 %v4237
    %v4324 = vunpack.c.l.b16 %v4238
    %v4325 = vunpack.c.l.b16 %v4239
    %v4326 = vunpack.c.h.b16 %v4239
    %v4327 = vunpack.c.l.b16 %v4240
    %v4328 = vunpack.c.l.b16 %v4241
    %v4329 = vunpack.c.h.b16 %v4241
    %v4330 = vunpack.c.l.b16 %v4242
    %v4331 = vunpack.c.l.b16 %v4243
    %v4332 = vunpack.c.h.b16 %v4243
    %v4333 = vunpack.c.l.b16 %v4244
    %v4334 = vpack.c.b16 %v4289, %v4286
    %v4335 = vpack.c.b16 %v4290, %v4287
    %v4336 = vpack.c.b16 %v4291, %v4288
    %v4337 = vpack.c.b16 %v4295, %v4292
    %v4338 = vpack.c.b16 %v4296, %v4293
    %v4339 = vpack.c.b16 %v4297, %v4294
    %v4340 = vpack.c.b16 %v4301, %v4298
    %v4341 = vpack.c.b16 %v4302, %v4299
    %v4342 = vpack.c.b16 %v4303, %v4300
    %v4343 = vpack.c.b16 %v4307, %v4304
    %v4344 = vpack.c.b16 %v4308, %v4305
    %v4345 = vpack.c.b16 %v4309, %v4306
    %v4346 = vpack.c.b16 %v4313, %v4310
    %v4347 = vpack.c.b16 %v4314, %v4311
    %v4348 = vpack.c.b16 %v4315, %v4312
    %v4349 = vpack.c.b16 %v4319, %v4316
    %v4350 = vpack.c.b16 %v4320, %v4317
    %v4351 = vpack.c.b16 %v4321, %v4318
    %v4352 = vpack.c.b16 %v4325, %v4322
    %v4353 = vpack.c.b16 %v4326, %v4323
    %v4354 = vpack.c.b16 %v4327, %v4324
    %v4355 = vpack.c.b16 %v4331, %v4328
    %v4356 = vpack.c.b16 %v4332, %v4329
    %v4357 = vpack.c.b16 %v4333, %v4330
    %4382 = vmatpush.bf16.msra.mxu0 %v4355
    %4383 = vmatpush.bf16.msra.mxu0 %v4352
    %4384 = vmatpush.bf16.msra.mxu0 %v4349
    %4385 = vmatpush.bf16.msra.mxu0 %v4346
    %4386 = vmatpush.bf16.msra.mxu0 %v4343
    %4387 = vmatpush.bf16.msra.mxu0 %v4340
    %4388 = vmatpush.bf16.msra.mxu0 %v4337
    %4389 = vmatpush.bf16.msra.mxu0 %v4334
    %4390 = vmatmul.bf16.gmra.mxu0 %v4208
    %v4391 = vpop.f32.mrf.mxu0
    %v4392 = vadd.f32 %v4248, %v4391
    %v4393 = vpop.f32.mrf.mxu0
    %v4394 = vadd.f32 %v4248, %v4393
    %4395 = vmatmul.bf16.gmra.mxu0 %v4209
    %v4396 = vpop.f32.mrf.mxu0
    %v4397 = vadd.f32 %v4248, %v4396
    %v4398 = vpop.f32.mrf.mxu0
    %v4399 = vadd.f32 %v4248, %v4398
    %4400 = vmatmul.bf16.gmra.mxu0 %v4210
    %v4401 = vpop.f32.mrf.mxu0
    %v4402 = vadd.f32 %v4248, %v4401
    %v4403 = vpop.f32.mrf.mxu0
    %v4404 = vadd.f32 %v4248, %v4403
    %4405 = vmatmul.bf16.gmra.mxu0 %v4211
    %v4406 = vpop.f32.mrf.mxu0
    %v4407 = vadd.f32 %v4248, %v4406
    %v4408 = vpop.f32.mrf.mxu0
    %v4409 = vadd.f32 %v4248, %v4408
    %4410 = vdwg.mxu0
    %4411 = vmatpush.bf16.msra.mxu0 %v4356
    %4412 = vmatpush.bf16.msra.mxu0 %v4353
    %4413 = vmatpush.bf16.msra.mxu0 %v4350
    %4414 = vmatpush.bf16.msra.mxu0 %v4347
    %4415 = vmatpush.bf16.msra.mxu0 %v4344
    %4416 = vmatpush.bf16.msra.mxu0 %v4341
    %4417 = vmatpush.bf16.msra.mxu0 %v4338
    %4418 = vmatpush.bf16.msra.mxu0 %v4335
    %4419 = vmatmul.bf16.gmra.mxu0 %v4208
    %v4420 = vpop.f32.mrf.mxu0
    %v4421 = vadd.f32 %v4249, %v4420
    %v4422 = vpop.f32.mrf.mxu0
    %v4423 = vadd.f32 %v4249, %v4422
    %4424 = vmatmul.bf16.gmra.mxu0 %v4209
    %v4425 = vpop.f32.mrf.mxu0
    %v4426 = vadd.f32 %v4249, %v4425
    %v4427 = vpop.f32.mrf.mxu0
    %v4428 = vadd.f32 %v4249, %v4427
    %4429 = vmatmul.bf16.gmra.mxu0 %v4210
    %v4430 = vpop.f32.mrf.mxu0
    %v4431 = vadd.f32 %v4249, %v4430
    %v4432 = vpop.f32.mrf.mxu0
    %v4433 = vadd.f32 %v4249, %v4432
    %4434 = vmatmul.bf16.gmra.mxu0 %v4211
    %v4435 = vpop.f32.mrf.mxu0
    %v4436 = vadd.f32 %v4249, %v4435
    %v4437 = vpop.f32.mrf.mxu0
    %v4438 = vadd.f32 %v4249, %v4437
    %4439 = vdwg.mxu0
    %4440 = vmatpush.bf16.msra.mxu0 %v4357
    %4441 = vmatpush.bf16.msra.mxu0 %v4354
    %4442 = vmatpush.bf16.msra.mxu0 %v4351
    %4443 = vmatpush.bf16.msra.mxu0 %v4348
    %4444 = vmatpush.bf16.msra.mxu0 %v4345
    %4445 = vmatpush.bf16.msra.mxu0 %v4342
    %4446 = vmatpush.bf16.msra.mxu0 %v4339
    %4447 = vmatpush.bf16.msra.mxu0 %v4336
    %4448 = vmatmul.bf16.gmra.mxu0 %v4208
    %v4449 = vpop.f32.mrf.mxu0
    %v4450 = vadd.f32 %v4250, %v4449
    %v4451 = vpop.f32.mrf.mxu0
    %v4452 = vadd.f32 %v4250, %v4451
    %4453 = vmatmul.bf16.gmra.mxu0 %v4209
    %v4454 = vpop.f32.mrf.mxu0
    %v4455 = vadd.f32 %v4250, %v4454
    %v4456 = vpop.f32.mrf.mxu0
    %v4457 = vadd.f32 %v4250, %v4456
    %4458 = vmatmul.bf16.gmra.mxu0 %v4210
    %v4459 = vpop.f32.mrf.mxu0
    %v4460 = vadd.f32 %v4250, %v4459
    %v4461 = vpop.f32.mrf.mxu0
    %v4462 = vadd.f32 %v4250, %v4461
    %4463 = vmatmul.bf16.gmra.mxu0 %v4211
    %v4464 = vpop.f32.mrf.mxu0
    %v4465 = vadd.f32 %v4250, %v4464
    %v4466 = vpop.f32.mrf.mxu0
    %v4467 = vadd.f32 %v4250, %v4466
    %4468 = vdwg.mxu0
    %v4469 = vmul.f32 %v4392, 0.25
    %v4470 = vmul.f32 %v4394, 0.25
    %v4471 = vmul.f32 %v4397, 0.25
    %v4472 = vmul.f32 %v4399, 0.25
    %v4473 = vmul.f32 %v4402, 0.25
    %v4474 = vmul.f32 %v4404, 0.25
    %v4475 = vmul.f32 %v4407, 0.25
    %v4476 = vmul.f32 %v4409, 0.25
    %v4477 = vpack.c.bf16 %v4469, %v4469
    %v4478 = vpack.c.bf16 %v4470, %v4470
    %v4479 = vpack.c.bf16 %v4471, %v4471
    %v4480 = vpack.c.bf16 %v4472, %v4472
    %v4481 = vpack.c.bf16 %v4473, %v4473
    %v4482 = vpack.c.bf16 %v4474, %v4474
    %v4483 = vpack.c.bf16 %v4475, %v4475
    %v4484 = vpack.c.bf16 %v4476, %v4476
    %v4485 = vpack.c.bf16 %v4421, %v4421
    %v4486 = vpack.c.bf16 %v4423, %v4423
    %v4487 = vpack.c.bf16 %v4426, %v4426
    %v4488 = vpack.c.bf16 %v4428, %v4428
    %v4489 = vpack.c.bf16 %v4431, %v4431
    %v4490 = vpack.c.bf16 %v4433, %v4433
    %v4491 = vpack.c.bf16 %v4436, %v4436
    %v4492 = vpack.c.bf16 %v4438, %v4438
    %v4493 = vpack.c.bf16 %v4450, %v4450
    %v4494 = vpack.c.bf16 %v4452, %v4452
    %v4495 = vpack.c.bf16 %v4455, %v4455
    %v4496 = vpack.c.bf16 %v4457, %v4457
    %v4497 = vpack.c.bf16 %v4460, %v4460
    %v4498 = vpack.c.bf16 %v4462, %v4462
    %v4499 = vpack.c.bf16 %v4465, %v4465
    %v4500 = vpack.c.bf16 %v4467, %v4467
    %v4509 = vunpack.c.l.b16 %v4477
    %v4510 = vunpack.c.l.b16 %v4478
    %v4511 = vunpack.c.l.b16 %v4479
    %v4512 = vunpack.c.l.b16 %v4480
    %v4513 = vunpack.c.l.b16 %v4481
    %v4514 = vunpack.c.l.b16 %v4482
    %v4515 = vunpack.c.l.b16 %v4483
    %v4516 = vunpack.c.l.b16 %v4484
    %v4517 = vpack.c.b16 %v4510, %v4509
    %v4518 = vpack.c.b16 %v4512, %v4511
    %v4519 = vpack.c.b16 %v4514, %v4513
    %v4520 = vpack.c.b16 %v4516, %v4515
    %v4529 = vunpack.c.l.b16 %v4485
    %v4530 = vunpack.c.l.b16 %v4486
    %v4531 = vunpack.c.l.b16 %v4487
    %v4532 = vunpack.c.l.b16 %v4488
    %v4533 = vunpack.c.l.b16 %v4489
    %v4534 = vunpack.c.l.b16 %v4490
    %v4535 = vunpack.c.l.b16 %v4491
    %v4536 = vunpack.c.l.b16 %v4492
    %v4537 = vpack.c.b16 %v4530, %v4529
    %v4538 = vpack.c.b16 %v4532, %v4531
    %v4539 = vpack.c.b16 %v4534, %v4533
    %v4540 = vpack.c.b16 %v4536, %v4535
    %v4542 = vsel %vm527, %v4517, 0
    %v4545 = vsel %vm527, %v4518, 0
    %v4548 = vsel %vm527, %v4519, 0
    %v4551 = vsel %vm527, %v4520, 0
    %v4554 = vsel %vm527, %v4537, 0
    %v4557 = vsel %vm527, %v4538, 0
    %v4560 = vsel %vm527, %v4539, 0
    %v4563 = vsel %vm527, %v4540, 0
    %4565 = vmatpush.bf16.xpose.msra.mxu0 0
    %4566 = vmatpush.bf16.xpose.msra.mxu0 0
    %4567 = vmatpush.bf16.xpose.msra.mxu0 0
    %4568 = vmatpush.bf16.xpose.msra.mxu0 0
    %4569 = vmatpush.bf16.xpose.msra.mxu0 %v4563
    %4570 = vmatpush.bf16.xpose.msra.mxu0 %v4560
    %4571 = vmatpush.bf16.xpose.msra.mxu0 %v4557
    %4572 = vmatpush.bf16.xpose.msra.mxu0 %v4554
    %4573 = vmatmul.bf16.gmra.mxu0 %v4542
    %v4574 = vpop.f32.mrf.mxu0
    %v4575 = vadd.f32 %v188, %v4574
    %v4576 = vpop.f32.mrf.mxu0
    %v4577 = vadd.f32 %v189, %v4576
    %4578 = vmatmul.bf16.gmra.mxu0 %v4545
    %v4579 = vpop.f32.mrf.mxu0
    %v4580 = vadd.f32 %v190, %v4579
    %v4581 = vpop.f32.mrf.mxu0
    %v4582 = vadd.f32 %v191, %v4581
    %4583 = vmatmul.bf16.gmra.mxu0 %v4548
    %v4584 = vpop.f32.mrf.mxu0
    %v4585 = vadd.f32 %v192, %v4584
    %v4586 = vpop.f32.mrf.mxu0
    %v4587 = vadd.f32 %v193, %v4586
    %4588 = vmatmul.bf16.gmra.mxu0 %v4551
    %v4589 = vpop.f32.mrf.mxu0
    %v4590 = vadd.f32 %v194, %v4589
    %v4591 = vpop.f32.mrf.mxu0
    %v4592 = vadd.f32 %v195, %v4591
    %4593 = vdwg.mxu0
    %4594 = vrot.lane.b32.xlu0 %v4517, 112
    %v4595 = vpop.permute.xlu0 %4594
    %4596 = vrot.lane.b32.xlu0 %v4518, 112
    %v4597 = vpop.permute.xlu0 %4596
    %4598 = vrot.lane.b32.xlu0 %v4519, 112
    %v4599 = vpop.permute.xlu0 %4598
    %4600 = vrot.lane.b32.xlu0 %v4520, 112
    %v4601 = vpop.permute.xlu0 %4600
    %4602 = vrot.lane.b32.xlu0 %v4537, 112
    %v4603 = vpop.permute.xlu0 %4602
    %4604 = vrot.lane.b32.xlu0 %v4538, 112
    %v4605 = vpop.permute.xlu0 %4604
    %4606 = vrot.lane.b32.xlu0 %v4539, 112
    %v4607 = vpop.permute.xlu0 %4606
    %4608 = vrot.lane.b32.xlu0 %v4540, 112
    %v4609 = vpop.permute.xlu0 %4608
    %v4611 = vsel %vm527, %v4595, 0
    %v4614 = vsel %vm527, %v4597, 0
    %v4617 = vsel %vm527, %v4599, 0
    %v4620 = vsel %vm527, %v4601, 0
    %v4623 = vsel %vm527, %v4603, 0
    %v4626 = vsel %vm527, %v4605, 0
    %v4629 = vsel %vm527, %v4607, 0
    %v4632 = vsel %vm527, %v4609, 0
    %4634 = vmatpush.bf16.xpose.msra.mxu0 0
    %4635 = vmatpush.bf16.xpose.msra.mxu0 0
    %4636 = vmatpush.bf16.xpose.msra.mxu0 0
    %4637 = vmatpush.bf16.xpose.msra.mxu0 0
    %4638 = vmatpush.bf16.xpose.msra.mxu0 %v4632
    %4639 = vmatpush.bf16.xpose.msra.mxu0 %v4629
    %4640 = vmatpush.bf16.xpose.msra.mxu0 %v4626
    %4641 = vmatpush.bf16.xpose.msra.mxu0 %v4623
    %4642 = vmatmul.bf16.gmra.mxu0 %v4611
    %v4643 = vpop.f32.mrf.mxu0
    %v4644 = vadd.f32 %v188, %v4643
    %v4645 = vpop.f32.mrf.mxu0
    %v4646 = vadd.f32 %v189, %v4645
    %4647 = vmatmul.bf16.gmra.mxu0 %v4614
    %v4648 = vpop.f32.mrf.mxu0
    %v4649 = vadd.f32 %v190, %v4648
    %v4650 = vpop.f32.mrf.mxu0
    %v4651 = vadd.f32 %v191, %v4650
    %4652 = vmatmul.bf16.gmra.mxu0 %v4617
    %v4653 = vpop.f32.mrf.mxu0
    %v4654 = vadd.f32 %v192, %v4653
    %v4655 = vpop.f32.mrf.mxu0
    %v4656 = vadd.f32 %v193, %v4655
    %4657 = vmatmul.bf16.gmra.mxu0 %v4620
    %v4658 = vpop.f32.mrf.mxu0
    %v4659 = vadd.f32 %v194, %v4658
    %v4660 = vpop.f32.mrf.mxu0
    %v4661 = vadd.f32 %v195, %v4660
    %4662 = vdwg.mxu0
    %4663 = vrot.lane.b32.xlu0 %v4517, 96
    %v4664 = vpop.permute.xlu0 %4663
    %4665 = vrot.lane.b32.xlu0 %v4518, 96
    %v4666 = vpop.permute.xlu0 %4665
    %4667 = vrot.lane.b32.xlu0 %v4519, 96
    %v4668 = vpop.permute.xlu0 %4667
    %4669 = vrot.lane.b32.xlu0 %v4520, 96
    %v4670 = vpop.permute.xlu0 %4669
    %4671 = vrot.lane.b32.xlu0 %v4537, 96
    %v4672 = vpop.permute.xlu0 %4671
    %4673 = vrot.lane.b32.xlu0 %v4538, 96
    %v4674 = vpop.permute.xlu0 %4673
    %4675 = vrot.lane.b32.xlu0 %v4539, 96
    %v4676 = vpop.permute.xlu0 %4675
    %4677 = vrot.lane.b32.xlu0 %v4540, 96
    %v4678 = vpop.permute.xlu0 %4677
    %v4680 = vsel %vm527, %v4664, 0
    %v4683 = vsel %vm527, %v4666, 0
    %v4686 = vsel %vm527, %v4668, 0
    %v4689 = vsel %vm527, %v4670, 0
    %v4692 = vsel %vm527, %v4672, 0
    %v4695 = vsel %vm527, %v4674, 0
    %v4698 = vsel %vm527, %v4676, 0
    %v4701 = vsel %vm527, %v4678, 0
    %4703 = vmatpush.bf16.xpose.msra.mxu0 0
    %4704 = vmatpush.bf16.xpose.msra.mxu0 0
    %4705 = vmatpush.bf16.xpose.msra.mxu0 0
    %4706 = vmatpush.bf16.xpose.msra.mxu0 0
    %4707 = vmatpush.bf16.xpose.msra.mxu0 %v4701
    %4708 = vmatpush.bf16.xpose.msra.mxu0 %v4698
    %4709 = vmatpush.bf16.xpose.msra.mxu0 %v4695
    %4710 = vmatpush.bf16.xpose.msra.mxu0 %v4692
    %4711 = vmatmul.bf16.gmra.mxu0 %v4680
    %v4712 = vpop.f32.mrf.mxu0
    %v4713 = vadd.f32 %v188, %v4712
    %v4714 = vpop.f32.mrf.mxu0
    %v4715 = vadd.f32 %v189, %v4714
    %4716 = vmatmul.bf16.gmra.mxu0 %v4683
    %v4717 = vpop.f32.mrf.mxu0
    %v4718 = vadd.f32 %v190, %v4717
    %v4719 = vpop.f32.mrf.mxu0
    %v4720 = vadd.f32 %v191, %v4719
    %4721 = vmatmul.bf16.gmra.mxu0 %v4686
    %v4722 = vpop.f32.mrf.mxu0
    %v4723 = vadd.f32 %v192, %v4722
    %v4724 = vpop.f32.mrf.mxu0
    %v4725 = vadd.f32 %v193, %v4724
    %4726 = vmatmul.bf16.gmra.mxu0 %v4689
    %v4727 = vpop.f32.mrf.mxu0
    %v4728 = vadd.f32 %v194, %v4727
    %v4729 = vpop.f32.mrf.mxu0
    %v4730 = vadd.f32 %v195, %v4729
    %4731 = vdwg.mxu0
    %4732 = vrot.lane.b32.xlu0 %v4517, 80
    %v4733 = vpop.permute.xlu0 %4732
    %4734 = vrot.lane.b32.xlu0 %v4518, 80
    %v4735 = vpop.permute.xlu0 %4734
    %4736 = vrot.lane.b32.xlu0 %v4519, 80
    %v4737 = vpop.permute.xlu0 %4736
    %4738 = vrot.lane.b32.xlu0 %v4520, 80
    %v4739 = vpop.permute.xlu0 %4738
    %4740 = vrot.lane.b32.xlu0 %v4537, 80
    %v4741 = vpop.permute.xlu0 %4740
    %4742 = vrot.lane.b32.xlu0 %v4538, 80
    %v4743 = vpop.permute.xlu0 %4742
    %4744 = vrot.lane.b32.xlu0 %v4539, 80
    %v4745 = vpop.permute.xlu0 %4744
    %4746 = vrot.lane.b32.xlu0 %v4540, 80
    %v4747 = vpop.permute.xlu0 %4746
    %v4749 = vsel %vm527, %v4733, 0
    %v4752 = vsel %vm527, %v4735, 0
    %v4755 = vsel %vm527, %v4737, 0
    %v4758 = vsel %vm527, %v4739, 0
    %v4761 = vsel %vm527, %v4741, 0
    %v4764 = vsel %vm527, %v4743, 0
    %v4767 = vsel %vm527, %v4745, 0
    %v4770 = vsel %vm527, %v4747, 0
    %4772 = vmatpush.bf16.xpose.msra.mxu0 0
    %4773 = vmatpush.bf16.xpose.msra.mxu0 0
    %4774 = vmatpush.bf16.xpose.msra.mxu0 0
    %4775 = vmatpush.bf16.xpose.msra.mxu0 0
    %4776 = vmatpush.bf16.xpose.msra.mxu0 %v4770
    %4777 = vmatpush.bf16.xpose.msra.mxu0 %v4767
    %4778 = vmatpush.bf16.xpose.msra.mxu0 %v4764
    %4779 = vmatpush.bf16.xpose.msra.mxu0 %v4761
    %4780 = vmatmul.bf16.gmra.mxu0 %v4749
    %v4781 = vpop.f32.mrf.mxu0
    %v4782 = vadd.f32 %v188, %v4781
    %v4783 = vpop.f32.mrf.mxu0
    %v4784 = vadd.f32 %v189, %v4783
    %4785 = vmatmul.bf16.gmra.mxu0 %v4752
    %v4786 = vpop.f32.mrf.mxu0
    %v4787 = vadd.f32 %v190, %v4786
    %v4788 = vpop.f32.mrf.mxu0
    %v4789 = vadd.f32 %v191, %v4788
    %4790 = vmatmul.bf16.gmra.mxu0 %v4755
    %v4791 = vpop.f32.mrf.mxu0
    %v4792 = vadd.f32 %v192, %v4791
    %v4793 = vpop.f32.mrf.mxu0
    %v4794 = vadd.f32 %v193, %v4793
    %4795 = vmatmul.bf16.gmra.mxu0 %v4758
    %v4796 = vpop.f32.mrf.mxu0
    %v4797 = vadd.f32 %v194, %v4796
    %v4798 = vpop.f32.mrf.mxu0
    %v4799 = vadd.f32 %v195, %v4798
    %4800 = vdwg.mxu0
    %4801 = vrot.lane.b32.xlu0 %v4517, 64
    %v4802 = vpop.permute.xlu0 %4801
    %4803 = vrot.lane.b32.xlu0 %v4518, 64
    %v4804 = vpop.permute.xlu0 %4803
    %4805 = vrot.lane.b32.xlu0 %v4519, 64
    %v4806 = vpop.permute.xlu0 %4805
    %4807 = vrot.lane.b32.xlu0 %v4520, 64
    %v4808 = vpop.permute.xlu0 %4807
    %4809 = vrot.lane.b32.xlu0 %v4537, 64
    %v4810 = vpop.permute.xlu0 %4809
    %4811 = vrot.lane.b32.xlu0 %v4538, 64
    %v4812 = vpop.permute.xlu0 %4811
    %4813 = vrot.lane.b32.xlu0 %v4539, 64
    %v4814 = vpop.permute.xlu0 %4813
    %4815 = vrot.lane.b32.xlu0 %v4540, 64
    %v4816 = vpop.permute.xlu0 %4815
    %v4818 = vsel %vm527, %v4802, 0
    %v4821 = vsel %vm527, %v4804, 0
    %v4824 = vsel %vm527, %v4806, 0
    %v4827 = vsel %vm527, %v4808, 0
    %v4830 = vsel %vm527, %v4810, 0
    %v4833 = vsel %vm527, %v4812, 0
    %v4836 = vsel %vm527, %v4814, 0
    %v4839 = vsel %vm527, %v4816, 0
    %4841 = vmatpush.bf16.xpose.msra.mxu0 0
    %4842 = vmatpush.bf16.xpose.msra.mxu0 0
    %4843 = vmatpush.bf16.xpose.msra.mxu0 0
    %4844 = vmatpush.bf16.xpose.msra.mxu0 0
    %4845 = vmatpush.bf16.xpose.msra.mxu0 %v4839
    %4846 = vmatpush.bf16.xpose.msra.mxu0 %v4836
    %4847 = vmatpush.bf16.xpose.msra.mxu0 %v4833
    %4848 = vmatpush.bf16.xpose.msra.mxu0 %v4830
    %4849 = vmatmul.bf16.gmra.mxu0 %v4818
    %v4850 = vpop.f32.mrf.mxu0
    %v4851 = vadd.f32 %v188, %v4850
    %v4852 = vpop.f32.mrf.mxu0
    %v4853 = vadd.f32 %v189, %v4852
    %4854 = vmatmul.bf16.gmra.mxu0 %v4821
    %v4855 = vpop.f32.mrf.mxu0
    %v4856 = vadd.f32 %v190, %v4855
    %v4857 = vpop.f32.mrf.mxu0
    %v4858 = vadd.f32 %v191, %v4857
    %4859 = vmatmul.bf16.gmra.mxu0 %v4824
    %v4860 = vpop.f32.mrf.mxu0
    %v4861 = vadd.f32 %v192, %v4860
    %v4862 = vpop.f32.mrf.mxu0
    %v4863 = vadd.f32 %v193, %v4862
    %4864 = vmatmul.bf16.gmra.mxu0 %v4827
    %v4865 = vpop.f32.mrf.mxu0
    %v4866 = vadd.f32 %v194, %v4865
    %v4867 = vpop.f32.mrf.mxu0
    %v4868 = vadd.f32 %v195, %v4867
    %4869 = vdwg.mxu0
    %4870 = vrot.lane.b32.xlu0 %v4517, 48
    %v4871 = vpop.permute.xlu0 %4870
    %4872 = vrot.lane.b32.xlu0 %v4518, 48
    %v4873 = vpop.permute.xlu0 %4872
    %4874 = vrot.lane.b32.xlu0 %v4519, 48
    %v4875 = vpop.permute.xlu0 %4874
    %4876 = vrot.lane.b32.xlu0 %v4520, 48
    %v4877 = vpop.permute.xlu0 %4876
    %4878 = vrot.lane.b32.xlu0 %v4537, 48
    %v4879 = vpop.permute.xlu0 %4878
    %4880 = vrot.lane.b32.xlu0 %v4538, 48
    %v4881 = vpop.permute.xlu0 %4880
    %4882 = vrot.lane.b32.xlu0 %v4539, 48
    %v4883 = vpop.permute.xlu0 %4882
    %4884 = vrot.lane.b32.xlu0 %v4540, 48
    %v4885 = vpop.permute.xlu0 %4884
    %v4887 = vsel %vm527, %v4871, 0
    %v4890 = vsel %vm527, %v4873, 0
    %v4893 = vsel %vm527, %v4875, 0
    %v4896 = vsel %vm527, %v4877, 0
    %v4899 = vsel %vm527, %v4879, 0
    %v4902 = vsel %vm527, %v4881, 0
    %v4905 = vsel %vm527, %v4883, 0
    %v4908 = vsel %vm527, %v4885, 0
    %4910 = vmatpush.bf16.xpose.msra.mxu0 0
    %4911 = vmatpush.bf16.xpose.msra.mxu0 0
    %4912 = vmatpush.bf16.xpose.msra.mxu0 0
    %4913 = vmatpush.bf16.xpose.msra.mxu0 0
    %4914 = vmatpush.bf16.xpose.msra.mxu0 %v4908
    %4915 = vmatpush.bf16.xpose.msra.mxu0 %v4905
    %4916 = vmatpush.bf16.xpose.msra.mxu0 %v4902
    %4917 = vmatpush.bf16.xpose.msra.mxu0 %v4899
    %4918 = vmatmul.bf16.gmra.mxu0 %v4887
    %v4919 = vpop.f32.mrf.mxu0
    %v4920 = vadd.f32 %v188, %v4919
    %v4921 = vpop.f32.mrf.mxu0
    %v4922 = vadd.f32 %v189, %v4921
    %4923 = vmatmul.bf16.gmra.mxu0 %v4890
    %v4924 = vpop.f32.mrf.mxu0
    %v4925 = vadd.f32 %v190, %v4924
    %v4926 = vpop.f32.mrf.mxu0
    %v4927 = vadd.f32 %v191, %v4926
    %4928 = vmatmul.bf16.gmra.mxu0 %v4893
    %v4929 = vpop.f32.mrf.mxu0
    %v4930 = vadd.f32 %v192, %v4929
    %v4931 = vpop.f32.mrf.mxu0
    %v4932 = vadd.f32 %v193, %v4931
    %4933 = vmatmul.bf16.gmra.mxu0 %v4896
    %v4934 = vpop.f32.mrf.mxu0
    %v4935 = vadd.f32 %v194, %v4934
    %v4936 = vpop.f32.mrf.mxu0
    %v4937 = vadd.f32 %v195, %v4936
    %4938 = vdwg.mxu0
    %4939 = vrot.lane.b32.xlu0 %v4517, 32
    %v4940 = vpop.permute.xlu0 %4939
    %4941 = vrot.lane.b32.xlu0 %v4518, 32
    %v4942 = vpop.permute.xlu0 %4941
    %4943 = vrot.lane.b32.xlu0 %v4519, 32
    %v4944 = vpop.permute.xlu0 %4943
    %4945 = vrot.lane.b32.xlu0 %v4520, 32
    %v4946 = vpop.permute.xlu0 %4945
    %4947 = vrot.lane.b32.xlu0 %v4537, 32
    %v4948 = vpop.permute.xlu0 %4947
    %4949 = vrot.lane.b32.xlu0 %v4538, 32
    %v4950 = vpop.permute.xlu0 %4949
    %4951 = vrot.lane.b32.xlu0 %v4539, 32
    %v4952 = vpop.permute.xlu0 %4951
    %4953 = vrot.lane.b32.xlu0 %v4540, 32
    %v4954 = vpop.permute.xlu0 %4953
    %v4956 = vsel %vm527, %v4940, 0
    %v4959 = vsel %vm527, %v4942, 0
    %v4962 = vsel %vm527, %v4944, 0
    %v4965 = vsel %vm527, %v4946, 0
    %v4968 = vsel %vm527, %v4948, 0
    %v4971 = vsel %vm527, %v4950, 0
    %v4974 = vsel %vm527, %v4952, 0
    %v4977 = vsel %vm527, %v4954, 0
    %4979 = vmatpush.bf16.xpose.msra.mxu0 0
    %4980 = vmatpush.bf16.xpose.msra.mxu0 0
    %4981 = vmatpush.bf16.xpose.msra.mxu0 0
    %4982 = vmatpush.bf16.xpose.msra.mxu0 0
    %4983 = vmatpush.bf16.xpose.msra.mxu0 %v4977
    %4984 = vmatpush.bf16.xpose.msra.mxu0 %v4974
    %4985 = vmatpush.bf16.xpose.msra.mxu0 %v4971
    %4986 = vmatpush.bf16.xpose.msra.mxu0 %v4968
    %4987 = vmatmul.bf16.gmra.mxu0 %v4956
    %v4988 = vpop.f32.mrf.mxu0
    %v4989 = vadd.f32 %v188, %v4988
    %v4990 = vpop.f32.mrf.mxu0
    %v4991 = vadd.f32 %v189, %v4990
    %4992 = vmatmul.bf16.gmra.mxu0 %v4959
    %v4993 = vpop.f32.mrf.mxu0
    %v4994 = vadd.f32 %v190, %v4993
    %v4995 = vpop.f32.mrf.mxu0
    %v4996 = vadd.f32 %v191, %v4995
    %4997 = vmatmul.bf16.gmra.mxu0 %v4962
    %v4998 = vpop.f32.mrf.mxu0
    %v4999 = vadd.f32 %v192, %v4998
    %v5000 = vpop.f32.mrf.mxu0
    %v5001 = vadd.f32 %v193, %v5000
    %5002 = vmatmul.bf16.gmra.mxu0 %v4965
    %v5003 = vpop.f32.mrf.mxu0
    %v5004 = vadd.f32 %v194, %v5003
    %v5005 = vpop.f32.mrf.mxu0
    %v5006 = vadd.f32 %v195, %v5005
    %5007 = vdwg.mxu0
    %5008 = vrot.lane.b32.xlu0 %v4517, 16
    %v5009 = vpop.permute.xlu0 %5008
    %5010 = vrot.lane.b32.xlu0 %v4518, 16
    %v5011 = vpop.permute.xlu0 %5010
    %5012 = vrot.lane.b32.xlu0 %v4519, 16
    %v5013 = vpop.permute.xlu0 %5012
    %5014 = vrot.lane.b32.xlu0 %v4520, 16
    %v5015 = vpop.permute.xlu0 %5014
    %5016 = vrot.lane.b32.xlu0 %v4537, 16
    %v5017 = vpop.permute.xlu0 %5016
    %5018 = vrot.lane.b32.xlu0 %v4538, 16
    %v5019 = vpop.permute.xlu0 %5018
    %5020 = vrot.lane.b32.xlu0 %v4539, 16
    %v5021 = vpop.permute.xlu0 %5020
    %5022 = vrot.lane.b32.xlu0 %v4540, 16
    %v5023 = vpop.permute.xlu0 %5022
    %v5025 = vsel %vm527, %v5009, 0
    %v5028 = vsel %vm527, %v5011, 0
    %v5031 = vsel %vm527, %v5013, 0
    %v5034 = vsel %vm527, %v5015, 0
    %v5037 = vsel %vm527, %v5017, 0
    %v5040 = vsel %vm527, %v5019, 0
    %v5043 = vsel %vm527, %v5021, 0
    %v5046 = vsel %vm527, %v5023, 0
    %5048 = vmatpush.bf16.xpose.msra.mxu0 0
    %5049 = vmatpush.bf16.xpose.msra.mxu0 0
    %5050 = vmatpush.bf16.xpose.msra.mxu0 0
    %5051 = vmatpush.bf16.xpose.msra.mxu0 0
    %5052 = vmatpush.bf16.xpose.msra.mxu0 %v5046
    %5053 = vmatpush.bf16.xpose.msra.mxu0 %v5043
    %5054 = vmatpush.bf16.xpose.msra.mxu0 %v5040
    %5055 = vmatpush.bf16.xpose.msra.mxu0 %v5037
    %5056 = vmatmul.bf16.gmra.mxu0 %v5025
    %v5057 = vpop.f32.mrf.mxu0
    %v5058 = vadd.f32 %v188, %v5057
    %v5059 = vpop.f32.mrf.mxu0
    %v5060 = vadd.f32 %v189, %v5059
    %5061 = vmatmul.bf16.gmra.mxu0 %v5028
    %v5062 = vpop.f32.mrf.mxu0
    %v5063 = vadd.f32 %v190, %v5062
    %v5064 = vpop.f32.mrf.mxu0
    %v5065 = vadd.f32 %v191, %v5064
    %5066 = vmatmul.bf16.gmra.mxu0 %v5031
    %v5067 = vpop.f32.mrf.mxu0
    %v5068 = vadd.f32 %v192, %v5067
    %v5069 = vpop.f32.mrf.mxu0
    %v5070 = vadd.f32 %v193, %v5069
    %5071 = vmatmul.bf16.gmra.mxu0 %v5034
    %v5072 = vpop.f32.mrf.mxu0
    %v5073 = vadd.f32 %v194, %v5072
    %v5074 = vpop.f32.mrf.mxu0
    %v5075 = vadd.f32 %v195, %v5074
    %5076 = vdwg.mxu0
    %v5077 = vsel %vm1064, %v4575, -inf
    %5078 = vmax.xlane.f32.xlu0 %v5077
    %v5079 = vpop.xlane.xlu0 %5078
    %v5080 = vsel %vm1064, %v4577, -inf
    %5081 = vmax.xlane.f32.xlu0 %v5080
    %v5082 = vpop.xlane.xlu0 %5081
    %v5083 = vsel %vm1064, %v4580, -inf
    %5084 = vmax.xlane.f32.xlu0 %v5083
    %v5085 = vpop.xlane.xlu0 %5084
    %v5086 = vsel %vm1064, %v4582, -inf
    %5087 = vmax.xlane.f32.xlu0 %v5086
    %v5088 = vpop.xlane.xlu0 %5087
    %v5089 = vsel %vm1064, %v4585, -inf
    %5090 = vmax.xlane.f32.xlu0 %v5089
    %v5091 = vpop.xlane.xlu0 %5090
    %v5092 = vsel %vm1064, %v4587, -inf
    %5093 = vmax.xlane.f32.xlu0 %v5092
    %v5094 = vpop.xlane.xlu0 %5093
    %v5095 = vsel %vm1064, %v4590, -inf
    %5096 = vmax.xlane.f32.xlu0 %v5095
    %v5097 = vpop.xlane.xlu0 %5096
    %v5098 = vsel %vm1064, %v4592, -inf
    %5099 = vmax.xlane.f32.xlu0 %v5098
    %v5100 = vpop.xlane.xlu0 %5099
    %v5101 = vsel %vm1064, %v4644, -inf
    %5102 = vmax.xlane.f32.xlu0 %v5101
    %v5103 = vpop.xlane.xlu0 %5102
    %v5104 = vsel %vm1064, %v4646, -inf
    %5105 = vmax.xlane.f32.xlu0 %v5104
    %v5106 = vpop.xlane.xlu0 %5105
    %v5107 = vsel %vm1064, %v4649, -inf
    %5108 = vmax.xlane.f32.xlu0 %v5107
    %v5109 = vpop.xlane.xlu0 %5108
    %v5110 = vsel %vm1064, %v4651, -inf
    %5111 = vmax.xlane.f32.xlu0 %v5110
    %v5112 = vpop.xlane.xlu0 %5111
    %v5113 = vsel %vm1064, %v4654, -inf
    %5114 = vmax.xlane.f32.xlu0 %v5113
    %v5115 = vpop.xlane.xlu0 %5114
    %v5116 = vsel %vm1064, %v4656, -inf
    %5117 = vmax.xlane.f32.xlu0 %v5116
    %v5118 = vpop.xlane.xlu0 %5117
    %v5119 = vsel %vm1064, %v4659, -inf
    %5120 = vmax.xlane.f32.xlu0 %v5119
    %v5121 = vpop.xlane.xlu0 %5120
    %v5122 = vsel %vm1064, %v4661, -inf
    %5123 = vmax.xlane.f32.xlu0 %v5122
    %v5124 = vpop.xlane.xlu0 %5123
    %v5125 = vsel %vm1064, %v4713, -inf
    %5126 = vmax.xlane.f32.xlu0 %v5125
    %v5127 = vpop.xlane.xlu0 %5126
    %v5128 = vsel %vm1064, %v4715, -inf
    %5129 = vmax.xlane.f32.xlu0 %v5128
    %v5130 = vpop.xlane.xlu0 %5129
    %v5131 = vsel %vm1064, %v4718, -inf
    %5132 = vmax.xlane.f32.xlu0 %v5131
    %v5133 = vpop.xlane.xlu0 %5132
    %v5134 = vsel %vm1064, %v4720, -inf
    %5135 = vmax.xlane.f32.xlu0 %v5134
    %v5136 = vpop.xlane.xlu0 %5135
    %v5137 = vsel %vm1064, %v4723, -inf
    %5138 = vmax.xlane.f32.xlu0 %v5137
    %v5139 = vpop.xlane.xlu0 %5138
    %v5140 = vsel %vm1064, %v4725, -inf
    %5141 = vmax.xlane.f32.xlu0 %v5140
    %v5142 = vpop.xlane.xlu0 %5141
    %v5143 = vsel %vm1064, %v4728, -inf
    %5144 = vmax.xlane.f32.xlu0 %v5143
    %v5145 = vpop.xlane.xlu0 %5144
    %v5146 = vsel %vm1064, %v4730, -inf
    %5147 = vmax.xlane.f32.xlu0 %v5146
    %v5148 = vpop.xlane.xlu0 %5147
    %v5149 = vsel %vm1064, %v4782, -inf
    %5150 = vmax.xlane.f32.xlu0 %v5149
    %v5151 = vpop.xlane.xlu0 %5150
    %v5152 = vsel %vm1064, %v4784, -inf
    %5153 = vmax.xlane.f32.xlu0 %v5152
    %v5154 = vpop.xlane.xlu0 %5153
    %v5155 = vsel %vm1064, %v4787, -inf
    %5156 = vmax.xlane.f32.xlu0 %v5155
    %v5157 = vpop.xlane.xlu0 %5156
    %v5158 = vsel %vm1064, %v4789, -inf
    %5159 = vmax.xlane.f32.xlu0 %v5158
    %v5160 = vpop.xlane.xlu0 %5159
    %v5161 = vsel %vm1064, %v4792, -inf
    %5162 = vmax.xlane.f32.xlu0 %v5161
    %v5163 = vpop.xlane.xlu0 %5162
    %v5164 = vsel %vm1064, %v4794, -inf
    %5165 = vmax.xlane.f32.xlu0 %v5164
    %v5166 = vpop.xlane.xlu0 %5165
    %v5167 = vsel %vm1064, %v4797, -inf
    %5168 = vmax.xlane.f32.xlu0 %v5167
    %v5169 = vpop.xlane.xlu0 %5168
    %v5170 = vsel %vm1064, %v4799, -inf
    %5171 = vmax.xlane.f32.xlu0 %v5170
    %v5172 = vpop.xlane.xlu0 %5171
    %v5173 = vsel %vm1064, %v4851, -inf
    %5174 = vmax.xlane.f32.xlu0 %v5173
    %v5175 = vpop.xlane.xlu0 %5174
    %v5176 = vsel %vm1064, %v4853, -inf
    %5177 = vmax.xlane.f32.xlu0 %v5176
    %v5178 = vpop.xlane.xlu0 %5177
    %v5179 = vsel %vm1064, %v4856, -inf
    %5180 = vmax.xlane.f32.xlu0 %v5179
    %v5181 = vpop.xlane.xlu0 %5180
    %v5182 = vsel %vm1064, %v4858, -inf
    %5183 = vmax.xlane.f32.xlu0 %v5182
    %v5184 = vpop.xlane.xlu0 %5183
    %v5185 = vsel %vm1064, %v4861, -inf
    %5186 = vmax.xlane.f32.xlu0 %v5185
    %v5187 = vpop.xlane.xlu0 %5186
    %v5188 = vsel %vm1064, %v4863, -inf
    %5189 = vmax.xlane.f32.xlu0 %v5188
    %v5190 = vpop.xlane.xlu0 %5189
    %v5191 = vsel %vm1064, %v4866, -inf
    %5192 = vmax.xlane.f32.xlu0 %v5191
    %v5193 = vpop.xlane.xlu0 %5192
    %v5194 = vsel %vm1064, %v4868, -inf
    %5195 = vmax.xlane.f32.xlu0 %v5194
    %v5196 = vpop.xlane.xlu0 %5195
    %v5197 = vsel %vm1064, %v4920, -inf
    %5198 = vmax.xlane.f32.xlu0 %v5197
    %v5199 = vpop.xlane.xlu0 %5198
    %v5200 = vsel %vm1064, %v4922, -inf
    %5201 = vmax.xlane.f32.xlu0 %v5200
    %v5202 = vpop.xlane.xlu0 %5201
    %v5203 = vsel %vm1064, %v4925, -inf
    %5204 = vmax.xlane.f32.xlu0 %v5203
    %v5205 = vpop.xlane.xlu0 %5204
    %v5206 = vsel %vm1064, %v4927, -inf
    %5207 = vmax.xlane.f32.xlu0 %v5206
    %v5208 = vpop.xlane.xlu0 %5207
    %v5209 = vsel %vm1064, %v4930, -inf
    %5210 = vmax.xlane.f32.xlu0 %v5209
    %v5211 = vpop.xlane.xlu0 %5210
    %v5212 = vsel %vm1064, %v4932, -inf
    %5213 = vmax.xlane.f32.xlu0 %v5212
    %v5214 = vpop.xlane.xlu0 %5213
    %v5215 = vsel %vm1064, %v4935, -inf
    %5216 = vmax.xlane.f32.xlu0 %v5215
    %v5217 = vpop.xlane.xlu0 %5216
    %v5218 = vsel %vm1064, %v4937, -inf
    %5219 = vmax.xlane.f32.xlu0 %v5218
    %v5220 = vpop.xlane.xlu0 %5219
    %v5221 = vsel %vm1064, %v4989, -inf
    %5222 = vmax.xlane.f32.xlu0 %v5221
    %v5223 = vpop.xlane.xlu0 %5222
    %v5224 = vsel %vm1064, %v4991, -inf
    %5225 = vmax.xlane.f32.xlu0 %v5224
    %v5226 = vpop.xlane.xlu0 %5225
    %v5227 = vsel %vm1064, %v4994, -inf
    %5228 = vmax.xlane.f32.xlu0 %v5227
    %v5229 = vpop.xlane.xlu0 %5228
    %v5230 = vsel %vm1064, %v4996, -inf
    %5231 = vmax.xlane.f32.xlu0 %v5230
    %v5232 = vpop.xlane.xlu0 %5231
    %v5233 = vsel %vm1064, %v4999, -inf
    %5234 = vmax.xlane.f32.xlu0 %v5233
    %v5235 = vpop.xlane.xlu0 %5234
    %v5236 = vsel %vm1064, %v5001, -inf
    %5237 = vmax.xlane.f32.xlu0 %v5236
    %v5238 = vpop.xlane.xlu0 %5237
    %v5239 = vsel %vm1064, %v5004, -inf
    %5240 = vmax.xlane.f32.xlu0 %v5239
    %v5241 = vpop.xlane.xlu0 %5240
    %v5242 = vsel %vm1064, %v5006, -inf
    %5243 = vmax.xlane.f32.xlu0 %v5242
    %v5244 = vpop.xlane.xlu0 %5243
    %v5245 = vsel %vm1064, %v5058, -inf
    %5246 = vmax.xlane.f32.xlu0 %v5245
    %v5247 = vpop.xlane.xlu0 %5246
    %v5248 = vsel %vm1064, %v5060, -inf
    %5249 = vmax.xlane.f32.xlu0 %v5248
    %v5250 = vpop.xlane.xlu0 %5249
    %v5251 = vsel %vm1064, %v5063, -inf
    %5252 = vmax.xlane.f32.xlu0 %v5251
    %v5253 = vpop.xlane.xlu0 %5252
    %v5254 = vsel %vm1064, %v5065, -inf
    %5255 = vmax.xlane.f32.xlu0 %v5254
    %v5256 = vpop.xlane.xlu0 %5255
    %v5257 = vsel %vm1064, %v5068, -inf
    %5258 = vmax.xlane.f32.xlu0 %v5257
    %v5259 = vpop.xlane.xlu0 %5258
    %v5260 = vsel %vm1064, %v5070, -inf
    %5261 = vmax.xlane.f32.xlu0 %v5260
    %v5262 = vpop.xlane.xlu0 %5261
    %v5263 = vsel %vm1064, %v5073, -inf
    %5264 = vmax.xlane.f32.xlu0 %v5263
    %v5265 = vpop.xlane.xlu0 %5264
    %v5266 = vsel %vm1064, %v5075, -inf
    %5267 = vmax.xlane.f32.xlu0 %v5266
    %v5268 = vpop.xlane.xlu0 %5267
    %v5269 = vsub.f32 %v4575, %v5079
    %v5270 = vsub.f32 %v4577, %v5082
    %v5271 = vsub.f32 %v4580, %v5085
    %v5272 = vsub.f32 %v4582, %v5088
    %v5273 = vsub.f32 %v4585, %v5091
    %v5274 = vsub.f32 %v4587, %v5094
    %v5275 = vsub.f32 %v4590, %v5097
    %v5276 = vsub.f32 %v4592, %v5100
    %v5277 = vsub.f32 %v4644, %v5103
    %v5278 = vsub.f32 %v4646, %v5106
    %v5279 = vsub.f32 %v4649, %v5109
    %v5280 = vsub.f32 %v4651, %v5112
    %v5281 = vsub.f32 %v4654, %v5115
    %v5282 = vsub.f32 %v4656, %v5118
    %v5283 = vsub.f32 %v4659, %v5121
    %v5284 = vsub.f32 %v4661, %v5124
    %v5285 = vsub.f32 %v4713, %v5127
    %v5286 = vsub.f32 %v4715, %v5130
    %v5287 = vsub.f32 %v4718, %v5133
    %v5288 = vsub.f32 %v4720, %v5136
    %v5289 = vsub.f32 %v4723, %v5139
    %v5290 = vsub.f32 %v4725, %v5142
    %v5291 = vsub.f32 %v4728, %v5145
    %v5292 = vsub.f32 %v4730, %v5148
    %v5293 = vsub.f32 %v4782, %v5151
    %v5294 = vsub.f32 %v4784, %v5154
    %v5295 = vsub.f32 %v4787, %v5157
    %v5296 = vsub.f32 %v4789, %v5160
    %v5297 = vsub.f32 %v4792, %v5163
    %v5298 = vsub.f32 %v4794, %v5166
    %v5299 = vsub.f32 %v4797, %v5169
    %v5300 = vsub.f32 %v4799, %v5172
    %v5301 = vsub.f32 %v4851, %v5175
    %v5302 = vsub.f32 %v4853, %v5178
    %v5303 = vsub.f32 %v4856, %v5181
    %v5304 = vsub.f32 %v4858, %v5184
    %v5305 = vsub.f32 %v4861, %v5187
    %v5306 = vsub.f32 %v4863, %v5190
    %v5307 = vsub.f32 %v4866, %v5193
    %v5308 = vsub.f32 %v4868, %v5196
    %v5309 = vsub.f32 %v4920, %v5199
    %v5310 = vsub.f32 %v4922, %v5202
    %v5311 = vsub.f32 %v4925, %v5205
    %v5312 = vsub.f32 %v4927, %v5208
    %v5313 = vsub.f32 %v4930, %v5211
    %v5314 = vsub.f32 %v4932, %v5214
    %v5315 = vsub.f32 %v4935, %v5217
    %v5316 = vsub.f32 %v4937, %v5220
    %v5317 = vsub.f32 %v4989, %v5223
    %v5318 = vsub.f32 %v4991, %v5226
    %v5319 = vsub.f32 %v4994, %v5229
    %v5320 = vsub.f32 %v4996, %v5232
    %v5321 = vsub.f32 %v4999, %v5235
    %v5322 = vsub.f32 %v5001, %v5238
    %v5323 = vsub.f32 %v5004, %v5241
    %v5324 = vsub.f32 %v5006, %v5244
    %v5325 = vsub.f32 %v5058, %v5247
    %v5326 = vsub.f32 %v5060, %v5250
    %v5327 = vsub.f32 %v5063, %v5253
    %v5328 = vsub.f32 %v5065, %v5256
    %v5329 = vsub.f32 %v5068, %v5259
    %v5330 = vsub.f32 %v5070, %v5262
    %v5331 = vsub.f32 %v5073, %v5265
    %v5332 = vsub.f32 %v5075, %v5268
    %v5333 = vmul.f32 %v5269, 1.442695
    %v5334 = vpow.pop %v5333
    %v5335 = vmul.f32 %v5270, 1.442695
    %v5336 = vpow.pop %v5335
    %v5337 = vmul.f32 %v5271, 1.442695
    %v5338 = vpow.pop %v5337
    %v5339 = vmul.f32 %v5272, 1.442695
    %v5340 = vpow.pop %v5339
    %v5341 = vmul.f32 %v5273, 1.442695
    %v5342 = vpow.pop %v5341
    %v5343 = vmul.f32 %v5274, 1.442695
    %v5344 = vpow.pop %v5343
    %v5345 = vmul.f32 %v5275, 1.442695
    %v5346 = vpow.pop %v5345
    %v5347 = vmul.f32 %v5276, 1.442695
    %v5348 = vpow.pop %v5347
    %v5349 = vmul.f32 %v5277, 1.442695
    %v5350 = vpow.pop %v5349
    %v5351 = vmul.f32 %v5278, 1.442695
    %v5352 = vpow.pop %v5351
    %v5353 = vmul.f32 %v5279, 1.442695
    %v5354 = vpow.pop %v5353
    %v5355 = vmul.f32 %v5280, 1.442695
    %v5356 = vpow.pop %v5355
    %v5357 = vmul.f32 %v5281, 1.442695
    %v5358 = vpow.pop %v5357
    %v5359 = vmul.f32 %v5282, 1.442695
    %v5360 = vpow.pop %v5359
    %v5361 = vmul.f32 %v5283, 1.442695
    %v5362 = vpow.pop %v5361
    %v5363 = vmul.f32 %v5284, 1.442695
    %v5364 = vpow.pop %v5363
    %v5365 = vmul.f32 %v5285, 1.442695
    %v5366 = vpow.pop %v5365
    %v5367 = vmul.f32 %v5286, 1.442695
    %v5368 = vpow.pop %v5367
    %v5369 = vmul.f32 %v5287, 1.442695
    %v5370 = vpow.pop %v5369
    %v5371 = vmul.f32 %v5288, 1.442695
    %v5372 = vpow.pop %v5371
    %v5373 = vmul.f32 %v5289, 1.442695
    %v5374 = vpow.pop %v5373
    %v5375 = vmul.f32 %v5290, 1.442695
    %v5376 = vpow.pop %v5375
    %v5377 = vmul.f32 %v5291, 1.442695
    %v5378 = vpow.pop %v5377
    %v5379 = vmul.f32 %v5292, 1.442695
    %v5380 = vpow.pop %v5379
    %v5381 = vmul.f32 %v5293, 1.442695
    %v5382 = vpow.pop %v5381
    %v5383 = vmul.f32 %v5294, 1.442695
    %v5384 = vpow.pop %v5383
    %v5385 = vmul.f32 %v5295, 1.442695
    %v5386 = vpow.pop %v5385
    %v5387 = vmul.f32 %v5296, 1.442695
    %v5388 = vpow.pop %v5387
    %v5389 = vmul.f32 %v5297, 1.442695
    %v5390 = vpow.pop %v5389
    %v5391 = vmul.f32 %v5298, 1.442695
    %v5392 = vpow.pop %v5391
    %v5393 = vmul.f32 %v5299, 1.442695
    %v5394 = vpow.pop %v5393
    %v5395 = vmul.f32 %v5300, 1.442695
    %v5396 = vpow.pop %v5395
    %v5397 = vmul.f32 %v5301, 1.442695
    %v5398 = vpow.pop %v5397
    %v5399 = vmul.f32 %v5302, 1.442695
    %v5400 = vpow.pop %v5399
    %v5401 = vmul.f32 %v5303, 1.442695
    %v5402 = vpow.pop %v5401
    %v5403 = vmul.f32 %v5304, 1.442695
    %v5404 = vpow.pop %v5403
    %v5405 = vmul.f32 %v5305, 1.442695
    %v5406 = vpow.pop %v5405
    %v5407 = vmul.f32 %v5306, 1.442695
    %v5408 = vpow.pop %v5407
    %v5409 = vmul.f32 %v5307, 1.442695
    %v5410 = vpow.pop %v5409
    %v5411 = vmul.f32 %v5308, 1.442695
    %v5412 = vpow.pop %v5411
    %v5413 = vmul.f32 %v5309, 1.442695
    %v5414 = vpow.pop %v5413
    %v5415 = vmul.f32 %v5310, 1.442695
    %v5416 = vpow.pop %v5415
    %v5417 = vmul.f32 %v5311, 1.442695
    %v5418 = vpow.pop %v5417
    %v5419 = vmul.f32 %v5312, 1.442695
    %v5420 = vpow.pop %v5419
    %v5421 = vmul.f32 %v5313, 1.442695
    %v5422 = vpow.pop %v5421
    %v5423 = vmul.f32 %v5314, 1.442695
    %v5424 = vpow.pop %v5423
    %v5425 = vmul.f32 %v5315, 1.442695
    %v5426 = vpow.pop %v5425
    %v5427 = vmul.f32 %v5316, 1.442695
    %v5428 = vpow.pop %v5427
    %v5429 = vmul.f32 %v5317, 1.442695
    %v5430 = vpow.pop %v5429
    %v5431 = vmul.f32 %v5318, 1.442695
    %v5432 = vpow.pop %v5431
    %v5433 = vmul.f32 %v5319, 1.442695
    %v5434 = vpow.pop %v5433
    %v5435 = vmul.f32 %v5320, 1.442695
    %v5436 = vpow.pop %v5435
    %v5437 = vmul.f32 %v5321, 1.442695
    %v5438 = vpow.pop %v5437
    %v5439 = vmul.f32 %v5322, 1.442695
    %v5440 = vpow.pop %v5439
    %v5441 = vmul.f32 %v5323, 1.442695
    %v5442 = vpow.pop %v5441
    %v5443 = vmul.f32 %v5324, 1.442695
    %v5444 = vpow.pop %v5443
    %v5445 = vmul.f32 %v5325, 1.442695
    %v5446 = vpow.pop %v5445
    %v5447 = vmul.f32 %v5326, 1.442695
    %v5448 = vpow.pop %v5447
    %v5449 = vmul.f32 %v5327, 1.442695
    %v5450 = vpow.pop %v5449
    %v5451 = vmul.f32 %v5328, 1.442695
    %v5452 = vpow.pop %v5451
    %v5453 = vmul.f32 %v5329, 1.442695
    %v5454 = vpow.pop %v5453
    %v5455 = vmul.f32 %v5330, 1.442695
    %v5456 = vpow.pop %v5455
    %v5457 = vmul.f32 %v5331, 1.442695
    %v5458 = vpow.pop %v5457
    %v5459 = vmul.f32 %v5332, 1.442695
    %v5460 = vpow.pop %v5459
    %v5461 = vsel %vm1064, %v5334, 0.0
    %5462 = vadd.xlane.f32.xlu0 %v5461
    %v5463 = vpop.xlane.xlu0 %5462
    %v5464 = vsel %vm1064, %v5336, 0.0
    %5465 = vadd.xlane.f32.xlu0 %v5464
    %v5466 = vpop.xlane.xlu0 %5465
    %v5467 = vsel %vm1064, %v5338, 0.0
    %5468 = vadd.xlane.f32.xlu0 %v5467
    %v5469 = vpop.xlane.xlu0 %5468
    %v5470 = vsel %vm1064, %v5340, 0.0
    %5471 = vadd.xlane.f32.xlu0 %v5470
    %v5472 = vpop.xlane.xlu0 %5471
    %v5473 = vsel %vm1064, %v5342, 0.0
    %5474 = vadd.xlane.f32.xlu0 %v5473
    %v5475 = vpop.xlane.xlu0 %5474
    %v5476 = vsel %vm1064, %v5344, 0.0
    %5477 = vadd.xlane.f32.xlu0 %v5476
    %v5478 = vpop.xlane.xlu0 %5477
    %v5479 = vsel %vm1064, %v5346, 0.0
    %5480 = vadd.xlane.f32.xlu0 %v5479
    %v5481 = vpop.xlane.xlu0 %5480
    %v5482 = vsel %vm1064, %v5348, 0.0
    %5483 = vadd.xlane.f32.xlu0 %v5482
    %v5484 = vpop.xlane.xlu0 %5483
    %v5485 = vsel %vm1064, %v5350, 0.0
    %5486 = vadd.xlane.f32.xlu0 %v5485
    %v5487 = vpop.xlane.xlu0 %5486
    %v5488 = vsel %vm1064, %v5352, 0.0
    %5489 = vadd.xlane.f32.xlu0 %v5488
    %v5490 = vpop.xlane.xlu0 %5489
    %v5491 = vsel %vm1064, %v5354, 0.0
    %5492 = vadd.xlane.f32.xlu0 %v5491
    %v5493 = vpop.xlane.xlu0 %5492
    %v5494 = vsel %vm1064, %v5356, 0.0
    %5495 = vadd.xlane.f32.xlu0 %v5494
    %v5496 = vpop.xlane.xlu0 %5495
    %v5497 = vsel %vm1064, %v5358, 0.0
    %5498 = vadd.xlane.f32.xlu0 %v5497
    %v5499 = vpop.xlane.xlu0 %5498
    %v5500 = vsel %vm1064, %v5360, 0.0
    %5501 = vadd.xlane.f32.xlu0 %v5500
    %v5502 = vpop.xlane.xlu0 %5501
    %v5503 = vsel %vm1064, %v5362, 0.0
    %5504 = vadd.xlane.f32.xlu0 %v5503
    %v5505 = vpop.xlane.xlu0 %5504
    %v5506 = vsel %vm1064, %v5364, 0.0
    %5507 = vadd.xlane.f32.xlu0 %v5506
    %v5508 = vpop.xlane.xlu0 %5507
    %v5509 = vsel %vm1064, %v5366, 0.0
    %5510 = vadd.xlane.f32.xlu0 %v5509
    %v5511 = vpop.xlane.xlu0 %5510
    %v5512 = vsel %vm1064, %v5368, 0.0
    %5513 = vadd.xlane.f32.xlu0 %v5512
    %v5514 = vpop.xlane.xlu0 %5513
    %v5515 = vsel %vm1064, %v5370, 0.0
    %5516 = vadd.xlane.f32.xlu0 %v5515
    %v5517 = vpop.xlane.xlu0 %5516
    %v5518 = vsel %vm1064, %v5372, 0.0
    %5519 = vadd.xlane.f32.xlu0 %v5518
    %v5520 = vpop.xlane.xlu0 %5519
    %v5521 = vsel %vm1064, %v5374, 0.0
    %5522 = vadd.xlane.f32.xlu0 %v5521
    %v5523 = vpop.xlane.xlu0 %5522
    %v5524 = vsel %vm1064, %v5376, 0.0
    %5525 = vadd.xlane.f32.xlu0 %v5524
    %v5526 = vpop.xlane.xlu0 %5525
    %v5527 = vsel %vm1064, %v5378, 0.0
    %5528 = vadd.xlane.f32.xlu0 %v5527
    %v5529 = vpop.xlane.xlu0 %5528
    %v5530 = vsel %vm1064, %v5380, 0.0
    %5531 = vadd.xlane.f32.xlu0 %v5530
    %v5532 = vpop.xlane.xlu0 %5531
    %v5533 = vsel %vm1064, %v5382, 0.0
    %5534 = vadd.xlane.f32.xlu0 %v5533
    %v5535 = vpop.xlane.xlu0 %5534
    %v5536 = vsel %vm1064, %v5384, 0.0
    %5537 = vadd.xlane.f32.xlu0 %v5536
    %v5538 = vpop.xlane.xlu0 %5537
    %v5539 = vsel %vm1064, %v5386, 0.0
    %5540 = vadd.xlane.f32.xlu0 %v5539
    %v5541 = vpop.xlane.xlu0 %5540
    %v5542 = vsel %vm1064, %v5388, 0.0
    %5543 = vadd.xlane.f32.xlu0 %v5542
    %v5544 = vpop.xlane.xlu0 %5543
    %v5545 = vsel %vm1064, %v5390, 0.0
    %5546 = vadd.xlane.f32.xlu0 %v5545
    %v5547 = vpop.xlane.xlu0 %5546
    %v5548 = vsel %vm1064, %v5392, 0.0
    %5549 = vadd.xlane.f32.xlu0 %v5548
    %v5550 = vpop.xlane.xlu0 %5549
    %v5551 = vsel %vm1064, %v5394, 0.0
    %5552 = vadd.xlane.f32.xlu0 %v5551
    %v5553 = vpop.xlane.xlu0 %5552
    %v5554 = vsel %vm1064, %v5396, 0.0
    %5555 = vadd.xlane.f32.xlu0 %v5554
    %v5556 = vpop.xlane.xlu0 %5555
    %v5557 = vsel %vm1064, %v5398, 0.0
    %5558 = vadd.xlane.f32.xlu0 %v5557
    %v5559 = vpop.xlane.xlu0 %5558
    %v5560 = vsel %vm1064, %v5400, 0.0
    %5561 = vadd.xlane.f32.xlu0 %v5560
    %v5562 = vpop.xlane.xlu0 %5561
    %v5563 = vsel %vm1064, %v5402, 0.0
    %5564 = vadd.xlane.f32.xlu0 %v5563
    %v5565 = vpop.xlane.xlu0 %5564
    %v5566 = vsel %vm1064, %v5404, 0.0
    %5567 = vadd.xlane.f32.xlu0 %v5566
    %v5568 = vpop.xlane.xlu0 %5567
    %v5569 = vsel %vm1064, %v5406, 0.0
    %5570 = vadd.xlane.f32.xlu0 %v5569
    %v5571 = vpop.xlane.xlu0 %5570
    %v5572 = vsel %vm1064, %v5408, 0.0
    %5573 = vadd.xlane.f32.xlu0 %v5572
    %v5574 = vpop.xlane.xlu0 %5573
    %v5575 = vsel %vm1064, %v5410, 0.0
    %5576 = vadd.xlane.f32.xlu0 %v5575
    %v5577 = vpop.xlane.xlu0 %5576
    %v5578 = vsel %vm1064, %v5412, 0.0
    %5579 = vadd.xlane.f32.xlu0 %v5578
    %v5580 = vpop.xlane.xlu0 %5579
    %v5581 = vsel %vm1064, %v5414, 0.0
    %5582 = vadd.xlane.f32.xlu0 %v5581
    %v5583 = vpop.xlane.xlu0 %5582
    %v5584 = vsel %vm1064, %v5416, 0.0
    %5585 = vadd.xlane.f32.xlu0 %v5584
    %v5586 = vpop.xlane.xlu0 %5585
    %v5587 = vsel %vm1064, %v5418, 0.0
    %5588 = vadd.xlane.f32.xlu0 %v5587
    %v5589 = vpop.xlane.xlu0 %5588
    %v5590 = vsel %vm1064, %v5420, 0.0
    %5591 = vadd.xlane.f32.xlu0 %v5590
    %v5592 = vpop.xlane.xlu0 %5591
    %v5593 = vsel %vm1064, %v5422, 0.0
    %5594 = vadd.xlane.f32.xlu0 %v5593
    %v5595 = vpop.xlane.xlu0 %5594
    %v5596 = vsel %vm1064, %v5424, 0.0
    %5597 = vadd.xlane.f32.xlu0 %v5596
    %v5598 = vpop.xlane.xlu0 %5597
    %v5599 = vsel %vm1064, %v5426, 0.0
    %5600 = vadd.xlane.f32.xlu0 %v5599
    %v5601 = vpop.xlane.xlu0 %5600
    %v5602 = vsel %vm1064, %v5428, 0.0
    %5603 = vadd.xlane.f32.xlu0 %v5602
    %v5604 = vpop.xlane.xlu0 %5603
    %v5605 = vsel %vm1064, %v5430, 0.0
    %5606 = vadd.xlane.f32.xlu0 %v5605
    %v5607 = vpop.xlane.xlu0 %5606
    %v5608 = vsel %vm1064, %v5432, 0.0
    %5609 = vadd.xlane.f32.xlu0 %v5608
    %v5610 = vpop.xlane.xlu0 %5609
    %v5611 = vsel %vm1064, %v5434, 0.0
    %5612 = vadd.xlane.f32.xlu0 %v5611
    %v5613 = vpop.xlane.xlu0 %5612
    %v5614 = vsel %vm1064, %v5436, 0.0
    %5615 = vadd.xlane.f32.xlu0 %v5614
    %v5616 = vpop.xlane.xlu0 %5615
    %v5617 = vsel %vm1064, %v5438, 0.0
    %5618 = vadd.xlane.f32.xlu0 %v5617
    %v5619 = vpop.xlane.xlu0 %5618
    %v5620 = vsel %vm1064, %v5440, 0.0
    %5621 = vadd.xlane.f32.xlu0 %v5620
    %v5622 = vpop.xlane.xlu0 %5621
    %v5623 = vsel %vm1064, %v5442, 0.0
    %5624 = vadd.xlane.f32.xlu0 %v5623
    %v5625 = vpop.xlane.xlu0 %5624
    %v5626 = vsel %vm1064, %v5444, 0.0
    %5627 = vadd.xlane.f32.xlu0 %v5626
    %v5628 = vpop.xlane.xlu0 %5627
    %v5629 = vsel %vm1064, %v5446, 0.0
    %5630 = vadd.xlane.f32.xlu0 %v5629
    %v5631 = vpop.xlane.xlu0 %5630
    %v5632 = vsel %vm1064, %v5448, 0.0
    %5633 = vadd.xlane.f32.xlu0 %v5632
    %v5634 = vpop.xlane.xlu0 %5633
    %v5635 = vsel %vm1064, %v5450, 0.0
    %5636 = vadd.xlane.f32.xlu0 %v5635
    %v5637 = vpop.xlane.xlu0 %5636
    %v5638 = vsel %vm1064, %v5452, 0.0
    %5639 = vadd.xlane.f32.xlu0 %v5638
    %v5640 = vpop.xlane.xlu0 %5639
    %v5641 = vsel %vm1064, %v5454, 0.0
    %5642 = vadd.xlane.f32.xlu0 %v5641
    %v5643 = vpop.xlane.xlu0 %5642
    %v5644 = vsel %vm1064, %v5456, 0.0
    %5645 = vadd.xlane.f32.xlu0 %v5644
    %v5646 = vpop.xlane.xlu0 %5645
    %v5647 = vsel %vm1064, %v5458, 0.0
    %5648 = vadd.xlane.f32.xlu0 %v5647
    %v5649 = vpop.xlane.xlu0 %5648
    %v5650 = vsel %vm1064, %v5460, 0.0
    %5651 = vadd.xlane.f32.xlu0 %v5650
    %v5652 = vpop.xlane.xlu0 %5651
    %v5653 = vrcp.pop %v5463
    %v5654 = vrcp.pop %v5466
    %v5655 = vrcp.pop %v5469
    %v5656 = vrcp.pop %v5472
    %v5657 = vrcp.pop %v5475
    %v5658 = vrcp.pop %v5478
    %v5659 = vrcp.pop %v5481
    %v5660 = vrcp.pop %v5484
    %v5661 = vrcp.pop %v5487
    %v5662 = vrcp.pop %v5490
    %v5663 = vrcp.pop %v5493
    %v5664 = vrcp.pop %v5496
    %v5665 = vrcp.pop %v5499
    %v5666 = vrcp.pop %v5502
    %v5667 = vrcp.pop %v5505
    %v5668 = vrcp.pop %v5508
    %v5669 = vrcp.pop %v5511
    %v5670 = vrcp.pop %v5514
    %v5671 = vrcp.pop %v5517
    %v5672 = vrcp.pop %v5520
    %v5673 = vrcp.pop %v5523
    %v5674 = vrcp.pop %v5526
    %v5675 = vrcp.pop %v5529
    %v5676 = vrcp.pop %v5532
    %v5677 = vrcp.pop %v5535
    %v5678 = vrcp.pop %v5538
    %v5679 = vrcp.pop %v5541
    %v5680 = vrcp.pop %v5544
    %v5681 = vrcp.pop %v5547
    %v5682 = vrcp.pop %v5550
    %v5683 = vrcp.pop %v5553
    %v5684 = vrcp.pop %v5556
    %v5685 = vrcp.pop %v5559
    %v5686 = vrcp.pop %v5562
    %v5687 = vrcp.pop %v5565
    %v5688 = vrcp.pop %v5568
    %v5689 = vrcp.pop %v5571
    %v5690 = vrcp.pop %v5574
    %v5691 = vrcp.pop %v5577
    %v5692 = vrcp.pop %v5580
    %v5693 = vrcp.pop %v5583
    %v5694 = vrcp.pop %v5586
    %v5695 = vrcp.pop %v5589
    %v5696 = vrcp.pop %v5592
    %v5697 = vrcp.pop %v5595
    %v5698 = vrcp.pop %v5598
    %v5699 = vrcp.pop %v5601
    %v5700 = vrcp.pop %v5604
    %v5701 = vrcp.pop %v5607
    %v5702 = vrcp.pop %v5610
    %v5703 = vrcp.pop %v5613
    %v5704 = vrcp.pop %v5616
    %v5705 = vrcp.pop %v5619
    %v5706 = vrcp.pop %v5622
    %v5707 = vrcp.pop %v5625
    %v5708 = vrcp.pop %v5628
    %v5709 = vrcp.pop %v5631
    %v5710 = vrcp.pop %v5634
    %v5711 = vrcp.pop %v5637
    %v5712 = vrcp.pop %v5640
    %v5713 = vrcp.pop %v5643
    %v5714 = vrcp.pop %v5646
    %v5715 = vrcp.pop %v5649
    %v5716 = vrcp.pop %v5652
    %v5717 = vmul.f32 %v5334, %v5653
    %v5718 = vmul.f32 %v5336, %v5654
    %v5719 = vmul.f32 %v5338, %v5655
    %v5720 = vmul.f32 %v5340, %v5656
    %v5721 = vmul.f32 %v5342, %v5657
    %v5722 = vmul.f32 %v5344, %v5658
    %v5723 = vmul.f32 %v5346, %v5659
    %v5724 = vmul.f32 %v5348, %v5660
    %v5725 = vmul.f32 %v5350, %v5661
    %v5726 = vmul.f32 %v5352, %v5662
    %v5727 = vmul.f32 %v5354, %v5663
    %v5728 = vmul.f32 %v5356, %v5664
    %v5729 = vmul.f32 %v5358, %v5665
    %v5730 = vmul.f32 %v5360, %v5666
    %v5731 = vmul.f32 %v5362, %v5667
    %v5732 = vmul.f32 %v5364, %v5668
    %v5733 = vmul.f32 %v5366, %v5669
    %v5734 = vmul.f32 %v5368, %v5670
    %v5735 = vmul.f32 %v5370, %v5671
    %v5736 = vmul.f32 %v5372, %v5672
    %v5737 = vmul.f32 %v5374, %v5673
    %v5738 = vmul.f32 %v5376, %v5674
    %v5739 = vmul.f32 %v5378, %v5675
    %v5740 = vmul.f32 %v5380, %v5676
    %v5741 = vmul.f32 %v5382, %v5677
    %v5742 = vmul.f32 %v5384, %v5678
    %v5743 = vmul.f32 %v5386, %v5679
    %v5744 = vmul.f32 %v5388, %v5680
    %v5745 = vmul.f32 %v5390, %v5681
    %v5746 = vmul.f32 %v5392, %v5682
    %v5747 = vmul.f32 %v5394, %v5683
    %v5748 = vmul.f32 %v5396, %v5684
    %v5749 = vmul.f32 %v5398, %v5685
    %v5750 = vmul.f32 %v5400, %v5686
    %v5751 = vmul.f32 %v5402, %v5687
    %v5752 = vmul.f32 %v5404, %v5688
    %v5753 = vmul.f32 %v5406, %v5689
    %v5754 = vmul.f32 %v5408, %v5690
    %v5755 = vmul.f32 %v5410, %v5691
    %v5756 = vmul.f32 %v5412, %v5692
    %v5757 = vmul.f32 %v5414, %v5693
    %v5758 = vmul.f32 %v5416, %v5694
    %v5759 = vmul.f32 %v5418, %v5695
    %v5760 = vmul.f32 %v5420, %v5696
    %v5761 = vmul.f32 %v5422, %v5697
    %v5762 = vmul.f32 %v5424, %v5698
    %v5763 = vmul.f32 %v5426, %v5699
    %v5764 = vmul.f32 %v5428, %v5700
    %v5765 = vmul.f32 %v5430, %v5701
    %v5766 = vmul.f32 %v5432, %v5702
    %v5767 = vmul.f32 %v5434, %v5703
    %v5768 = vmul.f32 %v5436, %v5704
    %v5769 = vmul.f32 %v5438, %v5705
    %v5770 = vmul.f32 %v5440, %v5706
    %v5771 = vmul.f32 %v5442, %v5707
    %v5772 = vmul.f32 %v5444, %v5708
    %v5773 = vmul.f32 %v5446, %v5709
    %v5774 = vmul.f32 %v5448, %v5710
    %v5775 = vmul.f32 %v5450, %v5711
    %v5776 = vmul.f32 %v5452, %v5712
    %v5777 = vmul.f32 %v5454, %v5713
    %v5778 = vmul.f32 %v5456, %v5714
    %v5779 = vmul.f32 %v5458, %v5715
    %v5780 = vmul.f32 %v5460, %v5716
    %v5781 = vpack.c.bf16 %v5717, %v5717
    %v5782 = vpack.c.bf16 %v5718, %v5718
    %v5783 = vpack.c.bf16 %v5719, %v5719
    %v5784 = vpack.c.bf16 %v5720, %v5720
    %v5785 = vpack.c.bf16 %v5721, %v5721
    %v5786 = vpack.c.bf16 %v5722, %v5722
    %v5787 = vpack.c.bf16 %v5723, %v5723
    %v5788 = vpack.c.bf16 %v5724, %v5724
    %v5789 = vpack.c.bf16 %v5725, %v5725
    %v5790 = vpack.c.bf16 %v5726, %v5726
    %v5791 = vpack.c.bf16 %v5727, %v5727
    %v5792 = vpack.c.bf16 %v5728, %v5728
    %v5793 = vpack.c.bf16 %v5729, %v5729
    %v5794 = vpack.c.bf16 %v5730, %v5730
    %v5795 = vpack.c.bf16 %v5731, %v5731
    %v5796 = vpack.c.bf16 %v5732, %v5732
    %v5797 = vpack.c.bf16 %v5733, %v5733
    %v5798 = vpack.c.bf16 %v5734, %v5734
    %v5799 = vpack.c.bf16 %v5735, %v5735
    %v5800 = vpack.c.bf16 %v5736, %v5736
    %v5801 = vpack.c.bf16 %v5737, %v5737
    %v5802 = vpack.c.bf16 %v5738, %v5738
    %v5803 = vpack.c.bf16 %v5739, %v5739
    %v5804 = vpack.c.bf16 %v5740, %v5740
    %v5805 = vpack.c.bf16 %v5741, %v5741
    %v5806 = vpack.c.bf16 %v5742, %v5742
    %v5807 = vpack.c.bf16 %v5743, %v5743
    %v5808 = vpack.c.bf16 %v5744, %v5744
    %v5809 = vpack.c.bf16 %v5745, %v5745
    %v5810 = vpack.c.bf16 %v5746, %v5746
    %v5811 = vpack.c.bf16 %v5747, %v5747
    %v5812 = vpack.c.bf16 %v5748, %v5748
    %v5813 = vpack.c.bf16 %v5749, %v5749
    %v5814 = vpack.c.bf16 %v5750, %v5750
    %v5815 = vpack.c.bf16 %v5751, %v5751
    %v5816 = vpack.c.bf16 %v5752, %v5752
    %v5817 = vpack.c.bf16 %v5753, %v5753
    %v5818 = vpack.c.bf16 %v5754, %v5754
    %v5819 = vpack.c.bf16 %v5755, %v5755
    %v5820 = vpack.c.bf16 %v5756, %v5756
    %v5821 = vpack.c.bf16 %v5757, %v5757
    %v5822 = vpack.c.bf16 %v5758, %v5758
    %v5823 = vpack.c.bf16 %v5759, %v5759
    %v5824 = vpack.c.bf16 %v5760, %v5760
    %v5825 = vpack.c.bf16 %v5761, %v5761
    %v5826 = vpack.c.bf16 %v5762, %v5762
    %v5827 = vpack.c.bf16 %v5763, %v5763
    %v5828 = vpack.c.bf16 %v5764, %v5764
    %v5829 = vpack.c.bf16 %v5765, %v5765
    %v5830 = vpack.c.bf16 %v5766, %v5766
    %v5831 = vpack.c.bf16 %v5767, %v5767
    %v5832 = vpack.c.bf16 %v5768, %v5768
    %v5833 = vpack.c.bf16 %v5769, %v5769
    %v5834 = vpack.c.bf16 %v5770, %v5770
    %v5835 = vpack.c.bf16 %v5771, %v5771
    %v5836 = vpack.c.bf16 %v5772, %v5772
    %v5837 = vpack.c.bf16 %v5773, %v5773
    %v5838 = vpack.c.bf16 %v5774, %v5774
    %v5839 = vpack.c.bf16 %v5775, %v5775
    %v5840 = vpack.c.bf16 %v5776, %v5776
    %v5841 = vpack.c.bf16 %v5777, %v5777
    %v5842 = vpack.c.bf16 %v5778, %v5778
    %v5843 = vpack.c.bf16 %v5779, %v5779
    %v5844 = vpack.c.bf16 %v5780, %v5780
    %v5853 = vunpack.c.l.b16 %v5781
    %v5854 = vunpack.c.l.b16 %v5782
    %v5855 = vunpack.c.l.b16 %v5783
    %v5856 = vunpack.c.l.b16 %v5784
    %v5857 = vunpack.c.l.b16 %v5785
    %v5858 = vunpack.c.l.b16 %v5786
    %v5859 = vunpack.c.l.b16 %v5787
    %v5860 = vunpack.c.l.b16 %v5788
    %v5861 = vpack.c.b16 %v5854, %v5853
    %v5862 = vpack.c.b16 %v5856, %v5855
    %v5863 = vpack.c.b16 %v5858, %v5857
    %v5864 = vpack.c.b16 %v5860, %v5859
    %v5873 = vunpack.c.l.b16 %v4493
    %v5874 = vunpack.c.l.b16 %v4494
    %v5875 = vunpack.c.l.b16 %v4495
    %v5876 = vunpack.c.l.b16 %v4496
    %v5877 = vunpack.c.l.b16 %v4497
    %v5878 = vunpack.c.l.b16 %v4498
    %v5879 = vunpack.c.l.b16 %v4499
    %v5880 = vunpack.c.l.b16 %v4500
    %v5881 = vpack.c.b16 %v5874, %v5873
    %v5882 = vpack.c.b16 %v5876, %v5875
    %v5883 = vpack.c.b16 %v5878, %v5877
    %v5884 = vpack.c.b16 %v5880, %v5879
    %v5890 = vsel %vm1064, %v5861, 0
    %v5893 = vsel %vm1064, %v5862, 0
    %v5896 = vsel %vm1064, %v5863, 0
    %v5899 = vsel %vm1064, %v5864, 0
    %5901 = vmatpush.bf16.msra.mxu0 0
    %5902 = vmatpush.bf16.msra.mxu0 0
    %5903 = vmatpush.bf16.msra.mxu0 0
    %5904 = vmatpush.bf16.msra.mxu0 0
    %5905 = vmatpush.bf16.msra.mxu0 %v5884
    %5906 = vmatpush.bf16.msra.mxu0 %v5883
    %5907 = vmatpush.bf16.msra.mxu0 %v5882
    %5908 = vmatpush.bf16.msra.mxu0 %v5881
    %5909 = vmatmul.bf16.gmra.mxu0 %v5890
    %v5910 = vpop.f32.mrf.mxu0
    %v5911 = vadd.f32 0.0, %v5910
    %v5912 = vpop.f32.mrf.mxu0
    %v5913 = vadd.f32 0.0, %v5912
    %5914 = vmatmul.bf16.gmra.mxu0 %v5893
    %v5915 = vpop.f32.mrf.mxu0
    %v5916 = vadd.f32 0.0, %v5915
    %v5917 = vpop.f32.mrf.mxu0
    %v5918 = vadd.f32 0.0, %v5917
    %5919 = vmatmul.bf16.gmra.mxu0 %v5896
    %v5920 = vpop.f32.mrf.mxu0
    %v5921 = vadd.f32 0.0, %v5920
    %v5922 = vpop.f32.mrf.mxu0
    %v5923 = vadd.f32 0.0, %v5922
    %5924 = vmatmul.bf16.gmra.mxu0 %v5899
    %v5925 = vpop.f32.mrf.mxu0
    %v5926 = vadd.f32 0.0, %v5925
    %v5927 = vpop.f32.mrf.mxu0
    %v5928 = vadd.f32 0.0, %v5927
    %5929 = vdwg.mxu0
    %v5938 = vunpack.c.l.b16 %v5789
    %v5939 = vunpack.c.l.b16 %v5790
    %v5940 = vunpack.c.l.b16 %v5791
    %v5941 = vunpack.c.l.b16 %v5792
    %v5942 = vunpack.c.l.b16 %v5793
    %v5943 = vunpack.c.l.b16 %v5794
    %v5944 = vunpack.c.l.b16 %v5795
    %v5945 = vunpack.c.l.b16 %v5796
    %v5946 = vpack.c.b16 %v5939, %v5938
    %v5947 = vpack.c.b16 %v5941, %v5940
    %v5948 = vpack.c.b16 %v5943, %v5942
    %v5949 = vpack.c.b16 %v5945, %v5944
    %5950 = vrot.lane.b32.xlu0 %v5881, 112
    %v5951 = vpop.permute.xlu0 %5950
    %5952 = vrot.lane.b32.xlu0 %v5882, 112
    %v5953 = vpop.permute.xlu0 %5952
    %5954 = vrot.lane.b32.xlu0 %v5883, 112
    %v5955 = vpop.permute.xlu0 %5954
    %5956 = vrot.lane.b32.xlu0 %v5884, 112
    %v5957 = vpop.permute.xlu0 %5956
    %v5963 = vsel %vm1064, %v5946, 0
    %v5966 = vsel %vm1064, %v5947, 0
    %v5969 = vsel %vm1064, %v5948, 0
    %v5972 = vsel %vm1064, %v5949, 0
    %5974 = vmatpush.bf16.msra.mxu0 0
    %5975 = vmatpush.bf16.msra.mxu0 0
    %5976 = vmatpush.bf16.msra.mxu0 0
    %5977 = vmatpush.bf16.msra.mxu0 0
    %5978 = vmatpush.bf16.msra.mxu0 %v5957
    %5979 = vmatpush.bf16.msra.mxu0 %v5955
    %5980 = vmatpush.bf16.msra.mxu0 %v5953
    %5981 = vmatpush.bf16.msra.mxu0 %v5951
    %5982 = vmatmul.bf16.gmra.mxu0 %v5963
    %v5983 = vpop.f32.mrf.mxu0
    %v5984 = vadd.f32 0.0, %v5983
    %v5985 = vpop.f32.mrf.mxu0
    %v5986 = vadd.f32 0.0, %v5985
    %5987 = vmatmul.bf16.gmra.mxu0 %v5966
    %v5988 = vpop.f32.mrf.mxu0
    %v5989 = vadd.f32 0.0, %v5988
    %v5990 = vpop.f32.mrf.mxu0
    %v5991 = vadd.f32 0.0, %v5990
    %5992 = vmatmul.bf16.gmra.mxu0 %v5969
    %v5993 = vpop.f32.mrf.mxu0
    %v5994 = vadd.f32 0.0, %v5993
    %v5995 = vpop.f32.mrf.mxu0
    %v5996 = vadd.f32 0.0, %v5995
    %5997 = vmatmul.bf16.gmra.mxu0 %v5972
    %v5998 = vpop.f32.mrf.mxu0
    %v5999 = vadd.f32 0.0, %v5998
    %v6000 = vpop.f32.mrf.mxu0
    %v6001 = vadd.f32 0.0, %v6000
    %6002 = vdwg.mxu0
    %v6011 = vunpack.c.l.b16 %v5797
    %v6012 = vunpack.c.l.b16 %v5798
    %v6013 = vunpack.c.l.b16 %v5799
    %v6014 = vunpack.c.l.b16 %v5800
    %v6015 = vunpack.c.l.b16 %v5801
    %v6016 = vunpack.c.l.b16 %v5802
    %v6017 = vunpack.c.l.b16 %v5803
    %v6018 = vunpack.c.l.b16 %v5804
    %v6019 = vpack.c.b16 %v6012, %v6011
    %v6020 = vpack.c.b16 %v6014, %v6013
    %v6021 = vpack.c.b16 %v6016, %v6015
    %v6022 = vpack.c.b16 %v6018, %v6017
    %6023 = vrot.lane.b32.xlu0 %v5881, 96
    %v6024 = vpop.permute.xlu0 %6023
    %6025 = vrot.lane.b32.xlu0 %v5882, 96
    %v6026 = vpop.permute.xlu0 %6025
    %6027 = vrot.lane.b32.xlu0 %v5883, 96
    %v6028 = vpop.permute.xlu0 %6027
    %6029 = vrot.lane.b32.xlu0 %v5884, 96
    %v6030 = vpop.permute.xlu0 %6029
    %v6036 = vsel %vm1064, %v6019, 0
    %v6039 = vsel %vm1064, %v6020, 0
    %v6042 = vsel %vm1064, %v6021, 0
    %v6045 = vsel %vm1064, %v6022, 0
    %6047 = vmatpush.bf16.msra.mxu0 0
    %6048 = vmatpush.bf16.msra.mxu0 0
    %6049 = vmatpush.bf16.msra.mxu0 0
    %6050 = vmatpush.bf16.msra.mxu0 0
    %6051 = vmatpush.bf16.msra.mxu0 %v6030
    %6052 = vmatpush.bf16.msra.mxu0 %v6028
    %6053 = vmatpush.bf16.msra.mxu0 %v6026
    %6054 = vmatpush.bf16.msra.mxu0 %v6024
    %6055 = vmatmul.bf16.gmra.mxu0 %v6036
    %v6056 = vpop.f32.mrf.mxu0
    %v6057 = vadd.f32 0.0, %v6056
    %v6058 = vpop.f32.mrf.mxu0
    %v6059 = vadd.f32 0.0, %v6058
    %6060 = vmatmul.bf16.gmra.mxu0 %v6039
    %v6061 = vpop.f32.mrf.mxu0
    %v6062 = vadd.f32 0.0, %v6061
    %v6063 = vpop.f32.mrf.mxu0
    %v6064 = vadd.f32 0.0, %v6063
    %6065 = vmatmul.bf16.gmra.mxu0 %v6042
    %v6066 = vpop.f32.mrf.mxu0
    %v6067 = vadd.f32 0.0, %v6066
    %v6068 = vpop.f32.mrf.mxu0
    %v6069 = vadd.f32 0.0, %v6068
    %6070 = vmatmul.bf16.gmra.mxu0 %v6045
    %v6071 = vpop.f32.mrf.mxu0
    %v6072 = vadd.f32 0.0, %v6071
    %v6073 = vpop.f32.mrf.mxu0
    %v6074 = vadd.f32 0.0, %v6073
    %6075 = vdwg.mxu0
    %v6084 = vunpack.c.l.b16 %v5805
    %v6085 = vunpack.c.l.b16 %v5806
    %v6086 = vunpack.c.l.b16 %v5807
    %v6087 = vunpack.c.l.b16 %v5808
    %v6088 = vunpack.c.l.b16 %v5809
    %v6089 = vunpack.c.l.b16 %v5810
    %v6090 = vunpack.c.l.b16 %v5811
    %v6091 = vunpack.c.l.b16 %v5812
    %v6092 = vpack.c.b16 %v6085, %v6084
    %v6093 = vpack.c.b16 %v6087, %v6086
    %v6094 = vpack.c.b16 %v6089, %v6088
    %v6095 = vpack.c.b16 %v6091, %v6090
    %6096 = vrot.lane.b32.xlu0 %v5881, 80
    %v6097 = vpop.permute.xlu0 %6096
    %6098 = vrot.lane.b32.xlu0 %v5882, 80
    %v6099 = vpop.permute.xlu0 %6098
    %6100 = vrot.lane.b32.xlu0 %v5883, 80
    %v6101 = vpop.permute.xlu0 %6100
    %6102 = vrot.lane.b32.xlu0 %v5884, 80
    %v6103 = vpop.permute.xlu0 %6102
    %v6109 = vsel %vm1064, %v6092, 0
    %v6112 = vsel %vm1064, %v6093, 0
    %v6115 = vsel %vm1064, %v6094, 0
    %v6118 = vsel %vm1064, %v6095, 0
    %6120 = vmatpush.bf16.msra.mxu0 0
    %6121 = vmatpush.bf16.msra.mxu0 0
    %6122 = vmatpush.bf16.msra.mxu0 0
    %6123 = vmatpush.bf16.msra.mxu0 0
    %6124 = vmatpush.bf16.msra.mxu0 %v6103
    %6125 = vmatpush.bf16.msra.mxu0 %v6101
    %6126 = vmatpush.bf16.msra.mxu0 %v6099
    %6127 = vmatpush.bf16.msra.mxu0 %v6097
    %6128 = vmatmul.bf16.gmra.mxu0 %v6109
    %v6129 = vpop.f32.mrf.mxu0
    %v6130 = vadd.f32 0.0, %v6129
    %v6131 = vpop.f32.mrf.mxu0
    %v6132 = vadd.f32 0.0, %v6131
    %6133 = vmatmul.bf16.gmra.mxu0 %v6112
    %v6134 = vpop.f32.mrf.mxu0
    %v6135 = vadd.f32 0.0, %v6134
    %v6136 = vpop.f32.mrf.mxu0
    %v6137 = vadd.f32 0.0, %v6136
    %6138 = vmatmul.bf16.gmra.mxu0 %v6115
    %v6139 = vpop.f32.mrf.mxu0
    %v6140 = vadd.f32 0.0, %v6139
    %v6141 = vpop.f32.mrf.mxu0
    %v6142 = vadd.f32 0.0, %v6141
    %6143 = vmatmul.bf16.gmra.mxu0 %v6118
    %v6144 = vpop.f32.mrf.mxu0
    %v6145 = vadd.f32 0.0, %v6144
    %v6146 = vpop.f32.mrf.mxu0
    %v6147 = vadd.f32 0.0, %v6146
    %6148 = vdwg.mxu0
    %v6157 = vunpack.c.l.b16 %v5813
    %v6158 = vunpack.c.l.b16 %v5814
    %v6159 = vunpack.c.l.b16 %v5815
    %v6160 = vunpack.c.l.b16 %v5816
    %v6161 = vunpack.c.l.b16 %v5817
    %v6162 = vunpack.c.l.b16 %v5818
    %v6163 = vunpack.c.l.b16 %v5819
    %v6164 = vunpack.c.l.b16 %v5820
    %v6165 = vpack.c.b16 %v6158, %v6157
    %v6166 = vpack.c.b16 %v6160, %v6159
    %v6167 = vpack.c.b16 %v6162, %v6161
    %v6168 = vpack.c.b16 %v6164, %v6163
    %6169 = vrot.lane.b32.xlu0 %v5881, 64
    %v6170 = vpop.permute.xlu0 %6169
    %6171 = vrot.lane.b32.xlu0 %v5882, 64
    %v6172 = vpop.permute.xlu0 %6171
    %6173 = vrot.lane.b32.xlu0 %v5883, 64
    %v6174 = vpop.permute.xlu0 %6173
    %6175 = vrot.lane.b32.xlu0 %v5884, 64
    %v6176 = vpop.permute.xlu0 %6175
    %v6182 = vsel %vm1064, %v6165, 0
    %v6185 = vsel %vm1064, %v6166, 0
    %v6188 = vsel %vm1064, %v6167, 0
    %v6191 = vsel %vm1064, %v6168, 0
    %6193 = vmatpush.bf16.msra.mxu0 0
    %6194 = vmatpush.bf16.msra.mxu0 0
    %6195 = vmatpush.bf16.msra.mxu0 0
    %6196 = vmatpush.bf16.msra.mxu0 0
    %6197 = vmatpush.bf16.msra.mxu0 %v6176
    %6198 = vmatpush.bf16.msra.mxu0 %v6174
    %6199 = vmatpush.bf16.msra.mxu0 %v6172
    %6200 = vmatpush.bf16.msra.mxu0 %v6170
    %6201 = vmatmul.bf16.gmra.mxu0 %v6182
    %v6202 = vpop.f32.mrf.mxu0
    %v6203 = vadd.f32 0.0, %v6202
    %v6204 = vpop.f32.mrf.mxu0
    %v6205 = vadd.f32 0.0, %v6204
    %6206 = vmatmul.bf16.gmra.mxu0 %v6185
    %v6207 = vpop.f32.mrf.mxu0
    %v6208 = vadd.f32 0.0, %v6207
    %v6209 = vpop.f32.mrf.mxu0
    %v6210 = vadd.f32 0.0, %v6209
    %6211 = vmatmul.bf16.gmra.mxu0 %v6188
    %v6212 = vpop.f32.mrf.mxu0
    %v6213 = vadd.f32 0.0, %v6212
    %v6214 = vpop.f32.mrf.mxu0
    %v6215 = vadd.f32 0.0, %v6214
    %6216 = vmatmul.bf16.gmra.mxu0 %v6191
    %v6217 = vpop.f32.mrf.mxu0
    %v6218 = vadd.f32 0.0, %v6217
    %v6219 = vpop.f32.mrf.mxu0
    %v6220 = vadd.f32 0.0, %v6219
    %6221 = vdwg.mxu0
    %v6230 = vunpack.c.l.b16 %v5821
    %v6231 = vunpack.c.l.b16 %v5822
    %v6232 = vunpack.c.l.b16 %v5823
    %v6233 = vunpack.c.l.b16 %v5824
    %v6234 = vunpack.c.l.b16 %v5825
    %v6235 = vunpack.c.l.b16 %v5826
    %v6236 = vunpack.c.l.b16 %v5827
    %v6237 = vunpack.c.l.b16 %v5828
    %v6238 = vpack.c.b16 %v6231, %v6230
    %v6239 = vpack.c.b16 %v6233, %v6232
    %v6240 = vpack.c.b16 %v6235, %v6234
    %v6241 = vpack.c.b16 %v6237, %v6236
    %6242 = vrot.lane.b32.xlu0 %v5881, 48
    %v6243 = vpop.permute.xlu0 %6242
    %6244 = vrot.lane.b32.xlu0 %v5882, 48
    %v6245 = vpop.permute.xlu0 %6244
    %6246 = vrot.lane.b32.xlu0 %v5883, 48
    %v6247 = vpop.permute.xlu0 %6246
    %6248 = vrot.lane.b32.xlu0 %v5884, 48
    %v6249 = vpop.permute.xlu0 %6248
    %v6255 = vsel %vm1064, %v6238, 0
    %v6258 = vsel %vm1064, %v6239, 0
    %v6261 = vsel %vm1064, %v6240, 0
    %v6264 = vsel %vm1064, %v6241, 0
    %6266 = vmatpush.bf16.msra.mxu0 0
    %6267 = vmatpush.bf16.msra.mxu0 0
    %6268 = vmatpush.bf16.msra.mxu0 0
    %6269 = vmatpush.bf16.msra.mxu0 0
    %6270 = vmatpush.bf16.msra.mxu0 %v6249
    %6271 = vmatpush.bf16.msra.mxu0 %v6247
    %6272 = vmatpush.bf16.msra.mxu0 %v6245
    %6273 = vmatpush.bf16.msra.mxu0 %v6243
    %6274 = vmatmul.bf16.gmra.mxu0 %v6255
    %v6275 = vpop.f32.mrf.mxu0
    %v6276 = vadd.f32 0.0, %v6275
    %v6277 = vpop.f32.mrf.mxu0
    %v6278 = vadd.f32 0.0, %v6277
    %6279 = vmatmul.bf16.gmra.mxu0 %v6258
    %v6280 = vpop.f32.mrf.mxu0
    %v6281 = vadd.f32 0.0, %v6280
    %v6282 = vpop.f32.mrf.mxu0
    %v6283 = vadd.f32 0.0, %v6282
    %6284 = vmatmul.bf16.gmra.mxu0 %v6261
    %v6285 = vpop.f32.mrf.mxu0
    %v6286 = vadd.f32 0.0, %v6285
    %v6287 = vpop.f32.mrf.mxu0
    %v6288 = vadd.f32 0.0, %v6287
    %6289 = vmatmul.bf16.gmra.mxu0 %v6264
    %v6290 = vpop.f32.mrf.mxu0
    %v6291 = vadd.f32 0.0, %v6290
    %v6292 = vpop.f32.mrf.mxu0
    %v6293 = vadd.f32 0.0, %v6292
    %6294 = vdwg.mxu0
    %v6303 = vunpack.c.l.b16 %v5829
    %v6304 = vunpack.c.l.b16 %v5830
    %v6305 = vunpack.c.l.b16 %v5831
    %v6306 = vunpack.c.l.b16 %v5832
    %v6307 = vunpack.c.l.b16 %v5833
    %v6308 = vunpack.c.l.b16 %v5834
    %v6309 = vunpack.c.l.b16 %v5835
    %v6310 = vunpack.c.l.b16 %v5836
    %v6311 = vpack.c.b16 %v6304, %v6303
    %v6312 = vpack.c.b16 %v6306, %v6305
    %v6313 = vpack.c.b16 %v6308, %v6307
    %v6314 = vpack.c.b16 %v6310, %v6309
    %6315 = vrot.lane.b32.xlu0 %v5881, 32
    %v6316 = vpop.permute.xlu0 %6315
    %6317 = vrot.lane.b32.xlu0 %v5882, 32
    %v6318 = vpop.permute.xlu0 %6317
    %6319 = vrot.lane.b32.xlu0 %v5883, 32
    %v6320 = vpop.permute.xlu0 %6319
    %6321 = vrot.lane.b32.xlu0 %v5884, 32
    %v6322 = vpop.permute.xlu0 %6321
    %v6328 = vsel %vm1064, %v6311, 0
    %v6331 = vsel %vm1064, %v6312, 0
    %v6334 = vsel %vm1064, %v6313, 0
    %v6337 = vsel %vm1064, %v6314, 0
    %6339 = vmatpush.bf16.msra.mxu0 0
    %6340 = vmatpush.bf16.msra.mxu0 0
    %6341 = vmatpush.bf16.msra.mxu0 0
    %6342 = vmatpush.bf16.msra.mxu0 0
    %6343 = vmatpush.bf16.msra.mxu0 %v6322
    %6344 = vmatpush.bf16.msra.mxu0 %v6320
    %6345 = vmatpush.bf16.msra.mxu0 %v6318
    %6346 = vmatpush.bf16.msra.mxu0 %v6316
    %6347 = vmatmul.bf16.gmra.mxu0 %v6328
    %v6348 = vpop.f32.mrf.mxu0
    %v6349 = vadd.f32 0.0, %v6348
    %v6350 = vpop.f32.mrf.mxu0
    %v6351 = vadd.f32 0.0, %v6350
    %6352 = vmatmul.bf16.gmra.mxu0 %v6331
    %v6353 = vpop.f32.mrf.mxu0
    %v6354 = vadd.f32 0.0, %v6353
    %v6355 = vpop.f32.mrf.mxu0
    %v6356 = vadd.f32 0.0, %v6355
    %6357 = vmatmul.bf16.gmra.mxu0 %v6334
    %v6358 = vpop.f32.mrf.mxu0
    %v6359 = vadd.f32 0.0, %v6358
    %v6360 = vpop.f32.mrf.mxu0
    %v6361 = vadd.f32 0.0, %v6360
    %6362 = vmatmul.bf16.gmra.mxu0 %v6337
    %v6363 = vpop.f32.mrf.mxu0
    %v6364 = vadd.f32 0.0, %v6363
    %v6365 = vpop.f32.mrf.mxu0
    %v6366 = vadd.f32 0.0, %v6365
    %6367 = vdwg.mxu0
    %v6376 = vunpack.c.l.b16 %v5837
    %v6377 = vunpack.c.l.b16 %v5838
    %v6378 = vunpack.c.l.b16 %v5839
    %v6379 = vunpack.c.l.b16 %v5840
    %v6380 = vunpack.c.l.b16 %v5841
    %v6381 = vunpack.c.l.b16 %v5842
    %v6382 = vunpack.c.l.b16 %v5843
    %v6383 = vunpack.c.l.b16 %v5844
    %v6384 = vpack.c.b16 %v6377, %v6376
    %v6385 = vpack.c.b16 %v6379, %v6378
    %v6386 = vpack.c.b16 %v6381, %v6380
    %v6387 = vpack.c.b16 %v6383, %v6382
    %6388 = vrot.lane.b32.xlu0 %v5881, 16
    %v6389 = vpop.permute.xlu0 %6388
    %6390 = vrot.lane.b32.xlu0 %v5882, 16
    %v6391 = vpop.permute.xlu0 %6390
    %6392 = vrot.lane.b32.xlu0 %v5883, 16
    %v6393 = vpop.permute.xlu0 %6392
    %6394 = vrot.lane.b32.xlu0 %v5884, 16
    %v6395 = vpop.permute.xlu0 %6394
    %v6401 = vsel %vm1064, %v6384, 0
    %v6404 = vsel %vm1064, %v6385, 0
    %v6407 = vsel %vm1064, %v6386, 0
    %v6410 = vsel %vm1064, %v6387, 0
    %6412 = vmatpush.bf16.msra.mxu0 0
    %6413 = vmatpush.bf16.msra.mxu0 0
    %6414 = vmatpush.bf16.msra.mxu0 0
    %6415 = vmatpush.bf16.msra.mxu0 0
    %6416 = vmatpush.bf16.msra.mxu0 %v6395
    %6417 = vmatpush.bf16.msra.mxu0 %v6393
    %6418 = vmatpush.bf16.msra.mxu0 %v6391
    %6419 = vmatpush.bf16.msra.mxu0 %v6389
    %6420 = vmatmul.bf16.gmra.mxu0 %v6401
    %v6421 = vpop.f32.mrf.mxu0
    %v6422 = vadd.f32 0.0, %v6421
    %v6423 = vpop.f32.mrf.mxu0
    %v6424 = vadd.f32 0.0, %v6423
    %6425 = vmatmul.bf16.gmra.mxu0 %v6404
    %v6426 = vpop.f32.mrf.mxu0
    %v6427 = vadd.f32 0.0, %v6426
    %v6428 = vpop.f32.mrf.mxu0
    %v6429 = vadd.f32 0.0, %v6428
    %6430 = vmatmul.bf16.gmra.mxu0 %v6407
    %v6431 = vpop.f32.mrf.mxu0
    %v6432 = vadd.f32 0.0, %v6431
    %v6433 = vpop.f32.mrf.mxu0
    %v6434 = vadd.f32 0.0, %v6433
    %6435 = vmatmul.bf16.gmra.mxu0 %v6410
    %v6436 = vpop.f32.mrf.mxu0
    %v6437 = vadd.f32 0.0, %v6436
    %v6438 = vpop.f32.mrf.mxu0
    %v6439 = vadd.f32 0.0, %v6438
    %6440 = vdwg.mxu0
    %6449 = vrot.lane.b32.xlu0 %v5984, 16
    %v6450 = vpop.permute.xlu0 %6449
    %6451 = vrot.lane.b32.xlu0 %v5986, 16
    %v6452 = vpop.permute.xlu0 %6451
    %6453 = vrot.lane.b32.xlu0 %v5989, 16
    %v6454 = vpop.permute.xlu0 %6453
    %6455 = vrot.lane.b32.xlu0 %v5991, 16
    %v6456 = vpop.permute.xlu0 %6455
    %6457 = vrot.lane.b32.xlu0 %v5994, 16
    %v6458 = vpop.permute.xlu0 %6457
    %6459 = vrot.lane.b32.xlu0 %v5996, 16
    %v6460 = vpop.permute.xlu0 %6459
    %6461 = vrot.lane.b32.xlu0 %v5999, 16
    %v6462 = vpop.permute.xlu0 %6461
    %6463 = vrot.lane.b32.xlu0 %v6001, 16
    %v6464 = vpop.permute.xlu0 %6463
    %6481 = vrot.lane.b32.xlu0 %v6057, 32
    %v6482 = vpop.permute.xlu0 %6481
    %6483 = vrot.lane.b32.xlu0 %v6059, 32
    %v6484 = vpop.permute.xlu0 %6483
    %6485 = vrot.lane.b32.xlu0 %v6062, 32
    %v6486 = vpop.permute.xlu0 %6485
    %6487 = vrot.lane.b32.xlu0 %v6064, 32
    %v6488 = vpop.permute.xlu0 %6487
    %6489 = vrot.lane.b32.xlu0 %v6067, 32
    %v6490 = vpop.permute.xlu0 %6489
    %6491 = vrot.lane.b32.xlu0 %v6069, 32
    %v6492 = vpop.permute.xlu0 %6491
    %6493 = vrot.lane.b32.xlu0 %v6072, 32
    %v6494 = vpop.permute.xlu0 %6493
    %6495 = vrot.lane.b32.xlu0 %v6074, 32
    %v6496 = vpop.permute.xlu0 %6495
    %6513 = vrot.lane.b32.xlu0 %v6130, 48
    %v6514 = vpop.permute.xlu0 %6513
    %6515 = vrot.lane.b32.xlu0 %v6132, 48
    %v6516 = vpop.permute.xlu0 %6515
    %6517 = vrot.lane.b32.xlu0 %v6135, 48
    %v6518 = vpop.permute.xlu0 %6517
    %6519 = vrot.lane.b32.xlu0 %v6137, 48
    %v6520 = vpop.permute.xlu0 %6519
    %6521 = vrot.lane.b32.xlu0 %v6140, 48
    %v6522 = vpop.permute.xlu0 %6521
    %6523 = vrot.lane.b32.xlu0 %v6142, 48
    %v6524 = vpop.permute.xlu0 %6523
    %6525 = vrot.lane.b32.xlu0 %v6145, 48
    %v6526 = vpop.permute.xlu0 %6525
    %6527 = vrot.lane.b32.xlu0 %v6147, 48
    %v6528 = vpop.permute.xlu0 %6527
    %6545 = vrot.lane.b32.xlu0 %v6203, 64
    %v6546 = vpop.permute.xlu0 %6545
    %6547 = vrot.lane.b32.xlu0 %v6205, 64
    %v6548 = vpop.permute.xlu0 %6547
    %6549 = vrot.lane.b32.xlu0 %v6208, 64
    %v6550 = vpop.permute.xlu0 %6549
    %6551 = vrot.lane.b32.xlu0 %v6210, 64
    %v6552 = vpop.permute.xlu0 %6551
    %6553 = vrot.lane.b32.xlu0 %v6213, 64
    %v6554 = vpop.permute.xlu0 %6553
    %6555 = vrot.lane.b32.xlu0 %v6215, 64
    %v6556 = vpop.permute.xlu0 %6555
    %6557 = vrot.lane.b32.xlu0 %v6218, 64
    %v6558 = vpop.permute.xlu0 %6557
    %6559 = vrot.lane.b32.xlu0 %v6220, 64
    %v6560 = vpop.permute.xlu0 %6559
    %6577 = vrot.lane.b32.xlu0 %v6276, 80
    %v6578 = vpop.permute.xlu0 %6577
    %6579 = vrot.lane.b32.xlu0 %v6278, 80
    %v6580 = vpop.permute.xlu0 %6579
    %6581 = vrot.lane.b32.xlu0 %v6281, 80
    %v6582 = vpop.permute.xlu0 %6581
    %6583 = vrot.lane.b32.xlu0 %v6283, 80
    %v6584 = vpop.permute.xlu0 %6583
    %6585 = vrot.lane.b32.xlu0 %v6286, 80
    %v6586 = vpop.permute.xlu0 %6585
    %6587 = vrot.lane.b32.xlu0 %v6288, 80
    %v6588 = vpop.permute.xlu0 %6587
    %6589 = vrot.lane.b32.xlu0 %v6291, 80
    %v6590 = vpop.permute.xlu0 %6589
    %6591 = vrot.lane.b32.xlu0 %v6293, 80
    %v6592 = vpop.permute.xlu0 %6591
    %6609 = vrot.lane.b32.xlu0 %v6349, 96
    %v6610 = vpop.permute.xlu0 %6609
    %6611 = vrot.lane.b32.xlu0 %v6351, 96
    %v6612 = vpop.permute.xlu0 %6611
    %6613 = vrot.lane.b32.xlu0 %v6354, 96
    %v6614 = vpop.permute.xlu0 %6613
    %6615 = vrot.lane.b32.xlu0 %v6356, 96
    %v6616 = vpop.permute.xlu0 %6615
    %6617 = vrot.lane.b32.xlu0 %v6359, 96
    %v6618 = vpop.permute.xlu0 %6617
    %6619 = vrot.lane.b32.xlu0 %v6361, 96
    %v6620 = vpop.permute.xlu0 %6619
    %6621 = vrot.lane.b32.xlu0 %v6364, 96
    %v6622 = vpop.permute.xlu0 %6621
    %6623 = vrot.lane.b32.xlu0 %v6366, 96
    %v6624 = vpop.permute.xlu0 %6623
    %6641 = vrot.lane.b32.xlu0 %v6422, 112
    %v6642 = vpop.permute.xlu0 %6641
    %6643 = vrot.lane.b32.xlu0 %v6424, 112
    %v6644 = vpop.permute.xlu0 %6643
    %6645 = vrot.lane.b32.xlu0 %v6427, 112
    %v6646 = vpop.permute.xlu0 %6645
    %6647 = vrot.lane.b32.xlu0 %v6429, 112
    %v6648 = vpop.permute.xlu0 %6647
    %6649 = vrot.lane.b32.xlu0 %v6432, 112
    %v6650 = vpop.permute.xlu0 %6649
    %6651 = vrot.lane.b32.xlu0 %v6434, 112
    %v6652 = vpop.permute.xlu0 %6651
    %6653 = vrot.lane.b32.xlu0 %v6437, 112
    %v6654 = vpop.permute.xlu0 %6653
    %6655 = vrot.lane.b32.xlu0 %v6439, 112
    %v6656 = vpop.permute.xlu0 %6655
    %v6665 = vsel %vm527, %v5911, %v6450
    %v6666 = vsel %vm527, %v5913, %v6452
    %v6667 = vsel %vm527, %v5916, %v6454
    %v6668 = vsel %vm527, %v5918, %v6456
    %v6669 = vsel %vm527, %v5921, %v6458
    %v6670 = vsel %vm527, %v5923, %v6460
    %v6671 = vsel %vm527, %v5926, %v6462
    %v6672 = vsel %vm527, %v5928, %v6464
    %v6673 = vsel %vm2661, %v6665, %v6482
    %v6674 = vsel %vm2661, %v6666, %v6484
    %v6675 = vsel %vm2661, %v6667, %v6486
    %v6676 = vsel %vm2661, %v6668, %v6488
    %v6677 = vsel %vm2661, %v6669, %v6490
    %v6678 = vsel %vm2661, %v6670, %v6492
    %v6679 = vsel %vm2661, %v6671, %v6494
    %v6680 = vsel %vm2661, %v6672, %v6496
    %v6681 = vsel %vm2670, %v6673, %v6514
    %v6682 = vsel %vm2670, %v6674, %v6516
    %v6683 = vsel %vm2670, %v6675, %v6518
    %v6684 = vsel %vm2670, %v6676, %v6520
    %v6685 = vsel %vm2670, %v6677, %v6522
    %v6686 = vsel %vm2670, %v6678, %v6524
    %v6687 = vsel %vm2670, %v6679, %v6526
    %v6688 = vsel %vm2670, %v6680, %v6528
    %v6689 = vsel %vm1064, %v6681, %v6546
    %v6690 = vsel %vm1064, %v6682, %v6548
    %v6691 = vsel %vm1064, %v6683, %v6550
    %v6692 = vsel %vm1064, %v6684, %v6552
    %v6693 = vsel %vm1064, %v6685, %v6554
    %v6694 = vsel %vm1064, %v6686, %v6556
    %v6695 = vsel %vm1064, %v6687, %v6558
    %v6696 = vsel %vm1064, %v6688, %v6560
    %v6697 = vsel %vm2687, %v6689, %v6578
    %v6698 = vsel %vm2687, %v6690, %v6580
    %v6699 = vsel %vm2687, %v6691, %v6582
    %v6700 = vsel %vm2687, %v6692, %v6584
    %v6701 = vsel %vm2687, %v6693, %v6586
    %v6702 = vsel %vm2687, %v6694, %v6588
    %v6703 = vsel %vm2687, %v6695, %v6590
    %v6704 = vsel %vm2687, %v6696, %v6592
    %v6705 = vsel %vm2696, %v6697, %v6610
    %v6706 = vsel %vm2696, %v6698, %v6612
    %v6707 = vsel %vm2696, %v6699, %v6614
    %v6708 = vsel %vm2696, %v6700, %v6616
    %v6709 = vsel %vm2696, %v6701, %v6618
    %v6710 = vsel %vm2696, %v6702, %v6620
    %v6711 = vsel %vm2696, %v6703, %v6622
    %v6712 = vsel %vm2696, %v6704, %v6624
    %v6713 = vsel %vm2705, %v6705, %v6642
    %v6714 = vsel %vm2705, %v6706, %v6644
    %v6715 = vsel %vm2705, %v6707, %v6646
    %v6716 = vsel %vm2705, %v6708, %v6648
    %v6717 = vsel %vm2705, %v6709, %v6650
    %v6718 = vsel %vm2705, %v6710, %v6652
    %v6719 = vsel %vm2705, %v6711, %v6654
    %v6720 = vsel %vm2705, %v6712, %v6656
    %v6721 = vpack.c.bf16 %v6714, %v6713
    %v6722 = vpack.c.bf16 %v6716, %v6715
    %v6723 = vpack.c.bf16 %v6718, %v6717
    %v6724 = vpack.c.bf16 %v6720, %v6719
    %s6725 = scalar_lea.vmem %s7, 64
    %v6726 = vld [vmem:[%s6725] sm:$0xf]
    %v6727 = vld [vmem:[%s6725 + $0x4] sm:$0xf]
    %v6728 = vld [vmem:[%s6725 + $0x8] sm:$0xf]
    %v6729 = vld [vmem:[%s6725 + $0xc] sm:$0xf]
    %v6730 = vld [vmem:[%s6725 + $0x10] sm:$0xf]
    %v6731 = vld [vmem:[%s6725 + $0x14] sm:$0xf]
    %v6732 = vld [vmem:[%s6725 + $0x18] sm:$0xf]
    %v6733 = vld [vmem:[%s6725 + $0x1c] sm:$0xf]
    %v6734 = vld [vmem:[%s6725 + $0x20] sm:$0xf]
    %v6735 = vld [vmem:[%s6725 + $0x24] sm:$0xf]
    %v6736 = vld [vmem:[%s6725 + $0x28] sm:$0xf]
    %v6737 = vld [vmem:[%s6725 + $0x2c] sm:$0xf]
    %v6738 = vld [vmem:[%s6725 + $0x30] sm:$0xf]
    %v6739 = vld [vmem:[%s6725 + $0x34] sm:$0xf]
    %v6740 = vld [vmem:[%s6725 + $0x38] sm:$0xf]
    %v6741 = vld [vmem:[%s6725 + $0x3c] sm:$0xf]
    %s6742 = scalar_lea.vmem %s8, 1
    %v6743 = vld [vmem:[%s6742] sm:$0x1]
    %v6745 = vperm.slane %v6743, 0
    %v6763 = vunpack.c.l.b16 %v6726
    %v6764 = vunpack.c.l.b16 %v6727
    %v6765 = vunpack.c.l.b16 %v6728
    %v6766 = vunpack.c.l.b16 %v6729
    %v6767 = vunpack.c.l.b16 %v6730
    %v6768 = vunpack.c.l.b16 %v6731
    %v6769 = vunpack.c.l.b16 %v6732
    %v6770 = vunpack.c.l.b16 %v6733
    %v6771 = vunpack.c.l.b16 %v6734
    %v6772 = vunpack.c.l.b16 %v6735
    %v6773 = vunpack.c.l.b16 %v6736
    %v6774 = vunpack.c.l.b16 %v6737
    %v6775 = vunpack.c.l.b16 %v6738
    %v6776 = vunpack.c.l.b16 %v6739
    %v6777 = vunpack.c.l.b16 %v6740
    %v6778 = vunpack.c.l.b16 %v6741
    %v6779 = vpack.c.b16 %v6764, %v6763
    %v6780 = vpack.c.b16 %v6766, %v6765
    %v6781 = vpack.c.b16 %v6768, %v6767
    %v6782 = vpack.c.b16 %v6770, %v6769
    %v6783 = vpack.c.b16 %v6772, %v6771
    %v6784 = vpack.c.b16 %v6774, %v6773
    %v6785 = vpack.c.b16 %v6776, %v6775
    %v6786 = vpack.c.b16 %v6778, %v6777
    %6795 = vmatpush.bf16.msra.mxu0 %v6786
    %6796 = vmatpush.bf16.msra.mxu0 %v6785
    %6797 = vmatpush.bf16.msra.mxu0 %v6784
    %6798 = vmatpush.bf16.msra.mxu0 %v6783
    %6799 = vmatpush.bf16.msra.mxu0 %v6782
    %6800 = vmatpush.bf16.msra.mxu0 %v6781
    %6801 = vmatpush.bf16.msra.mxu0 %v6780
    %6802 = vmatpush.bf16.msra.mxu0 %v6779
    %6803 = vmatmul.bf16.gmra.mxu0 %v6721
    %v6804 = vpop.f32.mrf.mxu0
    %v6805 = vadd.f32 %v6745, %v6804
    %v6806 = vpop.f32.mrf.mxu0
    %v6807 = vadd.f32 %v6745, %v6806
    %6808 = vmatmul.bf16.gmra.mxu0 %v6722
    %v6809 = vpop.f32.mrf.mxu0
    %v6810 = vadd.f32 %v6745, %v6809
    %v6811 = vpop.f32.mrf.mxu0
    %v6812 = vadd.f32 %v6745, %v6811
    %6813 = vmatmul.bf16.gmra.mxu0 %v6723
    %v6814 = vpop.f32.mrf.mxu0
    %v6815 = vadd.f32 %v6745, %v6814
    %v6816 = vpop.f32.mrf.mxu0
    %v6817 = vadd.f32 %v6745, %v6816
    %6818 = vmatmul.bf16.gmra.mxu0 %v6724
    %v6819 = vpop.f32.mrf.mxu0
    %v6820 = vadd.f32 %v6745, %v6819
    %v6821 = vpop.f32.mrf.mxu0
    %v6822 = vadd.f32 %v6745, %v6821
    %6823 = vdwg.mxu0
    %v6824 = vadd.f32 %v6805, %v4200
    %v6825 = vadd.f32 %v6807, %v4201
    %v6826 = vadd.f32 %v6810, %v4202
    %v6827 = vadd.f32 %v6812, %v4203
    %v6828 = vadd.f32 %v6815, %v4204
    %v6829 = vadd.f32 %v6817, %v4205
    %v6830 = vadd.f32 %v6820, %v4206
    %v6831 = vadd.f32 %v6822, %v4207
    %s6832 = scalar_lea.vmem %s9, 1
    %v6833 = vld [vmem:[%s6832] sm:$0x1]
    %s6834 = scalar_lea.vmem %s10, 1
    %v6835 = vld [vmem:[%s6834] sm:$0x1]
    %6836 = vadd.xlane.f32.xlu0 %v6824
    %v6837 = vpop.xlane.xlu0 %6836
    %6838 = vadd.xlane.f32.xlu0 %v6825
    %v6839 = vpop.xlane.xlu0 %6838
    %6840 = vadd.xlane.f32.xlu0 %v6826
    %v6841 = vpop.xlane.xlu0 %6840
    %6842 = vadd.xlane.f32.xlu0 %v6827
    %v6843 = vpop.xlane.xlu0 %6842
    %6844 = vadd.xlane.f32.xlu0 %v6828
    %v6845 = vpop.xlane.xlu0 %6844
    %6846 = vadd.xlane.f32.xlu0 %v6829
    %v6847 = vpop.xlane.xlu0 %6846
    %6848 = vadd.xlane.f32.xlu0 %v6830
    %v6849 = vpop.xlane.xlu0 %6848
    %6850 = vadd.xlane.f32.xlu0 %v6831
    %v6851 = vpop.xlane.xlu0 %6850
    %v6852 = vmul.f32 %v6837, %v2847
    %v6853 = vmul.f32 %v6839, %v2847
    %v6854 = vmul.f32 %v6841, %v2847
    %v6855 = vmul.f32 %v6843, %v2847
    %v6856 = vmul.f32 %v6845, %v2847
    %v6857 = vmul.f32 %v6847, %v2847
    %v6858 = vmul.f32 %v6849, %v2847
    %v6859 = vmul.f32 %v6851, %v2847
    %v6860 = vsub.f32 %v6824, %v6852
    %v6861 = vsub.f32 %v6825, %v6853
    %v6862 = vsub.f32 %v6826, %v6854
    %v6863 = vsub.f32 %v6827, %v6855
    %v6864 = vsub.f32 %v6828, %v6856
    %v6865 = vsub.f32 %v6829, %v6857
    %v6866 = vsub.f32 %v6830, %v6858
    %v6867 = vsub.f32 %v6831, %v6859
    %v6868 = vmul.f32 %v6860, %v6860
    %v6869 = vmul.f32 %v6861, %v6861
    %v6870 = vmul.f32 %v6862, %v6862
    %v6871 = vmul.f32 %v6863, %v6863
    %v6872 = vmul.f32 %v6864, %v6864
    %v6873 = vmul.f32 %v6865, %v6865
    %v6874 = vmul.f32 %v6866, %v6866
    %v6875 = vmul.f32 %v6867, %v6867
    %6876 = vadd.xlane.f32.xlu0 %v6868
    %v6877 = vpop.xlane.xlu0 %6876
    %6878 = vadd.xlane.f32.xlu0 %v6869
    %v6879 = vpop.xlane.xlu0 %6878
    %6880 = vadd.xlane.f32.xlu0 %v6870
    %v6881 = vpop.xlane.xlu0 %6880
    %6882 = vadd.xlane.f32.xlu0 %v6871
    %v6883 = vpop.xlane.xlu0 %6882
    %6884 = vadd.xlane.f32.xlu0 %v6872
    %v6885 = vpop.xlane.xlu0 %6884
    %6886 = vadd.xlane.f32.xlu0 %v6873
    %v6887 = vpop.xlane.xlu0 %6886
    %6888 = vadd.xlane.f32.xlu0 %v6874
    %v6889 = vpop.xlane.xlu0 %6888
    %6890 = vadd.xlane.f32.xlu0 %v6875
    %v6891 = vpop.xlane.xlu0 %6890
    %v6892 = vmul.f32 %v6877, %v2847
    %v6893 = vmul.f32 %v6879, %v2847
    %v6894 = vmul.f32 %v6881, %v2847
    %v6895 = vmul.f32 %v6883, %v2847
    %v6896 = vmul.f32 %v6885, %v2847
    %v6897 = vmul.f32 %v6887, %v2847
    %v6898 = vmul.f32 %v6889, %v2847
    %v6899 = vmul.f32 %v6891, %v2847
    %v6900 = vadd.f32 %v6892, 1e-12
    %v6901 = vadd.f32 %v6893, 1e-12
    %v6902 = vadd.f32 %v6894, 1e-12
    %v6903 = vadd.f32 %v6895, 1e-12
    %v6904 = vadd.f32 %v6896, 1e-12
    %v6905 = vadd.f32 %v6897, 1e-12
    %v6906 = vadd.f32 %v6898, 1e-12
    %v6907 = vadd.f32 %v6899, 1e-12
    %v6908 = vrsqrt.pop %v6900
    %v6909 = vmul.f32 %v6908, %v6900
    %v6910 = vmul.f32 %v6909, %v6908
    %v6911 = vmul.f32 0.5, %v6910
    %v6912 = vsub.f32 1.5, %v6911
    %v6913 = vmul.f32 %v6908, %v6912
    %vm6914 = vweird.f32 %v6900
    %vm6915 = vweird.f32 %v6908
    %vm6916 = vmor %vm6914, %vm6915
    %v6917 = vsel %vm6916, %v6908, %v6913
    %v6918 = vrsqrt.pop %v6901
    %v6919 = vmul.f32 %v6918, %v6901
    %v6920 = vmul.f32 %v6919, %v6918
    %v6921 = vmul.f32 0.5, %v6920
    %v6922 = vsub.f32 1.5, %v6921
    %v6923 = vmul.f32 %v6918, %v6922
    %vm6924 = vweird.f32 %v6901
    %vm6925 = vweird.f32 %v6918
    %vm6926 = vmor %vm6924, %vm6925
    %v6927 = vsel %vm6926, %v6918, %v6923
    %v6928 = vrsqrt.pop %v6902
    %v6929 = vmul.f32 %v6928, %v6902
    %v6930 = vmul.f32 %v6929, %v6928
    %v6931 = vmul.f32 0.5, %v6930
    %v6932 = vsub.f32 1.5, %v6931
    %v6933 = vmul.f32 %v6928, %v6932
    %vm6934 = vweird.f32 %v6902
    %vm6935 = vweird.f32 %v6928
    %vm6936 = vmor %vm6934, %vm6935
    %v6937 = vsel %vm6936, %v6928, %v6933
    %v6938 = vrsqrt.pop %v6903
    %v6939 = vmul.f32 %v6938, %v6903
    %v6940 = vmul.f32 %v6939, %v6938
    %v6941 = vmul.f32 0.5, %v6940
    %v6942 = vsub.f32 1.5, %v6941
    %v6943 = vmul.f32 %v6938, %v6942
    %vm6944 = vweird.f32 %v6903
    %vm6945 = vweird.f32 %v6938
    %vm6946 = vmor %vm6944, %vm6945
    %v6947 = vsel %vm6946, %v6938, %v6943
    %v6948 = vrsqrt.pop %v6904
    %v6949 = vmul.f32 %v6948, %v6904
    %v6950 = vmul.f32 %v6949, %v6948
    %v6951 = vmul.f32 0.5, %v6950
    %v6952 = vsub.f32 1.5, %v6951
    %v6953 = vmul.f32 %v6948, %v6952
    %vm6954 = vweird.f32 %v6904
    %vm6955 = vweird.f32 %v6948
    %vm6956 = vmor %vm6954, %vm6955
    %v6957 = vsel %vm6956, %v6948, %v6953
    %v6958 = vrsqrt.pop %v6905
    %v6959 = vmul.f32 %v6958, %v6905
    %v6960 = vmul.f32 %v6959, %v6958
    %v6961 = vmul.f32 0.5, %v6960
    %v6962 = vsub.f32 1.5, %v6961
    %v6963 = vmul.f32 %v6958, %v6962
    %vm6964 = vweird.f32 %v6905
    %vm6965 = vweird.f32 %v6958
    %vm6966 = vmor %vm6964, %vm6965
    %v6967 = vsel %vm6966, %v6958, %v6963
    %v6968 = vrsqrt.pop %v6906
    %v6969 = vmul.f32 %v6968, %v6906
    %v6970 = vmul.f32 %v6969, %v6968
    %v6971 = vmul.f32 0.5, %v6970
    %v6972 = vsub.f32 1.5, %v6971
    %v6973 = vmul.f32 %v6968, %v6972
    %vm6974 = vweird.f32 %v6906
    %vm6975 = vweird.f32 %v6968
    %vm6976 = vmor %vm6974, %vm6975
    %v6977 = vsel %vm6976, %v6968, %v6973
    %v6978 = vrsqrt.pop %v6907
    %v6979 = vmul.f32 %v6978, %v6907
    %v6980 = vmul.f32 %v6979, %v6978
    %v6981 = vmul.f32 0.5, %v6980
    %v6982 = vsub.f32 1.5, %v6981
    %v6983 = vmul.f32 %v6978, %v6982
    %vm6984 = vweird.f32 %v6907
    %vm6985 = vweird.f32 %v6978
    %vm6986 = vmor %vm6984, %vm6985
    %v6987 = vsel %vm6986, %v6978, %v6983
    %v6988 = vmul.f32 %v6860, %v6917
    %v6989 = vmul.f32 %v6861, %v6927
    %v6990 = vmul.f32 %v6862, %v6937
    %v6991 = vmul.f32 %v6863, %v6947
    %v6992 = vmul.f32 %v6864, %v6957
    %v6993 = vmul.f32 %v6865, %v6967
    %v6994 = vmul.f32 %v6866, %v6977
    %v6995 = vmul.f32 %v6867, %v6987
    %v6997 = vperm.slane %v6833, 0
    %v6999 = vmul.f32 %v6988, %v6997
    %v7000 = vmul.f32 %v6989, %v6997
    %v7001 = vmul.f32 %v6990, %v6997
    %v7002 = vmul.f32 %v6991, %v6997
    %v7003 = vmul.f32 %v6992, %v6997
    %v7004 = vmul.f32 %v6993, %v6997
    %v7005 = vmul.f32 %v6994, %v6997
    %v7006 = vmul.f32 %v6995, %v6997
    %v7008 = vperm.slane %v6835, 0
    %v7010 = vadd.f32 %v6999, %v7008
    %v7011 = vadd.f32 %v7000, %v7008
    %v7012 = vadd.f32 %v7001, %v7008
    %v7013 = vadd.f32 %v7002, %v7008
    %v7014 = vadd.f32 %v7003, %v7008
    %v7015 = vadd.f32 %v7004, %v7008
    %v7016 = vadd.f32 %v7005, %v7008
    %v7017 = vadd.f32 %v7006, %v7008
    %v7018 = vpack.c.bf16 %v7011, %v7010
    %v7019 = vpack.c.bf16 %v7013, %v7012
    %v7020 = vpack.c.bf16 %v7015, %v7014
    %v7021 = vpack.c.bf16 %v7017, %v7016
    %s7022 = scalar_lea.vmem [#allocation5], 256
    %v7023 = vld [vmem:[%s7022] sm:$0xff]
    %v7024 = vld [vmem:[%s7022 + $0x8] sm:$0xff]
    %v7025 = vld [vmem:[%s7022 + $0x10] sm:$0xff]
    %v7026 = vld [vmem:[%s7022 + $0x18] sm:$0xff]
    %v7027 = vld [vmem:[%s7022 + $0x20] sm:$0xff]
    %v7028 = vld [vmem:[%s7022 + $0x28] sm:$0xff]
    %v7029 = vld [vmem:[%s7022 + $0x30] sm:$0xff]
    %v7030 = vld [vmem:[%s7022 + $0x38] sm:$0xff]
    %v7031 = vld [vmem:[%s7022 + $0x40] sm:$0xff]
    %v7032 = vld [vmem:[%s7022 + $0x48] sm:$0xff]
    %v7033 = vld [vmem:[%s7022 + $0x50] sm:$0xff]
    %v7034 = vld [vmem:[%s7022 + $0x58] sm:$0xff]
    %v7035 = vld [vmem:[%s7022 + $0x60] sm:$0xff]
    %v7036 = vld [vmem:[%s7022 + $0x68] sm:$0xff]
    %v7037 = vld [vmem:[%s7022 + $0x70] sm:$0xff]
    %v7038 = vld [vmem:[%s7022 + $0x78] sm:$0xff]
    %v7039 = vld [vmem:[%s7022 + $0x80] sm:$0xff]
    %v7040 = vld [vmem:[%s7022 + $0x88] sm:$0xff]
    %v7041 = vld [vmem:[%s7022 + $0x90] sm:$0xff]
    %v7042 = vld [vmem:[%s7022 + $0x98] sm:$0xff]
    %v7043 = vld [vmem:[%s7022 + $0xa0] sm:$0xff]
    %v7044 = vld [vmem:[%s7022 + $0xa8] sm:$0xff]
    %v7045 = vld [vmem:[%s7022 + $0xb0] sm:$0xff]
    %v7046 = vld [vmem:[%s7022 + $0xb8] sm:$0xff]
    %v7047 = vld [vmem:[%s7022 + $0xc0] sm:$0xff]
    %v7048 = vld [vmem:[%s7022 + $0xc8] sm:$0xff]
    %v7049 = vld [vmem:[%s7022 + $0xd0] sm:$0xff]
    %v7050 = vld [vmem:[%s7022 + $0xd8] sm:$0xff]
    %v7051 = vld [vmem:[%s7022 + $0xe0] sm:$0xff]
    %v7052 = vld [vmem:[%s7022 + $0xe8] sm:$0xff]
    %v7053 = vld [vmem:[%s7022 + $0xf0] sm:$0xff]
    %v7054 = vld [vmem:[%s7022 + $0xf8] sm:$0xff]
    %s7055 = scalar_lea.vmem %s12, 4
    %v7056 = vld [vmem:[%s7055] sm:$0xf]
    %v7058 = vperm.slane %v7056, 0
    %v7059 = vperm.slane %v7056, 1
    %v7060 = vperm.slane %v7056, 2
    %v7061 = vperm.slane %v7056, 3
    %v7098 = vunpack.c.l.b16 %v7023
    %v7099 = vunpack.c.h.b16 %v7023
    %v7100 = vunpack.c.l.b16 %v7024
    %v7101 = vunpack.c.h.b16 %v7024
    %v7102 = vunpack.c.l.b16 %v7025
    %v7103 = vunpack.c.h.b16 %v7025
    %v7104 = vunpack.c.l.b16 %v7026
    %v7105 = vunpack.c.h.b16 %v7026
    %v7106 = vunpack.c.l.b16 %v7027
    %v7107 = vunpack.c.h.b16 %v7027
    %v7108 = vunpack.c.l.b16 %v7028
    %v7109 = vunpack.c.h.b16 %v7028
    %v7110 = vunpack.c.l.b16 %v7029
    %v7111 = vunpack.c.h.b16 %v7029
    %v7112 = vunpack.c.l.b16 %v7030
    %v7113 = vunpack.c.h.b16 %v7030
    %v7114 = vunpack.c.l.b16 %v7031
    %v7115 = vunpack.c.h.b16 %v7031
    %v7116 = vunpack.c.l.b16 %v7032
    %v7117 = vunpack.c.h.b16 %v7032
    %v7118 = vunpack.c.l.b16 %v7033
    %v7119 = vunpack.c.h.b16 %v7033
    %v7120 = vunpack.c.l.b16 %v7034
    %v7121 = vunpack.c.h.b16 %v7034
    %v7122 = vunpack.c.l.b16 %v7035
    %v7123 = vunpack.c.h.b16 %v7035
    %v7124 = vunpack.c.l.b16 %v7036
    %v7125 = vunpack.c.h.b16 %v7036
    %v7126 = vunpack.c.l.b16 %v7037
    %v7127 = vunpack.c.h.b16 %v7037
    %v7128 = vunpack.c.l.b16 %v7038
    %v7129 = vunpack.c.h.b16 %v7038
    %v7130 = vunpack.c.l.b16 %v7039
    %v7131 = vunpack.c.h.b16 %v7039
    %v7132 = vunpack.c.l.b16 %v7040
    %v7133 = vunpack.c.h.b16 %v7040
    %v7134 = vunpack.c.l.b16 %v7041
    %v7135 = vunpack.c.h.b16 %v7041
    %v7136 = vunpack.c.l.b16 %v7042
    %v7137 = vunpack.c.h.b16 %v7042
    %v7138 = vunpack.c.l.b16 %v7043
    %v7139 = vunpack.c.h.b16 %v7043
    %v7140 = vunpack.c.l.b16 %v7044
    %v7141 = vunpack.c.h.b16 %v7044
    %v7142 = vunpack.c.l.b16 %v7045
    %v7143 = vunpack.c.h.b16 %v7045
    %v7144 = vunpack.c.l.b16 %v7046
    %v7145 = vunpack.c.h.b16 %v7046
    %v7146 = vunpack.c.l.b16 %v7047
    %v7147 = vunpack.c.h.b16 %v7047
    %v7148 = vunpack.c.l.b16 %v7048
    %v7149 = vunpack.c.h.b16 %v7048
    %v7150 = vunpack.c.l.b16 %v7049
    %v7151 = vunpack.c.h.b16 %v7049
    %v7152 = vunpack.c.l.b16 %v7050
    %v7153 = vunpack.c.h.b16 %v7050
    %v7154 = vunpack.c.l.b16 %v7051
    %v7155 = vunpack.c.h.b16 %v7051
    %v7156 = vunpack.c.l.b16 %v7052
    %v7157 = vunpack.c.h.b16 %v7052
    %v7158 = vunpack.c.l.b16 %v7053
    %v7159 = vunpack.c.h.b16 %v7053
    %v7160 = vunpack.c.l.b16 %v7054
    %v7161 = vunpack.c.h.b16 %v7054
    %v7162 = vpack.c.b16 %v7102, %v7098
    %v7163 = vpack.c.b16 %v7103, %v7099
    %v7164 = vpack.c.b16 %v7104, %v7100
    %v7165 = vpack.c.b16 %v7105, %v7101
    %v7166 = vpack.c.b16 %v7110, %v7106
    %v7167 = vpack.c.b16 %v7111, %v7107
    %v7168 = vpack.c.b16 %v7112, %v7108
    %v7169 = vpack.c.b16 %v7113, %v7109
    %v7170 = vpack.c.b16 %v7118, %v7114
    %v7171 = vpack.c.b16 %v7119, %v7115
    %v7172 = vpack.c.b16 %v7120, %v7116
    %v7173 = vpack.c.b16 %v7121, %v7117
    %v7174 = vpack.c.b16 %v7126, %v7122
    %v7175 = vpack.c.b16 %v7127, %v7123
    %v7176 = vpack.c.b16 %v7128, %v7124
    %v7177 = vpack.c.b16 %v7129, %v7125
    %v7178 = vpack.c.b16 %v7134, %v7130
    %v7179 = vpack.c.b16 %v7135, %v7131
    %v7180 = vpack.c.b16 %v7136, %v7132
    %v7181 = vpack.c.b16 %v7137, %v7133
    %v7182 = vpack.c.b16 %v7142, %v7138
    %v7183 = vpack.c.b16 %v7143, %v7139
    %v7184 = vpack.c.b16 %v7144, %v7140
    %v7185 = vpack.c.b16 %v7145, %v7141
    %v7186 = vpack.c.b16 %v7150, %v7146
    %v7187 = vpack.c.b16 %v7151, %v7147
    %v7188 = vpack.c.b16 %v7152, %v7148
    %v7189 = vpack.c.b16 %v7153, %v7149
    %v7190 = vpack.c.b16 %v7158, %v7154
    %v7191 = vpack.c.b16 %v7159, %v7155
    %v7192 = vpack.c.b16 %v7160, %v7156
    %v7193 = vpack.c.b16 %v7161, %v7157
    %7226 = vmatpush.bf16.msra.mxu0 %v7190
    %7227 = vmatpush.bf16.msra.mxu0 %v7186
    %7228 = vmatpush.bf16.msra.mxu0 %v7182
    %7229 = vmatpush.bf16.msra.mxu0 %v7178
    %7230 = vmatpush.bf16.msra.mxu0 %v7174
    %7231 = vmatpush.bf16.msra.mxu0 %v7170
    %7232 = vmatpush.bf16.msra.mxu0 %v7166
    %7233 = vmatpush.bf16.msra.mxu0 %v7162
    %7234 = vmatmul.bf16.gmra.mxu0 %v7018
    %v7235 = vpop.f32.mrf.mxu0
    %v7236 = vadd.f32 %v7058, %v7235
    %v7237 = vpop.f32.mrf.mxu0
    %v7238 = vadd.f32 %v7058, %v7237
    %7239 = vmatmul.bf16.gmra.mxu0 %v7019
    %v7240 = vpop.f32.mrf.mxu0
    %v7241 = vadd.f32 %v7058, %v7240
    %v7242 = vpop.f32.mrf.mxu0
    %v7243 = vadd.f32 %v7058, %v7242
    %7244 = vmatmul.bf16.gmra.mxu0 %v7020
    %v7245 = vpop.f32.mrf.mxu0
    %v7246 = vadd.f32 %v7058, %v7245
    %v7247 = vpop.f32.mrf.mxu0
    %v7248 = vadd.f32 %v7058, %v7247
    %7249 = vmatmul.bf16.gmra.mxu0 %v7021
    %v7250 = vpop.f32.mrf.mxu0
    %v7251 = vadd.f32 %v7058, %v7250
    %v7252 = vpop.f32.mrf.mxu0
    %v7253 = vadd.f32 %v7058, %v7252
    %7254 = vdwg.mxu0
    %7255 = vmatpush.bf16.msra.mxu0 %v7191
    %7256 = vmatpush.bf16.msra.mxu0 %v7187
    %7257 = vmatpush.bf16.msra.mxu0 %v7183
    %7258 = vmatpush.bf16.msra.mxu0 %v7179
    %7259 = vmatpush.bf16.msra.mxu0 %v7175
    %7260 = vmatpush.bf16.msra.mxu0 %v7171
    %7261 = vmatpush.bf16.msra.mxu0 %v7167
    %7262 = vmatpush.bf16.msra.mxu0 %v7163
    %7263 = vmatmul.bf16.gmra.mxu0 %v7018
    %v7264 = vpop.f32.mrf.mxu0
    %v7265 = vadd.f32 %v7059, %v7264
    %v7266 = vpop.f32.mrf.mxu0
    %v7267 = vadd.f32 %v7059, %v7266
    %7268 = vmatmul.bf16.gmra.mxu0 %v7019
    %v7269 = vpop.f32.mrf.mxu0
    %v7270 = vadd.f32 %v7059, %v7269
    %v7271 = vpop.f32.mrf.mxu0
    %v7272 = vadd.f32 %v7059, %v7271
    %7273 = vmatmul.bf16.gmra.mxu0 %v7020
    %v7274 = vpop.f32.mrf.mxu0
    %v7275 = vadd.f32 %v7059, %v7274
    %v7276 = vpop.f32.mrf.mxu0
    %v7277 = vadd.f32 %v7059, %v7276
    %7278 = vmatmul.bf16.gmra.mxu0 %v7021
    %v7279 = vpop.f32.mrf.mxu0
    %v7280 = vadd.f32 %v7059, %v7279
    %v7281 = vpop.f32.mrf.mxu0
    %v7282 = vadd.f32 %v7059, %v7281
    %7283 = vdwg.mxu0
    %7284 = vmatpush.bf16.msra.mxu0 %v7192
    %7285 = vmatpush.bf16.msra.mxu0 %v7188
    %7286 = vmatpush.bf16.msra.mxu0 %v7184
    %7287 = vmatpush.bf16.msra.mxu0 %v7180
    %7288 = vmatpush.bf16.msra.mxu0 %v7176
    %7289 = vmatpush.bf16.msra.mxu0 %v7172
    %7290 = vmatpush.bf16.msra.mxu0 %v7168
    %7291 = vmatpush.bf16.msra.mxu0 %v7164
    %7292 = vmatmul.bf16.gmra.mxu0 %v7018
    %v7293 = vpop.f32.mrf.mxu0
    %v7294 = vadd.f32 %v7060, %v7293
    %v7295 = vpop.f32.mrf.mxu0
    %v7296 = vadd.f32 %v7060, %v7295
    %7297 = vmatmul.bf16.gmra.mxu0 %v7019
    %v7298 = vpop.f32.mrf.mxu0
    %v7299 = vadd.f32 %v7060, %v7298
    %v7300 = vpop.f32.mrf.mxu0
    %v7301 = vadd.f32 %v7060, %v7300
    %7302 = vmatmul.bf16.gmra.mxu0 %v7020
    %v7303 = vpop.f32.mrf.mxu0
    %v7304 = vadd.f32 %v7060, %v7303
    %v7305 = vpop.f32.mrf.mxu0
    %v7306 = vadd.f32 %v7060, %v7305
    %7307 = vmatmul.bf16.gmra.mxu0 %v7021
    %v7308 = vpop.f32.mrf.mxu0
    %v7309 = vadd.f32 %v7060, %v7308
    %v7310 = vpop.f32.mrf.mxu0
    %v7311 = vadd.f32 %v7060, %v7310
    %7312 = vdwg.mxu0
    %7313 = vmatpush.bf16.msra.mxu0 %v7193
    %7314 = vmatpush.bf16.msra.mxu0 %v7189
    %7315 = vmatpush.bf16.msra.mxu0 %v7185
    %7316 = vmatpush.bf16.msra.mxu0 %v7181
    %7317 = vmatpush.bf16.msra.mxu0 %v7177
    %7318 = vmatpush.bf16.msra.mxu0 %v7173
    %7319 = vmatpush.bf16.msra.mxu0 %v7169
    %7320 = vmatpush.bf16.msra.mxu0 %v7165
    %7321 = vmatmul.bf16.gmra.mxu0 %v7018
    %v7322 = vpop.f32.mrf.mxu0
    %v7323 = vadd.f32 %v7061, %v7322
    %v7324 = vpop.f32.mrf.mxu0
    %v7325 = vadd.f32 %v7061, %v7324
    %7326 = vmatmul.bf16.gmra.mxu0 %v7019
    %v7327 = vpop.f32.mrf.mxu0
    %v7328 = vadd.f32 %v7061, %v7327
    %v7329 = vpop.f32.mrf.mxu0
    %v7330 = vadd.f32 %v7061, %v7329
    %7331 = vmatmul.bf16.gmra.mxu0 %v7020
    %v7332 = vpop.f32.mrf.mxu0
    %v7333 = vadd.f32 %v7061, %v7332
    %v7334 = vpop.f32.mrf.mxu0
    %v7335 = vadd.f32 %v7061, %v7334
    %7336 = vmatmul.bf16.gmra.mxu0 %v7021
    %v7337 = vpop.f32.mrf.mxu0
    %v7338 = vadd.f32 %v7061, %v7337
    %v7339 = vpop.f32.mrf.mxu0
    %v7340 = vadd.f32 %v7061, %v7339
    %7341 = vdwg.mxu0
    %v7342 = vmul.f32 %v7236, 0.5
    %v7343 = vmul.f32 %v7265, 0.5
    %v7344 = vmul.f32 %v7294, 0.5
    %v7345 = vmul.f32 %v7323, 0.5
    %v7346 = vmul.f32 %v7238, 0.5
    %v7347 = vmul.f32 %v7267, 0.5
    %v7348 = vmul.f32 %v7296, 0.5
    %v7349 = vmul.f32 %v7325, 0.5
    %v7350 = vmul.f32 %v7241, 0.5
    %v7351 = vmul.f32 %v7270, 0.5
    %v7352 = vmul.f32 %v7299, 0.5
    %v7353 = vmul.f32 %v7328, 0.5
    %v7354 = vmul.f32 %v7243, 0.5
    %v7355 = vmul.f32 %v7272, 0.5
    %v7356 = vmul.f32 %v7301, 0.5
    %v7357 = vmul.f32 %v7330, 0.5
    %v7358 = vmul.f32 %v7246, 0.5
    %v7359 = vmul.f32 %v7275, 0.5
    %v7360 = vmul.f32 %v7304, 0.5
    %v7361 = vmul.f32 %v7333, 0.5
    %v7362 = vmul.f32 %v7248, 0.5
    %v7363 = vmul.f32 %v7277, 0.5
    %v7364 = vmul.f32 %v7306, 0.5
    %v7365 = vmul.f32 %v7335, 0.5
    %v7366 = vmul.f32 %v7251, 0.5
    %v7367 = vmul.f32 %v7280, 0.5
    %v7368 = vmul.f32 %v7309, 0.5
    %v7369 = vmul.f32 %v7338, 0.5
    %v7370 = vmul.f32 %v7253, 0.5
    %v7371 = vmul.f32 %v7282, 0.5
    %v7372 = vmul.f32 %v7311, 0.5
    %v7373 = vmul.f32 %v7340, 0.5
    %v7374 = vmul.f32 %v7236, 0.044715
    %v7375 = vmul.f32 %v7265, 0.044715
    %v7376 = vmul.f32 %v7294, 0.044715
    %v7377 = vmul.f32 %v7323, 0.044715
    %v7378 = vmul.f32 %v7238, 0.044715
    %v7379 = vmul.f32 %v7267, 0.044715
    %v7380 = vmul.f32 %v7296, 0.044715
    %v7381 = vmul.f32 %v7325, 0.044715
    %v7382 = vmul.f32 %v7241, 0.044715
    %v7383 = vmul.f32 %v7270, 0.044715
    %v7384 = vmul.f32 %v7299, 0.044715
    %v7385 = vmul.f32 %v7328, 0.044715
    %v7386 = vmul.f32 %v7243, 0.044715
    %v7387 = vmul.f32 %v7272, 0.044715
    %v7388 = vmul.f32 %v7301, 0.044715
    %v7389 = vmul.f32 %v7330, 0.044715
    %v7390 = vmul.f32 %v7246, 0.044715
    %v7391 = vmul.f32 %v7275, 0.044715
    %v7392 = vmul.f32 %v7304, 0.044715
    %v7393 = vmul.f32 %v7333, 0.044715
    %v7394 = vmul.f32 %v7248, 0.044715
    %v7395 = vmul.f32 %v7277, 0.044715
    %v7396 = vmul.f32 %v7306, 0.044715
    %v7397 = vmul.f32 %v7335, 0.044715
    %v7398 = vmul.f32 %v7251, 0.044715
    %v7399 = vmul.f32 %v7280, 0.044715
    %v7400 = vmul.f32 %v7309, 0.044715
    %v7401 = vmul.f32 %v7338, 0.044715
    %v7402 = vmul.f32 %v7253, 0.044715
    %v7403 = vmul.f32 %v7282, 0.044715
    %v7404 = vmul.f32 %v7311, 0.044715
    %v7405 = vmul.f32 %v7340, 0.044715
    %v7406 = vmul.f32 %v7374, %v7236
    %v7407 = vmul.f32 %v7375, %v7265
    %v7408 = vmul.f32 %v7376, %v7294
    %v7409 = vmul.f32 %v7377, %v7323
    %v7410 = vmul.f32 %v7378, %v7238
    %v7411 = vmul.f32 %v7379, %v7267
    %v7412 = vmul.f32 %v7380, %v7296
    %v7413 = vmul.f32 %v7381, %v7325
    %v7414 = vmul.f32 %v7382, %v7241
    %v7415 = vmul.f32 %v7383, %v7270
    %v7416 = vmul.f32 %v7384, %v7299
    %v7417 = vmul.f32 %v7385, %v7328
    %v7418 = vmul.f32 %v7386, %v7243
    %v7419 = vmul.f32 %v7387, %v7272
    %v7420 = vmul.f32 %v7388, %v7301
    %v7421 = vmul.f32 %v7389, %v7330
    %v7422 = vmul.f32 %v7390, %v7246
    %v7423 = vmul.f32 %v7391, %v7275
    %v7424 = vmul.f32 %v7392, %v7304
    %v7425 = vmul.f32 %v7393, %v7333
    %v7426 = vmul.f32 %v7394, %v7248
    %v7427 = vmul.f32 %v7395, %v7277
    %v7428 = vmul.f32 %v7396, %v7306
    %v7429 = vmul.f32 %v7397, %v7335
    %v7430 = vmul.f32 %v7398, %v7251
    %v7431 = vmul.f32 %v7399, %v7280
    %v7432 = vmul.f32 %v7400, %v7309
    %v7433 = vmul.f32 %v7401, %v7338
    %v7434 = vmul.f32 %v7402, %v7253
    %v7435 = vmul.f32 %v7403, %v7282
    %v7436 = vmul.f32 %v7404, %v7311
    %v7437 = vmul.f32 %v7405, %v7340
    %v7438 = vmul.f32 %v7406, %v7236
    %v7439 = vmul.f32 %v7407, %v7265
    %v7440 = vmul.f32 %v7408, %v7294
    %v7441 = vmul.f32 %v7409, %v7323
    %v7442 = vmul.f32 %v7410, %v7238
    %v7443 = vmul.f32 %v7411, %v7267
    %v7444 = vmul.f32 %v7412, %v7296
    %v7445 = vmul.f32 %v7413, %v7325
    %v7446 = vmul.f32 %v7414, %v7241
    %v7447 = vmul.f32 %v7415, %v7270
    %v7448 = vmul.f32 %v7416, %v7299
    %v7449 = vmul.f32 %v7417, %v7328
    %v7450 = vmul.f32 %v7418, %v7243
    %v7451 = vmul.f32 %v7419, %v7272
    %v7452 = vmul.f32 %v7420, %v7301
    %v7453 = vmul.f32 %v7421, %v7330
    %v7454 = vmul.f32 %v7422, %v7246
    %v7455 = vmul.f32 %v7423, %v7275
    %v7456 = vmul.f32 %v7424, %v7304
    %v7457 = vmul.f32 %v7425, %v7333
    %v7458 = vmul.f32 %v7426, %v7248
    %v7459 = vmul.f32 %v7427, %v7277
    %v7460 = vmul.f32 %v7428, %v7306
    %v7461 = vmul.f32 %v7429, %v7335
    %v7462 = vmul.f32 %v7430, %v7251
    %v7463 = vmul.f32 %v7431, %v7280
    %v7464 = vmul.f32 %v7432, %v7309
    %v7465 = vmul.f32 %v7433, %v7338
    %v7466 = vmul.f32 %v7434, %v7253
    %v7467 = vmul.f32 %v7435, %v7282
    %v7468 = vmul.f32 %v7436, %v7311
    %v7469 = vmul.f32 %v7437, %v7340
    %v7470 = vadd.f32 %v7236, %v7438
    %v7471 = vadd.f32 %v7265, %v7439
    %v7472 = vadd.f32 %v7294, %v7440
    %v7473 = vadd.f32 %v7323, %v7441
    %v7474 = vadd.f32 %v7238, %v7442
    %v7475 = vadd.f32 %v7267, %v7443
    %v7476 = vadd.f32 %v7296, %v7444
    %v7477 = vadd.f32 %v7325, %v7445
    %v7478 = vadd.f32 %v7241, %v7446
    %v7479 = vadd.f32 %v7270, %v7447
    %v7480 = vadd.f32 %v7299, %v7448
    %v7481 = vadd.f32 %v7328, %v7449
    %v7482 = vadd.f32 %v7243, %v7450
    %v7483 = vadd.f32 %v7272, %v7451
    %v7484 = vadd.f32 %v7301, %v7452
    %v7485 = vadd.f32 %v7330, %v7453
    %v7486 = vadd.f32 %v7246, %v7454
    %v7487 = vadd.f32 %v7275, %v7455
    %v7488 = vadd.f32 %v7304, %v7456
    %v7489 = vadd.f32 %v7333, %v7457
    %v7490 = vadd.f32 %v7248, %v7458
    %v7491 = vadd.f32 %v7277, %v7459
    %v7492 = vadd.f32 %v7306, %v7460
    %v7493 = vadd.f32 %v7335, %v7461
    %v7494 = vadd.f32 %v7251, %v7462
    %v7495 = vadd.f32 %v7280, %v7463
    %v7496 = vadd.f32 %v7309, %v7464
    %v7497 = vadd.f32 %v7338, %v7465
    %v7498 = vadd.f32 %v7253, %v7466
    %v7499 = vadd.f32 %v7282, %v7467
    %v7500 = vadd.f32 %v7311, %v7468
    %v7501 = vadd.f32 %v7340, %v7469
    %v7502 = vmul.f32 %v7470, 0.7978846
    %v7503 = vmul.f32 %v7471, 0.7978846
    %v7504 = vmul.f32 %v7472, 0.7978846
    %v7505 = vmul.f32 %v7473, 0.7978846
    %v7506 = vmul.f32 %v7474, 0.7978846
    %v7507 = vmul.f32 %v7475, 0.7978846
    %v7508 = vmul.f32 %v7476, 0.7978846
    %v7509 = vmul.f32 %v7477, 0.7978846
    %v7510 = vmul.f32 %v7478, 0.7978846
    %v7511 = vmul.f32 %v7479, 0.7978846
    %v7512 = vmul.f32 %v7480, 0.7978846
    %v7513 = vmul.f32 %v7481, 0.7978846
    %v7514 = vmul.f32 %v7482, 0.7978846
    %v7515 = vmul.f32 %v7483, 0.7978846
    %v7516 = vmul.f32 %v7484, 0.7978846
    %v7517 = vmul.f32 %v7485, 0.7978846
    %v7518 = vmul.f32 %v7486, 0.7978846
    %v7519 = vmul.f32 %v7487, 0.7978846
    %v7520 = vmul.f32 %v7488, 0.7978846
    %v7521 = vmul.f32 %v7489, 0.7978846
    %v7522 = vmul.f32 %v7490, 0.7978846
    %v7523 = vmul.f32 %v7491, 0.7978846
    %v7524 = vmul.f32 %v7492, 0.7978846
    %v7525 = vmul.f32 %v7493, 0.7978846
    %v7526 = vmul.f32 %v7494, 0.7978846
    %v7527 = vmul.f32 %v7495, 0.7978846
    %v7528 = vmul.f32 %v7496, 0.7978846
    %v7529 = vmul.f32 %v7497, 0.7978846
    %v7530 = vmul.f32 %v7498, 0.7978846
    %v7531 = vmul.f32 %v7499, 0.7978846
    %v7532 = vmul.f32 %v7500, 0.7978846
    %v7533 = vmul.f32 %v7501, 0.7978846
    %v7534 = vtanh.pop %v7502
    %v7535 = vtanh.pop %v7503
    %v7536 = vtanh.pop %v7504
    %v7537 = vtanh.pop %v7505
    %v7538 = vtanh.pop %v7506
    %v7539 = vtanh.pop %v7507
    %v7540 = vtanh.pop %v7508
    %v7541 = vtanh.pop %v7509
    %v7542 = vtanh.pop %v7510
    %v7543 = vtanh.pop %v7511
    %v7544 = vtanh.pop %v7512
    %v7545 = vtanh.pop %v7513
    %v7546 = vtanh.pop %v7514
    %v7547 = vtanh.pop %v7515
    %v7548 = vtanh.pop %v7516
    %v7549 = vtanh.pop %v7517
    %v7550 = vtanh.pop %v7518
    %v7551 = vtanh.pop %v7519
    %v7552 = vtanh.pop %v7520
    %v7553 = vtanh.pop %v7521
    %v7554 = vtanh.pop %v7522
    %v7555 = vtanh.pop %v7523
    %v7556 = vtanh.pop %v7524
    %v7557 = vtanh.pop %v7525
    %v7558 = vtanh.pop %v7526
    %v7559 = vtanh.pop %v7527
    %v7560 = vtanh.pop %v7528
    %v7561 = vtanh.pop %v7529
    %v7562 = vtanh.pop %v7530
    %v7563 = vtanh.pop %v7531
    %v7564 = vtanh.pop %v7532
    %v7565 = vtanh.pop %v7533
    %v7566 = vadd.f32 %v7534, 1.0
    %v7567 = vadd.f32 %v7535, 1.0
    %v7568 = vadd.f32 %v7536, 1.0
    %v7569 = vadd.f32 %v7537, 1.0
    %v7570 = vadd.f32 %v7538, 1.0
    %v7571 = vadd.f32 %v7539, 1.0
    %v7572 = vadd.f32 %v7540, 1.0
    %v7573 = vadd.f32 %v7541, 1.0
    %v7574 = vadd.f32 %v7542, 1.0
    %v7575 = vadd.f32 %v7543, 1.0
    %v7576 = vadd.f32 %v7544, 1.0
    %v7577 = vadd.f32 %v7545, 1.0
    %v7578 = vadd.f32 %v7546, 1.0
    %v7579 = vadd.f32 %v7547, 1.0
    %v7580 = vadd.f32 %v7548, 1.0
    %v7581 = vadd.f32 %v7549, 1.0
    %v7582 = vadd.f32 %v7550, 1.0
    %v7583 = vadd.f32 %v7551, 1.0
    %v7584 = vadd.f32 %v7552, 1.0
    %v7585 = vadd.f32 %v7553, 1.0
    %v7586 = vadd.f32 %v7554, 1.0
    %v7587 = vadd.f32 %v7555, 1.0
    %v7588 = vadd.f32 %v7556, 1.0
    %v7589 = vadd.f32 %v7557, 1.0
    %v7590 = vadd.f32 %v7558, 1.0
    %v7591 = vadd.f32 %v7559, 1.0
    %v7592 = vadd.f32 %v7560, 1.0
    %v7593 = vadd.f32 %v7561, 1.0
    %v7594 = vadd.f32 %v7562, 1.0
    %v7595 = vadd.f32 %v7563, 1.0
    %v7596 = vadd.f32 %v7564, 1.0
    %v7597 = vadd.f32 %v7565, 1.0
    %v7598 = vmul.f32 %v7342, %v7566
    %v7599 = vmul.f32 %v7343, %v7567
    %v7600 = vmul.f32 %v7344, %v7568
    %v7601 = vmul.f32 %v7345, %v7569
    %v7602 = vmul.f32 %v7346, %v7570
    %v7603 = vmul.f32 %v7347, %v7571
    %v7604 = vmul.f32 %v7348, %v7572
    %v7605 = vmul.f32 %v7349, %v7573
    %v7606 = vmul.f32 %v7350, %v7574
    %v7607 = vmul.f32 %v7351, %v7575
    %v7608 = vmul.f32 %v7352, %v7576
    %v7609 = vmul.f32 %v7353, %v7577
    %v7610 = vmul.f32 %v7354, %v7578
    %v7611 = vmul.f32 %v7355, %v7579
    %v7612 = vmul.f32 %v7356, %v7580
    %v7613 = vmul.f32 %v7357, %v7581
    %v7614 = vmul.f32 %v7358, %v7582
    %v7615 = vmul.f32 %v7359, %v7583
    %v7616 = vmul.f32 %v7360, %v7584
    %v7617 = vmul.f32 %v7361, %v7585
    %v7618 = vmul.f32 %v7362, %v7586
    %v7619 = vmul.f32 %v7363, %v7587
    %v7620 = vmul.f32 %v7364, %v7588
    %v7621 = vmul.f32 %v7365, %v7589
    %v7622 = vmul.f32 %v7366, %v7590
    %v7623 = vmul.f32 %v7367, %v7591
    %v7624 = vmul.f32 %v7368, %v7592
    %v7625 = vmul.f32 %v7369, %v7593
    %v7626 = vmul.f32 %v7370, %v7594
    %v7627 = vmul.f32 %v7371, %v7595
    %v7628 = vmul.f32 %v7372, %v7596
    %v7629 = vmul.f32 %v7373, %v7597
    %v7630 = vpack.c.bf16 %v7602, %v7598
    %v7631 = vpack.c.bf16 %v7603, %v7599
    %v7632 = vpack.c.bf16 %v7604, %v7600
    %v7633 = vpack.c.bf16 %v7605, %v7601
    %v7634 = vpack.c.bf16 %v7610, %v7606
    %v7635 = vpack.c.bf16 %v7611, %v7607
    %v7636 = vpack.c.bf16 %v7612, %v7608
    %v7637 = vpack.c.bf16 %v7613, %v7609
    %v7638 = vpack.c.bf16 %v7618, %v7614
    %v7639 = vpack.c.bf16 %v7619, %v7615
    %v7640 = vpack.c.bf16 %v7620, %v7616
    %v7641 = vpack.c.bf16 %v7621, %v7617
    %v7642 = vpack.c.bf16 %v7626, %v7622
    %v7643 = vpack.c.bf16 %v7627, %v7623
    %v7644 = vpack.c.bf16 %v7628, %v7624
    %v7645 = vpack.c.bf16 %v7629, %v7625
    %s7646 = scalar_lea.vmem [#allocation7], 256
    %v7647 = vld [vmem:[%s7646] sm:$0xf]
    %v7648 = vld [vmem:[%s7646 + $0x4] sm:$0xf]
    %v7649 = vld [vmem:[%s7646 + $0x8] sm:$0xf]
    %v7650 = vld [vmem:[%s7646 + $0xc] sm:$0xf]
    %v7651 = vld [vmem:[%s7646 + $0x10] sm:$0xf]
    %v7652 = vld [vmem:[%s7646 + $0x14] sm:$0xf]
    %v7653 = vld [vmem:[%s7646 + $0x18] sm:$0xf]
    %v7654 = vld [vmem:[%s7646 + $0x1c] sm:$0xf]
    %v7655 = vld [vmem:[%s7646 + $0x20] sm:$0xf]
    %v7656 = vld [vmem:[%s7646 + $0x24] sm:$0xf]
    %v7657 = vld [vmem:[%s7646 + $0x28] sm:$0xf]
    %v7658 = vld [vmem:[%s7646 + $0x2c] sm:$0xf]
    %v7659 = vld [vmem:[%s7646 + $0x30] sm:$0xf]
    %v7660 = vld [vmem:[%s7646 + $0x34] sm:$0xf]
    %v7661 = vld [vmem:[%s7646 + $0x38] sm:$0xf]
    %v7662 = vld [vmem:[%s7646 + $0x3c] sm:$0xf]
    %v7663 = vld [vmem:[%s7646 + $0x40] sm:$0xf]
    %v7664 = vld [vmem:[%s7646 + $0x44] sm:$0xf]
    %v7665 = vld [vmem:[%s7646 + $0x48] sm:$0xf]
    %v7666 = vld [vmem:[%s7646 + $0x4c] sm:$0xf]
    %v7667 = vld [vmem:[%s7646 + $0x50] sm:$0xf]
    %v7668 = vld [vmem:[%s7646 + $0x54] sm:$0xf]
    %v7669 = vld [vmem:[%s7646 + $0x58] sm:$0xf]
    %v7670 = vld [vmem:[%s7646 + $0x5c] sm:$0xf]
    %v7671 = vld [vmem:[%s7646 + $0x60] sm:$0xf]
    %v7672 = vld [vmem:[%s7646 + $0x64] sm:$0xf]
    %v7673 = vld [vmem:[%s7646 + $0x68] sm:$0xf]
    %v7674 = vld [vmem:[%s7646 + $0x6c] sm:$0xf]
    %v7675 = vld [vmem:[%s7646 + $0x70] sm:$0xf]
    %v7676 = vld [vmem:[%s7646 + $0x74] sm:$0xf]
    %v7677 = vld [vmem:[%s7646 + $0x78] sm:$0xf]
    %v7678 = vld [vmem:[%s7646 + $0x7c] sm:$0xf]
    %v7679 = vld [vmem:[%s7646 + $0x80] sm:$0xf]
    %v7680 = vld [vmem:[%s7646 + $0x84] sm:$0xf]
    %v7681 = vld [vmem:[%s7646 + $0x88] sm:$0xf]
    %v7682 = vld [vmem:[%s7646 + $0x8c] sm:$0xf]
    %v7683 = vld [vmem:[%s7646 + $0x90] sm:$0xf]
    %v7684 = vld [vmem:[%s7646 + $0x94] sm:$0xf]
    %v7685 = vld [vmem:[%s7646 + $0x98] sm:$0xf]
    %v7686 = vld [vmem:[%s7646 + $0x9c] sm:$0xf]
    %v7687 = vld [vmem:[%s7646 + $0xa0] sm:$0xf]
    %v7688 = vld [vmem:[%s7646 + $0xa4] sm:$0xf]
    %v7689 = vld [vmem:[%s7646 + $0xa8] sm:$0xf]
    %v7690 = vld [vmem:[%s7646 + $0xac] sm:$0xf]
    %v7691 = vld [vmem:[%s7646 + $0xb0] sm:$0xf]
    %v7692 = vld [vmem:[%s7646 + $0xb4] sm:$0xf]
    %v7693 = vld [vmem:[%s7646 + $0xb8] sm:$0xf]
    %v7694 = vld [vmem:[%s7646 + $0xbc] sm:$0xf]
    %v7695 = vld [vmem:[%s7646 + $0xc0] sm:$0xf]
    %v7696 = vld [vmem:[%s7646 + $0xc4] sm:$0xf]
    %v7697 = vld [vmem:[%s7646 + $0xc8] sm:$0xf]
    %v7698 = vld [vmem:[%s7646 + $0xcc] sm:$0xf]
    %v7699 = vld [vmem:[%s7646 + $0xd0] sm:$0xf]
    %v7700 = vld [vmem:[%s7646 + $0xd4] sm:$0xf]
    %v7701 = vld [vmem:[%s7646 + $0xd8] sm:$0xf]
    %v7702 = vld [vmem:[%s7646 + $0xdc] sm:$0xf]
    %v7703 = vld [vmem:[%s7646 + $0xe0] sm:$0xf]
    %v7704 = vld [vmem:[%s7646 + $0xe4] sm:$0xf]
    %v7705 = vld [vmem:[%s7646 + $0xe8] sm:$0xf]
    %v7706 = vld [vmem:[%s7646 + $0xec] sm:$0xf]
    %v7707 = vld [vmem:[%s7646 + $0xf0] sm:$0xf]
    %v7708 = vld [vmem:[%s7646 + $0xf4] sm:$0xf]
    %v7709 = vld [vmem:[%s7646 + $0xf8] sm:$0xf]
    %v7710 = vld [vmem:[%s7646 + $0xfc] sm:$0xf]
    %s7711 = scalar_lea.vmem %s14, 1
    %v7712 = vld [vmem:[%s7711] sm:$0x1]
    %v7714 = vperm.slane %v7712, 0
    %v7780 = vunpack.c.l.b16 %v7647
    %v7781 = vunpack.c.l.b16 %v7648
    %v7782 = vunpack.c.l.b16 %v7649
    %v7783 = vunpack.c.l.b16 %v7650
    %v7784 = vunpack.c.l.b16 %v7651
    %v7785 = vunpack.c.l.b16 %v7652
    %v7786 = vunpack.c.l.b16 %v7653
    %v7787 = vunpack.c.l.b16 %v7654
    %v7788 = vunpack.c.l.b16 %v7655
    %v7789 = vunpack.c.l.b16 %v7656
    %v7790 = vunpack.c.l.b16 %v7657
    %v7791 = vunpack.c.l.b16 %v7658
    %v7792 = vunpack.c.l.b16 %v7659
    %v7793 = vunpack.c.l.b16 %v7660
    %v7794 = vunpack.c.l.b16 %v7661
    %v7795 = vunpack.c.l.b16 %v7662
    %v7796 = vunpack.c.l.b16 %v7663
    %v7797 = vunpack.c.l.b16 %v7664
    %v7798 = vunpack.c.l.b16 %v7665
    %v7799 = vunpack.c.l.b16 %v7666
    %v7800 = vunpack.c.l.b16 %v7667
    %v7801 = vunpack.c.l.b16 %v7668
    %v7802 = vunpack.c.l.b16 %v7669
    %v7803 = vunpack.c.l.b16 %v7670
    %v7804 = vunpack.c.l.b16 %v7671
    %v7805 = vunpack.c.l.b16 %v7672
    %v7806 = vunpack.c.l.b16 %v7673
    %v7807 = vunpack.c.l.b16 %v7674
    %v7808 = vunpack.c.l.b16 %v7675
    %v7809 = vunpack.c.l.b16 %v7676
    %v7810 = vunpack.c.l.b16 %v7677
    %v7811 = vunpack.c.l.b16 %v7678
    %v7812 = vunpack.c.l.b16 %v7679
    %v7813 = vunpack.c.l.b16 %v7680
    %v7814 = vunpack.c.l.b16 %v7681
    %v7815 = vunpack.c.l.b16 %v7682
    %v7816 = vunpack.c.l.b16 %v7683
    %v7817 = vunpack.c.l.b16 %v7684
    %v7818 = vunpack.c.l.b16 %v7685
    %v7819 = vunpack.c.l.b16 %v7686
    %v7820 = vunpack.c.l.b16 %v7687
    %v7821 = vunpack.c.l.b16 %v7688
    %v7822 = vunpack.c.l.b16 %v7689
    %v7823 = vunpack.c.l.b16 %v7690
    %v7824 = vunpack.c.l.b16 %v7691
    %v7825 = vunpack.c.l.b16 %v7692
    %v7826 = vunpack.c.l.b16 %v7693
    %v7827 = vunpack.c.l.b16 %v7694
    %v7828 = vunpack.c.l.b16 %v7695
    %v7829 = vunpack.c.l.b16 %v7696
    %v7830 = vunpack.c.l.b16 %v7697
    %v7831 = vunpack.c.l.b16 %v7698
    %v7832 = vunpack.c.l.b16 %v7699
    %v7833 = vunpack.c.l.b16 %v7700
    %v7834 = vunpack.c.l.b16 %v7701
    %v7835 = vunpack.c.l.b16 %v7702
    %v7836 = vunpack.c.l.b16 %v7703
    %v7837 = vunpack.c.l.b16 %v7704
    %v7838 = vunpack.c.l.b16 %v7705
    %v7839 = vunpack.c.l.b16 %v7706
    %v7840 = vunpack.c.l.b16 %v7707
    %v7841 = vunpack.c.l.b16 %v7708
    %v7842 = vunpack.c.l.b16 %v7709
    %v7843 = vunpack.c.l.b16 %v7710
    %v7844 = vpack.c.b16 %v7781, %v7780
    %v7845 = vpack.c.b16 %v7783, %v7782
    %v7846 = vpack.c.b16 %v7785, %v7784
    %v7847 = vpack.c.b16 %v7787, %v7786
    %v7848 = vpack.c.b16 %v7789, %v7788
    %v7849 = vpack.c.b16 %v7791, %v7790
    %v7850 = vpack.c.b16 %v7793, %v7792
    %v7851 = vpack.c.b16 %v7795, %v7794
    %v7852 = vpack.c.b16 %v7797, %v7796
    %v7853 = vpack.c.b16 %v7799, %v7798
    %v7854 = vpack.c.b16 %v7801, %v7800
    %v7855 = vpack.c.b16 %v7803, %v7802
    %v7856 = vpack.c.b16 %v7805, %v7804
    %v7857 = vpack.c.b16 %v7807, %v7806
    %v7858 = vpack.c.b16 %v7809, %v7808
    %v7859 = vpack.c.b16 %v7811, %v7810
    %v7860 = vpack.c.b16 %v7813, %v7812
    %v7861 = vpack.c.b16 %v7815, %v7814
    %v7862 = vpack.c.b16 %v7817, %v7816
    %v7863 = vpack.c.b16 %v7819, %v7818
    %v7864 = vpack.c.b16 %v7821, %v7820
    %v7865 = vpack.c.b16 %v7823, %v7822
    %v7866 = vpack.c.b16 %v7825, %v7824
    %v7867 = vpack.c.b16 %v7827, %v7826
    %v7868 = vpack.c.b16 %v7829, %v7828
    %v7869 = vpack.c.b16 %v7831, %v7830
    %v7870 = vpack.c.b16 %v7833, %v7832
    %v7871 = vpack.c.b16 %v7835, %v7834
    %v7872 = vpack.c.b16 %v7837, %v7836
    %v7873 = vpack.c.b16 %v7839, %v7838
    %v7874 = vpack.c.b16 %v7841, %v7840
    %v7875 = vpack.c.b16 %v7843, %v7842
    %7908 = vmatpush.bf16.msra.mxu0 %v7851
    %7909 = vmatpush.bf16.msra.mxu0 %v7850
    %7910 = vmatpush.bf16.msra.mxu0 %v7849
    %7911 = vmatpush.bf16.msra.mxu0 %v7848
    %7912 = vmatpush.bf16.msra.mxu0 %v7847
    %7913 = vmatpush.bf16.msra.mxu0 %v7846
    %7914 = vmatpush.bf16.msra.mxu0 %v7845
    %7915 = vmatpush.bf16.msra.mxu0 %v7844
    %7916 = vmatmul.bf16.gmra.mxu0 %v7630
    %v7917 = vpop.f32.mrf.mxu0
    %v7918 = vadd.f32 %v7714, %v7917
    %v7919 = vpop.f32.mrf.mxu0
    %v7920 = vadd.f32 %v7714, %v7919
    %7921 = vmatmul.bf16.gmra.mxu0 %v7634
    %v7922 = vpop.f32.mrf.mxu0
    %v7923 = vadd.f32 %v7714, %v7922
    %v7924 = vpop.f32.mrf.mxu0
    %v7925 = vadd.f32 %v7714, %v7924
    %7926 = vmatmul.bf16.gmra.mxu0 %v7638
    %v7927 = vpop.f32.mrf.mxu0
    %v7928 = vadd.f32 %v7714, %v7927
    %v7929 = vpop.f32.mrf.mxu0
    %v7930 = vadd.f32 %v7714, %v7929
    %7931 = vmatmul.bf16.gmra.mxu0 %v7642
    %v7932 = vpop.f32.mrf.mxu0
    %v7933 = vadd.f32 %v7714, %v7932
    %v7934 = vpop.f32.mrf.mxu0
    %v7935 = vadd.f32 %v7714, %v7934
    %7936 = vdwg.mxu0
    %7937 = vmatpush.bf16.msra.mxu0 %v7859
    %7938 = vmatpush.bf16.msra.mxu0 %v7858
    %7939 = vmatpush.bf16.msra.mxu0 %v7857
    %7940 = vmatpush.bf16.msra.mxu0 %v7856
    %7941 = vmatpush.bf16.msra.mxu0 %v7855
    %7942 = vmatpush.bf16.msra.mxu0 %v7854
    %7943 = vmatpush.bf16.msra.mxu0 %v7853
    %7944 = vmatpush.bf16.msra.mxu0 %v7852
    %7945 = vmatmul.bf16.gmra.mxu0 %v7631
    %v7946 = vpop.f32.mrf.mxu0
    %v7947 = vadd.f32 %v7918, %v7946
    %v7948 = vpop.f32.mrf.mxu0
    %v7949 = vadd.f32 %v7920, %v7948
    %7950 = vmatmul.bf16.gmra.mxu0 %v7635
    %v7951 = vpop.f32.mrf.mxu0
    %v7952 = vadd.f32 %v7923, %v7951
    %v7953 = vpop.f32.mrf.mxu0
    %v7954 = vadd.f32 %v7925, %v7953
    %7955 = vmatmul.bf16.gmra.mxu0 %v7639
    %v7956 = vpop.f32.mrf.mxu0
    %v7957 = vadd.f32 %v7928, %v7956
    %v7958 = vpop.f32.mrf.mxu0
    %v7959 = vadd.f32 %v7930, %v7958
    %7960 = vmatmul.bf16.gmra.mxu0 %v7643
    %v7961 = vpop.f32.mrf.mxu0
    %v7962 = vadd.f32 %v7933, %v7961
    %v7963 = vpop.f32.mrf.mxu0
    %v7964 = vadd.f32 %v7935, %v7963
    %7965 = vdwg.mxu0
    %7966 = vmatpush.bf16.msra.mxu0 %v7867
    %7967 = vmatpush.bf16.msra.mxu0 %v7866
    %7968 = vmatpush.bf16.msra.mxu0 %v7865
    %7969 = vmatpush.bf16.msra.mxu0 %v7864
    %7970 = vmatpush.bf16.msra.mxu0 %v7863
    %7971 = vmatpush.bf16.msra.mxu0 %v7862
    %7972 = vmatpush.bf16.msra.mxu0 %v7861
    %7973 = vmatpush.bf16.msra.mxu0 %v7860
    %7974 = vmatmul.bf16.gmra.mxu0 %v7632
    %v7975 = vpop.f32.mrf.mxu0
    %v7976 = vadd.f32 %v7947, %v7975
    %v7977 = vpop.f32.mrf.mxu0
    %v7978 = vadd.f32 %v7949, %v7977
    %7979 = vmatmul.bf16.gmra.mxu0 %v7636
    %v7980 = vpop.f32.mrf.mxu0
    %v7981 = vadd.f32 %v7952, %v7980
    %v7982 = vpop.f32.mrf.mxu0
    %v7983 = vadd.f32 %v7954, %v7982
    %7984 = vmatmul.bf16.gmra.mxu0 %v7640
    %v7985 = vpop.f32.mrf.mxu0
    %v7986 = vadd.f32 %v7957, %v7985
    %v7987 = vpop.f32.mrf.mxu0
    %v7988 = vadd.f32 %v7959, %v7987
    %7989 = vmatmul.bf16.gmra.mxu0 %v7644
    %v7990 = vpop.f32.mrf.mxu0
    %v7991 = vadd.f32 %v7962, %v7990
    %v7992 = vpop.f32.mrf.mxu0
    %v7993 = vadd.f32 %v7964, %v7992
    %7994 = vdwg.mxu0
    %7995 = vmatpush.bf16.msra.mxu0 %v7875
    %7996 = vmatpush.bf16.msra.mxu0 %v7874
    %7997 = vmatpush.bf16.msra.mxu0 %v7873
    %7998 = vmatpush.bf16.msra.mxu0 %v7872
    %7999 = vmatpush.bf16.msra.mxu0 %v7871
    %8000 = vmatpush.bf16.msra.mxu0 %v7870
    %8001 = vmatpush.bf16.msra.mxu0 %v7869
    %8002 = vmatpush.bf16.msra.mxu0 %v7868
    %8003 = vmatmul.bf16.gmra.mxu0 %v7633
    %v8004 = vpop.f32.mrf.mxu0
    %v8005 = vadd.f32 %v7976, %v8004
    %v8006 = vpop.f32.mrf.mxu0
    %v8007 = vadd.f32 %v7978, %v8006
    %8008 = vmatmul.bf16.gmra.mxu0 %v7637
    %v8009 = vpop.f32.mrf.mxu0
    %v8010 = vadd.f32 %v7981, %v8009
    %v8011 = vpop.f32.mrf.mxu0
    %v8012 = vadd.f32 %v7983, %v8011
    %8013 = vmatmul.bf16.gmra.mxu0 %v7641
    %v8014 = vpop.f32.mrf.mxu0
    %v8015 = vadd.f32 %v7986, %v8014
    %v8016 = vpop.f32.mrf.mxu0
    %v8017 = vadd.f32 %v7988, %v8016
    %8018 = vmatmul.bf16.gmra.mxu0 %v7645
    %v8019 = vpop.f32.mrf.mxu0
    %v8020 = vadd.f32 %v7991, %v8019
    %v8021 = vpop.f32.mrf.mxu0
    %v8022 = vadd.f32 %v7993, %v8021
    %8023 = vdwg.mxu0
    %v8024 = vadd.f32 %v8005, %v7010
    %v8025 = vadd.f32 %v8007, %v7011
    %v8026 = vadd.f32 %v8010, %v7012
    %v8027 = vadd.f32 %v8012, %v7013
    %v8028 = vadd.f32 %v8015, %v7014
    %v8029 = vadd.f32 %v8017, %v7015
    %v8030 = vadd.f32 %v8020, %v7016
    %v8031 = vadd.f32 %v8022, %v7017
    %s8032 = scalar_lea.vmem %s15, 1
    %v8033 = vld [vmem:[%s8032] sm:$0x1]
    %s8034 = scalar_lea.vmem %s16, 1
    %v8035 = vld [vmem:[%s8034] sm:$0x1]
    %8036 = vadd.xlane.f32.xlu0 %v8024
    %v8037 = vpop.xlane.xlu0 %8036
    %8038 = vadd.xlane.f32.xlu0 %v8025
    %v8039 = vpop.xlane.xlu0 %8038
    %8040 = vadd.xlane.f32.xlu0 %v8026
    %v8041 = vpop.xlane.xlu0 %8040
    %8042 = vadd.xlane.f32.xlu0 %v8027
    %v8043 = vpop.xlane.xlu0 %8042
    %8044 = vadd.xlane.f32.xlu0 %v8028
    %v8045 = vpop.xlane.xlu0 %8044
    %8046 = vadd.xlane.f32.xlu0 %v8029
    %v8047 = vpop.xlane.xlu0 %8046
    %8048 = vadd.xlane.f32.xlu0 %v8030
    %v8049 = vpop.xlane.xlu0 %8048
    %8050 = vadd.xlane.f32.xlu0 %v8031
    %v8051 = vpop.xlane.xlu0 %8050
    %v8052 = vmul.f32 %v8037, %v2847
    %v8053 = vmul.f32 %v8039, %v2847
    %v8054 = vmul.f32 %v8041, %v2847
    %v8055 = vmul.f32 %v8043, %v2847
    %v8056 = vmul.f32 %v8045, %v2847
    %v8057 = vmul.f32 %v8047, %v2847
    %v8058 = vmul.f32 %v8049, %v2847
    %v8059 = vmul.f32 %v8051, %v2847
    %v8060 = vsub.f32 %v8024, %v8052
    %v8061 = vsub.f32 %v8025, %v8053
    %v8062 = vsub.f32 %v8026, %v8054
    %v8063 = vsub.f32 %v8027, %v8055
    %v8064 = vsub.f32 %v8028, %v8056
    %v8065 = vsub.f32 %v8029, %v8057
    %v8066 = vsub.f32 %v8030, %v8058
    %v8067 = vsub.f32 %v8031, %v8059
    %v8068 = vmul.f32 %v8060, %v8060
    %v8069 = vmul.f32 %v8061, %v8061
    %v8070 = vmul.f32 %v8062, %v8062
    %v8071 = vmul.f32 %v8063, %v8063
    %v8072 = vmul.f32 %v8064, %v8064
    %v8073 = vmul.f32 %v8065, %v8065
    %v8074 = vmul.f32 %v8066, %v8066
    %v8075 = vmul.f32 %v8067, %v8067
    %8076 = vadd.xlane.f32.xlu0 %v8068
    %v8077 = vpop.xlane.xlu0 %8076
    %8078 = vadd.xlane.f32.xlu0 %v8069
    %v8079 = vpop.xlane.xlu0 %8078
    %8080 = vadd.xlane.f32.xlu0 %v8070
    %v8081 = vpop.xlane.xlu0 %8080
    %8082 = vadd.xlane.f32.xlu0 %v8071
    %v8083 = vpop.xlane.xlu0 %8082
    %8084 = vadd.xlane.f32.xlu0 %v8072
    %v8085 = vpop.xlane.xlu0 %8084
    %8086 = vadd.xlane.f32.xlu0 %v8073
    %v8087 = vpop.xlane.xlu0 %8086
    %8088 = vadd.xlane.f32.xlu0 %v8074
    %v8089 = vpop.xlane.xlu0 %8088
    %8090 = vadd.xlane.f32.xlu0 %v8075
    %v8091 = vpop.xlane.xlu0 %8090
    %v8092 = vmul.f32 %v8077, %v2847
    %v8093 = vmul.f32 %v8079, %v2847
    %v8094 = vmul.f32 %v8081, %v2847
    %v8095 = vmul.f32 %v8083, %v2847
    %v8096 = vmul.f32 %v8085, %v2847
    %v8097 = vmul.f32 %v8087, %v2847
    %v8098 = vmul.f32 %v8089, %v2847
    %v8099 = vmul.f32 %v8091, %v2847
    %v8100 = vadd.f32 %v8092, 1e-12
    %v8101 = vadd.f32 %v8093, 1e-12
    %v8102 = vadd.f32 %v8094, 1e-12
    %v8103 = vadd.f32 %v8095, 1e-12
    %v8104 = vadd.f32 %v8096, 1e-12
    %v8105 = vadd.f32 %v8097, 1e-12
    %v8106 = vadd.f32 %v8098, 1e-12
    %v8107 = vadd.f32 %v8099, 1e-12
    %v8108 = vrsqrt.pop %v8100
    %v8109 = vmul.f32 %v8108, %v8100
    %v8110 = vmul.f32 %v8109, %v8108
    %v8111 = vmul.f32 0.5, %v8110
    %v8112 = vsub.f32 1.5, %v8111
    %v8113 = vmul.f32 %v8108, %v8112
    %vm8114 = vweird.f32 %v8100
    %vm8115 = vweird.f32 %v8108
    %vm8116 = vmor %vm8114, %vm8115
    %v8117 = vsel %vm8116, %v8108, %v8113
    %v8118 = vrsqrt.pop %v8101
    %v8119 = vmul.f32 %v8118, %v8101
    %v8120 = vmul.f32 %v8119, %v8118
    %v8121 = vmul.f32 0.5, %v8120
    %v8122 = vsub.f32 1.5, %v8121
    %v8123 = vmul.f32 %v8118, %v8122
    %vm8124 = vweird.f32 %v8101
    %vm8125 = vweird.f32 %v8118
    %vm8126 = vmor %vm8124, %vm8125
    %v8127 = vsel %vm8126, %v8118, %v8123
    %v8128 = vrsqrt.pop %v8102
    %v8129 = vmul.f32 %v8128, %v8102
    %v8130 = vmul.f32 %v8129, %v8128
    %v8131 = vmul.f32 0.5, %v8130
    %v8132 = vsub.f32 1.5, %v8131
    %v8133 = vmul.f32 %v8128, %v8132
    %vm8134 = vweird.f32 %v8102
    %vm8135 = vweird.f32 %v8128
    %vm8136 = vmor %vm8134, %vm8135
    %v8137 = vsel %vm8136, %v8128, %v8133
    %v8138 = vrsqrt.pop %v8103
    %v8139 = vmul.f32 %v8138, %v8103
    %v8140 = vmul.f32 %v8139, %v8138
    %v8141 = vmul.f32 0.5, %v8140
    %v8142 = vsub.f32 1.5, %v8141
    %v8143 = vmul.f32 %v8138, %v8142
    %vm8144 = vweird.f32 %v8103
    %vm8145 = vweird.f32 %v8138
    %vm8146 = vmor %vm8144, %vm8145
    %v8147 = vsel %vm8146, %v8138, %v8143
    %v8148 = vrsqrt.pop %v8104
    %v8149 = vmul.f32 %v8148, %v8104
    %v8150 = vmul.f32 %v8149, %v8148
    %v8151 = vmul.f32 0.5, %v8150
    %v8152 = vsub.f32 1.5, %v8151
    %v8153 = vmul.f32 %v8148, %v8152
    %vm8154 = vweird.f32 %v8104
    %vm8155 = vweird.f32 %v8148
    %vm8156 = vmor %vm8154, %vm8155
    %v8157 = vsel %vm8156, %v8148, %v8153
    %v8158 = vrsqrt.pop %v8105
    %v8159 = vmul.f32 %v8158, %v8105
    %v8160 = vmul.f32 %v8159, %v8158
    %v8161 = vmul.f32 0.5, %v8160
    %v8162 = vsub.f32 1.5, %v8161
    %v8163 = vmul.f32 %v8158, %v8162
    %vm8164 = vweird.f32 %v8105
    %vm8165 = vweird.f32 %v8158
    %vm8166 = vmor %vm8164, %vm8165
    %v8167 = vsel %vm8166, %v8158, %v8163
    %v8168 = vrsqrt.pop %v8106
    %v8169 = vmul.f32 %v8168, %v8106
    %v8170 = vmul.f32 %v8169, %v8168
    %v8171 = vmul.f32 0.5, %v8170
    %v8172 = vsub.f32 1.5, %v8171
    %v8173 = vmul.f32 %v8168, %v8172
    %vm8174 = vweird.f32 %v8106
    %vm8175 = vweird.f32 %v8168
    %vm8176 = vmor %vm8174, %vm8175
    %v8177 = vsel %vm8176, %v8168, %v8173
    %v8178 = vrsqrt.pop %v8107
    %v8179 = vmul.f32 %v8178, %v8107
    %v8180 = vmul.f32 %v8179, %v8178
    %v8181 = vmul.f32 0.5, %v8180
    %v8182 = vsub.f32 1.5, %v8181
    %v8183 = vmul.f32 %v8178, %v8182
    %vm8184 = vweird.f32 %v8107
    %vm8185 = vweird.f32 %v8178
    %vm8186 = vmor %vm8184, %vm8185
    %v8187 = vsel %vm8186, %v8178, %v8183
    %v8188 = vmul.f32 %v8060, %v8117
    %v8189 = vmul.f32 %v8061, %v8127
    %v8190 = vmul.f32 %v8062, %v8137
    %v8191 = vmul.f32 %v8063, %v8147
    %v8192 = vmul.f32 %v8064, %v8157
    %v8193 = vmul.f32 %v8065, %v8167
    %v8194 = vmul.f32 %v8066, %v8177
    %v8195 = vmul.f32 %v8067, %v8187
    %v8197 = vperm.slane %v8033, 0
    %v8199 = vmul.f32 %v8188, %v8197
    %v8200 = vmul.f32 %v8189, %v8197
    %v8201 = vmul.f32 %v8190, %v8197
    %v8202 = vmul.f32 %v8191, %v8197
    %v8203 = vmul.f32 %v8192, %v8197
    %v8204 = vmul.f32 %v8193, %v8197
    %v8205 = vmul.f32 %v8194, %v8197
    %v8206 = vmul.f32 %v8195, %v8197
    %v8208 = vperm.slane %v8035, 0
    %v8210 = vadd.f32 %v8199, %v8208
    %v8211 = vadd.f32 %v8200, %v8208
    %v8212 = vadd.f32 %v8201, %v8208
    %v8213 = vadd.f32 %v8202, %v8208
    %v8214 = vadd.f32 %v8203, %v8208
    %v8215 = vadd.f32 %v8204, %v8208
    %v8216 = vadd.f32 %v8205, %v8208
    %v8217 = vadd.f32 %v8206, %v8208
    %v8218 = vadd.f32 %v8210, %v114
    %v8219 = vadd.f32 %v8211, %v115
    %v8220 = vadd.f32 %v8212, %v116
    %v8221 = vadd.f32 %v8213, %v117
    %v8222 = vadd.f32 %v8214, %v118
    %v8223 = vadd.f32 %v8215, %v119
    %v8224 = vadd.f32 %v8216, %v120
    %v8225 = vadd.f32 %v8217, %v121
    %v8226 = vld [vmem:[%s17] sm:$0x1]
    %v8228 = vperm.slane %v8226, 0
    %v8230 = vmul.f32 %v8218, %v8228
    %v8231 = vmul.f32 %v8219, %v8228
    %v8232 = vmul.f32 %v8220, %v8228
    %v8233 = vmul.f32 %v8221, %v8228
    %v8234 = vmul.f32 %v8222, %v8228
    %v8235 = vmul.f32 %v8223, %v8228
    %v8236 = vmul.f32 %v8224, %v8228
    %v8237 = vmul.f32 %v8225, %v8228
    %8238 = vadd.xlane.f32.xlu0 %v8230
    %v8239 = vpop.xlane.xlu0 %8238
    %8240 = vadd.xlane.f32.xlu0 %v8231
    %v8241 = vpop.xlane.xlu0 %8240
    %8242 = vadd.xlane.f32.xlu0 %v8232
    %v8243 = vpop.xlane.xlu0 %8242
    %8244 = vadd.xlane.f32.xlu0 %v8233
    %v8245 = vpop.xlane.xlu0 %8244
    %8246 = vadd.xlane.f32.xlu0 %v8234
    %v8247 = vpop.xlane.xlu0 %8246
    %8248 = vadd.xlane.f32.xlu0 %v8235
    %v8249 = vpop.xlane.xlu0 %8248
    %8250 = vadd.xlane.f32.xlu0 %v8236
    %v8251 = vpop.xlane.xlu0 %8250
    %8252 = vadd.xlane.f32.xlu0 %v8237
    %v8253 = vpop.xlane.xlu0 %8252
    %v8254 = vld [vmem:[#allocation2] sm:$0x1]
    %v8256 = vperm.slane %v8254, 0
    %v8258 = vadd.f32 %v8239, %v8256
    %v8259 = vadd.f32 %v8241, %v8256
    %v8260 = vadd.f32 %v8243, %v8256
    %v8261 = vadd.f32 %v8245, %v8256
    %v8262 = vadd.f32 %v8247, %v8256
    %v8263 = vadd.f32 %v8249, %v8256
    %v8264 = vadd.f32 %v8251, %v8256
    %v8265 = vadd.f32 %v8253, %v8256
    %vm8266 = vcmask 7168
    %8267 = vst.msk [vmem:[%s19] sm:$0xff] %vm8266, %v8258
    %8268 = vst.msk [vmem:[%s19 + $0x8] sm:$0xff] %vm8266, %v8259
    %8269 = vst.msk [vmem:[%s19 + $0x10] sm:$0xff] %vm8266, %v8260
    %8270 = vst.msk [vmem:[%s19 + $0x18] sm:$0xff] %vm8266, %v8261
    %8271 = vst.msk [vmem:[%s19 + $0x20] sm:$0xff] %vm8266, %v8262
    %8272 = vst.msk [vmem:[%s19 + $0x28] sm:$0xff] %vm8266, %v8263
    %8273 = vst.msk [vmem:[%s19 + $0x30] sm:$0xff] %vm8266, %v8264
    %8274 = vst.msk [vmem:[%s19 + $0x38] sm:$0xff] %vm8266, %v8265
    %v8275 = vlaneseq
    %v8276 = vshrl.u32 %v8275, 7
    %v8277 = vadd.s32 %v8276, 8
    %vm8278 = vcmp.lt.s32.totalorder %v8276, 10
    %vm8279 = vcmp.lt.s32.totalorder %v8277, 10
    %v8280 = vsel %vm8278, %v8258, -1e+30
    %v8281 = vsel %vm8279, %v8259, -1e+30
    %v8282 = vsel %vm8278, %v8260, -1e+30
    %v8283 = vsel %vm8279, %v8261, -1e+30
    %v8284 = vsel %vm8278, %v8262, -1e+30
    %v8285 = vsel %vm8279, %v8263, -1e+30
    %v8286 = vsel %vm8278, %v8264, -1e+30
    %v8287 = vsel %vm8279, %v8265, -1e+30
    %v8288 = vsel %vm8266, %v8280, -inf
    %v8289 = vsel %vm8266, %v8281, -inf
    %v8290 = vmax.f32 %v8288, %v8289
    %v8291 = vrot.slane %v8290, 4
    %v8292 = vmax.f32 %v8290, %v8291
    %v8293 = vrot.slane %v8292, 2
    %v8294 = vmax.f32 %v8292, %v8293
    %v8295 = vrot.slane %v8294, 1
    %v8296 = vmax.f32 %v8294, %v8295
    %v8297 = vsel %vm8266, %v8282, -inf
    %v8298 = vsel %vm8266, %v8283, -inf
    %v8299 = vmax.f32 %v8297, %v8298
    %v8300 = vrot.slane %v8299, 4
    %v8301 = vmax.f32 %v8299, %v8300
    %v8302 = vrot.slane %v8301, 2
    %v8303 = vmax.f32 %v8301, %v8302
    %v8304 = vrot.slane %v8303, 1
    %v8305 = vmax.f32 %v8303, %v8304
    %v8306 = vsel %vm8266, %v8284, -inf
    %v8307 = vsel %vm8266, %v8285, -inf
    %v8308 = vmax.f32 %v8306, %v8307
    %v8309 = vrot.slane %v8308, 4
    %v8310 = vmax.f32 %v8308, %v8309
    %v8311 = vrot.slane %v8310, 2
    %v8312 = vmax.f32 %v8310, %v8311
    %v8313 = vrot.slane %v8312, 1
    %v8314 = vmax.f32 %v8312, %v8313
    %v8315 = vsel %vm8266, %v8286, -inf
    %v8316 = vsel %vm8266, %v8287, -inf
    %v8317 = vmax.f32 %v8315, %v8316
    %v8318 = vrot.slane %v8317, 4
    %v8319 = vmax.f32 %v8317, %v8318
    %v8320 = vrot.slane %v8319, 2
    %v8321 = vmax.f32 %v8319, %v8320
    %v8322 = vrot.slane %v8321, 1
    %v8323 = vmax.f32 %v8321, %v8322
    %v8324 = vsub.f32 %v8258, %v8296
    %v8325 = vsub.f32 %v8259, %v8296
    %v8326 = vsub.f32 %v8260, %v8305
    %v8327 = vsub.f32 %v8261, %v8305
    %v8328 = vsub.f32 %v8262, %v8314
    %v8329 = vsub.f32 %v8263, %v8314
    %v8330 = vsub.f32 %v8264, %v8323
    %v8331 = vsub.f32 %v8265, %v8323
    %v8332 = vmul.f32 %v8324, 1.442695
    %v8333 = vpow.pop %v8332
    %v8334 = vmul.f32 %v8325, 1.442695
    %v8335 = vpow.pop %v8334
    %v8336 = vmul.f32 %v8326, 1.442695
    %v8337 = vpow.pop %v8336
    %v8338 = vmul.f32 %v8327, 1.442695
    %v8339 = vpow.pop %v8338
    %v8340 = vmul.f32 %v8328, 1.442695
    %v8341 = vpow.pop %v8340
    %v8342 = vmul.f32 %v8329, 1.442695
    %v8343 = vpow.pop %v8342
    %v8344 = vmul.f32 %v8330, 1.442695
    %v8345 = vpow.pop %v8344
    %v8346 = vmul.f32 %v8331, 1.442695
    %v8347 = vpow.pop %v8346
    %v8348 = vsel %vm8278, %v8333, 0.0
    %v8349 = vsel %vm8279, %v8335, 0.0
    %v8350 = vsel %vm8278, %v8337, 0.0
    %v8351 = vsel %vm8279, %v8339, 0.0
    %v8352 = vsel %vm8278, %v8341, 0.0
    %v8353 = vsel %vm8279, %v8343, 0.0
    %v8354 = vsel %vm8278, %v8345, 0.0
    %v8355 = vsel %vm8279, %v8347, 0.0
    %v8356 = vsel %vm8266, %v8348, 0.0
    %v8357 = vsel %vm8266, %v8349, 0.0
    %v8358 = vadd.f32 %v8356, %v8357
    %v8359 = vrot.slane %v8358, 4
    %v8360 = vadd.f32 %v8358, %v8359
    %v8361 = vrot.slane %v8360, 2
    %v8362 = vadd.f32 %v8360, %v8361
    %v8363 = vrot.slane %v8362, 1
    %v8364 = vadd.f32 %v8362, %v8363
    %v8365 = vsel %vm8266, %v8350, 0.0
    %v8366 = vsel %vm8266, %v8351, 0.0
    %v8367 = vadd.f32 %v8365, %v8366
    %v8368 = vrot.slane %v8367, 4
    %v8369 = vadd.f32 %v8367, %v8368
    %v8370 = vrot.slane %v8369, 2
    %v8371 = vadd.f32 %v8369, %v8370
    %v8372 = vrot.slane %v8371, 1
    %v8373 = vadd.f32 %v8371, %v8372
    %v8374 = vsel %vm8266, %v8352, 0.0
    %v8375 = vsel %vm8266, %v8353, 0.0
    %v8376 = vadd.f32 %v8374, %v8375
    %v8377 = vrot.slane %v8376, 4
    %v8378 = vadd.f32 %v8376, %v8377
    %v8379 = vrot.slane %v8378, 2
    %v8380 = vadd.f32 %v8378, %v8379
    %v8381 = vrot.slane %v8380, 1
    %v8382 = vadd.f32 %v8380, %v8381
    %v8383 = vsel %vm8266, %v8354, 0.0
    %v8384 = vsel %vm8266, %v8355, 0.0
    %v8385 = vadd.f32 %v8383, %v8384
    %v8386 = vrot.slane %v8385, 4
    %v8387 = vadd.f32 %v8385, %v8386
    %v8388 = vrot.slane %v8387, 2
    %v8389 = vadd.f32 %v8387, %v8388
    %v8390 = vrot.slane %v8389, 1
    %v8391 = vadd.f32 %v8389, %v8390
    %v8392 = vlog2.pop %v8364
    %v8393 = vmul.f32 %v8392, 0.6931472
    %v8394 = vlog2.pop %v8373
    %v8395 = vmul.f32 %v8394, 0.6931472
    %v8396 = vlog2.pop %v8382
    %v8397 = vmul.f32 %v8396, 0.6931472
    %v8398 = vlog2.pop %v8391
    %v8399 = vmul.f32 %v8398, 0.6931472
    %v8400 = vadd.f32 %v8393, %v8296
    %v8401 = vadd.f32 %v8395, %v8305
    %v8402 = vadd.f32 %v8397, %v8314
    %v8403 = vadd.f32 %v8399, %v8323
    %v8404 = vld [vmem:[%s4] sm:$0xff]
    %v8405 = vld [vmem:[%s4 + $0x8] sm:$0xff]
    %v8406 = vld [vmem:[%s4 + $0x10] sm:$0xff]
    %v8407 = vld [vmem:[%s4 + $0x18] sm:$0xff]
    %v8408 = vld [vmem:[%s4 + $0x20] sm:$0xff]
    %v8409 = vld [vmem:[%s4 + $0x28] sm:$0xff]
    %v8410 = vld [vmem:[%s4 + $0x30] sm:$0xff]
    %v8411 = vld [vmem:[%s4 + $0x38] sm:$0xff]
    %v8412 = vmul.f32 %v8258, %v8404
    %v8413 = vmul.f32 %v8259, %v8405
    %v8414 = vmul.f32 %v8260, %v8406
    %v8415 = vmul.f32 %v8261, %v8407
    %v8416 = vmul.f32 %v8262, %v8408
    %v8417 = vmul.f32 %v8263, %v8409
    %v8418 = vmul.f32 %v8264, %v8410
    %v8419 = vmul.f32 %v8265, %v8411
    %v8420 = vsel %vm8266, %v8412, 0.0
    %v8421 = vsel %vm8266, %v8413, 0.0
    %v8422 = vadd.f32 %v8420, %v8421
    %v8423 = vrot.slane %v8422, 4
    %v8424 = vadd.f32 %v8422, %v8423
    %v8425 = vrot.slane %v8424, 2
    %v8426 = vadd.f32 %v8424, %v8425
    %v8427 = vrot.slane %v8426, 1
    %v8428 = vadd.f32 %v8426, %v8427
    %v8429 = vsel %vm8266, %v8414, 0.0
    %v8430 = vsel %vm8266, %v8415, 0.0
    %v8431 = vadd.f32 %v8429, %v8430
    %v8432 = vrot.slane %v8431, 4
    %v8433 = vadd.f32 %v8431, %v8432
    %v8434 = vrot.slane %v8433, 2
    %v8435 = vadd.f32 %v8433, %v8434
    %v8436 = vrot.slane %v8435, 1
    %v8437 = vadd.f32 %v8435, %v8436
    %v8438 = vsel %vm8266, %v8416, 0.0
    %v8439 = vsel %vm8266, %v8417, 0.0
    %v8440 = vadd.f32 %v8438, %v8439
    %v8441 = vrot.slane %v8440, 4
    %v8442 = vadd.f32 %v8440, %v8441
    %v8443 = vrot.slane %v8442, 2
    %v8444 = vadd.f32 %v8442, %v8443
    %v8445 = vrot.slane %v8444, 1
    %v8446 = vadd.f32 %v8444, %v8445
    %v8447 = vsel %vm8266, %v8418, 0.0
    %v8448 = vsel %vm8266, %v8419, 0.0
    %v8449 = vadd.f32 %v8447, %v8448
    %v8450 = vrot.slane %v8449, 4
    %v8451 = vadd.f32 %v8449, %v8450
    %v8452 = vrot.slane %v8451, 2
    %v8453 = vadd.f32 %v8451, %v8452
    %v8454 = vrot.slane %v8453, 1
    %v8455 = vadd.f32 %v8453, %v8454
    %v8456 = vsub.f32 %v8400, %v8428
    %v8457 = vsub.f32 %v8401, %v8437
    %v8458 = vsub.f32 %v8402, %v8446
    %v8459 = vsub.f32 %v8403, %v8455
    %vm8460 = vcmask 0
    %8461 = vst.msk [vmem:[%s20] sm:$0x1] %vm8460, %v8456
    %8462 = vst.msk [vmem:[%s20 + $0x1] sm:$0x1] %vm8460, %v8457
    %8463 = vst.msk [vmem:[%s20 + $0x2] sm:$0x1] %vm8460, %v8458
    %8464 = vst.msk [vmem:[%s20 + $0x3] sm:$0x1] %vm8460, %v8459
    // Predicated region
    $region90: #{contextual_clip_forward.1} parent=1 // pred_check
      _
    $region91: #{contextual_clip_forward.1} parent=1 // pred_check_branch
      %8466 = sbr.rel (0) target = $region93
    $region92: #{contextual_clip_forward.1} parent=1 // pred_region
      _
    $region93: #{contextual_clip_forward.1} parent=1 // pred_fallthru
      _
    // Predicated region
    $region94: #{contextual_clip_forward.1} parent=1 // pred_check
      _
    $region95: #{contextual_clip_forward.1} parent=1 // pred_check_branch
      %8468 = sbr.rel (0) target = $region97
    $region96: #{contextual_clip_forward.1} parent=1 // pred_region
      _
    $region97: #{contextual_clip_forward.1} parent=1 // pred_fallthru
      _
    // Predicated region
    $region98: #{contextual_clip_forward.1} parent=1 // pred_check
      _
    $region99: #{contextual_clip_forward.1} parent=1 // pred_check_branch
      %8470 = sbr.rel (0) target = $region101
    $region100: #{contextual_clip_forward.1} parent=1 // pred_region
      _
    $region101: #{contextual_clip_forward.1} parent=1 // pred_fallthru
      _
    // Predicated region
    $region102: #{contextual_clip_forward.1} parent=1 // pred_check
      _
    $region103: #{contextual_clip_forward.1} parent=1 // pred_check_branch
      %8472 = sbr.rel (0) target = $region105
    $region104: #{contextual_clip_forward.1} parent=1 // pred_region
      _
    $region105: #{contextual_clip_forward.1} parent=1 // pred_fallthru
      _
    %8473 = vsyncpa [#allocation4], 1
    %8474 = vsyncpa [#allocation6], 1

</llo_original>
